<compile_context>
chip_gen: v7x
topology: tpu7x:2x2x1
jax: 0.10.0
libtpu: 0.0.40
codegen_flags: <defaults>
</compile_context>

<pallas_src>
import functools

import jax
import jax.numpy as jnp
from jax.experimental import pallas as pl
from jax.experimental.pallas import tpu as pltpu


def _round_up(x, m):
    return (x + m - 1) // m * m


# ----------------------------------------------------------------------------
# K-tiled fused matmul:  y = [relu](x @ w + b)
# ----------------------------------------------------------------------------
def _matmul_kernel(x_ref, w_ref, b_ref, o_ref, acc_ref, *, relu):
    @pl.when(pl.program_id(2) == 0)
    def _init():
        acc_ref[...] = jnp.zeros_like(acc_ref)

    acc_ref[...] += jnp.dot(x_ref[...], w_ref[...],
                            preferred_element_type=jnp.float32)

    @pl.when(pl.program_id(2) == pl.num_programs(2) - 1)
    def _finalize():
        y = acc_ref[...] + b_ref[...]
        if relu:
            y = jnp.maximum(y, 0.0)
        o_ref[...] = y.astype(o_ref.dtype)


def fused_linear(x, w, b=None, *, relu=False, out_dtype=jnp.float32):
    """x:(M,K), w:(K,N), b:(1,N) or None; bf16 operands, f32 accumulation."""
    M, K = x.shape
    N = w.shape[1]
    if b is None:
        b = jnp.zeros((1, N), jnp.float32)

    Mp = _round_up(M, 128)
    tm = 512 if Mp % 512 == 0 else (256 if Mp % 256 == 0 else 128)
    if K <= 512:
        Kp, tk = K, K                      # single K tile (full-dim block)
    else:
        Kp, tk = _round_up(K, 512), 512
    Np = _round_up(N, 128)
    tn = 256 if Np % 256 == 0 else 128

    xp = jnp.pad(x.astype(jnp.bfloat16), ((0, Mp - M), (0, Kp - K)))
    wp = jnp.pad(w.astype(jnp.bfloat16), ((0, Kp - K), (0, Np - N)))
    bp = jnp.pad(b.astype(jnp.float32), ((0, 0), (0, Np - N)))

    grid = (Mp // tm, Np // tn, Kp // tk)
    out_itemsize = jnp.dtype(out_dtype).itemsize
    out = pl.pallas_call(
        functools.partial(_matmul_kernel, relu=relu),
        out_shape=jax.ShapeDtypeStruct((Mp, Np), out_dtype),
        grid_spec=pltpu.PrefetchScalarGridSpec(
            num_scalar_prefetch=0,
            grid=grid,
            in_specs=[
                pl.BlockSpec((tm, tk), lambda i, j, k: (i, k)),
                pl.BlockSpec((tk, tn), lambda i, j, k: (k, j)),
                pl.BlockSpec((1, tn), lambda i, j, k: (0, j)),
            ],
            out_specs=pl.BlockSpec((tm, tn), lambda i, j, k: (i, j)),
            scratch_shapes=[pltpu.VMEM((tm, tn), jnp.float32)],
        ),
        compiler_params=pltpu.CompilerParams(
            dimension_semantics=("parallel", "parallel", "arbitrary"),
            vmem_limit_bytes=32 * 1024 * 1024,
        ),
        cost_estimate=pl.CostEstimate(
            flops=2 * Mp * Kp * Np,
            transcendentals=0,
            bytes_accessed=Mp * Kp * 2 + Kp * Np * 2 + Mp * Np * out_itemsize,
        ),
    )(xp, wp, bp)
    if (Mp, Np) != (M, N):
        out = out[:M, :N]
    return out


# ----------------------------------------------------------------------------
# Stride-1 3x3 conv (+folded BN +ReLU): haloed VMEM tile, 9 shifted matmuls.
# ----------------------------------------------------------------------------
def _conv3x3_s1_kernel(x_ref, w_ref, b_ref, o_ref, *, rows, Wp, C):
    # x_ref: (1, Hp*Wp, C) flattened, zero-padded NHWC image in VMEM (bf16).
    # o_ref: (1, H*Wp, C); the last 2 columns of each image row are garbage and
    # are sliced off by the wrapper.
    CHUNK = 512
    b = b_ref[...]
    for r0 in range(0, rows, CHUNK):
        r = min(CHUNK, rows - r0)
        acc = jnp.zeros((r, C), jnp.float32)
        for kh in range(3):
            for kw in range(3):
                d = kh * Wp + kw
                patch = x_ref[0, r0 + d:r0 + d + r, :]          # (r, C) bf16
                acc = acc + jnp.dot(patch, w_ref[kh * 3 + kw],
                                    preferred_element_type=jnp.float32)
        o_ref[0, r0:r0 + r, :] = jnp.maximum(acc + b, 0.0).astype(o_ref.dtype)


def conv3x3_s1_bn_relu(x, w9, b):
    """x: (N, H, W, C) bf16 NHWC; w9: (9, C, C) bf16; b: (1, C) f32."""
    N, H, W, C = x.shape
    Wp = W + 2
    Hp = H + 3          # one extra bottom zero-row keeps the flat shifted reads in bounds
    xp = jnp.pad(x, ((0, 0), (1, 2), (1, 1), (0, 0))).reshape(N, Hp * Wp, C)
    rows = H * Wp
    out = pl.pallas_call(
        functools.partial(_conv3x3_s1_kernel, rows=rows, Wp=Wp, C=C),
        out_shape=jax.ShapeDtypeStruct((N, rows, C), jnp.bfloat16),
        grid=(N,),
        in_specs=[
            pl.BlockSpec((1, Hp * Wp, C), lambda n: (n, 0, 0)),
            pl.BlockSpec((9, C, C), lambda n: (0, 0, 0)),
            pl.BlockSpec((1, C), lambda n: (0, 0)),
        ],
        out_specs=pl.BlockSpec((1, rows, C), lambda n: (n, 0, 0)),
        compiler_params=pltpu.CompilerParams(
            dimension_semantics=("parallel",),
            vmem_limit_bytes=32 * 1024 * 1024,
        ),
    )(xp, w9, b)
    return out.reshape(N, H, Wp, C)[:, :, :W, :]


# ----------------------------------------------------------------------------
# Fused relational head: pair formation + g layers 2..3 + Sum(dim=1) + f MLP.
# ----------------------------------------------------------------------------
def _relational_kernel(u_ref, v_ref, vc_ref, b1_ref,
                       g2w_ref, g2b_ref, g3w_ref, g3b_ref,
                       f1w_ref, f1b_ref, f2w_ref, f2b_ref, f3w_ref, f3b_ref,
                       o_ref):
    nc = u_ref.shape[1]
    na = vc_ref.shape[1]
    u = u_ref[0]        # (nc, emb)  = ctx objects @ Wa   (first pair element)
    v = v_ref[0]        # (nc, emb)  = ctx objects @ Wb   (second pair element)
    vc = vc_ref[0]      # (na, emb)  = choice objects @ Wb
    b1 = b1_ref[...]    # (1, emb)   folded bias of g layer 1

    def mm(a, wref):
        return jnp.dot(a.astype(jnp.bfloat16), wref[...],
                       preferred_element_type=jnp.float32)

    def g_tail(h):
        h = jnp.maximum(mm(h, g2w_ref) + g2b_ref[...], 0.0)
        h = jnp.maximum(mm(h, g3w_ref) + g3b_ref[...], 0.0)
        return h

    # All nc*nc ordered context pairs, formed in VMEM (never in HBM):
    # pair(i, j) pre-activation = u[j] + v[i] + b1.
    pre_ctx = jnp.concatenate([u + v[i:i + 1, :] for i in range(nc)], axis=0) + b1
    g_ctx = g_tail(jnp.maximum(pre_ctx, 0.0))
    ctx_sum = jnp.sum(g_ctx, axis=0, keepdims=True)           # Sum(dim=1) of g

    # Context-choice pairs for each answer + relation + Sum(dim=1).
    rows = []
    for i in range(na):
        pre_i = u + vc[i:i + 1, :] + b1                        # (nc, emb)
        g_i = g_tail(jnp.maximum(pre_i, 0.0))
        rows.append(ctx_sum + jnp.sum(g_i, axis=0, keepdims=True))
    relations = jnp.concatenate(rows, axis=0)                  # (na, emb)

    # TODO(synk): use_layer_norm=False -> Identity; Dropout(p=0.0) -> identity.
    r = jnp.maximum(mm(relations, f1w_ref) + f1b_ref[...], 0.0)
    r = jnp.maximum(mm(r, f2w_ref) + f2b_ref[...], 0.0)
    r = mm(r, f3w_ref) + f3b_ref[...]
    o_ref[0] = r.astype(o_ref.dtype)


def relational_head(u, v, vc, params):
    B, nc, emb = u.shape
    na = vc.shape[1]
    full2 = lambda b: (0, 0)
    batched3 = lambda b: (b, 0, 0)
    return pl.pallas_call(
        _relational_kernel,
        out_shape=jax.ShapeDtypeStruct((B, na, emb), jnp.float32),
        grid=(B,),
        in_specs=[
            pl.BlockSpec((1, nc, emb), batched3),              # u_ctx
            pl.BlockSpec((1, nc, emb), batched3),              # v_ctx
            pl.BlockSpec((1, na, emb), batched3),              # v_choice
            pl.BlockSpec((1, emb), full2),                     # g1 bias (folded)
            pl.BlockSpec((emb, emb), full2), pl.BlockSpec((1, emb), full2),  # g2
            pl.BlockSpec((emb, emb), full2), pl.BlockSpec((1, emb), full2),  # g3
            pl.BlockSpec((emb, emb), full2), pl.BlockSpec((1, emb), full2),  # f1
            pl.BlockSpec((emb, emb), full2), pl.BlockSpec((1, emb), full2),  # f2
            pl.BlockSpec((emb, emb), full2), pl.BlockSpec((1, emb), full2),  # f3
        ],
        out_specs=pl.BlockSpec((1, na, emb), batched3),
        compiler_params=pltpu.CompilerParams(
            dimension_semantics=("parallel",),
            vmem_limit_bytes=32 * 1024 * 1024,
        ),
    )(u, v, vc, params["g1_b"],
      params["g2_w"], params["g2_b"], params["g3_w"], params["g3_b"],
      params["f1_w"], params["f1_b"], params["f2_w"], params["f2_b"],
      params["f3_w"], params["f3_b"])


# ----------------------------------------------------------------------------
# JAX-side glue: stride-2 first conv im2col (Cin=1, 9 columns only).
# ----------------------------------------------------------------------------
def _im2col_s2(x):
    """x: (N, H, W) single-channel; 3x3, stride 2, pad 1 -> (N*Ho*Wo, 9)."""
    N, H, W = x.shape
    xp = jnp.pad(x, ((0, 0), (1, 1), (1, 1)))
    Ho = (H + 2 - 3) // 2 + 1
    Wo = (W + 2 - 3) // 2 + 1
    taps = []
    for kh in range(3):
        for kw in range(3):
            taps.append(xp[:, kh:kh + 2 * Ho:2, kw:kw + 2 * Wo:2])
    cols = jnp.stack(taps, axis=-1)                  # (N, Ho, Wo, 9)
    return cols.reshape(N * Ho * Wo, 9), Ho, Wo


# ----------------------------------------------------------------------------
# Parameter construction (deterministic, synthetic; BN folded at build time)
# ----------------------------------------------------------------------------
def init_params(key, cnn_channels, embedding_size, image_size):
    C = cnn_channels
    CP = _round_up(C, 128)                 # lane-dense channel count inside the CNN
    conv_dim = C * (image_size // 2) ** 2
    obj_dim = conv_dim + 9
    emb = embedding_size
    keys = iter(jax.random.split(key, 64))

    def linear(din, dout):
        w = jax.random.normal(next(keys), (dout, din), jnp.float32) / jnp.sqrt(din)
        b = 0.01 * jax.random.normal(next(keys), (dout,), jnp.float32)
        return w, b

    def bn(dout, eps=1e-5):
        gamma = 1.0 + 0.1 * jax.random.normal(next(keys), (dout,), jnp.float32)
        beta = 0.1 * jax.random.normal(next(keys), (dout,), jnp.float32)
        # eval-mode BN (running_mean=0, running_var=1) -> per-feature scale/shift
        return gamma / jnp.sqrt(1.0 + eps), beta

    def fold_bn(w, b):                     # w: (dout, din)
        scale, shift = bn(w.shape[0])
        return w * scale[:, None], b * scale + shift

    p = {}

    # conv1: Conv(1 -> C, 3x3, s=2, p=1) + BN + ReLU, as a (9, CP) matmul operand.
    w = jax.random.normal(next(keys), (C, 9), jnp.float32) / 3.0
    b = 0.01 * jax.random.normal(next(keys), (C,), jnp.float32)
    wf, bf = fold_bn(w, b)
    p["conv1_w"] = (jnp.zeros((9, CP), jnp.float32)
                    .at[:, :C].set(wf.T)).astype(jnp.bfloat16)
    p["conv1_b"] = jnp.zeros((1, CP), jnp.float32).at[0, :C].set(bf)

    # conv2..4: Conv(C -> C, 3x3, s=1, p=1) + BN + ReLU, weights as (9, CP, CP).
    convs = []
    for _ in range(3):
        w = jax.random.normal(next(keys), (C, C, 3, 3), jnp.float32) / jnp.sqrt(9.0 * C)
        b = 0.01 * jax.random.normal(next(keys), (C,), jnp.float32)
        scale, shift = bn(C)
        wf = w * scale[:, None, None, None]
        bf = b * scale + shift
        w9 = jnp.transpose(wf, (2, 3, 1, 0)).reshape(9, C, C)   # (kh*3+kw, cin, cout)
        convs.append({
            "w": (jnp.zeros((9, CP, CP), jnp.float32)
                  .at[:, :C, :C].set(w9)).astype(jnp.bfloat16),
            "b": jnp.zeros((1, CP), jnp.float32).at[0, :C].set(bf),
        })
    p["convs"] = convs

    # g layer 1 (Linear(2*obj_dim -> emb) + BN + ReLU), exploited linearly:
    # cat(a,b) @ W1^T == a @ Wa + b @ Wb, so store [Wa | Wb] as one (obj_dim, 2*emb).
    w1, b1 = linear(2 * obj_dim, emb)
    w1f, b1f = fold_bn(w1, b1)
    p["g1_wab"] = jnp.concatenate(
        [w1f[:, :obj_dim].T, w1f[:, obj_dim:].T], axis=1).astype(jnp.bfloat16)
    p["g1_b"] = b1f.reshape(1, emb)

    # g layers 2..3, f layers 1..2 (Linear+BN+ReLU), f final (plain Linear).
    for name, has_bn in [("g2", True), ("g3", True),
                         ("f1", True), ("f2", True), ("f3", False)]:
        w, b = linear(emb, emb)
        if has_bn:
            w, b = fold_bn(w, b)
        p[name + "_w"] = w.T.astype(jnp.bfloat16)      # stored (in, out)
        p[name + "_b"] = b.reshape(1, emb)
    return p


# ----------------------------------------------------------------------------
# Forward pass
# ----------------------------------------------------------------------------
def wild_relation_network_forward(params, context, answers, *, num_channels):
    B, nc, _, H, W = context.shape
    na = answers.shape[1]
    P = nc + na
    C = num_channels
    emb = params["g1_b"].shape[1]

    x = jnp.concatenate([context, answers], axis=1)            # (B, P, 1, H, W)
    x = x.reshape(B * P, H, W)                                 # single input channel

    # conv1 (stride 2): tiny JAX im2col (9 cols) + K-tiled bf16 fused matmul,
    # lane-dense (channel-padded to 128) bf16 NHWC output.
    cols, Ho, Wo = _im2col_s2(x)
    y = fused_linear(cols, params["conv1_w"], params["conv1_b"],
                     relu=True, out_dtype=jnp.bfloat16)
    CP = params["conv1_w"].shape[1]
    x = y.reshape(B * P, Ho, Wo, CP)

    # conv2..4 (stride 1): fused halo conv in VMEM, no HBM im2col, no transposes.
    for layer in params["convs"]:
        x = conv3x3_s1_bn_relu(x, layer["w"], layer["b"])

    # Flatten + TagPanelEmbeddings (9-dim one-hot; all answer panels share tag 8).
    feats = x[..., :C].reshape(B, P, Ho * Wo * C).astype(jnp.float32)
    # TODO(synk): flatten order is (H, W, C) (NHWC) instead of PyTorch's (C, H, W);
    # the synthetic g1 weights are defined in this order (same function family up
    # to a fixed permutation of first-layer weight rows).
    tags = jnp.zeros((P, 9), jnp.float32)
    tags = tags.at[jnp.arange(nc), jnp.arange(nc)].set(1.0)
    tags = tags.at[nc:, 8].set(1.0)
    objects = jnp.concatenate(
        [feats, jnp.broadcast_to(tags[None], (B, P, 9))], axis=2)

    # g layer 1 by linearity: project every object once through [Wa | Wb];
    # the nc^2 / na*nc pair tensors are never materialized in HBM.
    proj = fused_linear(objects.reshape(B * P, -1), params["g1_wab"], None,
                        relu=False, out_dtype=jnp.float32)
    proj = proj.reshape(B, P, 2 * emb)
    u_ctx = proj[:, :nc, :emb]
    v_ctx = proj[:, :nc, emb:]
    v_cho = proj[:, nc:, emb:]

    # Fused relational head: pair formation + g tail + Sum(dim=1) + f MLP.
    return relational_head(u_ctx, v_ctx, v_cho, params)


# ----------------------------------------------------------------------------
# Main
# ----------------------------------------------------------------------------
if __name__ == "__main__":
    B = 2
    num_context_panels = 8
    num_answer_panels = 4
    H = W = 16                       # small stand-in for image_size=160
    cnn_channels = 8                 # stand-in for num_channels=32
    embedding_size = 128             # matches the reference default

    root = jax.random.PRNGKey(0)
    kp, kc, ka = jax.random.split(root, 3)
    params = init_params(kp, cnn_channels, embedding_size, H)
    context = jax.random.normal(kc, (B, num_context_panels, 1, H, W), jnp.float32)
    answers = jax.random.normal(ka, (B, num_answer_panels, 1, H, W), jnp.float32)

    fwd = jax.jit(functools.partial(wild_relation_network_forward,
                                    num_channels=cnn_channels))
    out = fwd(params, context, answers)
    jax.block_until_ready(out)
    assert out.shape == (B, num_answer_panels, embedding_size), out.shape
    assert bool(jnp.all(jnp.isfinite(out)))
    print("KERNEL_OK")
</pallas_src>

<mosaic_0001>
module attributes {stable_mosaic.version = 11 : i64} {
  func.func @_matmul_kernel(%arg0: i32, %arg1: i32, %arg2: i32, %arg3: memref<512x9xbf16, #tpu.memory_space<vmem>>, %arg4: memref<9x128xbf16, #tpu.memory_space<vmem>>, %arg5: memref<1x128xf32, #tpu.memory_space<vmem>>, %arg6: memref<512x128xbf16, #tpu.memory_space<vmem>>, %arg7: memref<512x128xf32, #tpu.memory_space<vmem>>) attributes {dimension_semantics = [#tpu.dimension_semantics<parallel>, #tpu.dimension_semantics<parallel>, #tpu.dimension_semantics<arbitrary>], iteration_bounds = array<i64: 3, 1, 1>, scalar_prefetch = 0 : i64, scratch_operands = 1 : i64, tpu.core_type = #tpu.core_type<tc>, window_params = [{transform_indices = @transform_0, window_bounds = array<i64: 512, 9>}, {transform_indices = @transform_1, window_bounds = array<i64: 9, 128>}, {transform_indices = @transform_2, window_bounds = array<i64: 1, 128>}, {transform_indices = @transform_3, window_bounds = array<i64: 512, 128>}]} {
    %c0_i32 = arith.constant 0 : i32
    %0 = arith.cmpi eq, %arg2, %c0_i32 : i32
    %1 = arith.extui %0 : i1 to i32
    %c0_i32_0 = arith.constant 0 : i32
    %2 = arith.cmpi ne, %1, %c0_i32_0 : i32
    scf.if %2 {
      %cst_10 = arith.constant 0.000000e+00 : f32
      %12 = vector.broadcast %cst_10 : f32 to vector<512x128xf32>
      %c0_11 = arith.constant 0 : index
      %c0_12 = arith.constant 0 : index
      %13 = vector.load %arg7[%c0_11, %c0_12] : memref<512x128xf32, #tpu.memory_space<vmem>>, vector<512x128xf32>
      tpu.vector_store %arg7[%c0_11, %c0_12], %12 {strides = array<i32>} : memref<512x128xf32, #tpu.memory_space<vmem>>, vector<512x128xf32>,
    } else {
    }
    %c0 = arith.constant 0 : index
    %c0_1 = arith.constant 0 : index
    %3 = vector.load %arg7[%c0, %c0_1] : memref<512x128xf32, #tpu.memory_space<vmem>>, vector<512x128xf32>
    %c0_2 = arith.constant 0 : index
    %c0_3 = arith.constant 0 : index
    %4 = vector.load %arg3[%c0_2, %c0_3] : memref<512x9xbf16, #tpu.memory_space<vmem>>, vector<512x9xbf16>
    %c0_4 = arith.constant 0 : index
    %c0_5 = arith.constant 0 : index
    %5 = vector.load %arg4[%c0_4, %c0_5] : memref<9x128xbf16, #tpu.memory_space<vmem>>, vector<9x128xbf16>
    %cst = arith.constant dense<0.000000e+00> : vector<512x128xf32>
    %6 = tpu.matmul %4, %5, %cst {dimension_numbers = #tpu.dot_dimension_numbers<[1], [0], [0], [1], [0, 0, 1, 1], [], []>} : vector<512x9xbf16>, vector<9x128xbf16>, vector<512x128xf32> -> vector<512x128xf32>
    %7 = arith.addf %3, %6 : vector<512x128xf32>
    %c0_6 = arith.constant 0 : index
    %c0_7 = arith.constant 0 : index
    %8 = vector.load %arg7[%c0_6, %c0_7] : memref<512x128xf32, #tpu.memory_space<vmem>>, vector<512x128xf32>
    tpu.vector_store %arg7[%c0_6, %c0_7], %7 {strides = array<i32>} : memref<512x128xf32, #tpu.memory_space<vmem>>, vector<512x128xf32>,
    %c0_i32_8 = arith.constant 0 : i32
    %9 = arith.cmpi eq, %arg2, %c0_i32_8 : i32
    %10 = arith.extui %9 : i1 to i32
    %c0_i32_9 = arith.constant 0 : i32
    %11 = arith.cmpi ne, %10, %c0_i32_9 : i32
    scf.if %11 {
      %c0_10 = arith.constant 0 : index
      %c0_11 = arith.constant 0 : index
      %12 = vector.load %arg7[%c0_10, %c0_11] : memref<512x128xf32, #tpu.memory_space<vmem>>, vector<512x128xf32>
      %c0_12 = arith.constant 0 : index
      %c0_13 = arith.constant 0 : index
      %13 = vector.load %arg5[%c0_12, %c0_13] : memref<1x128xf32, #tpu.memory_space<vmem>>, vector<1x128xf32>
      %14 = vector.broadcast %13 : vector<1x128xf32> to vector<512x128xf32>
      %15 = arith.addf %12, %14 : vector<512x128xf32>
      %cst_14 = arith.constant 0.000000e+00 : f32
      %16 = vector.broadcast %cst_14 : f32 to vector<512x128xf32>
      %17 = arith.maximumf %15, %16 : vector<512x128xf32>
      %18 = arith.truncf %17 : vector<512x128xf32> to vector<512x128xbf16>
      %c0_15 = arith.constant 0 : index
      %c0_16 = arith.constant 0 : index
      %19 = vector.load %arg6[%c0_15, %c0_16] : memref<512x128xbf16, #tpu.memory_space<vmem>>, vector<512x128xbf16>
      tpu.vector_store %arg6[%c0_15, %c0_16], %18 {strides = array<i32>} : memref<512x128xbf16, #tpu.memory_space<vmem>>, vector<512x128xbf16>,
    } else {
    }
    return
  }
  func.func @transform_0(%arg0: i32, %arg1: i32, %arg2: i32) -> (i32, i32) {
    %c0_i32 = arith.constant 0 : i32
    return %arg0, %arg2 : i32, i32
  }
  func.func @transform_1(%arg0: i32, %arg1: i32, %arg2: i32) -> (i32, i32) {
    %c0_i32 = arith.constant 0 : i32
    return %arg2, %arg1 : i32, i32
  }
  func.func @transform_2(%arg0: i32, %arg1: i32, %arg2: i32) -> (i32, i32) {
    %c0_i32 = arith.constant 0 : i32
    %c0_i32_0 = arith.constant 0 : i32
    return %c0_i32, %arg1 : i32, i32
  }
  func.func @transform_3(%arg0: i32, %arg1: i32, %arg2: i32) -> (i32, i32) {
    %c0_i32 = arith.constant 0 : i32
    return %arg0, %arg1 : i32, i32
  }
}

module attributes {stable_mosaic.version = 11 : i64} {
  func.func @_conv3x3_s1_kernel(%arg0: i32, %arg1: memref<1x110x128xbf16, #tpu.memory_space<vmem>>, %arg2: memref<9x128x128xbf16, #tpu.memory_space<vmem>>, %arg3: memref<1x128xf32, #tpu.memory_space<vmem>>, %arg4: memref<1x80x128xbf16, #tpu.memory_space<vmem>>) attributes {dimension_semantics = [#tpu.dimension_semantics<parallel>], iteration_bounds = array<i64: 24>, scalar_prefetch = 0 : i64, scratch_operands = 0 : i64, tpu.core_type = #tpu.core_type<tc>, window_params = [{transform_indices = @transform_0, window_bounds = array<i64: 1, 110, 128>}, {pipeline_mode = #tpu.pipeline_mode<synchronous>, transform_indices = @transform_1, window_bounds = array<i64: 9, 128, 128>}, {pipeline_mode = #tpu.pipeline_mode<synchronous>, transform_indices = @transform_2, window_bounds = array<i64: 1, 128>}, {transform_indices = @transform_3, window_bounds = array<i64: 1, 80, 128>}]} {
    %c0 = arith.constant 0 : index
    %c0_0 = arith.constant 0 : index
    %0 = vector.load %arg3[%c0, %c0_0] : memref<1x128xf32, #tpu.memory_space<vmem>>, vector<1x128xf32>
    %cst = arith.constant 0.000000e+00 : f32
    %1 = vector.broadcast %cst : f32 to vector<80x128xf32>
    %c0_1 = arith.constant 0 : index
    %c0_2 = arith.constant 0 : index
    %c0_3 = arith.constant 0 : index
    %2 = vector.load %arg1[%c0_1, %c0_2, %c0_3] : memref<1x110x128xbf16, #tpu.memory_space<vmem>>, vector<1x80x128xbf16>
    %3 = vector.shape_cast %2 : vector<1x80x128xbf16> to vector<80x128xbf16>
    %c0_4 = arith.constant 0 : index
    %c0_5 = arith.constant 0 : index
    %c0_6 = arith.constant 0 : index
    %4 = vector.load %arg2[%c0_4, %c0_5, %c0_6] : memref<9x128x128xbf16, #tpu.memory_space<vmem>>, vector<1x128x128xbf16>
    %5 = vector.shape_cast %4 : vector<1x128x128xbf16> to vector<128x128xbf16>
    %cst_7 = arith.constant dense<0.000000e+00> : vector<80x128xf32>
    %6 = tpu.matmul %3, %5, %cst_7 {dimension_numbers = #tpu.dot_dimension_numbers<[1], [0], [0], [1], [0, 0, 1, 1], [], []>} : vector<80x128xbf16>, vector<128x128xbf16>, vector<80x128xf32> -> vector<80x128xf32>
    %7 = arith.addf %1, %6 : vector<80x128xf32>
    %c0_8 = arith.constant 0 : index
    %c1 = arith.constant 1 : index
    %c0_9 = arith.constant 0 : index
    %8 = vector.load %arg1[%c0_8, %c1, %c0_9] : memref<1x110x128xbf16, #tpu.memory_space<vmem>>, vector<1x80x128xbf16>
    %9 = vector.shape_cast %8 : vector<1x80x128xbf16> to vector<80x128xbf16>
    %c1_10 = arith.constant 1 : index
    %c0_11 = arith.constant 0 : index
    %c0_12 = arith.constant 0 : index
    %10 = vector.load %arg2[%c1_10, %c0_11, %c0_12] : memref<9x128x128xbf16, #tpu.memory_space<vmem>>, vector<1x128x128xbf16>
    %11 = vector.shape_cast %10 : vector<1x128x128xbf16> to vector<128x128xbf16>
    %cst_13 = arith.constant dense<0.000000e+00> : vector<80x128xf32>
    %12 = tpu.matmul %9, %11, %cst_13 {dimension_numbers = #tpu.dot_dimension_numbers<[1], [0], [0], [1], [0, 0, 1, 1], [], []>} : vector<80x128xbf16>, vector<128x128xbf16>, vector<80x128xf32> -> vector<80x128xf32>
    %13 = arith.addf %7, %12 : vector<80x128xf32>
    %c0_14 = arith.constant 0 : index
    %c2 = arith.constant 2 : index
    %c0_15 = arith.constant 0 : index
    %14 = vector.load %arg1[%c0_14, %c2, %c0_15] : memref<1x110x128xbf16, #tpu.memory_space<vmem>>, vector<1x80x128xbf16>
    %15 = vector.shape_cast %14 : vector<1x80x128xbf16> to vector<80x128xbf16>
    %c2_16 = arith.constant 2 : index
    %c0_17 = arith.constant 0 : index
    %c0_18 = arith.constant 0 : index
    %16 = vector.load %arg2[%c2_16, %c0_17, %c0_18] : memref<9x128x128xbf16, #tpu.memory_space<vmem>>, vector<1x128x128xbf16>
    %17 = vector.shape_cast %16 : vector<1x128x128xbf16> to vector<128x128xbf16>
    %cst_19 = arith.constant dense<0.000000e+00> : vector<80x128xf32>
    %18 = tpu.matmul %15, %17, %cst_19 {dimension_numbers = #tpu.dot_dimension_numbers<[1], [0], [0], [1], [0, 0, 1, 1], [], []>} : vector<80x128xbf16>, vector<128x128xbf16>, vector<80x128xf32> -> vector<80x128xf32>
    %19 = arith.addf %13, %18 : vector<80x128xf32>
    %c0_20 = arith.constant 0 : index
    %c10 = arith.constant 10 : index
    %c0_21 = arith.constant 0 : index
    %20 = vector.load %arg1[%c0_20, %c10, %c0_21] : memref<1x110x128xbf16, #tpu.memory_space<vmem>>, vector<1x80x128xbf16>
    %21 = vector.shape_cast %20 : vector<1x80x128xbf16> to vector<80x128xbf16>
    %c3 = arith.constant 3 : index
    %c0_22 = arith.constant 0 : index
    %c0_23 = arith.constant 0 : index
    %22 = vector.load %arg2[%c3, %c0_22, %c0_23] : memref<9x128x128xbf16, #tpu.memory_space<vmem>>, vector<1x128x128xbf16>
    %23 = vector.shape_cast %22 : vector<1x128x128xbf16> to vector<128x128xbf16>
    %cst_24 = arith.constant dense<0.000000e+00> : vector<80x128xf32>
    %24 = tpu.matmul %21, %23, %cst_24 {dimension_numbers = #tpu.dot_dimension_numbers<[1], [0], [0], [1], [0, 0, 1, 1], [], []>} : vector<80x128xbf16>, vector<128x128xbf16>, vector<80x128xf32> -> vector<80x128xf32>
    %25 = arith.addf %19, %24 : vector<80x128xf32>
    %c0_25 = arith.constant 0 : index
    %c11 = arith.constant 11 : index
    %c0_26 = arith.constant 0 : index
    %26 = vector.load %arg1[%c0_25, %c11, %c0_26] : memref<1x110x128xbf16, #tpu.memory_space<vmem>>, vector<1x80x128xbf16>
    %27 = vector.shape_cast %26 : vector<1x80x128xbf16> to vector<80x128xbf16>
    %c4 = arith.constant 4 : index
    %c0_27 = arith.constant 0 : index
    %c0_28 = arith.constant 0 : index
    %28 = vector.load %arg2[%c4, %c0_27, %c0_28] : memref<9x128x128xbf16, #tpu.memory_space<vmem>>, vector<1x128x128xbf16>
    %29 = vector.shape_cast %28 : vector<1x128x128xbf16> to vector<128x128xbf16>
    %cst_29 = arith.constant dense<0.000000e+00> : vector<80x128xf32>
    %30 = tpu.matmul %27, %29, %cst_29 {dimension_numbers = #tpu.dot_dimension_numbers<[1], [0], [0], [1], [0, 0, 1, 1], [], []>} : vector<80x128xbf16>, vector<128x128xbf16>, vector<80x128xf32> -> vector<80x128xf32>
    %31 = arith.addf %25, %30 : vector<80x128xf32>
    %c0_30 = arith.constant 0 : index
    %c12 = arith.constant 12 : index
    %c0_31 = arith.constant 0 : index
    %32 = vector.load %arg1[%c0_30, %c12, %c0_31] : memref<1x110x128xbf16, #tpu.memory_space<vmem>>, vector<1x80x128xbf16>
    %33 = vector.shape_cast %32 : vector<1x80x128xbf16> to vector<80x128xbf16>
    %c5 = arith.constant 5 : index
    %c0_32 = arith.constant 0 : index
    %c0_33 = arith.constant 0 : index
    %34 = vector.load %arg2[%c5, %c0_32, %c0_33] : memref<9x128x128xbf16, #tpu.memory_space<vmem>>, vector<1x128x128xbf16>
    %35 = vector.shape_cast %34 : vector<1x128x128xbf16> to vector<128x128xbf16>
    %cst_34 = arith.constant dense<0.000000e+00> : vector<80x128xf32>
    %36 = tpu.matmul %33, %35, %cst_34 {dimension_numbers = #tpu.dot_dimension_numbers<[1], [0], [0], [1], [0, 0, 1, 1], [], []>} : vector<80x128xbf16>, vector<128x128xbf16>, vector<80x128xf32> -> vector<80x128xf32>
    %37 = arith.addf %31, %36 : vector<80x128xf32>
    %c0_35 = arith.constant 0 : index
    %c20 = arith.constant 20 : index
    %c0_36 = arith.constant 0 : index
    %38 = vector.load %arg1[%c0_35, %c20, %c0_36] : memref<1x110x128xbf16, #tpu.memory_space<vmem>>, vector<1x80x128xbf16>
    %39 = vector.shape_cast %38 : vector<1x80x128xbf16> to vector<80x128xbf16>
    %c6 = arith.constant 6 : index
    %c0_37 = arith.constant 0 : index
    %c0_38 = arith.constant 0 : index
    %40 = vector.load %arg2[%c6, %c0_37, %c0_38] : memref<9x128x128xbf16, #tpu.memory_space<vmem>>, vector<1x128x128xbf16>
    %41 = vector.shape_cast %40 : vector<1x128x128xbf16> to vector<128x128xbf16>
    %cst_39 = arith.constant dense<0.000000e+00> : vector<80x128xf32>
    %42 = tpu.matmul %39, %41, %cst_39 {dimension_numbers = #tpu.dot_dimension_numbers<[1], [0], [0], [1], [0, 0, 1, 1], [], []>} : vector<80x128xbf16>, vector<128x128xbf16>, vector<80x128xf32> -> vector<80x128xf32>
    %43 = arith.addf %37, %42 : vector<80x128xf32>
    %c0_40 = arith.constant 0 : index
    %c21 = arith.constant 21 : index
    %c0_41 = arith.constant 0 : index
    %44 = vector.load %arg1[%c0_40, %c21, %c0_41] : memref<1x110x128xbf16, #tpu.memory_space<vmem>>, vector<1x80x128xbf16>
    %45 = vector.shape_cast %44 : vector<1x80x128xbf16> to vector<80x128xbf16>
    %c7 = arith.constant 7 : index
    %c0_42 = arith.constant 0 : index
    %c0_43 = arith.constant 0 : index
    %46 = vector.load %arg2[%c7, %c0_42, %c0_43] : memref<9x128x128xbf16, #tpu.memory_space<vmem>>, vector<1x128x128xbf16>
    %47 = vector.shape_cast %46 : vector<1x128x128xbf16> to vector<128x128xbf16>
    %cst_44 = arith.constant dense<0.000000e+00> : vector<80x128xf32>
    %48 = tpu.matmul %45, %47, %cst_44 {dimension_numbers = #tpu.dot_dimension_numbers<[1], [0], [0], [1], [0, 0, 1, 1], [], []>} : vector<80x128xbf16>, vector<128x128xbf16>, vector<80x128xf32> -> vector<80x128xf32>
    %49 = arith.addf %43, %48 : vector<80x128xf32>
    %c0_45 = arith.constant 0 : index
    %c22 = arith.constant 22 : index
    %c0_46 = arith.constant 0 : index
    %50 = vector.load %arg1[%c0_45, %c22, %c0_46] : memref<1x110x128xbf16, #tpu.memory_space<vmem>>, vector<1x80x128xbf16>
    %51 = vector.shape_cast %50 : vector<1x80x128xbf16> to vector<80x128xbf16>
    %c8 = arith.constant 8 : index
    %c0_47 = arith.constant 0 : index
    %c0_48 = arith.constant 0 : index
    %52 = vector.load %arg2[%c8, %c0_47, %c0_48] : memref<9x128x128xbf16, #tpu.memory_space<vmem>>, vector<1x128x128xbf16>
    %53 = vector.shape_cast %52 : vector<1x128x128xbf16> to vector<128x128xbf16>
    %cst_49 = arith.constant dense<0.000000e+00> : vector<80x128xf32>
    %54 = tpu.matmul %51, %53, %cst_49 {dimension_numbers = #tpu.dot_dimension_numbers<[1], [0], [0], [1], [0, 0, 1, 1], [], []>} : vector<80x128xbf16>, vector<128x128xbf16>, vector<80x128xf32> -> vector<80x128xf32>
    %55 = arith.addf %49, %54 : vector<80x128xf32>
    %56 = vector.broadcast %0 : vector<1x128xf32> to vector<80x128xf32>
    %57 = arith.addf %55, %56 : vector<80x128xf32>
    %cst_50 = arith.constant 0.000000e+00 : f32
    %58 = vector.broadcast %cst_50 : f32 to vector<80x128xf32>
    %59 = arith.maximumf %57, %58 : vector<80x128xf32>
    %60 = arith.truncf %59 : vector<80x128xf32> to vector<80x128xbf16>
    %c0_51 = arith.constant 0 : index
    %c0_52 = arith.constant 0 : index
    %c0_53 = arith.constant 0 : index
    %61 = vector.load %arg4[%c0_51, %c0_52, %c0_53] : memref<1x80x128xbf16, #tpu.memory_space<vmem>>, vector<1x80x128xbf16>
    %62 = vector.shape_cast %61 : vector<1x80x128xbf16> to vector<80x128xbf16>
    %63 = vector.shape_cast %60 : vector<80x128xbf16> to vector<1x80x128xbf16>
    tpu.vector_store %arg4[%c0_51, %c0_52, %c0_53], %63 {strides = array<i32>} : memref<1x80x128xbf16, #tpu.memory_space<vmem>>, vector<1x80x128xbf16>,
    return
  }
  func.func @transform_0(%arg0: i32) -> (i32, i32, i32) {
    %c0_i32 = arith.constant 0 : i32
    %c0_i32_0 = arith.constant 0 : i32
    %c0_i32_1 = arith.constant 0 : i32
    return %arg0, %c0_i32, %c0_i32_0 : i32, i32, i32
  }
  func.func @transform_1(%arg0: i32) -> (i32, i32, i32) {
    %c0_i32 = arith.constant 0 : i32
    %c0_i32_0 = arith.constant 0 : i32
    %c0_i32_1 = arith.constant 0 : i32
    %c0_i32_2 = arith.constant 0 : i32
    return %c0_i32, %c0_i32_0, %c0_i32_1 : i32, i32, i32
  }
  func.func @transform_2(%arg0: i32) -> (i32, i32) {
    %c0_i32 = arith.constant 0 : i32
    %c0_i32_0 = arith.constant 0 : i32
    %c0_i32_1 = arith.constant 0 : i32
    return %c0_i32, %c0_i32_0 : i32, i32
  }
  func.func @transform_3(%arg0: i32) -> (i32, i32, i32) {
    %c0_i32 = arith.constant 0 : i32
    %c0_i32_0 = arith.constant 0 : i32
    %c0_i32_1 = arith.constant 0 : i32
    return %arg0, %c0_i32, %c0_i32_0 : i32, i32, i32
  }
}

module attributes {stable_mosaic.version = 11 : i64} {
  func.func @_matmul_kernel(%arg0: i32, %arg1: i32, %arg2: i32, %arg3: memref<128x512xbf16, #tpu.memory_space<vmem>>, %arg4: memref<512x256xbf16, #tpu.memory_space<vmem>>, %arg5: memref<1x256xf32, #tpu.memory_space<vmem>>, %arg6: memref<128x256xf32, #tpu.memory_space<vmem>>, %arg7: memref<128x256xf32, #tpu.memory_space<vmem>>) attributes {dimension_semantics = [#tpu.dimension_semantics<parallel>, #tpu.dimension_semantics<parallel>, #tpu.dimension_semantics<arbitrary>], iteration_bounds = array<i64: 1, 1, 2>, scalar_prefetch = 0 : i64, scratch_operands = 1 : i64, tpu.core_type = #tpu.core_type<tc>, window_params = [{transform_indices = @transform_0, window_bounds = array<i64: 128, 512>}, {transform_indices = @transform_1, window_bounds = array<i64: 512, 256>}, {transform_indices = @transform_2, window_bounds = array<i64: 1, 256>}, {transform_indices = @transform_3, window_bounds = array<i64: 128, 256>}]} {
    %c0_i32 = arith.constant 0 : i32
    %0 = arith.cmpi eq, %arg2, %c0_i32 : i32
    %1 = arith.extui %0 : i1 to i32
    %c0_i32_0 = arith.constant 0 : i32
    %2 = arith.cmpi ne, %1, %c0_i32_0 : i32
    scf.if %2 {
      %cst_9 = arith.constant 0.000000e+00 : f32
      %12 = vector.broadcast %cst_9 : f32 to vector<128x256xf32>
      %c0_10 = arith.constant 0 : index
      %c0_11 = arith.constant 0 : index
      %13 = vector.load %arg7[%c0_10, %c0_11] : memref<128x256xf32, #tpu.memory_space<vmem>>, vector<128x256xf32>
      tpu.vector_store %arg7[%c0_10, %c0_11], %12 {strides = array<i32>} : memref<128x256xf32, #tpu.memory_space<vmem>>, vector<128x256xf32>,
    } else {
    }
    %c0 = arith.constant 0 : index
    %c0_1 = arith.constant 0 : index
    %3 = vector.load %arg7[%c0, %c0_1] : memref<128x256xf32, #tpu.memory_space<vmem>>, vector<128x256xf32>
    %c0_2 = arith.constant 0 : index
    %c0_3 = arith.constant 0 : index
    %4 = vector.load %arg3[%c0_2, %c0_3] : memref<128x512xbf16, #tpu.memory_space<vmem>>, vector<128x512xbf16>
    %c0_4 = arith.constant 0 : index
    %c0_5 = arith.constant 0 : index
    %5 = vector.load %arg4[%c0_4, %c0_5] : memref<512x256xbf16, #tpu.memory_space<vmem>>, vector<512x256xbf16>
    %cst = arith.constant dense<0.000000e+00> : vector<128x256xf32>
    %6 = tpu.matmul %4, %5, %cst {dimension_numbers = #tpu.dot_dimension_numbers<[1], [0], [0], [1], [0, 0, 1, 1], [], []>} : vector<128x512xbf16>, vector<512x256xbf16>, vector<128x256xf32> -> vector<128x256xf32>
    %7 = arith.addf %3, %6 : vector<128x256xf32>
    %c0_6 = arith.constant 0 : index
    %c0_7 = arith.constant 0 : index
    %8 = vector.load %arg7[%c0_6, %c0_7] : memref<128x256xf32, #tpu.memory_space<vmem>>, vector<128x256xf32>
    tpu.vector_store %arg7[%c0_6, %c0_7], %7 {strides = array<i32>} : memref<128x256xf32, #tpu.memory_space<vmem>>, vector<128x256xf32>,
    %c1_i32 = arith.constant 1 : i32
    %9 = arith.cmpi eq, %arg2, %c1_i32 : i32
    %10 = arith.extui %9 : i1 to i32
    %c0_i32_8 = arith.constant 0 : i32
    %11 = arith.cmpi ne, %10, %c0_i32_8 : i32
    scf.if %11 {
      %c0_9 = arith.constant 0 : index
      %c0_10 = arith.constant 0 : index
      %12 = vector.load %arg7[%c0_9, %c0_10] : memref<128x256xf32, #tpu.memory_space<vmem>>, vector<128x256xf32>
      %c0_11 = arith.constant 0 : index
      %c0_12 = arith.constant 0 : index
      %13 = vector.load %arg5[%c0_11, %c0_12] : memref<1x256xf32, #tpu.memory_space<vmem>>, vector<1x256xf32>
      %14 = vector.broadcast %13 : vector<1x256xf32> to vector<128x256xf32>
      %15 = arith.addf %12, %14 : vector<128x256xf32>
      %c0_13 = arith.constant 0 : index
      %c0_14 = arith.constant 0 : index
      %16 = vector.load %arg6[%c0_13, %c0_14] : memref<128x256xf32, #tpu.memory_space<vmem>>, vector<128x256xf32>
      tpu.vector_store %arg6[%c0_13, %c0_14], %15 {strides = array<i32>} : memref<128x256xf32, #tpu.memory_space<vmem>>, vector<128x256xf32>,
    } else {
    }
    return
  }
  func.func @transform_0(%arg0: i32, %arg1: i32, %arg2: i32) -> (i32, i32) {
    %c0_i32 = arith.constant 0 : i32
    return %arg0, %arg2 : i32, i32
  }
  func.func @transform_1(%arg0: i32, %arg1: i32, %arg2: i32) -> (i32, i32) {
    %c0_i32 = arith.constant 0 : i32
    return %arg2, %arg1 : i32, i32
  }
  func.func @transform_2(%arg0: i32, %arg1: i32, %arg2: i32) -> (i32, i32) {
    %c0_i32 = arith.constant 0 : i32
    %c0_i32_0 = arith.constant 0 : i32
    return %c0_i32, %arg1 : i32, i32
  }
  func.func @transform_3(%arg0: i32, %arg1: i32, %arg2: i32) -> (i32, i32) {
    %c0_i32 = arith.constant 0 : i32
    return %arg0, %arg1 : i32, i32
  }
}

module attributes {stable_mosaic.version = 11 : i64} {
  func.func @_relational_kernel(%arg0: i32, %arg1: memref<1x8x128xf32, #tpu.memory_space<vmem>>, %arg2: memref<1x8x128xf32, #tpu.memory_space<vmem>>, %arg3: memref<1x4x128xf32, #tpu.memory_space<vmem>>, %arg4: memref<1x128xf32, #tpu.memory_space<vmem>>, %arg5: memref<128x128xbf16, #tpu.memory_space<vmem>>, %arg6: memref<1x128xf32, #tpu.memory_space<vmem>>, %arg7: memref<128x128xbf16, #tpu.memory_space<vmem>>, %arg8: memref<1x128xf32, #tpu.memory_space<vmem>>, %arg9: memref<128x128xbf16, #tpu.memory_space<vmem>>, %arg10: memref<1x128xf32, #tpu.memory_space<vmem>>, %arg11: memref<128x128xbf16, #tpu.memory_space<vmem>>, %arg12: memref<1x128xf32, #tpu.memory_space<vmem>>, %arg13: memref<128x128xbf16, #tpu.memory_space<vmem>>, %arg14: memref<1x128xf32, #tpu.memory_space<vmem>>, %arg15: memref<1x4x128xf32, #tpu.memory_space<vmem>>) attributes {dimension_semantics = [#tpu.dimension_semantics<parallel>], iteration_bounds = array<i64: 2>, scalar_prefetch = 0 : i64, scratch_operands = 0 : i64, tpu.core_type = #tpu.core_type<tc>, window_params = [{transform_indices = @transform_0, window_bounds = array<i64: 1, 8, 128>}, {transform_indices = @transform_1, window_bounds = array<i64: 1, 8, 128>}, {transform_indices = @transform_2, window_bounds = array<i64: 1, 4, 128>}, {pipeline_mode = #tpu.pipeline_mode<synchronous>, transform_indices = @transform_3, window_bounds = array<i64: 1, 128>}, {pipeline_mode = #tpu.pipeline_mode<synchronous>, transform_indices = @transform_4, window_bounds = array<i64: 128, 128>}, {pipeline_mode = #tpu.pipeline_mode<synchronous>, transform_indices = @transform_5, window_bounds = array<i64: 1, 128>}, {pipeline_mode = #tpu.pipeline_mode<synchronous>, transform_indices = @transform_6, window_bounds = array<i64: 128, 128>}, {pipeline_mode = #tpu.pipeline_mode<synchronous>, transform_indices = @transform_7, window_bounds = array<i64: 1, 128>}, {pipeline_mode = #tpu.pipeline_mode<synchronous>, transform_indices = @transform_8, window_bounds = array<i64: 128, 128>}, {pipeline_mode = #tpu.pipeline_mode<synchronous>, transform_indices = @transform_9, window_bounds = array<i64: 1, 128>}, {pipeline_mode = #tpu.pipeline_mode<synchronous>, transform_indices = @transform_10, window_bounds = array<i64: 128, 128>}, {pipeline_mode = #tpu.pipeline_mode<synchronous>, transform_indices = @transform_11, window_bounds = array<i64: 1, 128>}, {pipeline_mode = #tpu.pipeline_mode<synchronous>, transform_indices = @transform_12, window_bounds = array<i64: 128, 128>}, {pipeline_mode = #tpu.pipeline_mode<synchronous>, transform_indices = @transform_13, window_bounds = array<i64: 1, 128>}, {transform_indices = @transform_14, window_bounds = array<i64: 1, 4, 128>}]} {
    %c0 = arith.constant 0 : index
    %c0_0 = arith.constant 0 : index
    %c0_1 = arith.constant 0 : index
    %0 = vector.load %arg1[%c0, %c0_0, %c0_1] : memref<1x8x128xf32, #tpu.memory_space<vmem>>, vector<1x8x128xf32>
    %1 = vector.shape_cast %0 : vector<1x8x128xf32> to vector<8x128xf32>
    %c0_2 = arith.constant 0 : index
    %c0_3 = arith.constant 0 : index
    %c0_4 = arith.constant 0 : index
    %2 = vector.load %arg2[%c0_2, %c0_3, %c0_4] : memref<1x8x128xf32, #tpu.memory_space<vmem>>, vector<1x8x128xf32>
    %3 = vector.shape_cast %2 : vector<1x8x128xf32> to vector<8x128xf32>
    %c0_5 = arith.constant 0 : index
    %c0_6 = arith.constant 0 : index
    %c0_7 = arith.constant 0 : index
    %4 = vector.load %arg3[%c0_5, %c0_6, %c0_7] : memref<1x4x128xf32, #tpu.memory_space<vmem>>, vector<1x4x128xf32>
    %5 = vector.shape_cast %4 : vector<1x4x128xf32> to vector<4x128xf32>
    %c0_8 = arith.constant 0 : index
    %c0_9 = arith.constant 0 : index
    %6 = vector.load %arg4[%c0_8, %c0_9] : memref<1x128xf32, #tpu.memory_space<vmem>>, vector<1x128xf32>
    %7 = vector.extract_strided_slice %3 {offsets = [0, 0], sizes = [1, 128], strides = [1, 1]} : vector<8x128xf32> to vector<1x128xf32>
    %8 = vector.broadcast %7 : vector<1x128xf32> to vector<8x128xf32>
    %9 = arith.addf %1, %8 : vector<8x128xf32>
    %10 = vector.extract_strided_slice %3 {offsets = [1, 0], sizes = [1, 128], strides = [1, 1]} : vector<8x128xf32> to vector<1x128xf32>
    %11 = vector.broadcast %10 : vector<1x128xf32> to vector<8x128xf32>
    %12 = arith.addf %1, %11 : vector<8x128xf32>
    %13 = vector.extract_strided_slice %3 {offsets = [2, 0], sizes = [1, 128], strides = [1, 1]} : vector<8x128xf32> to vector<1x128xf32>
    %14 = vector.broadcast %13 : vector<1x128xf32> to vector<8x128xf32>
    %15 = arith.addf %1, %14 : vector<8x128xf32>
    %16 = vector.extract_strided_slice %3 {offsets = [3, 0], sizes = [1, 128], strides = [1, 1]} : vector<8x128xf32> to vector<1x128xf32>
    %17 = vector.broadcast %16 : vector<1x128xf32> to vector<8x128xf32>
    %18 = arith.addf %1, %17 : vector<8x128xf32>
    %19 = vector.extract_strided_slice %3 {offsets = [4, 0], sizes = [1, 128], strides = [1, 1]} : vector<8x128xf32> to vector<1x128xf32>
    %20 = vector.broadcast %19 : vector<1x128xf32> to vector<8x128xf32>
    %21 = arith.addf %1, %20 : vector<8x128xf32>
    %22 = vector.extract_strided_slice %3 {offsets = [5, 0], sizes = [1, 128], strides = [1, 1]} : vector<8x128xf32> to vector<1x128xf32>
    %23 = vector.broadcast %22 : vector<1x128xf32> to vector<8x128xf32>
    %24 = arith.addf %1, %23 : vector<8x128xf32>
    %25 = vector.extract_strided_slice %3 {offsets = [6, 0], sizes = [1, 128], strides = [1, 1]} : vector<8x128xf32> to vector<1x128xf32>
    %26 = vector.broadcast %25 : vector<1x128xf32> to vector<8x128xf32>
    %27 = arith.addf %1, %26 : vector<8x128xf32>
    %28 = vector.extract_strided_slice %3 {offsets = [7, 0], sizes = [1, 128], strides = [1, 1]} : vector<8x128xf32> to vector<1x128xf32>
    %29 = vector.broadcast %28 : vector<1x128xf32> to vector<8x128xf32>
    %30 = arith.addf %1, %29 : vector<8x128xf32>
    %31 = tpu.concatenate %9, %12, %15, %18, %21, %24, %27, %30 in 0 : vector<8x128xf32>, vector<8x128xf32>, vector<8x128xf32>, vector<8x128xf32>, vector<8x128xf32>, vector<8x128xf32>, vector<8x128xf32>, vector<8x128xf32> -> vector<64x128xf32>
    %32 = vector.broadcast %6 : vector<1x128xf32> to vector<64x128xf32>
    %33 = arith.addf %31, %32 : vector<64x128xf32>
    %cst = arith.constant 0.000000e+00 : f32
    %34 = vector.broadcast %cst : f32 to vector<64x128xf32>
    %35 = arith.maximumf %33, %34 : vector<64x128xf32>
    %36 = arith.truncf %35 : vector<64x128xf32> to vector<64x128xbf16>
    %c0_10 = arith.constant 0 : index
    %c0_11 = arith.constant 0 : index
    %37 = vector.load %arg5[%c0_10, %c0_11] : memref<128x128xbf16, #tpu.memory_space<vmem>>, vector<128x128xbf16>
    %cst_12 = arith.constant dense<0.000000e+00> : vector<64x128xf32>
    %38 = tpu.matmul %36, %37, %cst_12 {dimension_numbers = #tpu.dot_dimension_numbers<[1], [0], [0], [1], [0, 0, 1, 1], [], []>} : vector<64x128xbf16>, vector<128x128xbf16>, vector<64x128xf32> -> vector<64x128xf32>
    %c0_13 = arith.constant 0 : index
    %c0_14 = arith.constant 0 : index
    %39 = vector.load %arg6[%c0_13, %c0_14] : memref<1x128xf32, #tpu.memory_space<vmem>>, vector<1x128xf32>
    %40 = vector.broadcast %39 : vector<1x128xf32> to vector<64x128xf32>
    %41 = arith.addf %38, %40 : vector<64x128xf32>
    %cst_15 = arith.constant 0.000000e+00 : f32
    %42 = vector.broadcast %cst_15 : f32 to vector<64x128xf32>
    %43 = arith.maximumf %41, %42 : vector<64x128xf32>
    %44 = arith.truncf %43 : vector<64x128xf32> to vector<64x128xbf16>
    %c0_16 = arith.constant 0 : index
    %c0_17 = arith.constant 0 : index
    %45 = vector.load %arg7[%c0_16, %c0_17] : memref<128x128xbf16, #tpu.memory_space<vmem>>, vector<128x128xbf16>
    %cst_18 = arith.constant dense<0.000000e+00> : vector<64x128xf32>
    %46 = tpu.matmul %44, %45, %cst_18 {dimension_numbers = #tpu.dot_dimension_numbers<[1], [0], [0], [1], [0, 0, 1, 1], [], []>} : vector<64x128xbf16>, vector<128x128xbf16>, vector<64x128xf32> -> vector<64x128xf32>
    %c0_19 = arith.constant 0 : index
    %c0_20 = arith.constant 0 : index
    %47 = vector.load %arg8[%c0_19, %c0_20] : memref<1x128xf32, #tpu.memory_space<vmem>>, vector<1x128xf32>
    %48 = vector.broadcast %47 : vector<1x128xf32> to vector<64x128xf32>
    %49 = arith.addf %46, %48 : vector<64x128xf32>
    %cst_21 = arith.constant 0.000000e+00 : f32
    %50 = vector.broadcast %cst_21 : f32 to vector<64x128xf32>
    %51 = arith.maximumf %49, %50 : vector<64x128xf32>
    %cst_22 = arith.constant dense<0.000000e+00> : vector<128xf32>
    %52 = vector.multi_reduction <add>, %51, %cst_22 [0] : vector<64x128xf32> to vector<128xf32>
    %53 = vector.shape_cast %52 : vector<128xf32> to vector<1x128xf32>
    %54 = vector.extract_strided_slice %5 {offsets = [0, 0], sizes = [1, 128], strides = [1, 1]} : vector<4x128xf32> to vector<1x128xf32>
    %55 = vector.broadcast %54 : vector<1x128xf32> to vector<8x128xf32>
    %56 = arith.addf %1, %55 : vector<8x128xf32>
    %57 = vector.broadcast %6 : vector<1x128xf32> to vector<8x128xf32>
    %58 = arith.addf %56, %57 : vector<8x128xf32>
    %cst_23 = arith.constant 0.000000e+00 : f32
    %59 = vector.broadcast %cst_23 : f32 to vector<8x128xf32>
    %60 = arith.maximumf %58, %59 : vector<8x128xf32>
    %61 = arith.truncf %60 : vector<8x128xf32> to vector<8x128xbf16>
    %c0_24 = arith.constant 0 : index
    %c0_25 = arith.constant 0 : index
    %62 = vector.load %arg5[%c0_24, %c0_25] : memref<128x128xbf16, #tpu.memory_space<vmem>>, vector<128x128xbf16>
    %cst_26 = arith.constant dense<0.000000e+00> : vector<8x128xf32>
    %63 = tpu.matmul %61, %62, %cst_26 {dimension_numbers = #tpu.dot_dimension_numbers<[1], [0], [0], [1], [0, 0, 1, 1], [], []>} : vector<8x128xbf16>, vector<128x128xbf16>, vector<8x128xf32> -> vector<8x128xf32>
    %c0_27 = arith.constant 0 : index
    %c0_28 = arith.constant 0 : index
    %64 = vector.load %arg6[%c0_27, %c0_28] : memref<1x128xf32, #tpu.memory_space<vmem>>, vector<1x128xf32>
    %65 = vector.broadcast %64 : vector<1x128xf32> to vector<8x128xf32>
    %66 = arith.addf %63, %65 : vector<8x128xf32>
    %cst_29 = arith.constant 0.000000e+00 : f32
    %67 = vector.broadcast %cst_29 : f32 to vector<8x128xf32>
    %68 = arith.maximumf %66, %67 : vector<8x128xf32>
    %69 = arith.truncf %68 : vector<8x128xf32> to vector<8x128xbf16>
    %c0_30 = arith.constant 0 : index
    %c0_31 = arith.constant 0 : index
    %70 = vector.load %arg7[%c0_30, %c0_31] : memref<128x128xbf16, #tpu.memory_space<vmem>>, vector<128x128xbf16>
    %cst_32 = arith.constant dense<0.000000e+00> : vector<8x128xf32>
    %71 = tpu.matmul %69, %70, %cst_32 {dimension_numbers = #tpu.dot_dimension_numbers<[1], [0], [0], [1], [0, 0, 1, 1], [], []>} : vector<8x128xbf16>, vector<128x128xbf16>, vector<8x128xf32> -> vector<8x128xf32>
    %c0_33 = arith.constant 0 : index
    %c0_34 = arith.constant 0 : index
    %72 = vector.load %arg8[%c0_33, %c0_34] : memref<1x128xf32, #tpu.memory_space<vmem>>, vector<1x128xf32>
    %73 = vector.broadcast %72 : vector<1x128xf32> to vector<8x128xf32>
    %74 = arith.addf %71, %73 : vector<8x128xf32>
    %cst_35 = arith.constant 0.000000e+00 : f32
    %75 = vector.broadcast %cst_35 : f32 to vector<8x128xf32>
    %76 = arith.maximumf %74, %75 : vector<8x128xf32>
    %cst_36 = arith.constant dense<0.000000e+00> : vector<128xf32>
    %77 = vector.multi_reduction <add>, %76, %cst_36 [0] : vector<8x128xf32> to vector<128xf32>
    %78 = vector.shape_cast %77 : vector<128xf32> to vector<1x128xf32>
    %79 = arith.addf %53, %78 : vector<1x128xf32>
    %80 = vector.extract_strided_slice %5 {offsets = [1, 0], sizes = [1, 128], strides = [1, 1]} : vector<4x128xf32> to vector<1x128xf32>
    %81 = vector.broadcast %80 : vector<1x128xf32> to vector<8x128xf32>
    %82 = arith.addf %1, %81 : vector<8x128xf32>
    %83 = vector.broadcast %6 : vector<1x128xf32> to vector<8x128xf32>
    %84 = arith.addf %82, %83 : vector<8x128xf32>
    %cst_37 = arith.constant 0.000000e+00 : f32
    %85 = vector.broadcast %cst_37 : f32 to vector<8x128xf32>
    %86 = arith.maximumf %84, %85 : vector<8x128xf32>
    %87 = arith.truncf %86 : vector<8x128xf32> to vector<8x128xbf16>
    %c0_38 = arith.constant 0 : index
    %c0_39 = arith.constant 0 : index
    %88 = vector.load %arg5[%c0_38, %c0_39] : memref<128x128xbf16, #tpu.memory_space<vmem>>, vector<128x128xbf16>
    %cst_40 = arith.constant dense<0.000000e+00> : vector<8x128xf32>
    %89 = tpu.matmul %87, %88, %cst_40 {dimension_numbers = #tpu.dot_dimension_numbers<[1], [0], [0], [1], [0, 0, 1, 1], [], []>} : vector<8x128xbf16>, vector<128x128xbf16>, vector<8x128xf32> -> vector<8x128xf32>
    %c0_41 = arith.constant 0 : index
    %c0_42 = arith.constant 0 : index
    %90 = vector.load %arg6[%c0_41, %c0_42] : memref<1x128xf32, #tpu.memory_space<vmem>>, vector<1x128xf32>
    %91 = vector.broadcast %90 : vector<1x128xf32> to vector<8x128xf32>
    %92 = arith.addf %89, %91 : vector<8x128xf32>
    %cst_43 = arith.constant 0.000000e+00 : f32
    %93 = vector.broadcast %cst_43 : f32 to vector<8x128xf32>
    %94 = arith.maximumf %92, %93 : vector<8x128xf32>
    %95 = arith.truncf %94 : vector<8x128xf32> to vector<8x128xbf16>
    %c0_44 = arith.constant 0 : index
    %c0_45 = arith.constant 0 : index
    %96 = vector.load %arg7[%c0_44, %c0_45] : memref<128x128xbf16, #tpu.memory_space<vmem>>, vector<128x128xbf16>
    %cst_46 = arith.constant dense<0.000000e+00> : vector<8x128xf32>
    %97 = tpu.matmul %95, %96, %cst_46 {dimension_numbers = #tpu.dot_dimension_numbers<[1], [0], [0], [1], [0, 0, 1, 1], [], []>} : vector<8x128xbf16>, vector<128x128xbf16>, vector<8x128xf32> -> vector<8x128xf32>
    %c0_47 = arith.constant 0 : index
    %c0_48 = arith.constant 0 : index
    %98 = vector.load %arg8[%c0_47, %c0_48] : memref<1x128xf32, #tpu.memory_space<vmem>>, vector<1x128xf32>
    %99 = vector.broadcast %98 : vector<1x128xf32> to vector<8x128xf32>
    %100 = arith.addf %97, %99 : vector<8x128xf32>
    %cst_49 = arith.constant 0.000000e+00 : f32
    %101 = vector.broadcast %cst_49 : f32 to vector<8x128xf32>
    %102 = arith.maximumf %100, %101 : vector<8x128xf32>
    %cst_50 = arith.constant dense<0.000000e+00> : vector<128xf32>
    %103 = vector.multi_reduction <add>, %102, %cst_50 [0] : vector<8x128xf32> to vector<128xf32>
    %104 = vector.shape_cast %103 : vector<128xf32> to vector<1x128xf32>
    %105 = arith.addf %53, %104 : vector<1x128xf32>
    %106 = vector.extract_strided_slice %5 {offsets = [2, 0], sizes = [1, 128], strides = [1, 1]} : vector<4x128xf32> to vector<1x128xf32>
    %107 = vector.broadcast %106 : vector<1x128xf32> to vector<8x128xf32>
    %108 = arith.addf %1, %107 : vector<8x128xf32>
    %109 = vector.broadcast %6 : vector<1x128xf32> to vector<8x128xf32>
    %110 = arith.addf %108, %109 : vector<8x128xf32>
    %cst_51 = arith.constant 0.000000e+00 : f32
    %111 = vector.broadcast %cst_51 : f32 to vector<8x128xf32>
    %112 = arith.maximumf %110, %111 : vector<8x128xf32>
    %113 = arith.truncf %112 : vector<8x128xf32> to vector<8x128xbf16>
    %c0_52 = arith.constant 0 : index
    %c0_53 = arith.constant 0 : index
    %114 = vector.load %arg5[%c0_52, %c0_53] : memref<128x128xbf16, #tpu.memory_space<vmem>>, vector<128x128xbf16>
    %cst_54 = arith.constant dense<0.000000e+00> : vector<8x128xf32>
    %115 = tpu.matmul %113, %114, %cst_54 {dimension_numbers = #tpu.dot_dimension_numbers<[1], [0], [0], [1], [0, 0, 1, 1], [], []>} : vector<8x128xbf16>, vector<128x128xbf16>, vector<8x128xf32> -> vector<8x128xf32>
    %c0_55 = arith.constant 0 : index
    %c0_56 = arith.constant 0 : index
    %116 = vector.load %arg6[%c0_55, %c0_56] : memref<1x128xf32, #tpu.memory_space<vmem>>, vector<1x128xf32>
    %117 = vector.broadcast %116 : vector<1x128xf32> to vector<8x128xf32>
    %118 = arith.addf %115, %117 : vector<8x128xf32>
    %cst_57 = arith.constant 0.000000e+00 : f32
    %119 = vector.broadcast %cst_57 : f32 to vector<8x128xf32>
    %120 = arith.maximumf %118, %119 : vector<8x128xf32>
    %121 = arith.truncf %120 : vector<8x128xf32> to vector<8x128xbf16>
    %c0_58 = arith.constant 0 : index
    %c0_59 = arith.constant 0 : index
    %122 = vector.load %arg7[%c0_58, %c0_59] : memref<128x128xbf16, #tpu.memory_space<vmem>>, vector<128x128xbf16>
    %cst_60 = arith.constant dense<0.000000e+00> : vector<8x128xf32>
    %123 = tpu.matmul %121, %122, %cst_60 {dimension_numbers = #tpu.dot_dimension_numbers<[1], [0], [0], [1], [0, 0, 1, 1], [], []>} : vector<8x128xbf16>, vector<128x128xbf16>, vector<8x128xf32> -> vector<8x128xf32>
    %c0_61 = arith.constant 0 : index
    %c0_62 = arith.constant 0 : index
    %124 = vector.load %arg8[%c0_61, %c0_62] : memref<1x128xf32, #tpu.memory_space<vmem>>, vector<1x128xf32>
    %125 = vector.broadcast %124 : vector<1x128xf32> to vector<8x128xf32>
    %126 = arith.addf %123, %125 : vector<8x128xf32>
    %cst_63 = arith.constant 0.000000e+00 : f32
    %127 = vector.broadcast %cst_63 : f32 to vector<8x128xf32>
    %128 = arith.maximumf %126, %127 : vector<8x128xf32>
    %cst_64 = arith.constant dense<0.000000e+00> : vector<128xf32>
    %129 = vector.multi_reduction <add>, %128, %cst_64 [0] : vector<8x128xf32> to vector<128xf32>
    %130 = vector.shape_cast %129 : vector<128xf32> to vector<1x128xf32>
    %131 = arith.addf %53, %130 : vector<1x128xf32>
    %132 = vector.extract_strided_slice %5 {offsets = [3, 0], sizes = [1, 128], strides = [1, 1]} : vector<4x128xf32> to vector<1x128xf32>
    %133 = vector.broadcast %132 : vector<1x128xf32> to vector<8x128xf32>
    %134 = arith.addf %1, %133 : vector<8x128xf32>
    %135 = vector.broadcast %6 : vector<1x128xf32> to vector<8x128xf32>
    %136 = arith.addf %134, %135 : vector<8x128xf32>
    %cst_65 = arith.constant 0.000000e+00 : f32
    %137 = vector.broadcast %cst_65 : f32 to vector<8x128xf32>
    %138 = arith.maximumf %136, %137 : vector<8x128xf32>
    %139 = arith.truncf %138 : vector<8x128xf32> to vector<8x128xbf16>
    %c0_66 = arith.constant 0 : index
    %c0_67 = arith.constant 0 : index
    %140 = vector.load %arg5[%c0_66, %c0_67] : memref<128x128xbf16, #tpu.memory_space<vmem>>, vector<128x128xbf16>
    %cst_68 = arith.constant dense<0.000000e+00> : vector<8x128xf32>
    %141 = tpu.matmul %139, %140, %cst_68 {dimension_numbers = #tpu.dot_dimension_numbers<[1], [0], [0], [1], [0, 0, 1, 1], [], []>} : vector<8x128xbf16>, vector<128x128xbf16>, vector<8x128xf32> -> vector<8x128xf32>
    %c0_69 = arith.constant 0 : index
    %c0_70 = arith.constant 0 : index
    %142 = vector.load %arg6[%c0_69, %c0_70] : memref<1x128xf32, #tpu.memory_space<vmem>>, vector<1x128xf32>
    %143 = vector.broadcast %142 : vector<1x128xf32> to vector<8x128xf32>
    %144 = arith.addf %141, %143 : vector<8x128xf32>
    %cst_71 = arith.constant 0.000000e+00 : f32
    %145 = vector.broadcast %cst_71 : f32 to vector<8x128xf32>
    %146 = arith.maximumf %144, %145 : vector<8x128xf32>
    %147 = arith.truncf %146 : vector<8x128xf32> to vector<8x128xbf16>
    %c0_72 = arith.constant 0 : index
    %c0_73 = arith.constant 0 : index
    %148 = vector.load %arg7[%c0_72, %c0_73] : memref<128x128xbf16, #tpu.memory_space<vmem>>, vector<128x128xbf16>
    %cst_74 = arith.constant dense<0.000000e+00> : vector<8x128xf32>
    %149 = tpu.matmul %147, %148, %cst_74 {dimension_numbers = #tpu.dot_dimension_numbers<[1], [0], [0], [1], [0, 0, 1, 1], [], []>} : vector<8x128xbf16>, vector<128x128xbf16>, vector<8x128xf32> -> vector<8x128xf32>
    %c0_75 = arith.constant 0 : index
    %c0_76 = arith.constant 0 : index
    %150 = vector.load %arg8[%c0_75, %c0_76] : memref<1x128xf32, #tpu.memory_space<vmem>>, vector<1x128xf32>
    %151 = vector.broadcast %150 : vector<1x128xf32> to vector<8x128xf32>
    %152 = arith.addf %149, %151 : vector<8x128xf32>
    %cst_77 = arith.constant 0.000000e+00 : f32
    %153 = vector.broadcast %cst_77 : f32 to vector<8x128xf32>
    %154 = arith.maximumf %152, %153 : vector<8x128xf32>
    %cst_78 = arith.constant dense<0.000000e+00> : vector<128xf32>
    %155 = vector.multi_reduction <add>, %154, %cst_78 [0] : vector<8x128xf32> to vector<128xf32>
    %156 = vector.shape_cast %155 : vector<128xf32> to vector<1x128xf32>
    %157 = arith.addf %53, %156 : vector<1x128xf32>
    %158 = tpu.concatenate %79, %105, %131, %157 in 0 : vector<1x128xf32>, vector<1x128xf32>, vector<1x128xf32>, vector<1x128xf32> -> vector<4x128xf32>
    %159 = arith.truncf %158 : vector<4x128xf32> to vector<4x128xbf16>
    %c0_79 = arith.constant 0 : index
    %c0_80 = arith.constant 0 : index
    %160 = vector.load %arg9[%c0_79, %c0_80] : memref<128x128xbf16, #tpu.memory_space<vmem>>, vector<128x128xbf16>
    %cst_81 = arith.constant dense<0.000000e+00> : vector<4x128xf32>
    %161 = tpu.matmul %159, %160, %cst_81 {dimension_numbers = #tpu.dot_dimension_numbers<[1], [0], [0], [1], [0, 0, 1, 1], [], []>} : vector<4x128xbf16>, vector<128x128xbf16>, vector<4x128xf32> -> vector<4x128xf32>
    %c0_82 = arith.constant 0 : index
    %c0_83 = arith.constant 0 : index
    %162 = vector.load %arg10[%c0_82, %c0_83] : memref<1x128xf32, #tpu.memory_space<vmem>>, vector<1x128xf32>
    %163 = vector.broadcast %162 : vector<1x128xf32> to vector<4x128xf32>
    %164 = arith.addf %161, %163 : vector<4x128xf32>
    %cst_84 = arith.constant 0.000000e+00 : f32
    %165 = vector.broadcast %cst_84 : f32 to vector<4x128xf32>
    %166 = arith.maximumf %164, %165 : vector<4x128xf32>
    %167 = arith.truncf %166 : vector<4x128xf32> to vector<4x128xbf16>
    %c0_85 = arith.constant 0 : index
    %c0_86 = arith.constant 0 : index
    %168 = vector.load %arg11[%c0_85, %c0_86] : memref<128x128xbf16, #tpu.memory_space<vmem>>, vector<128x128xbf16>
    %cst_87 = arith.constant dense<0.000000e+00> : vector<4x128xf32>
    %169 = tpu.matmul %167, %168, %cst_87 {dimension_numbers = #tpu.dot_dimension_numbers<[1], [0], [0], [1], [0, 0, 1, 1], [], []>} : vector<4x128xbf16>, vector<128x128xbf16>, vector<4x128xf32> -> vector<4x128xf32>
    %c0_88 = arith.constant 0 : index
    %c0_89 = arith.constant 0 : index
    %170 = vector.load %arg12[%c0_88, %c0_89] : memref<1x128xf32, #tpu.memory_space<vmem>>, vector<1x128xf32>
    %171 = vector.broadcast %170 : vector<1x128xf32> to vector<4x128xf32>
    %172 = arith.addf %169, %171 : vector<4x128xf32>
    %cst_90 = arith.constant 0.000000e+00 : f32
    %173 = vector.broadcast %cst_90 : f32 to vector<4x128xf32>
    %174 = arith.maximumf %172, %173 : vector<4x128xf32>
    %175 = arith.truncf %174 : vector<4x128xf32> to vector<4x128xbf16>
    %c0_91 = arith.constant 0 : index
    %c0_92 = arith.constant 0 : index
    %176 = vector.load %arg13[%c0_91, %c0_92] : memref<128x128xbf16, #tpu.memory_space<vmem>>, vector<128x128xbf16>
    %cst_93 = arith.constant dense<0.000000e+00> : vector<4x128xf32>
    %177 = tpu.matmul %175, %176, %cst_93 {dimension_numbers = #tpu.dot_dimension_numbers<[1], [0], [0], [1], [0, 0, 1, 1], [], []>} : vector<4x128xbf16>, vector<128x128xbf16>, vector<4x128xf32> -> vector<4x128xf32>
    %c0_94 = arith.constant 0 : index
    %c0_95 = arith.constant 0 : index
    %178 = vector.load %arg14[%c0_94, %c0_95] : memref<1x128xf32, #tpu.memory_space<vmem>>, vector<1x128xf32>
    %179 = vector.broadcast %178 : vector<1x128xf32> to vector<4x128xf32>
    %180 = arith.addf %177, %179 : vector<4x128xf32>
    %c0_96 = arith.constant 0 : index
    %c0_97 = arith.constant 0 : index
    %c0_98 = arith.constant 0 : index
    %181 = vector.load %arg15[%c0_96, %c0_97, %c0_98] : memref<1x4x128xf32, #tpu.memory_space<vmem>>, vector<1x4x128xf32>
    %182 = vector.shape_cast %181 : vector<1x4x128xf32> to vector<4x128xf32>
    %183 = vector.shape_cast %180 : vector<4x128xf32> to vector<1x4x128xf32>
    tpu.vector_store %arg15[%c0_96, %c0_97, %c0_98], %183 {strides = array<i32>} : memref<1x4x128xf32, #tpu.memory_space<vmem>>, vector<1x4x128xf32>,
    return
  }
  func.func @transform_0(%arg0: i32) -> (i32, i32, i32) {
    %c0_i32 = arith.constant 0 : i32
    %c0_i32_0 = arith.constant 0 : i32
    %c0_i32_1 = arith.constant 0 : i32
    return %arg0, %c0_i32, %c0_i32_0 : i32, i32, i32
  }
  func.func @transform_1(%arg0: i32) -> (i32, i32, i32) {
    %c0_i32 = arith.constant 0 : i32
    %c0_i32_0 = arith.constant 0 : i32
    %c0_i32_1 = arith.constant 0 : i32
    return %arg0, %c0_i32, %c0_i32_0 : i32, i32, i32
  }
  func.func @transform_2(%arg0: i32) -> (i32, i32, i32) {
    %c0_i32 = arith.constant 0 : i32
    %c0_i32_0 = arith.constant 0 : i32
    %c0_i32_1 = arith.constant 0 : i32
    return %arg0, %c0_i32, %c0_i32_0 : i32, i32, i32
  }
  func.func @transform_3(%arg0: i32) -> (i32, i32) {
    %c0_i32 = arith.constant 0 : i32
    %c0_i32_0 = arith.constant 0 : i32
    %c0_i32_1 = arith.constant 0 : i32
    return %c0_i32, %c0_i32_0 : i32, i32
  }
  func.func @transform_4(%arg0: i32) -> (i32, i32) {
    %c0_i32 = arith.constant 0 : i32
    %c0_i32_0 = arith.constant 0 : i32
    %c0_i32_1 = arith.constant 0 : i32
    return %c0_i32, %c0_i32_0 : i32, i32
  }
  func.func @transform_5(%arg0: i32) -> (i32, i32) {
    %c0_i32 = arith.constant 0 : i32
    %c0_i32_0 = arith.constant 0 : i32
    %c0_i32_1 = arith.constant 0 : i32
    return %c0_i32, %c0_i32_0 : i32, i32
  }
  func.func @transform_6(%arg0: i32) -> (i32, i32) {
    %c0_i32 = arith.constant 0 : i32
    %c0_i32_0 = arith.constant 0 : i32
    %c0_i32_1 = arith.constant 0 : i32
    return %c0_i32, %c0_i32_0 : i32, i32
  }
  func.func @transform_7(%arg0: i32) -> (i32, i32) {
    %c0_i32 = arith.constant 0 : i32
    %c0_i32_0 = arith.constant 0 : i32
    %c0_i32_1 = arith.constant 0 : i32
    return %c0_i32, %c0_i32_0 : i32, i32
  }
  func.func @transform_8(%arg0: i32) -> (i32, i32) {
    %c0_i32 = arith.constant 0 : i32
    %c0_i32_0 = arith.constant 0 : i32
    %c0_i32_1 = arith.constant 0 : i32
    return %c0_i32, %c0_i32_0 : i32, i32
  }
  func.func @transform_9(%arg0: i32) -> (i32, i32) {
    %c0_i32 = arith.constant 0 : i32
    %c0_i32_0 = arith.constant 0 : i32
    %c0_i32_1 = arith.constant 0 : i32
    return %c0_i32, %c0_i32_0 : i32, i32
  }
  func.func @transform_10(%arg0: i32) -> (i32, i32) {
    %c0_i32 = arith.constant 0 : i32
    %c0_i32_0 = arith.constant 0 : i32
    %c0_i32_1 = arith.constant 0 : i32
    return %c0_i32, %c0_i32_0 : i32, i32
  }
  func.func @transform_11(%arg0: i32) -> (i32, i32) {
    %c0_i32 = arith.constant 0 : i32
    %c0_i32_0 = arith.constant 0 : i32
    %c0_i32_1 = arith.constant 0 : i32
    return %c0_i32, %c0_i32_0 : i32, i32
  }
  func.func @transform_12(%arg0: i32) -> (i32, i32) {
    %c0_i32 = arith.constant 0 : i32
    %c0_i32_0 = arith.constant 0 : i32
    %c0_i32_1 = arith.constant 0 : i32
    return %c0_i32, %c0_i32_0 : i32, i32
  }
  func.func @transform_13(%arg0: i32) -> (i32, i32) {
    %c0_i32 = arith.constant 0 : i32
    %c0_i32_0 = arith.constant 0 : i32
    %c0_i32_1 = arith.constant 0 : i32
    return %c0_i32, %c0_i32_0 : i32, i32
  }
  func.func @transform_14(%arg0: i32) -> (i32, i32, i32) {
    %c0_i32 = arith.constant 0 : i32
    %c0_i32_0 = arith.constant 0 : i32
    %c0_i32_1 = arith.constant 0 : i32
    return %arg0, %c0_i32, %c0_i32_0 : i32, i32, i32
  }
}

</mosaic_0001>

<llo_original>
// kernel: wild_relation_network_forward.6
$region0: #{wild_relation_network_forward.6}
  #allocation0 [shape = 'u32[]', space=smem, size = 0x4, offset = 0x4, fixed_abs, tag = 'smem constant byte address 0x4 - core index']
  #allocation1 [shape = 'u32[144,128]{1,0:T(1,128)}', space=vmem, size = 0x12000, scoped, tag = 'internal scratch']
  #allocation2 [shape = 'f32[512,128]{1,0:T(8,128)}', space=vmem, size = 0x40000, scoped, tag = 'scratch operand']
  %s0 = inlined_call_operand.vmem [shape: bf16[1536,9], index: 0, kind: input, shape index: {}]
  %s1 = inlined_call_operand.vmem [shape: bf16[9,128], index: 1, kind: input, shape index: {}]
  %s2 = inlined_call_operand.vmem [shape: f32[1,128], index: 2, kind: input, shape index: {}]
  %s3 = inlined_call_operand.vmem [shape: bf16[1536,128], index: 3, kind: output, shape index: {}]
  %s4 = sld [smem:[#allocation0]]
  $region53: #{wild_relation_network_forward.6} parent=0
    _
  %s6 = ssub.s32 1, %s4
  %s7 = scalar_select 0, %s6, %s4
  loop: start=0, step=1, limit=5
  $region2: #{wild_relation_network_forward.6} parent=0 // loop_pre_header
    _
  $region3: #{wild_relation_network_forward.6} parent=0 // loop_header
    %s9 = sphi 0, %s13
    %p10 = scmp.ge.s32.totalorder %s9, 5
    %s16 = sphi 0, %s35
    %s17 = sphi 0, %s31
    %s18 = sphi 0, %s27
    %s19 = sphi 0, %s16
    %s20 = sphi 0, %s17
    %s21 = sphi 0, %s18
    %s22 = sphi 0, %s19
    %s23 = sphi 0, %s20
    %s24 = sphi 0, %s21
    %s40 = sphi 0, %s42
    %s43 = sphi 0, %s40
    %s44 = sphi 0, %s43
    %s60 = sphi 0, %s44
    %s68 = sphi 0, %s70
    %s71 = sphi 0, %s68
    %s72 = sphi 0, %s71
    %s88 = sphi 0, %s72
    %s94 = sphi 0, %s96
    %s97 = sphi 0, %s94
    %s98 = sphi 0, %s97
    %s114 = sphi 0, %s98
    %s122 = sphi 0, %s124
    %s125 = sphi 0, %s122
    %s126 = sphi 0, %s125
    %s142 = sphi 0, %s126
  $region4: #{wild_relation_network_forward.6} parent=0 // loop_header_branch
    %12 = sbr.rel (%p10) target = $region8
  $region5: #{wild_relation_network_forward.6} parent=0 // loop_body
    %s14 = ssub.s32 %s9, 1
    %s15 = ssub.s32 %s9, 2
    %s25 = sadd.s32 1, %s18
    %p26 = scmp.ge.s32.totalorder %s25, 1
    %s27 = scalar_select %p26, 0, %s25
    %s28 = sadd.s32 1, %s17
    %s29 = scalar_select %p26, %s28, %s17
    %p30 = scmp.ge.s32.totalorder %s29, 1
    %s31 = scalar_select %p30, 0, %s29
    %s32 = sadd.s32 1, %s16
    %s33 = scalar_select %p30, %s32, %s16
    %p34 = scmp.ge.s32.totalorder %s33, 3
    %s35 = scalar_select %p34, 0, %s33
    %s36 = ssub.s32 %s16, %s35
    %s37 = ssub.s32 %s18, %s27
    %s38 = sor.u32 %s36, %s37
    %p39 = scmp.eq.s32.totalorder %s38, 0
    %s41 = sadd.s32 %s40, 1
    %s42 = scalar_select %p39, %s40, %s41
    %p45 = pneg %p39
    %p46 = scmp.eq.s32.totalorder %s9, 2
    %p47 = por %p45, %p46
    %p48 = scmp.ne.s32.totalorder %s40, %s43
    %p49 = scmp.eq.s32.totalorder %s9, 0
    %p50 = por %p48, %p49
    %p51 = scmp.ne.s32.totalorder %s40, %s43
    %p52 = scmp.eq.s32.totalorder %s14, 2
    %p53 = por %p51, %p52
    %p54 = scmp.ne.s32.totalorder %s43, %s44
    %p55 = scmp.eq.s32.totalorder %s14, 0
    %p56 = por %p54, %p55
    %p57 = scmp.ne.s32.totalorder %s43, %s44
    %p58 = scmp.eq.s32.totalorder %s15, 2
    %p59 = por %p57, %p58
    %p61 = scmp.ne.s32.totalorder %s44, %s60
    %p62 = scmp.eq.s32.totalorder %s15, 0
    %p63 = por %p61, %p62
    %s64 = ssub.s32 %s18, %s27
    %s65 = ssub.s32 %s17, %s31
    %s66 = sor.u32 %s64, %s65
    %p67 = scmp.eq.s32.totalorder %s66, 0
    %s69 = sadd.s32 %s68, 1
    %s70 = scalar_select %p67, %s68, %s69
    %p73 = pneg %p67
    %p74 = scmp.eq.s32.totalorder %s9, 2
    %p75 = por %p73, %p74
    %p76 = scmp.ne.s32.totalorder %s68, %s71
    %p77 = scmp.eq.s32.totalorder %s9, 0
    %p78 = por %p76, %p77
    %p79 = scmp.ne.s32.totalorder %s68, %s71
    %p80 = scmp.eq.s32.totalorder %s14, 2
    %p81 = por %p79, %p80
    %p82 = scmp.ne.s32.totalorder %s71, %s72
    %p83 = scmp.eq.s32.totalorder %s14, 0
    %p84 = por %p82, %p83
    %p85 = scmp.ne.s32.totalorder %s71, %s72
    %p86 = scmp.eq.s32.totalorder %s15, 2
    %p87 = por %p85, %p86
    %p89 = scmp.ne.s32.totalorder %s72, %s88
    %p90 = scmp.eq.s32.totalorder %s15, 0
    %p91 = por %p89, %p90
    %s92 = ssub.s32 %s17, %s31
    %p93 = scmp.eq.s32.totalorder %s92, 0
    %s95 = sadd.s32 %s94, 1
    %s96 = scalar_select %p93, %s94, %s95
    %p99 = pneg %p93
    %p100 = scmp.eq.s32.totalorder %s9, 2
    %p101 = por %p99, %p100
    %p102 = scmp.ne.s32.totalorder %s94, %s97
    %p103 = scmp.eq.s32.totalorder %s9, 0
    %p104 = por %p102, %p103
    %p105 = scmp.ne.s32.totalorder %s94, %s97
    %p106 = scmp.eq.s32.totalorder %s14, 2
    %p107 = por %p105, %p106
    %p108 = scmp.ne.s32.totalorder %s97, %s98
    %p109 = scmp.eq.s32.totalorder %s14, 0
    %p110 = por %p108, %p109
    %p111 = scmp.ne.s32.totalorder %s97, %s98
    %p112 = scmp.eq.s32.totalorder %s15, 2
    %p113 = por %p111, %p112
    %p115 = scmp.ne.s32.totalorder %s98, %s114
    %p116 = scmp.eq.s32.totalorder %s15, 0
    %p117 = por %p115, %p116
    %s118 = ssub.s32 %s16, %s35
    %s119 = ssub.s32 %s17, %s31
    %s120 = sor.u32 %s118, %s119
    %p121 = scmp.eq.s32.totalorder %s120, 0
    %s123 = sadd.s32 %s122, 1
    %s124 = scalar_select %p121, %s122, %s123
    %p127 = pneg %p121
    %p128 = scmp.eq.s32.totalorder %s9, 2
    %p129 = por %p127, %p128
    %p130 = scmp.ne.s32.totalorder %s122, %s125
    %p131 = scmp.eq.s32.totalorder %s9, 0
    %p132 = por %p130, %p131
    %p133 = scmp.ne.s32.totalorder %s122, %s125
    %p134 = scmp.eq.s32.totalorder %s14, 2
    %p135 = por %p133, %p134
    %p136 = scmp.ne.s32.totalorder %s125, %s126
    %p137 = scmp.eq.s32.totalorder %s14, 0
    %p138 = por %p136, %p137
    %p139 = scmp.ne.s32.totalorder %s125, %s126
    %p140 = scmp.eq.s32.totalorder %s15, 2
    %p141 = por %p139, %p140
    %p143 = scmp.ne.s32.totalorder %s126, %s142
    %p144 = scmp.eq.s32.totalorder %s15, 0
    %p145 = por %p143, %p144
    %p146 = scmp.le.s32.totalorder 1, %s9
    %p147 = scmp.lt.s32.totalorder %s9, 4
    %p148 = pnand %p146, %p147
    %p149 = pneg %p148
    // Predicated region
    $region9: #{wild_relation_network_forward.6} parent=5 // pred_check
      _
    $region10: #{wild_relation_network_forward.6} parent=5 // pred_check_branch
      %151 = sbr.rel (%p148) target = $region12
    $region11: #{wild_relation_network_forward.6} parent=5 // pred_region
      %s152 = ssub.s32 %s9, 1
      // Predicated region
      $region13: #{wild_relation_network_forward.6} parent=11 // pred_check
        %p153 = pneg %p84
      $region14: #{wild_relation_network_forward.6} parent=11 // pred_check_branch
        %155 = sbr.rel (%p153) target = $region16
      $region15: #{wild_relation_network_forward.6} parent=11 // pred_region
        %s156 = smul.u32 2, %s21
        %p157 = scmp.lt.s32.totalorder %s156, 1
        %s158 = scalar_select %p157, %s156, 1
        %p159 = scmp.lt.s32.totalorder %s20, 0
        %s160 = scalar_select %p159, %s20, 0
        %s161 = sadd.s32 %s160, %s158
        %s162 = smul.addr %s161, 4
        %s163 = scalar_lea.vmem %s1, %s162
        %s164 = smul.u32 2, %s21
      $region16: #{wild_relation_network_forward.6} parent=11 // pred_fallthru
        _
      // Predicated region
      $region17: #{wild_relation_network_forward.6} parent=11 // pred_check
        %p165 = pneg %p110
      $region18: #{wild_relation_network_forward.6} parent=11 // pred_check_branch
        %167 = sbr.rel (%p165) target = $region20
      $region19: #{wild_relation_network_forward.6} parent=11 // pred_region
        %p168 = scmp.lt.s32.totalorder %s20, 0
        %s169 = scalar_select %p168, %s20, 0
        %s170 = scalar_lea.vmem %s2, %s169
      $region20: #{wild_relation_network_forward.6} parent=11 // pred_fallthru
        _
    $region12: #{wild_relation_network_forward.6} parent=5 // pred_fallthru
      _
    %p171 = scmp.lt.s32.totalorder %s9, 3
    // Predicated region
    $region21: #{wild_relation_network_forward.6} parent=5 // pred_check
      %p172 = pneg %p171
    $region22: #{wild_relation_network_forward.6} parent=5 // pred_check_branch
      %174 = sbr.rel (%p172) target = $region24
    $region23: #{wild_relation_network_forward.6} parent=5 // pred_region
      // Predicated region
      $region25: #{wild_relation_network_forward.6} parent=23 // pred_check
        %p175 = pneg %p50
      $region26: #{wild_relation_network_forward.6} parent=23 // pred_check_branch
        %177 = sbr.rel (%p175) target = $region28
      $region27: #{wild_relation_network_forward.6} parent=23 // pred_region
        %s178 = smul.u32 64, %s16
        %p179 = scmp.lt.s32.totalorder %s178, 191
        %s180 = scalar_select %p179, %s178, 191
        %p181 = scmp.lt.s32.totalorder %s18, 0
        %s182 = scalar_select %p181, %s18, 0
        %s183 = sadd.s32 %s182, %s180
        %s184 = smul.addr %s183, 4
        %s185 = scalar_lea.vmem %s0, %s184
        %s186 = smul.u32 64, %s16
      $region28: #{wild_relation_network_forward.6} parent=23 // pred_fallthru
        _
    $region24: #{wild_relation_network_forward.6} parent=5 // pred_fallthru
      _
    %p187 = scmp.le.s32.totalorder 1, %s9
    %p188 = scmp.lt.s32.totalorder %s9, 4
    %p189 = pnand %p187, %p188
    %p190 = pneg %p189
    // Predicated region
    $region29: #{wild_relation_network_forward.6} parent=5 // pred_check
      _
    $region30: #{wild_relation_network_forward.6} parent=5 // pred_check_branch
      %192 = sbr.rel (%p189) target = $region32
    $region31: #{wild_relation_network_forward.6} parent=5 // pred_region
      %s193 = ssub.s32 %s9, 1
      %s194 = smul.u32 64, %s19
      %p195 = scmp.lt.s32.totalorder %s194, 191
      %s196 = scalar_select %p195, %s194, 191
      %p197 = scmp.lt.s32.totalorder %s21, 0
      %s198 = scalar_select %p197, %s21, 0
      %s199 = sadd.s32 %s198, %s196
      %s200 = smul.addr %s199, 4
      %s201 = scalar_lea.vmem %s0, %s200
      %p202 = pneg %p56
      %p203 = pneg %p53
      %s204 = smul.u32 2, %s21
      %p205 = scmp.lt.s32.totalorder %s204, 1
      %s206 = scalar_select %p205, %s204, 1
      %p207 = scmp.lt.s32.totalorder %s20, 0
      %s208 = scalar_select %p207, %s20, 0
      %s209 = sadd.s32 %s208, %s206
      %s210 = smul.addr %s209, 4
      %s211 = scalar_lea.vmem %s1, %s210
      %p212 = pneg %p84
      %p213 = pneg %p81
      %p214 = scmp.lt.s32.totalorder %s20, 0
      %s215 = scalar_select %p214, %s20, 0
      %s216 = scalar_lea.vmem %s2, %s215
      %p217 = pneg %p110
      %p218 = pneg %p107
      %p219 = pneg %p138
      %p220 = pneg %p135
      %s221 = smul.u32 64, %s19
      %p222 = scmp.lt.s32.totalorder %s221, 191
      %s223 = scalar_select %p222, %s221, 191
      %p224 = scmp.lt.s32.totalorder %s20, 0
      %s225 = scalar_select %p224, %s20, 0
      %s226 = sadd.s32 %s225, %s223
      %s227 = smul.addr %s226, 4
      %s228 = scalar_lea.vmem %s3, %s227
      %s229 = smul.u32 64, %s19
      %p230 = scmp.lt.s32.totalorder %s229, 191
      %s231 = scalar_select %p230, %s229, 191
      %p232 = scmp.lt.s32.totalorder %s21, 0
      %s233 = scalar_select %p232, %s21, 0
      %s234 = sadd.s32 %s233, %s231
      %s235 = smul.addr %s234, 4
      %s236 = scalar_lea.vmem %s0, %s235
      %s237 = smul.u32 64, %s19
      %s238 = smul.u32 2, %s21
      %p239 = scmp.lt.s32.totalorder %s238, 1
      %s240 = scalar_select %p239, %s238, 1
      %p241 = scmp.lt.s32.totalorder %s20, 0
      %s242 = scalar_select %p241, %s20, 0
      %s243 = sadd.s32 %s242, %s240
      %s244 = smul.addr %s243, 4
      %s245 = scalar_lea.vmem %s1, %s244
      %s246 = smul.u32 2, %s21
      %p247 = scmp.lt.s32.totalorder %s20, 0
      %s248 = scalar_select %p247, %s20, 0
      %s249 = scalar_lea.vmem %s2, %s248
      %s250 = smul.u32 64, %s19
      %p251 = scmp.lt.s32.totalorder %s250, 191
      %s252 = scalar_select %p251, %s250, 191
      %p253 = scmp.lt.s32.totalorder %s20, 0
      %s254 = scalar_select %p253, %s20, 0
      %s255 = sadd.s32 %s254, %s252
      %s256 = smul.addr %s255, 4
      %s257 = scalar_lea.vmem %s3, %s256
      %s258 = smul.u32 64, %s19
      %p260 = scmp.eq.s32.totalorder %s21, 0
      // Predicated region
      $region33: #{wild_relation_network_forward.6} parent=31 // pred_check
        %p261 = pneg %p260
      $region34: #{wild_relation_network_forward.6} parent=31 // pred_check_branch
        %263 = sbr.rel (%p261) target = $region36
      $region35: #{wild_relation_network_forward.6} parent=31 // pred_region
        %264 = vst [vmem:[#allocation2] sm:$0xff] 0.0
        %265 = vst [vmem:[#allocation2 + $0x8] sm:$0xff] 0.0
        %266 = vst [vmem:[#allocation2 + $0x10] sm:$0xff] 0.0
        %267 = vst [vmem:[#allocation2 + $0x18] sm:$0xff] 0.0
        %268 = vst [vmem:[#allocation2 + $0x20] sm:$0xff] 0.0
        %269 = vst [vmem:[#allocation2 + $0x28] sm:$0xff] 0.0
        %270 = vst [vmem:[#allocation2 + $0x30] sm:$0xff] 0.0
        %271 = vst [vmem:[#allocation2 + $0x38] sm:$0xff] 0.0
        %272 = vst [vmem:[#allocation2 + $0x40] sm:$0xff] 0.0
        %273 = vst [vmem:[#allocation2 + $0x48] sm:$0xff] 0.0
        %274 = vst [vmem:[#allocation2 + $0x50] sm:$0xff] 0.0
        %275 = vst [vmem:[#allocation2 + $0x58] sm:$0xff] 0.0
        %276 = vst [vmem:[#allocation2 + $0x60] sm:$0xff] 0.0
        %277 = vst [vmem:[#allocation2 + $0x68] sm:$0xff] 0.0
        %278 = vst [vmem:[#allocation2 + $0x70] sm:$0xff] 0.0
        %279 = vst [vmem:[#allocation2 + $0x78] sm:$0xff] 0.0
        %280 = vst [vmem:[#allocation2 + $0x80] sm:$0xff] 0.0
        %281 = vst [vmem:[#allocation2 + $0x88] sm:$0xff] 0.0
        %282 = vst [vmem:[#allocation2 + $0x90] sm:$0xff] 0.0
        %283 = vst [vmem:[#allocation2 + $0x98] sm:$0xff] 0.0
        %284 = vst [vmem:[#allocation2 + $0xa0] sm:$0xff] 0.0
        %285 = vst [vmem:[#allocation2 + $0xa8] sm:$0xff] 0.0
        %286 = vst [vmem:[#allocation2 + $0xb0] sm:$0xff] 0.0
        %287 = vst [vmem:[#allocation2 + $0xb8] sm:$0xff] 0.0
        %288 = vst [vmem:[#allocation2 + $0xc0] sm:$0xff] 0.0
        %289 = vst [vmem:[#allocation2 + $0xc8] sm:$0xff] 0.0
        %290 = vst [vmem:[#allocation2 + $0xd0] sm:$0xff] 0.0
        %291 = vst [vmem:[#allocation2 + $0xd8] sm:$0xff] 0.0
        %292 = vst [vmem:[#allocation2 + $0xe0] sm:$0xff] 0.0
        %293 = vst [vmem:[#allocation2 + $0xe8] sm:$0xff] 0.0
        %294 = vst [vmem:[#allocation2 + $0xf0] sm:$0xff] 0.0
        %295 = vst [vmem:[#allocation2 + $0xf8] sm:$0xff] 0.0
        %296 = vst [vmem:[#allocation2 + $0x100] sm:$0xff] 0.0
        %297 = vst [vmem:[#allocation2 + $0x108] sm:$0xff] 0.0
        %298 = vst [vmem:[#allocation2 + $0x110] sm:$0xff] 0.0
        %299 = vst [vmem:[#allocation2 + $0x118] sm:$0xff] 0.0
        %300 = vst [vmem:[#allocation2 + $0x120] sm:$0xff] 0.0
        %301 = vst [vmem:[#allocation2 + $0x128] sm:$0xff] 0.0
        %302 = vst [vmem:[#allocation2 + $0x130] sm:$0xff] 0.0
        %303 = vst [vmem:[#allocation2 + $0x138] sm:$0xff] 0.0
        %304 = vst [vmem:[#allocation2 + $0x140] sm:$0xff] 0.0
        %305 = vst [vmem:[#allocation2 + $0x148] sm:$0xff] 0.0
        %306 = vst [vmem:[#allocation2 + $0x150] sm:$0xff] 0.0
        %307 = vst [vmem:[#allocation2 + $0x158] sm:$0xff] 0.0
        %308 = vst [vmem:[#allocation2 + $0x160] sm:$0xff] 0.0
        %309 = vst [vmem:[#allocation2 + $0x168] sm:$0xff] 0.0
        %310 = vst [vmem:[#allocation2 + $0x170] sm:$0xff] 0.0
        %311 = vst [vmem:[#allocation2 + $0x178] sm:$0xff] 0.0
        %312 = vst [vmem:[#allocation2 + $0x180] sm:$0xff] 0.0
        %313 = vst [vmem:[#allocation2 + $0x188] sm:$0xff] 0.0
        %314 = vst [vmem:[#allocation2 + $0x190] sm:$0xff] 0.0
        %315 = vst [vmem:[#allocation2 + $0x198] sm:$0xff] 0.0
        %316 = vst [vmem:[#allocation2 + $0x1a0] sm:$0xff] 0.0
        %317 = vst [vmem:[#allocation2 + $0x1a8] sm:$0xff] 0.0
        %318 = vst [vmem:[#allocation2 + $0x1b0] sm:$0xff] 0.0
        %319 = vst [vmem:[#allocation2 + $0x1b8] sm:$0xff] 0.0
        %320 = vst [vmem:[#allocation2 + $0x1c0] sm:$0xff] 0.0
        %321 = vst [vmem:[#allocation2 + $0x1c8] sm:$0xff] 0.0
        %322 = vst [vmem:[#allocation2 + $0x1d0] sm:$0xff] 0.0
        %323 = vst [vmem:[#allocation2 + $0x1d8] sm:$0xff] 0.0
        %324 = vst [vmem:[#allocation2 + $0x1e0] sm:$0xff] 0.0
        %325 = vst [vmem:[#allocation2 + $0x1e8] sm:$0xff] 0.0
        %326 = vst [vmem:[#allocation2 + $0x1f0] sm:$0xff] 0.0
        %327 = vst [vmem:[#allocation2 + $0x1f8] sm:$0xff] 0.0
      $region36: #{wild_relation_network_forward.6} parent=31 // pred_fallthru
        _
      %v328 = vld [vmem:[#allocation2] sm:$0xff]
      %v329 = vld [vmem:[#allocation2 + $0x8] sm:$0xff]
      %v330 = vld [vmem:[#allocation2 + $0x10] sm:$0xff]
      %v331 = vld [vmem:[#allocation2 + $0x18] sm:$0xff]
      %v332 = vld [vmem:[#allocation2 + $0x20] sm:$0xff]
      %v333 = vld [vmem:[#allocation2 + $0x28] sm:$0xff]
      %v334 = vld [vmem:[#allocation2 + $0x30] sm:$0xff]
      %v335 = vld [vmem:[#allocation2 + $0x38] sm:$0xff]
      %v336 = vld [vmem:[#allocation2 + $0x40] sm:$0xff]
      %v337 = vld [vmem:[#allocation2 + $0x48] sm:$0xff]
      %v338 = vld [vmem:[#allocation2 + $0x50] sm:$0xff]
      %v339 = vld [vmem:[#allocation2 + $0x58] sm:$0xff]
      %v340 = vld [vmem:[#allocation2 + $0x60] sm:$0xff]
      %v341 = vld [vmem:[#allocation2 + $0x68] sm:$0xff]
      %v342 = vld [vmem:[#allocation2 + $0x70] sm:$0xff]
      %v343 = vld [vmem:[#allocation2 + $0x78] sm:$0xff]
      %v344 = vld [vmem:[#allocation2 + $0x80] sm:$0xff]
      %v345 = vld [vmem:[#allocation2 + $0x88] sm:$0xff]
      %v346 = vld [vmem:[#allocation2 + $0x90] sm:$0xff]
      %v347 = vld [vmem:[#allocation2 + $0x98] sm:$0xff]
      %v348 = vld [vmem:[#allocation2 + $0xa0] sm:$0xff]
      %v349 = vld [vmem:[#allocation2 + $0xa8] sm:$0xff]
      %v350 = vld [vmem:[#allocation2 + $0xb0] sm:$0xff]
      %v351 = vld [vmem:[#allocation2 + $0xb8] sm:$0xff]
      %v352 = vld [vmem:[#allocation2 + $0xc0] sm:$0xff]
      %v353 = vld [vmem:[#allocation2 + $0xc8] sm:$0xff]
      %v354 = vld [vmem:[#allocation2 + $0xd0] sm:$0xff]
      %v355 = vld [vmem:[#allocation2 + $0xd8] sm:$0xff]
      %v356 = vld [vmem:[#allocation2 + $0xe0] sm:$0xff]
      %v357 = vld [vmem:[#allocation2 + $0xe8] sm:$0xff]
      %v358 = vld [vmem:[#allocation2 + $0xf0] sm:$0xff]
      %v359 = vld [vmem:[#allocation2 + $0xf8] sm:$0xff]
      %v360 = vld [vmem:[#allocation2 + $0x100] sm:$0xff]
      %v361 = vld [vmem:[#allocation2 + $0x108] sm:$0xff]
      %v362 = vld [vmem:[#allocation2 + $0x110] sm:$0xff]
      %v363 = vld [vmem:[#allocation2 + $0x118] sm:$0xff]
      %v364 = vld [vmem:[#allocation2 + $0x120] sm:$0xff]
      %v365 = vld [vmem:[#allocation2 + $0x128] sm:$0xff]
      %v366 = vld [vmem:[#allocation2 + $0x130] sm:$0xff]
      %v367 = vld [vmem:[#allocation2 + $0x138] sm:$0xff]
      %v368 = vld [vmem:[#allocation2 + $0x140] sm:$0xff]
      %v369 = vld [vmem:[#allocation2 + $0x148] sm:$0xff]
      %v370 = vld [vmem:[#allocation2 + $0x150] sm:$0xff]
      %v371 = vld [vmem:[#allocation2 + $0x158] sm:$0xff]
      %v372 = vld [vmem:[#allocation2 + $0x160] sm:$0xff]
      %v373 = vld [vmem:[#allocation2 + $0x168] sm:$0xff]
      %v374 = vld [vmem:[#allocation2 + $0x170] sm:$0xff]
      %v375 = vld [vmem:[#allocation2 + $0x178] sm:$0xff]
      %v376 = vld [vmem:[#allocation2 + $0x180] sm:$0xff]
      %v377 = vld [vmem:[#allocation2 + $0x188] sm:$0xff]
      %v378 = vld [vmem:[#allocation2 + $0x190] sm:$0xff]
      %v379 = vld [vmem:[#allocation2 + $0x198] sm:$0xff]
      %v380 = vld [vmem:[#allocation2 + $0x1a0] sm:$0xff]
      %v381 = vld [vmem:[#allocation2 + $0x1a8] sm:$0xff]
      %v382 = vld [vmem:[#allocation2 + $0x1b0] sm:$0xff]
      %v383 = vld [vmem:[#allocation2 + $0x1b8] sm:$0xff]
      %v384 = vld [vmem:[#allocation2 + $0x1c0] sm:$0xff]
      %v385 = vld [vmem:[#allocation2 + $0x1c8] sm:$0xff]
      %v386 = vld [vmem:[#allocation2 + $0x1d0] sm:$0xff]
      %v387 = vld [vmem:[#allocation2 + $0x1d8] sm:$0xff]
      %v388 = vld [vmem:[#allocation2 + $0x1e0] sm:$0xff]
      %v389 = vld [vmem:[#allocation2 + $0x1e8] sm:$0xff]
      %v390 = vld [vmem:[#allocation2 + $0x1f0] sm:$0xff]
      %v391 = vld [vmem:[#allocation2 + $0x1f8] sm:$0xff]
      %v392 = vld [vmem:[%s236] sm:$0xf]
      %v393 = vld [vmem:[%s236 + $0x4] sm:$0xf]
      %v394 = vld [vmem:[%s236 + $0x8] sm:$0xf]
      %v395 = vld [vmem:[%s236 + $0xc] sm:$0xf]
      %v396 = vld [vmem:[%s236 + $0x10] sm:$0xf]
      %v397 = vld [vmem:[%s236 + $0x14] sm:$0xf]
      %v398 = vld [vmem:[%s236 + $0x18] sm:$0xf]
      %v399 = vld [vmem:[%s236 + $0x1c] sm:$0xf]
      %v400 = vld [vmem:[%s236 + $0x20] sm:$0xf]
      %v401 = vld [vmem:[%s236 + $0x24] sm:$0xf]
      %v402 = vld [vmem:[%s236 + $0x28] sm:$0xf]
      %v403 = vld [vmem:[%s236 + $0x2c] sm:$0xf]
      %v404 = vld [vmem:[%s236 + $0x30] sm:$0xf]
      %v405 = vld [vmem:[%s236 + $0x34] sm:$0xf]
      %v406 = vld [vmem:[%s236 + $0x38] sm:$0xf]
      %v407 = vld [vmem:[%s236 + $0x3c] sm:$0xf]
      %v408 = vld [vmem:[%s236 + $0x40] sm:$0xf]
      %v409 = vld [vmem:[%s236 + $0x44] sm:$0xf]
      %v410 = vld [vmem:[%s236 + $0x48] sm:$0xf]
      %v411 = vld [vmem:[%s236 + $0x4c] sm:$0xf]
      %v412 = vld [vmem:[%s236 + $0x50] sm:$0xf]
      %v413 = vld [vmem:[%s236 + $0x54] sm:$0xf]
      %v414 = vld [vmem:[%s236 + $0x58] sm:$0xf]
      %v415 = vld [vmem:[%s236 + $0x5c] sm:$0xf]
      %v416 = vld [vmem:[%s236 + $0x60] sm:$0xf]
      %v417 = vld [vmem:[%s236 + $0x64] sm:$0xf]
      %v418 = vld [vmem:[%s236 + $0x68] sm:$0xf]
      %v419 = vld [vmem:[%s236 + $0x6c] sm:$0xf]
      %v420 = vld [vmem:[%s236 + $0x70] sm:$0xf]
      %v421 = vld [vmem:[%s236 + $0x74] sm:$0xf]
      %v422 = vld [vmem:[%s236 + $0x78] sm:$0xf]
      %v423 = vld [vmem:[%s236 + $0x7c] sm:$0xf]
      %v424 = vld [vmem:[%s236 + $0x80] sm:$0xf]
      %v425 = vld [vmem:[%s236 + $0x84] sm:$0xf]
      %v426 = vld [vmem:[%s236 + $0x88] sm:$0xf]
      %v427 = vld [vmem:[%s236 + $0x8c] sm:$0xf]
      %v428 = vld [vmem:[%s236 + $0x90] sm:$0xf]
      %v429 = vld [vmem:[%s236 + $0x94] sm:$0xf]
      %v430 = vld [vmem:[%s236 + $0x98] sm:$0xf]
      %v431 = vld [vmem:[%s236 + $0x9c] sm:$0xf]
      %v432 = vld [vmem:[%s236 + $0xa0] sm:$0xf]
      %v433 = vld [vmem:[%s236 + $0xa4] sm:$0xf]
      %v434 = vld [vmem:[%s236 + $0xa8] sm:$0xf]
      %v435 = vld [vmem:[%s236 + $0xac] sm:$0xf]
      %v436 = vld [vmem:[%s236 + $0xb0] sm:$0xf]
      %v437 = vld [vmem:[%s236 + $0xb4] sm:$0xf]
      %v438 = vld [vmem:[%s236 + $0xb8] sm:$0xf]
      %v439 = vld [vmem:[%s236 + $0xbc] sm:$0xf]
      %v440 = vld [vmem:[%s236 + $0xc0] sm:$0xf]
      %v441 = vld [vmem:[%s236 + $0xc4] sm:$0xf]
      %v442 = vld [vmem:[%s236 + $0xc8] sm:$0xf]
      %v443 = vld [vmem:[%s236 + $0xcc] sm:$0xf]
      %v444 = vld [vmem:[%s236 + $0xd0] sm:$0xf]
      %v445 = vld [vmem:[%s236 + $0xd4] sm:$0xf]
      %v446 = vld [vmem:[%s236 + $0xd8] sm:$0xf]
      %v447 = vld [vmem:[%s236 + $0xdc] sm:$0xf]
      %v448 = vld [vmem:[%s236 + $0xe0] sm:$0xf]
      %v449 = vld [vmem:[%s236 + $0xe4] sm:$0xf]
      %v450 = vld [vmem:[%s236 + $0xe8] sm:$0xf]
      %v451 = vld [vmem:[%s236 + $0xec] sm:$0xf]
      %v452 = vld [vmem:[%s236 + $0xf0] sm:$0xf]
      %v453 = vld [vmem:[%s236 + $0xf4] sm:$0xf]
      %v454 = vld [vmem:[%s236 + $0xf8] sm:$0xf]
      %v455 = vld [vmem:[%s236 + $0xfc] sm:$0xf]
      %v456 = vld [vmem:[%s245] sm:$0xf]
      %v457 = vld [vmem:[%s245 + $0x4] sm:$0x1]
      %v522 = vunpack.c.l.b16 %v392
      %v523 = vunpack.c.l.b16 %v393
      %v524 = vunpack.c.l.b16 %v394
      %v525 = vunpack.c.l.b16 %v395
      %v526 = vunpack.c.l.b16 %v396
      %v527 = vunpack.c.l.b16 %v397
      %v528 = vunpack.c.l.b16 %v398
      %v529 = vunpack.c.l.b16 %v399
      %v530 = vunpack.c.l.b16 %v400
      %v531 = vunpack.c.l.b16 %v401
      %v532 = vunpack.c.l.b16 %v402
      %v533 = vunpack.c.l.b16 %v403
      %v534 = vunpack.c.l.b16 %v404
      %v535 = vunpack.c.l.b16 %v405
      %v536 = vunpack.c.l.b16 %v406
      %v537 = vunpack.c.l.b16 %v407
      %v538 = vunpack.c.l.b16 %v408
      %v539 = vunpack.c.l.b16 %v409
      %v540 = vunpack.c.l.b16 %v410
      %v541 = vunpack.c.l.b16 %v411
      %v542 = vunpack.c.l.b16 %v412
      %v543 = vunpack.c.l.b16 %v413
      %v544 = vunpack.c.l.b16 %v414
      %v545 = vunpack.c.l.b16 %v415
      %v546 = vunpack.c.l.b16 %v416
      %v547 = vunpack.c.l.b16 %v417
      %v548 = vunpack.c.l.b16 %v418
      %v549 = vunpack.c.l.b16 %v419
      %v550 = vunpack.c.l.b16 %v420
      %v551 = vunpack.c.l.b16 %v421
      %v552 = vunpack.c.l.b16 %v422
      %v553 = vunpack.c.l.b16 %v423
      %v554 = vunpack.c.l.b16 %v424
      %v555 = vunpack.c.l.b16 %v425
      %v556 = vunpack.c.l.b16 %v426
      %v557 = vunpack.c.l.b16 %v427
      %v558 = vunpack.c.l.b16 %v428
      %v559 = vunpack.c.l.b16 %v429
      %v560 = vunpack.c.l.b16 %v430
      %v561 = vunpack.c.l.b16 %v431
      %v562 = vunpack.c.l.b16 %v432
      %v563 = vunpack.c.l.b16 %v433
      %v564 = vunpack.c.l.b16 %v434
      %v565 = vunpack.c.l.b16 %v435
      %v566 = vunpack.c.l.b16 %v436
      %v567 = vunpack.c.l.b16 %v437
      %v568 = vunpack.c.l.b16 %v438
      %v569 = vunpack.c.l.b16 %v439
      %v570 = vunpack.c.l.b16 %v440
      %v571 = vunpack.c.l.b16 %v441
      %v572 = vunpack.c.l.b16 %v442
      %v573 = vunpack.c.l.b16 %v443
      %v574 = vunpack.c.l.b16 %v444
      %v575 = vunpack.c.l.b16 %v445
      %v576 = vunpack.c.l.b16 %v446
      %v577 = vunpack.c.l.b16 %v447
      %v578 = vunpack.c.l.b16 %v448
      %v579 = vunpack.c.l.b16 %v449
      %v580 = vunpack.c.l.b16 %v450
      %v581 = vunpack.c.l.b16 %v451
      %v582 = vunpack.c.l.b16 %v452
      %v583 = vunpack.c.l.b16 %v453
      %v584 = vunpack.c.l.b16 %v454
      %v585 = vunpack.c.l.b16 %v455
      %v586 = vpack.c.b16 %v523, %v522
      %v587 = vpack.c.b16 %v525, %v524
      %v588 = vpack.c.b16 %v527, %v526
      %v589 = vpack.c.b16 %v529, %v528
      %v590 = vpack.c.b16 %v531, %v530
      %v591 = vpack.c.b16 %v533, %v532
      %v592 = vpack.c.b16 %v535, %v534
      %v593 = vpack.c.b16 %v537, %v536
      %v594 = vpack.c.b16 %v539, %v538
      %v595 = vpack.c.b16 %v541, %v540
      %v596 = vpack.c.b16 %v543, %v542
      %v597 = vpack.c.b16 %v545, %v544
      %v598 = vpack.c.b16 %v547, %v546
      %v599 = vpack.c.b16 %v549, %v548
      %v600 = vpack.c.b16 %v551, %v550
      %v601 = vpack.c.b16 %v553, %v552
      %v602 = vpack.c.b16 %v555, %v554
      %v603 = vpack.c.b16 %v557, %v556
      %v604 = vpack.c.b16 %v559, %v558
      %v605 = vpack.c.b16 %v561, %v560
      %v606 = vpack.c.b16 %v563, %v562
      %v607 = vpack.c.b16 %v565, %v564
      %v608 = vpack.c.b16 %v567, %v566
      %v609 = vpack.c.b16 %v569, %v568
      %v610 = vpack.c.b16 %v571, %v570
      %v611 = vpack.c.b16 %v573, %v572
      %v612 = vpack.c.b16 %v575, %v574
      %v613 = vpack.c.b16 %v577, %v576
      %v614 = vpack.c.b16 %v579, %v578
      %v615 = vpack.c.b16 %v581, %v580
      %v616 = vpack.c.b16 %v583, %v582
      %v617 = vpack.c.b16 %v585, %v584
      %v620 = vunpack.c.l.b16 %v456
      %v621 = vunpack.c.l.b16 %v457
      %v622 = vpack.c.b16 %v621, %v620
      %vm623 = vcmask 72704
      %v625 = vsel %vm623, %v586, 0
      %v628 = vsel %vm623, %v587, 0
      %v631 = vsel %vm623, %v588, 0
      %v634 = vsel %vm623, %v589, 0
      %v637 = vsel %vm623, %v590, 0
      %v640 = vsel %vm623, %v591, 0
      %v643 = vsel %vm623, %v592, 0
      %v646 = vsel %vm623, %v593, 0
      %v649 = vsel %vm623, %v594, 0
      %v652 = vsel %vm623, %v595, 0
      %v655 = vsel %vm623, %v596, 0
      %v658 = vsel %vm623, %v597, 0
      %v661 = vsel %vm623, %v598, 0
      %v664 = vsel %vm623, %v599, 0
      %v667 = vsel %vm623, %v600, 0
      %v670 = vsel %vm623, %v601, 0
      %v673 = vsel %vm623, %v602, 0
      %v676 = vsel %vm623, %v603, 0
      %v679 = vsel %vm623, %v604, 0
      %v682 = vsel %vm623, %v605, 0
      %v685 = vsel %vm623, %v606, 0
      %v688 = vsel %vm623, %v607, 0
      %v691 = vsel %vm623, %v608, 0
      %v694 = vsel %vm623, %v609, 0
      %v697 = vsel %vm623, %v610, 0
      %v700 = vsel %vm623, %v611, 0
      %v703 = vsel %vm623, %v612, 0
      %v706 = vsel %vm623, %v613, 0
      %v709 = vsel %vm623, %v614, 0
      %v712 = vsel %vm623, %v615, 0
      %v715 = vsel %vm623, %v616, 0
      %v718 = vsel %vm623, %v617, 0
      %vm720 = vcmask 1043456
      %vm721 = vcmask 1044480
      %v722 = vsel %vm720, 4294967295, 65535
      %v723 = vsel %vm721, %v722, 0
      %v725 = vand.u32 %v622, %v723
      %727 = vmatprep.subr.bf16.mxu0 0
      %728 = vmatpush1.bf16.msra.mxu0 %v725
      %729 = vmatprep.subr.bf16.mxu0 0
      %730 = vmatpush1.bf16.msra.mxu0 0
      %731 = vmatprep.subr.bf16.mxu0 0
      %732 = vmatpush1.bf16.msra.mxu0 0
      %733 = vmatprep.subr.bf16.mxu0 0
      %734 = vmatpush1.bf16.msra.mxu0 0
      %735 = vmatprep.subr.bf16.mxu0 0
      %736 = vmatpush1.bf16.msra.mxu0 0
      %737 = vmatprep.subr.bf16.mxu0 0
      %738 = vmatpush1.bf16.msra.mxu0 0
      %739 = vmatprep.subr.bf16.mxu0 0
      %740 = vmatpush1.bf16.msra.mxu0 0
      %741 = vmatprep.subr.bf16.mxu0 0
      %742 = vmatpush1.bf16.msra.mxu0 0
      %743 = vmatprep.subr.bf16.mxu0 0
      %744 = vmatpush1.bf16.msra.mxu0 0
      %745 = vmatprep.subr.bf16.mxu0 0
      %746 = vmatpush1.bf16.msra.mxu0 0
      %747 = vmatprep.subr.bf16.mxu0 0
      %748 = vmatpush1.bf16.msra.mxu0 0
      %749 = vmatprep.subr.bf16.mxu0 0
      %750 = vmatpush1.bf16.msra.mxu0 0
      %751 = vmatprep.subr.bf16.mxu0 0
      %752 = vmatpush1.bf16.msra.mxu0 0
      %753 = vmatprep.subr.bf16.mxu0 0
      %754 = vmatpush1.bf16.msra.mxu0 0
      %755 = vmatprep.subr.bf16.mxu0 0
      %756 = vmatpush1.bf16.msra.mxu0 0
      %757 = vmatprep.subr.bf16.mxu0 0
      %758 = vmatpush1.bf16.msra.mxu0 0
      %759 = vmatprep.mubr.bf16.mxu0 0
      %760 = vmatmul.mubr.bf16.gmra.mrb[0].mxu0 %v625
      %v761 = vpop.f32.mrb[0].mxu0
      %v762 = vadd.f32 0.0, %v761
      %v763 = vpop.f32.mrb[0].mxu0
      %v764 = vpop.f32.mrb[0].mxu0
      %v765 = vadd.f32 0.0, %v764
      %v766 = vpop.f32.mrb[0].mxu0
      %767 = vmatprep.mubr.bf16.mxu0 0
      %768 = vmatmul.mubr.bf16.gmra.mrb[0].mxu0 %v628
      %v769 = vpop.f32.mrb[0].mxu0
      %v770 = vadd.f32 0.0, %v769
      %v771 = vpop.f32.mrb[0].mxu0
      %v772 = vpop.f32.mrb[0].mxu0
      %v773 = vadd.f32 0.0, %v772
      %v774 = vpop.f32.mrb[0].mxu0
      %775 = vmatprep.mubr.bf16.mxu0 0
      %776 = vmatmul.mubr.bf16.gmra.mrb[0].mxu0 %v631
      %v777 = vpop.f32.mrb[0].mxu0
      %v778 = vadd.f32 0.0, %v777
      %v779 = vpop.f32.mrb[0].mxu0
      %v780 = vpop.f32.mrb[0].mxu0
      %v781 = vadd.f32 0.0, %v780
      %v782 = vpop.f32.mrb[0].mxu0
      %783 = vmatprep.mubr.bf16.mxu0 0
      %784 = vmatmul.mubr.bf16.gmra.mrb[0].mxu0 %v634
      %v785 = vpop.f32.mrb[0].mxu0
      %v786 = vadd.f32 0.0, %v785
      %v787 = vpop.f32.mrb[0].mxu0
      %v788 = vpop.f32.mrb[0].mxu0
      %v789 = vadd.f32 0.0, %v788
      %v790 = vpop.f32.mrb[0].mxu0
      %791 = vmatprep.mubr.bf16.mxu0 0
      %792 = vmatmul.mubr.bf16.gmra.mrb[0].mxu0 %v637
      %v793 = vpop.f32.mrb[0].mxu0
      %v794 = vadd.f32 0.0, %v793
      %v795 = vpop.f32.mrb[0].mxu0
      %v796 = vpop.f32.mrb[0].mxu0
      %v797 = vadd.f32 0.0, %v796
      %v798 = vpop.f32.mrb[0].mxu0
      %799 = vmatprep.mubr.bf16.mxu0 0
      %800 = vmatmul.mubr.bf16.gmra.mrb[0].mxu0 %v640
      %v801 = vpop.f32.mrb[0].mxu0
      %v802 = vadd.f32 0.0, %v801
      %v803 = vpop.f32.mrb[0].mxu0
      %v804 = vpop.f32.mrb[0].mxu0
      %v805 = vadd.f32 0.0, %v804
      %v806 = vpop.f32.mrb[0].mxu0
      %807 = vmatprep.mubr.bf16.mxu0 0
      %808 = vmatmul.mubr.bf16.gmra.mrb[0].mxu0 %v643
      %v809 = vpop.f32.mrb[0].mxu0
      %v810 = vadd.f32 0.0, %v809
      %v811 = vpop.f32.mrb[0].mxu0
      %v812 = vpop.f32.mrb[0].mxu0
      %v813 = vadd.f32 0.0, %v812
      %v814 = vpop.f32.mrb[0].mxu0
      %815 = vmatprep.mubr.bf16.mxu0 0
      %816 = vmatmul.mubr.bf16.gmra.mrb[0].mxu0 %v646
      %v817 = vpop.f32.mrb[0].mxu0
      %v818 = vadd.f32 0.0, %v817
      %v819 = vpop.f32.mrb[0].mxu0
      %v820 = vpop.f32.mrb[0].mxu0
      %v821 = vadd.f32 0.0, %v820
      %v822 = vpop.f32.mrb[0].mxu0
      %823 = vmatprep.mubr.bf16.mxu0 0
      %824 = vmatmul.mubr.bf16.gmra.mrb[0].mxu0 %v649
      %v825 = vpop.f32.mrb[0].mxu0
      %v826 = vadd.f32 0.0, %v825
      %v827 = vpop.f32.mrb[0].mxu0
      %v828 = vpop.f32.mrb[0].mxu0
      %v829 = vadd.f32 0.0, %v828
      %v830 = vpop.f32.mrb[0].mxu0
      %831 = vmatprep.mubr.bf16.mxu0 0
      %832 = vmatmul.mubr.bf16.gmra.mrb[0].mxu0 %v652
      %v833 = vpop.f32.mrb[0].mxu0
      %v834 = vadd.f32 0.0, %v833
      %v835 = vpop.f32.mrb[0].mxu0
      %v836 = vpop.f32.mrb[0].mxu0
      %v837 = vadd.f32 0.0, %v836
      %v838 = vpop.f32.mrb[0].mxu0
      %839 = vmatprep.mubr.bf16.mxu0 0
      %840 = vmatmul.mubr.bf16.gmra.mrb[0].mxu0 %v655
      %v841 = vpop.f32.mrb[0].mxu0
      %v842 = vadd.f32 0.0, %v841
      %v843 = vpop.f32.mrb[0].mxu0
      %v844 = vpop.f32.mrb[0].mxu0
      %v845 = vadd.f32 0.0, %v844
      %v846 = vpop.f32.mrb[0].mxu0
      %847 = vmatprep.mubr.bf16.mxu0 0
      %848 = vmatmul.mubr.bf16.gmra.mrb[0].mxu0 %v658
      %v849 = vpop.f32.mrb[0].mxu0
      %v850 = vadd.f32 0.0, %v849
      %v851 = vpop.f32.mrb[0].mxu0
      %v852 = vpop.f32.mrb[0].mxu0
      %v853 = vadd.f32 0.0, %v852
      %v854 = vpop.f32.mrb[0].mxu0
      %855 = vmatprep.mubr.bf16.mxu0 0
      %856 = vmatmul.mubr.bf16.gmra.mrb[0].mxu0 %v661
      %v857 = vpop.f32.mrb[0].mxu0
      %v858 = vadd.f32 0.0, %v857
      %v859 = vpop.f32.mrb[0].mxu0
      %v860 = vpop.f32.mrb[0].mxu0
      %v861 = vadd.f32 0.0, %v860
      %v862 = vpop.f32.mrb[0].mxu0
      %863 = vmatprep.mubr.bf16.mxu0 0
      %864 = vmatmul.mubr.bf16.gmra.mrb[0].mxu0 %v664
      %v865 = vpop.f32.mrb[0].mxu0
      %v866 = vadd.f32 0.0, %v865
      %v867 = vpop.f32.mrb[0].mxu0
      %v868 = vpop.f32.mrb[0].mxu0
      %v869 = vadd.f32 0.0, %v868
      %v870 = vpop.f32.mrb[0].mxu0
      %871 = vmatprep.mubr.bf16.mxu0 0
      %872 = vmatmul.mubr.bf16.gmra.mrb[0].mxu0 %v667
      %v873 = vpop.f32.mrb[0].mxu0
      %v874 = vadd.f32 0.0, %v873
      %v875 = vpop.f32.mrb[0].mxu0
      %v876 = vpop.f32.mrb[0].mxu0
      %v877 = vadd.f32 0.0, %v876
      %v878 = vpop.f32.mrb[0].mxu0
      %879 = vmatprep.mubr.bf16.mxu0 0
      %880 = vmatmul.mubr.bf16.gmra.mrb[0].mxu0 %v670
      %v881 = vpop.f32.mrb[0].mxu0
      %v882 = vadd.f32 0.0, %v881
      %v883 = vpop.f32.mrb[0].mxu0
      %v884 = vpop.f32.mrb[0].mxu0
      %v885 = vadd.f32 0.0, %v884
      %v886 = vpop.f32.mrb[0].mxu0
      %887 = vmatprep.mubr.bf16.mxu0 0
      %888 = vmatmul.mubr.bf16.gmra.mrb[0].mxu0 %v673
      %v889 = vpop.f32.mrb[0].mxu0
      %v890 = vadd.f32 0.0, %v889
      %v891 = vpop.f32.mrb[0].mxu0
      %v892 = vpop.f32.mrb[0].mxu0
      %v893 = vadd.f32 0.0, %v892
      %v894 = vpop.f32.mrb[0].mxu0
      %895 = vmatprep.mubr.bf16.mxu0 0
      %896 = vmatmul.mubr.bf16.gmra.mrb[0].mxu0 %v676
      %v897 = vpop.f32.mrb[0].mxu0
      %v898 = vadd.f32 0.0, %v897
      %v899 = vpop.f32.mrb[0].mxu0
      %v900 = vpop.f32.mrb[0].mxu0
      %v901 = vadd.f32 0.0, %v900
      %v902 = vpop.f32.mrb[0].mxu0
      %903 = vmatprep.mubr.bf16.mxu0 0
      %904 = vmatmul.mubr.bf16.gmra.mrb[0].mxu0 %v679
      %v905 = vpop.f32.mrb[0].mxu0
      %v906 = vadd.f32 0.0, %v905
      %v907 = vpop.f32.mrb[0].mxu0
      %v908 = vpop.f32.mrb[0].mxu0
      %v909 = vadd.f32 0.0, %v908
      %v910 = vpop.f32.mrb[0].mxu0
      %911 = vmatprep.mubr.bf16.mxu0 0
      %912 = vmatmul.mubr.bf16.gmra.mrb[0].mxu0 %v682
      %v913 = vpop.f32.mrb[0].mxu0
      %v914 = vadd.f32 0.0, %v913
      %v915 = vpop.f32.mrb[0].mxu0
      %v916 = vpop.f32.mrb[0].mxu0
      %v917 = vadd.f32 0.0, %v916
      %v918 = vpop.f32.mrb[0].mxu0
      %919 = vmatprep.mubr.bf16.mxu0 0
      %920 = vmatmul.mubr.bf16.gmra.mrb[0].mxu0 %v685
      %v921 = vpop.f32.mrb[0].mxu0
      %v922 = vadd.f32 0.0, %v921
      %v923 = vpop.f32.mrb[0].mxu0
      %v924 = vpop.f32.mrb[0].mxu0
      %v925 = vadd.f32 0.0, %v924
      %v926 = vpop.f32.mrb[0].mxu0
      %927 = vmatprep.mubr.bf16.mxu0 0
      %928 = vmatmul.mubr.bf16.gmra.mrb[0].mxu0 %v688
      %v929 = vpop.f32.mrb[0].mxu0
      %v930 = vadd.f32 0.0, %v929
      %v931 = vpop.f32.mrb[0].mxu0
      %v932 = vpop.f32.mrb[0].mxu0
      %v933 = vadd.f32 0.0, %v932
      %v934 = vpop.f32.mrb[0].mxu0
      %935 = vmatprep.mubr.bf16.mxu0 0
      %936 = vmatmul.mubr.bf16.gmra.mrb[0].mxu0 %v691
      %v937 = vpop.f32.mrb[0].mxu0
      %v938 = vadd.f32 0.0, %v937
      %v939 = vpop.f32.mrb[0].mxu0
      %v940 = vpop.f32.mrb[0].mxu0
      %v941 = vadd.f32 0.0, %v940
      %v942 = vpop.f32.mrb[0].mxu0
      %943 = vmatprep.mubr.bf16.mxu0 0
      %944 = vmatmul.mubr.bf16.gmra.mrb[0].mxu0 %v694
      %v945 = vpop.f32.mrb[0].mxu0
      %v946 = vadd.f32 0.0, %v945
      %v947 = vpop.f32.mrb[0].mxu0
      %v948 = vpop.f32.mrb[0].mxu0
      %v949 = vadd.f32 0.0, %v948
      %v950 = vpop.f32.mrb[0].mxu0
      %951 = vmatprep.mubr.bf16.mxu0 0
      %952 = vmatmul.mubr.bf16.gmra.mrb[0].mxu0 %v697
      %v953 = vpop.f32.mrb[0].mxu0
      %v954 = vadd.f32 0.0, %v953
      %v955 = vpop.f32.mrb[0].mxu0
      %v956 = vpop.f32.mrb[0].mxu0
      %v957 = vadd.f32 0.0, %v956
      %v958 = vpop.f32.mrb[0].mxu0
      %959 = vmatprep.mubr.bf16.mxu0 0
      %960 = vmatmul.mubr.bf16.gmra.mrb[0].mxu0 %v700
      %v961 = vpop.f32.mrb[0].mxu0
      %v962 = vadd.f32 0.0, %v961
      %v963 = vpop.f32.mrb[0].mxu0
      %v964 = vpop.f32.mrb[0].mxu0
      %v965 = vadd.f32 0.0, %v964
      %v966 = vpop.f32.mrb[0].mxu0
      %967 = vmatprep.mubr.bf16.mxu0 0
      %968 = vmatmul.mubr.bf16.gmra.mrb[0].mxu0 %v703
      %v969 = vpop.f32.mrb[0].mxu0
      %v970 = vadd.f32 0.0, %v969
      %v971 = vpop.f32.mrb[0].mxu0
      %v972 = vpop.f32.mrb[0].mxu0
      %v973 = vadd.f32 0.0, %v972
      %v974 = vpop.f32.mrb[0].mxu0
      %975 = vmatprep.mubr.bf16.mxu0 0
      %976 = vmatmul.mubr.bf16.gmra.mrb[0].mxu0 %v706
      %v977 = vpop.f32.mrb[0].mxu0
      %v978 = vadd.f32 0.0, %v977
      %v979 = vpop.f32.mrb[0].mxu0
      %v980 = vpop.f32.mrb[0].mxu0
      %v981 = vadd.f32 0.0, %v980
      %v982 = vpop.f32.mrb[0].mxu0
      %983 = vmatprep.mubr.bf16.mxu0 0
      %984 = vmatmul.mubr.bf16.gmra.mrb[0].mxu0 %v709
      %v985 = vpop.f32.mrb[0].mxu0
      %v986 = vadd.f32 0.0, %v985
      %v987 = vpop.f32.mrb[0].mxu0
      %v988 = vpop.f32.mrb[0].mxu0
      %v989 = vadd.f32 0.0, %v988
      %v990 = vpop.f32.mrb[0].mxu0
      %991 = vmatprep.mubr.bf16.mxu0 0
      %992 = vmatmul.mubr.bf16.gmra.mrb[0].mxu0 %v712
      %v993 = vpop.f32.mrb[0].mxu0
      %v994 = vadd.f32 0.0, %v993
      %v995 = vpop.f32.mrb[0].mxu0
      %v996 = vpop.f32.mrb[0].mxu0
      %v997 = vadd.f32 0.0, %v996
      %v998 = vpop.f32.mrb[0].mxu0
      %999 = vmatprep.mubr.bf16.mxu0 0
      %1000 = vmatmul.mubr.bf16.gmra.mrb[0].mxu0 %v715
      %v1001 = vpop.f32.mrb[0].mxu0
      %v1002 = vadd.f32 0.0, %v1001
      %v1003 = vpop.f32.mrb[0].mxu0
      %v1004 = vpop.f32.mrb[0].mxu0
      %v1005 = vadd.f32 0.0, %v1004
      %v1006 = vpop.f32.mrb[0].mxu0
      %1007 = vmatprep.mubr.bf16.mxu0 0
      %1008 = vmatmul.mubr.bf16.gmra.mrb[0].mxu0 %v718
      %v1009 = vpop.f32.mrb[0].mxu0
      %v1010 = vadd.f32 0.0, %v1009
      %v1011 = vpop.f32.mrb[0].mxu0
      %v1012 = vpop.f32.mrb[0].mxu0
      %v1013 = vadd.f32 0.0, %v1012
      %v1014 = vpop.f32.mrb[0].mxu0
      %1015 = vdwg.mxu0
      %v1016 = vadd.f32 %v328, %v762
      %v1017 = vadd.f32 %v329, %v765
      %v1018 = vadd.f32 %v330, %v770
      %v1019 = vadd.f32 %v331, %v773
      %v1020 = vadd.f32 %v332, %v778
      %v1021 = vadd.f32 %v333, %v781
      %v1022 = vadd.f32 %v334, %v786
      %v1023 = vadd.f32 %v335, %v789
      %v1024 = vadd.f32 %v336, %v794
      %v1025 = vadd.f32 %v337, %v797
      %v1026 = vadd.f32 %v338, %v802
      %v1027 = vadd.f32 %v339, %v805
      %v1028 = vadd.f32 %v340, %v810
      %v1029 = vadd.f32 %v341, %v813
      %v1030 = vadd.f32 %v342, %v818
      %v1031 = vadd.f32 %v343, %v821
      %v1032 = vadd.f32 %v344, %v826
      %v1033 = vadd.f32 %v345, %v829
      %v1034 = vadd.f32 %v346, %v834
      %v1035 = vadd.f32 %v347, %v837
      %v1036 = vadd.f32 %v348, %v842
      %v1037 = vadd.f32 %v349, %v845
      %v1038 = vadd.f32 %v350, %v850
      %v1039 = vadd.f32 %v351, %v853
      %v1040 = vadd.f32 %v352, %v858
      %v1041 = vadd.f32 %v353, %v861
      %v1042 = vadd.f32 %v354, %v866
      %v1043 = vadd.f32 %v355, %v869
      %v1044 = vadd.f32 %v356, %v874
      %v1045 = vadd.f32 %v357, %v877
      %v1046 = vadd.f32 %v358, %v882
      %v1047 = vadd.f32 %v359, %v885
      %v1048 = vadd.f32 %v360, %v890
      %v1049 = vadd.f32 %v361, %v893
      %v1050 = vadd.f32 %v362, %v898
      %v1051 = vadd.f32 %v363, %v901
      %v1052 = vadd.f32 %v364, %v906
      %v1053 = vadd.f32 %v365, %v909
      %v1054 = vadd.f32 %v366, %v914
      %v1055 = vadd.f32 %v367, %v917
      %v1056 = vadd.f32 %v368, %v922
      %v1057 = vadd.f32 %v369, %v925
      %v1058 = vadd.f32 %v370, %v930
      %v1059 = vadd.f32 %v371, %v933
      %v1060 = vadd.f32 %v372, %v938
      %v1061 = vadd.f32 %v373, %v941
      %v1062 = vadd.f32 %v374, %v946
      %v1063 = vadd.f32 %v375, %v949
      %v1064 = vadd.f32 %v376, %v954
      %v1065 = vadd.f32 %v377, %v957
      %v1066 = vadd.f32 %v378, %v962
      %v1067 = vadd.f32 %v379, %v965
      %v1068 = vadd.f32 %v380, %v970
      %v1069 = vadd.f32 %v381, %v973
      %v1070 = vadd.f32 %v382, %v978
      %v1071 = vadd.f32 %v383, %v981
      %v1072 = vadd.f32 %v384, %v986
      %v1073 = vadd.f32 %v385, %v989
      %v1074 = vadd.f32 %v386, %v994
      %v1075 = vadd.f32 %v387, %v997
      %v1076 = vadd.f32 %v388, %v1002
      %v1077 = vadd.f32 %v389, %v1005
      %v1078 = vadd.f32 %v390, %v1010
      %v1079 = vadd.f32 %v391, %v1013
      %1080 = vst [vmem:[#allocation2] sm:$0xff] %v1016
      %1081 = vst [vmem:[#allocation2 + $0x8] sm:$0xff] %v1017
      %1082 = vst [vmem:[#allocation2 + $0x10] sm:$0xff] %v1018
      %1083 = vst [vmem:[#allocation2 + $0x18] sm:$0xff] %v1019
      %1084 = vst [vmem:[#allocation2 + $0x20] sm:$0xff] %v1020
      %1085 = vst [vmem:[#allocation2 + $0x28] sm:$0xff] %v1021
      %1086 = vst [vmem:[#allocation2 + $0x30] sm:$0xff] %v1022
      %1087 = vst [vmem:[#allocation2 + $0x38] sm:$0xff] %v1023
      %1088 = vst [vmem:[#allocation2 + $0x40] sm:$0xff] %v1024
      %1089 = vst [vmem:[#allocation2 + $0x48] sm:$0xff] %v1025
      %1090 = vst [vmem:[#allocation2 + $0x50] sm:$0xff] %v1026
      %1091 = vst [vmem:[#allocation2 + $0x58] sm:$0xff] %v1027
      %1092 = vst [vmem:[#allocation2 + $0x60] sm:$0xff] %v1028
      %1093 = vst [vmem:[#allocation2 + $0x68] sm:$0xff] %v1029
      %1094 = vst [vmem:[#allocation2 + $0x70] sm:$0xff] %v1030
      %1095 = vst [vmem:[#allocation2 + $0x78] sm:$0xff] %v1031
      %1096 = vst [vmem:[#allocation2 + $0x80] sm:$0xff] %v1032
      %1097 = vst [vmem:[#allocation2 + $0x88] sm:$0xff] %v1033
      %1098 = vst [vmem:[#allocation2 + $0x90] sm:$0xff] %v1034
      %1099 = vst [vmem:[#allocation2 + $0x98] sm:$0xff] %v1035
      %1100 = vst [vmem:[#allocation2 + $0xa0] sm:$0xff] %v1036
      %1101 = vst [vmem:[#allocation2 + $0xa8] sm:$0xff] %v1037
      %1102 = vst [vmem:[#allocation2 + $0xb0] sm:$0xff] %v1038
      %1103 = vst [vmem:[#allocation2 + $0xb8] sm:$0xff] %v1039
      %1104 = vst [vmem:[#allocation2 + $0xc0] sm:$0xff] %v1040
      %1105 = vst [vmem:[#allocation2 + $0xc8] sm:$0xff] %v1041
      %1106 = vst [vmem:[#allocation2 + $0xd0] sm:$0xff] %v1042
      %1107 = vst [vmem:[#allocation2 + $0xd8] sm:$0xff] %v1043
      %1108 = vst [vmem:[#allocation2 + $0xe0] sm:$0xff] %v1044
      %1109 = vst [vmem:[#allocation2 + $0xe8] sm:$0xff] %v1045
      %1110 = vst [vmem:[#allocation2 + $0xf0] sm:$0xff] %v1046
      %1111 = vst [vmem:[#allocation2 + $0xf8] sm:$0xff] %v1047
      %1112 = vst [vmem:[#allocation2 + $0x100] sm:$0xff] %v1048
      %1113 = vst [vmem:[#allocation2 + $0x108] sm:$0xff] %v1049
      %1114 = vst [vmem:[#allocation2 + $0x110] sm:$0xff] %v1050
      %1115 = vst [vmem:[#allocation2 + $0x118] sm:$0xff] %v1051
      %1116 = vst [vmem:[#allocation2 + $0x120] sm:$0xff] %v1052
      %1117 = vst [vmem:[#allocation2 + $0x128] sm:$0xff] %v1053
      %1118 = vst [vmem:[#allocation2 + $0x130] sm:$0xff] %v1054
      %1119 = vst [vmem:[#allocation2 + $0x138] sm:$0xff] %v1055
      %1120 = vst [vmem:[#allocation2 + $0x140] sm:$0xff] %v1056
      %1121 = vst [vmem:[#allocation2 + $0x148] sm:$0xff] %v1057
      %1122 = vst [vmem:[#allocation2 + $0x150] sm:$0xff] %v1058
      %1123 = vst [vmem:[#allocation2 + $0x158] sm:$0xff] %v1059
      %1124 = vst [vmem:[#allocation2 + $0x160] sm:$0xff] %v1060
      %1125 = vst [vmem:[#allocation2 + $0x168] sm:$0xff] %v1061
      %1126 = vst [vmem:[#allocation2 + $0x170] sm:$0xff] %v1062
      %1127 = vst [vmem:[#allocation2 + $0x178] sm:$0xff] %v1063
      %1128 = vst [vmem:[#allocation2 + $0x180] sm:$0xff] %v1064
      %1129 = vst [vmem:[#allocation2 + $0x188] sm:$0xff] %v1065
      %1130 = vst [vmem:[#allocation2 + $0x190] sm:$0xff] %v1066
      %1131 = vst [vmem:[#allocation2 + $0x198] sm:$0xff] %v1067
      %1132 = vst [vmem:[#allocation2 + $0x1a0] sm:$0xff] %v1068
      %1133 = vst [vmem:[#allocation2 + $0x1a8] sm:$0xff] %v1069
      %1134 = vst [vmem:[#allocation2 + $0x1b0] sm:$0xff] %v1070
      %1135 = vst [vmem:[#allocation2 + $0x1b8] sm:$0xff] %v1071
      %1136 = vst [vmem:[#allocation2 + $0x1c0] sm:$0xff] %v1072
      %1137 = vst [vmem:[#allocation2 + $0x1c8] sm:$0xff] %v1073
      %1138 = vst [vmem:[#allocation2 + $0x1d0] sm:$0xff] %v1074
      %1139 = vst [vmem:[#allocation2 + $0x1d8] sm:$0xff] %v1075
      %1140 = vst [vmem:[#allocation2 + $0x1e0] sm:$0xff] %v1076
      %1141 = vst [vmem:[#allocation2 + $0x1e8] sm:$0xff] %v1077
      %1142 = vst [vmem:[#allocation2 + $0x1f0] sm:$0xff] %v1078
      %1143 = vst [vmem:[#allocation2 + $0x1f8] sm:$0xff] %v1079
      // Predicated region
      $region37: #{wild_relation_network_forward.6} parent=31 // pred_check
        %p1144 = pneg %p260
      $region38: #{wild_relation_network_forward.6} parent=31 // pred_check_branch
        %1146 = sbr.rel (%p1144) target = $region40
      $region39: #{wild_relation_network_forward.6} parent=31 // pred_region
        %v1147 = vld [vmem:[#allocation2] sm:$0xff]
        %v1148 = vld [vmem:[#allocation2 + $0x8] sm:$0xff]
        %v1149 = vld [vmem:[#allocation2 + $0x10] sm:$0xff]
        %v1150 = vld [vmem:[#allocation2 + $0x18] sm:$0xff]
        %v1151 = vld [vmem:[#allocation2 + $0x20] sm:$0xff]
        %v1152 = vld [vmem:[#allocation2 + $0x28] sm:$0xff]
        %v1153 = vld [vmem:[#allocation2 + $0x30] sm:$0xff]
        %v1154 = vld [vmem:[#allocation2 + $0x38] sm:$0xff]
        %v1155 = vld [vmem:[#allocation2 + $0x40] sm:$0xff]
        %v1156 = vld [vmem:[#allocation2 + $0x48] sm:$0xff]
        %v1157 = vld [vmem:[#allocation2 + $0x50] sm:$0xff]
        %v1158 = vld [vmem:[#allocation2 + $0x58] sm:$0xff]
        %v1159 = vld [vmem:[#allocation2 + $0x60] sm:$0xff]
        %v1160 = vld [vmem:[#allocation2 + $0x68] sm:$0xff]
        %v1161 = vld [vmem:[#allocation2 + $0x70] sm:$0xff]
        %v1162 = vld [vmem:[#allocation2 + $0x78] sm:$0xff]
        %v1163 = vld [vmem:[#allocation2 + $0x80] sm:$0xff]
        %v1164 = vld [vmem:[#allocation2 + $0x88] sm:$0xff]
        %v1165 = vld [vmem:[#allocation2 + $0x90] sm:$0xff]
        %v1166 = vld [vmem:[#allocation2 + $0x98] sm:$0xff]
        %v1167 = vld [vmem:[#allocation2 + $0xa0] sm:$0xff]
        %v1168 = vld [vmem:[#allocation2 + $0xa8] sm:$0xff]
        %v1169 = vld [vmem:[#allocation2 + $0xb0] sm:$0xff]
        %v1170 = vld [vmem:[#allocation2 + $0xb8] sm:$0xff]
        %v1171 = vld [vmem:[#allocation2 + $0xc0] sm:$0xff]
        %v1172 = vld [vmem:[#allocation2 + $0xc8] sm:$0xff]
        %v1173 = vld [vmem:[#allocation2 + $0xd0] sm:$0xff]
        %v1174 = vld [vmem:[#allocation2 + $0xd8] sm:$0xff]
        %v1175 = vld [vmem:[#allocation2 + $0xe0] sm:$0xff]
        %v1176 = vld [vmem:[#allocation2 + $0xe8] sm:$0xff]
        %v1177 = vld [vmem:[#allocation2 + $0xf0] sm:$0xff]
        %v1178 = vld [vmem:[#allocation2 + $0xf8] sm:$0xff]
        %v1179 = vld [vmem:[#allocation2 + $0x100] sm:$0xff]
        %v1180 = vld [vmem:[#allocation2 + $0x108] sm:$0xff]
        %v1181 = vld [vmem:[#allocation2 + $0x110] sm:$0xff]
        %v1182 = vld [vmem:[#allocation2 + $0x118] sm:$0xff]
        %v1183 = vld [vmem:[#allocation2 + $0x120] sm:$0xff]
        %v1184 = vld [vmem:[#allocation2 + $0x128] sm:$0xff]
        %v1185 = vld [vmem:[#allocation2 + $0x130] sm:$0xff]
        %v1186 = vld [vmem:[#allocation2 + $0x138] sm:$0xff]
        %v1187 = vld [vmem:[#allocation2 + $0x140] sm:$0xff]
        %v1188 = vld [vmem:[#allocation2 + $0x148] sm:$0xff]
        %v1189 = vld [vmem:[#allocation2 + $0x150] sm:$0xff]
        %v1190 = vld [vmem:[#allocation2 + $0x158] sm:$0xff]
        %v1191 = vld [vmem:[#allocation2 + $0x160] sm:$0xff]
        %v1192 = vld [vmem:[#allocation2 + $0x168] sm:$0xff]
        %v1193 = vld [vmem:[#allocation2 + $0x170] sm:$0xff]
        %v1194 = vld [vmem:[#allocation2 + $0x178] sm:$0xff]
        %v1195 = vld [vmem:[#allocation2 + $0x180] sm:$0xff]
        %v1196 = vld [vmem:[#allocation2 + $0x188] sm:$0xff]
        %v1197 = vld [vmem:[#allocation2 + $0x190] sm:$0xff]
        %v1198 = vld [vmem:[#allocation2 + $0x198] sm:$0xff]
        %v1199 = vld [vmem:[#allocation2 + $0x1a0] sm:$0xff]
        %v1200 = vld [vmem:[#allocation2 + $0x1a8] sm:$0xff]
        %v1201 = vld [vmem:[#allocation2 + $0x1b0] sm:$0xff]
        %v1202 = vld [vmem:[#allocation2 + $0x1b8] sm:$0xff]
        %v1203 = vld [vmem:[#allocation2 + $0x1c0] sm:$0xff]
        %v1204 = vld [vmem:[#allocation2 + $0x1c8] sm:$0xff]
        %v1205 = vld [vmem:[#allocation2 + $0x1d0] sm:$0xff]
        %v1206 = vld [vmem:[#allocation2 + $0x1d8] sm:$0xff]
        %v1207 = vld [vmem:[#allocation2 + $0x1e0] sm:$0xff]
        %v1208 = vld [vmem:[#allocation2 + $0x1e8] sm:$0xff]
        %v1209 = vld [vmem:[#allocation2 + $0x1f0] sm:$0xff]
        %v1210 = vld [vmem:[#allocation2 + $0x1f8] sm:$0xff]
        %v1211 = vld [vmem:[%s249] sm:$0x1]
        %v1213 = vlaneseq
        %v1214 = vshrl.u32 %v1213, 7
        %v1215 = vsub.s32 0, %v1214
        %v1216 = vrot.slane %v1211, %v1215
        %v1218 = vadd.f32 %v1147, %v1216
        %v1219 = vadd.f32 %v1148, %v1216
        %v1220 = vadd.f32 %v1149, %v1216
        %v1221 = vadd.f32 %v1150, %v1216
        %v1222 = vadd.f32 %v1151, %v1216
        %v1223 = vadd.f32 %v1152, %v1216
        %v1224 = vadd.f32 %v1153, %v1216
        %v1225 = vadd.f32 %v1154, %v1216
        %v1226 = vadd.f32 %v1155, %v1216
        %v1227 = vadd.f32 %v1156, %v1216
        %v1228 = vadd.f32 %v1157, %v1216
        %v1229 = vadd.f32 %v1158, %v1216
        %v1230 = vadd.f32 %v1159, %v1216
        %v1231 = vadd.f32 %v1160, %v1216
        %v1232 = vadd.f32 %v1161, %v1216
        %v1233 = vadd.f32 %v1162, %v1216
        %v1234 = vadd.f32 %v1163, %v1216
        %v1235 = vadd.f32 %v1164, %v1216
        %v1236 = vadd.f32 %v1165, %v1216
        %v1237 = vadd.f32 %v1166, %v1216
        %v1238 = vadd.f32 %v1167, %v1216
        %v1239 = vadd.f32 %v1168, %v1216
        %v1240 = vadd.f32 %v1169, %v1216
        %v1241 = vadd.f32 %v1170, %v1216
        %v1242 = vadd.f32 %v1171, %v1216
        %v1243 = vadd.f32 %v1172, %v1216
        %v1244 = vadd.f32 %v1173, %v1216
        %v1245 = vadd.f32 %v1174, %v1216
        %v1246 = vadd.f32 %v1175, %v1216
        %v1247 = vadd.f32 %v1176, %v1216
        %v1248 = vadd.f32 %v1177, %v1216
        %v1249 = vadd.f32 %v1178, %v1216
        %v1250 = vadd.f32 %v1179, %v1216
        %v1251 = vadd.f32 %v1180, %v1216
        %v1252 = vadd.f32 %v1181, %v1216
        %v1253 = vadd.f32 %v1182, %v1216
        %v1254 = vadd.f32 %v1183, %v1216
        %v1255 = vadd.f32 %v1184, %v1216
        %v1256 = vadd.f32 %v1185, %v1216
        %v1257 = vadd.f32 %v1186, %v1216
        %v1258 = vadd.f32 %v1187, %v1216
        %v1259 = vadd.f32 %v1188, %v1216
        %v1260 = vadd.f32 %v1189, %v1216
        %v1261 = vadd.f32 %v1190, %v1216
        %v1262 = vadd.f32 %v1191, %v1216
        %v1263 = vadd.f32 %v1192, %v1216
        %v1264 = vadd.f32 %v1193, %v1216
        %v1265 = vadd.f32 %v1194, %v1216
        %v1266 = vadd.f32 %v1195, %v1216
        %v1267 = vadd.f32 %v1196, %v1216
        %v1268 = vadd.f32 %v1197, %v1216
        %v1269 = vadd.f32 %v1198, %v1216
        %v1270 = vadd.f32 %v1199, %v1216
        %v1271 = vadd.f32 %v1200, %v1216
        %v1272 = vadd.f32 %v1201, %v1216
        %v1273 = vadd.f32 %v1202, %v1216
        %v1274 = vadd.f32 %v1203, %v1216
        %v1275 = vadd.f32 %v1204, %v1216
        %v1276 = vadd.f32 %v1205, %v1216
        %v1277 = vadd.f32 %v1206, %v1216
        %v1278 = vadd.f32 %v1207, %v1216
        %v1279 = vadd.f32 %v1208, %v1216
        %v1280 = vadd.f32 %v1209, %v1216
        %v1281 = vadd.f32 %v1210, %v1216
        %v1282 = vmax.f32 %v1218, 0.0
        %v1283 = vmax.f32 %v1219, 0.0
        %v1284 = vmax.f32 %v1220, 0.0
        %v1285 = vmax.f32 %v1221, 0.0
        %v1286 = vmax.f32 %v1222, 0.0
        %v1287 = vmax.f32 %v1223, 0.0
        %v1288 = vmax.f32 %v1224, 0.0
        %v1289 = vmax.f32 %v1225, 0.0
        %v1290 = vmax.f32 %v1226, 0.0
        %v1291 = vmax.f32 %v1227, 0.0
        %v1292 = vmax.f32 %v1228, 0.0
        %v1293 = vmax.f32 %v1229, 0.0
        %v1294 = vmax.f32 %v1230, 0.0
        %v1295 = vmax.f32 %v1231, 0.0
        %v1296 = vmax.f32 %v1232, 0.0
        %v1297 = vmax.f32 %v1233, 0.0
        %v1298 = vmax.f32 %v1234, 0.0
        %v1299 = vmax.f32 %v1235, 0.0
        %v1300 = vmax.f32 %v1236, 0.0
        %v1301 = vmax.f32 %v1237, 0.0
        %v1302 = vmax.f32 %v1238, 0.0
        %v1303 = vmax.f32 %v1239, 0.0
        %v1304 = vmax.f32 %v1240, 0.0
        %v1305 = vmax.f32 %v1241, 0.0
        %v1306 = vmax.f32 %v1242, 0.0
        %v1307 = vmax.f32 %v1243, 0.0
        %v1308 = vmax.f32 %v1244, 0.0
        %v1309 = vmax.f32 %v1245, 0.0
        %v1310 = vmax.f32 %v1246, 0.0
        %v1311 = vmax.f32 %v1247, 0.0
        %v1312 = vmax.f32 %v1248, 0.0
        %v1313 = vmax.f32 %v1249, 0.0
        %v1314 = vmax.f32 %v1250, 0.0
        %v1315 = vmax.f32 %v1251, 0.0
        %v1316 = vmax.f32 %v1252, 0.0
        %v1317 = vmax.f32 %v1253, 0.0
        %v1318 = vmax.f32 %v1254, 0.0
        %v1319 = vmax.f32 %v1255, 0.0
        %v1320 = vmax.f32 %v1256, 0.0
        %v1321 = vmax.f32 %v1257, 0.0
        %v1322 = vmax.f32 %v1258, 0.0
        %v1323 = vmax.f32 %v1259, 0.0
        %v1324 = vmax.f32 %v1260, 0.0
        %v1325 = vmax.f32 %v1261, 0.0
        %v1326 = vmax.f32 %v1262, 0.0
        %v1327 = vmax.f32 %v1263, 0.0
        %v1328 = vmax.f32 %v1264, 0.0
        %v1329 = vmax.f32 %v1265, 0.0
        %v1330 = vmax.f32 %v1266, 0.0
        %v1331 = vmax.f32 %v1267, 0.0
        %v1332 = vmax.f32 %v1268, 0.0
        %v1333 = vmax.f32 %v1269, 0.0
        %v1334 = vmax.f32 %v1270, 0.0
        %v1335 = vmax.f32 %v1271, 0.0
        %v1336 = vmax.f32 %v1272, 0.0
        %v1337 = vmax.f32 %v1273, 0.0
        %v1338 = vmax.f32 %v1274, 0.0
        %v1339 = vmax.f32 %v1275, 0.0
        %v1340 = vmax.f32 %v1276, 0.0
        %v1341 = vmax.f32 %v1277, 0.0
        %v1342 = vmax.f32 %v1278, 0.0
        %v1343 = vmax.f32 %v1279, 0.0
        %v1344 = vmax.f32 %v1280, 0.0
        %v1345 = vmax.f32 %v1281, 0.0
        %v1346 = vpack.c.bf16 %v1283, %v1282
        %v1347 = vpack.c.bf16 %v1285, %v1284
        %v1348 = vpack.c.bf16 %v1287, %v1286
        %v1349 = vpack.c.bf16 %v1289, %v1288
        %v1350 = vpack.c.bf16 %v1291, %v1290
        %v1351 = vpack.c.bf16 %v1293, %v1292
        %v1352 = vpack.c.bf16 %v1295, %v1294
        %v1353 = vpack.c.bf16 %v1297, %v1296
        %v1354 = vpack.c.bf16 %v1299, %v1298
        %v1355 = vpack.c.bf16 %v1301, %v1300
        %v1356 = vpack.c.bf16 %v1303, %v1302
        %v1357 = vpack.c.bf16 %v1305, %v1304
        %v1358 = vpack.c.bf16 %v1307, %v1306
        %v1359 = vpack.c.bf16 %v1309, %v1308
        %v1360 = vpack.c.bf16 %v1311, %v1310
        %v1361 = vpack.c.bf16 %v1313, %v1312
        %v1362 = vpack.c.bf16 %v1315, %v1314
        %v1363 = vpack.c.bf16 %v1317, %v1316
        %v1364 = vpack.c.bf16 %v1319, %v1318
        %v1365 = vpack.c.bf16 %v1321, %v1320
        %v1366 = vpack.c.bf16 %v1323, %v1322
        %v1367 = vpack.c.bf16 %v1325, %v1324
        %v1368 = vpack.c.bf16 %v1327, %v1326
        %v1369 = vpack.c.bf16 %v1329, %v1328
        %v1370 = vpack.c.bf16 %v1331, %v1330
        %v1371 = vpack.c.bf16 %v1333, %v1332
        %v1372 = vpack.c.bf16 %v1335, %v1334
        %v1373 = vpack.c.bf16 %v1337, %v1336
        %v1374 = vpack.c.bf16 %v1339, %v1338
        %v1375 = vpack.c.bf16 %v1341, %v1340
        %v1376 = vpack.c.bf16 %v1343, %v1342
        %v1377 = vpack.c.bf16 %v1345, %v1344
        %v1410 = vunpack.c.l.b16 %v1346
        %v1411 = vunpack.c.h.b16 %v1346
        %v1412 = vunpack.c.l.b16 %v1347
        %v1413 = vunpack.c.h.b16 %v1347
        %v1414 = vunpack.c.l.b16 %v1348
        %v1415 = vunpack.c.h.b16 %v1348
        %v1416 = vunpack.c.l.b16 %v1349
        %v1417 = vunpack.c.h.b16 %v1349
        %v1418 = vunpack.c.l.b16 %v1350
        %v1419 = vunpack.c.h.b16 %v1350
        %v1420 = vunpack.c.l.b16 %v1351
        %v1421 = vunpack.c.h.b16 %v1351
        %v1422 = vunpack.c.l.b16 %v1352
        %v1423 = vunpack.c.h.b16 %v1352
        %v1424 = vunpack.c.l.b16 %v1353
        %v1425 = vunpack.c.h.b16 %v1353
        %v1426 = vunpack.c.l.b16 %v1354
        %v1427 = vunpack.c.h.b16 %v1354
        %v1428 = vunpack.c.l.b16 %v1355
        %v1429 = vunpack.c.h.b16 %v1355
        %v1430 = vunpack.c.l.b16 %v1356
        %v1431 = vunpack.c.h.b16 %v1356
        %v1432 = vunpack.c.l.b16 %v1357
        %v1433 = vunpack.c.h.b16 %v1357
        %v1434 = vunpack.c.l.b16 %v1358
        %v1435 = vunpack.c.h.b16 %v1358
        %v1436 = vunpack.c.l.b16 %v1359
        %v1437 = vunpack.c.h.b16 %v1359
        %v1438 = vunpack.c.l.b16 %v1360
        %v1439 = vunpack.c.h.b16 %v1360
        %v1440 = vunpack.c.l.b16 %v1361
        %v1441 = vunpack.c.h.b16 %v1361
        %v1442 = vunpack.c.l.b16 %v1362
        %v1443 = vunpack.c.h.b16 %v1362
        %v1444 = vunpack.c.l.b16 %v1363
        %v1445 = vunpack.c.h.b16 %v1363
        %v1446 = vunpack.c.l.b16 %v1364
        %v1447 = vunpack.c.h.b16 %v1364
        %v1448 = vunpack.c.l.b16 %v1365
        %v1449 = vunpack.c.h.b16 %v1365
        %v1450 = vunpack.c.l.b16 %v1366
        %v1451 = vunpack.c.h.b16 %v1366
        %v1452 = vunpack.c.l.b16 %v1367
        %v1453 = vunpack.c.h.b16 %v1367
        %v1454 = vunpack.c.l.b16 %v1368
        %v1455 = vunpack.c.h.b16 %v1368
        %v1456 = vunpack.c.l.b16 %v1369
        %v1457 = vunpack.c.h.b16 %v1369
        %v1458 = vunpack.c.l.b16 %v1370
        %v1459 = vunpack.c.h.b16 %v1370
        %v1460 = vunpack.c.l.b16 %v1371
        %v1461 = vunpack.c.h.b16 %v1371
        %v1462 = vunpack.c.l.b16 %v1372
        %v1463 = vunpack.c.h.b16 %v1372
        %v1464 = vunpack.c.l.b16 %v1373
        %v1465 = vunpack.c.h.b16 %v1373
        %v1466 = vunpack.c.l.b16 %v1374
        %v1467 = vunpack.c.h.b16 %v1374
        %v1468 = vunpack.c.l.b16 %v1375
        %v1469 = vunpack.c.h.b16 %v1375
        %v1470 = vunpack.c.l.b16 %v1376
        %v1471 = vunpack.c.h.b16 %v1376
        %v1472 = vunpack.c.l.b16 %v1377
        %v1473 = vunpack.c.h.b16 %v1377
        %v1474 = vpack.c.b16 %v1410, %v1410
        %v1475 = vpack.c.b16 %v1411, %v1411
        %v1476 = vpack.c.b16 %v1412, %v1412
        %v1477 = vpack.c.b16 %v1413, %v1413
        %v1478 = vpack.c.b16 %v1414, %v1414
        %v1479 = vpack.c.b16 %v1415, %v1415
        %v1480 = vpack.c.b16 %v1416, %v1416
        %v1481 = vpack.c.b16 %v1417, %v1417
        %v1482 = vpack.c.b16 %v1418, %v1418
        %v1483 = vpack.c.b16 %v1419, %v1419
        %v1484 = vpack.c.b16 %v1420, %v1420
        %v1485 = vpack.c.b16 %v1421, %v1421
        %v1486 = vpack.c.b16 %v1422, %v1422
        %v1487 = vpack.c.b16 %v1423, %v1423
        %v1488 = vpack.c.b16 %v1424, %v1424
        %v1489 = vpack.c.b16 %v1425, %v1425
        %v1490 = vpack.c.b16 %v1426, %v1426
        %v1491 = vpack.c.b16 %v1427, %v1427
        %v1492 = vpack.c.b16 %v1428, %v1428
        %v1493 = vpack.c.b16 %v1429, %v1429
        %v1494 = vpack.c.b16 %v1430, %v1430
        %v1495 = vpack.c.b16 %v1431, %v1431
        %v1496 = vpack.c.b16 %v1432, %v1432
        %v1497 = vpack.c.b16 %v1433, %v1433
        %v1498 = vpack.c.b16 %v1434, %v1434
        %v1499 = vpack.c.b16 %v1435, %v1435
        %v1500 = vpack.c.b16 %v1436, %v1436
        %v1501 = vpack.c.b16 %v1437, %v1437
        %v1502 = vpack.c.b16 %v1438, %v1438
        %v1503 = vpack.c.b16 %v1439, %v1439
        %v1504 = vpack.c.b16 %v1440, %v1440
        %v1505 = vpack.c.b16 %v1441, %v1441
        %v1506 = vpack.c.b16 %v1442, %v1442
        %v1507 = vpack.c.b16 %v1443, %v1443
        %v1508 = vpack.c.b16 %v1444, %v1444
        %v1509 = vpack.c.b16 %v1445, %v1445
        %v1510 = vpack.c.b16 %v1446, %v1446
        %v1511 = vpack.c.b16 %v1447, %v1447
        %v1512 = vpack.c.b16 %v1448, %v1448
        %v1513 = vpack.c.b16 %v1449, %v1449
        %v1514 = vpack.c.b16 %v1450, %v1450
        %v1515 = vpack.c.b16 %v1451, %v1451
        %v1516 = vpack.c.b16 %v1452, %v1452
        %v1517 = vpack.c.b16 %v1453, %v1453
        %v1518 = vpack.c.b16 %v1454, %v1454
        %v1519 = vpack.c.b16 %v1455, %v1455
        %v1520 = vpack.c.b16 %v1456, %v1456
        %v1521 = vpack.c.b16 %v1457, %v1457
        %v1522 = vpack.c.b16 %v1458, %v1458
        %v1523 = vpack.c.b16 %v1459, %v1459
        %v1524 = vpack.c.b16 %v1460, %v1460
        %v1525 = vpack.c.b16 %v1461, %v1461
        %v1526 = vpack.c.b16 %v1462, %v1462
        %v1527 = vpack.c.b16 %v1463, %v1463
        %v1528 = vpack.c.b16 %v1464, %v1464
        %v1529 = vpack.c.b16 %v1465, %v1465
        %v1530 = vpack.c.b16 %v1466, %v1466
        %v1531 = vpack.c.b16 %v1467, %v1467
        %v1532 = vpack.c.b16 %v1468, %v1468
        %v1533 = vpack.c.b16 %v1469, %v1469
        %v1534 = vpack.c.b16 %v1470, %v1470
        %v1535 = vpack.c.b16 %v1471, %v1471
        %v1536 = vpack.c.b16 %v1472, %v1472
        %v1537 = vpack.c.b16 %v1473, %v1473
        %1602 = vst [vmem:[%s257] sm:$0xf] %v1474
        %1603 = vst [vmem:[%s257 + $0x4] sm:$0xf] %v1475
        %1604 = vst [vmem:[%s257 + $0x8] sm:$0xf] %v1476
        %1605 = vst [vmem:[%s257 + $0xc] sm:$0xf] %v1477
        %1606 = vst [vmem:[%s257 + $0x10] sm:$0xf] %v1478
        %1607 = vst [vmem:[%s257 + $0x14] sm:$0xf] %v1479
        %1608 = vst [vmem:[%s257 + $0x18] sm:$0xf] %v1480
        %1609 = vst [vmem:[%s257 + $0x1c] sm:$0xf] %v1481
        %1610 = vst [vmem:[%s257 + $0x20] sm:$0xf] %v1482
        %1611 = vst [vmem:[%s257 + $0x24] sm:$0xf] %v1483
        %1612 = vst [vmem:[%s257 + $0x28] sm:$0xf] %v1484
        %1613 = vst [vmem:[%s257 + $0x2c] sm:$0xf] %v1485
        %1614 = vst [vmem:[%s257 + $0x30] sm:$0xf] %v1486
        %1615 = vst [vmem:[%s257 + $0x34] sm:$0xf] %v1487
        %1616 = vst [vmem:[%s257 + $0x38] sm:$0xf] %v1488
        %1617 = vst [vmem:[%s257 + $0x3c] sm:$0xf] %v1489
        %1618 = vst [vmem:[%s257 + $0x40] sm:$0xf] %v1490
        %1619 = vst [vmem:[%s257 + $0x44] sm:$0xf] %v1491
        %1620 = vst [vmem:[%s257 + $0x48] sm:$0xf] %v1492
        %1621 = vst [vmem:[%s257 + $0x4c] sm:$0xf] %v1493
        %1622 = vst [vmem:[%s257 + $0x50] sm:$0xf] %v1494
        %1623 = vst [vmem:[%s257 + $0x54] sm:$0xf] %v1495
        %1624 = vst [vmem:[%s257 + $0x58] sm:$0xf] %v1496
        %1625 = vst [vmem:[%s257 + $0x5c] sm:$0xf] %v1497
        %1626 = vst [vmem:[%s257 + $0x60] sm:$0xf] %v1498
        %1627 = vst [vmem:[%s257 + $0x64] sm:$0xf] %v1499
        %1628 = vst [vmem:[%s257 + $0x68] sm:$0xf] %v1500
        %1629 = vst [vmem:[%s257 + $0x6c] sm:$0xf] %v1501
        %1630 = vst [vmem:[%s257 + $0x70] sm:$0xf] %v1502
        %1631 = vst [vmem:[%s257 + $0x74] sm:$0xf] %v1503
        %1632 = vst [vmem:[%s257 + $0x78] sm:$0xf] %v1504
        %1633 = vst [vmem:[%s257 + $0x7c] sm:$0xf] %v1505
        %1634 = vst [vmem:[%s257 + $0x80] sm:$0xf] %v1506
        %1635 = vst [vmem:[%s257 + $0x84] sm:$0xf] %v1507
        %1636 = vst [vmem:[%s257 + $0x88] sm:$0xf] %v1508
        %1637 = vst [vmem:[%s257 + $0x8c] sm:$0xf] %v1509
        %1638 = vst [vmem:[%s257 + $0x90] sm:$0xf] %v1510
        %1639 = vst [vmem:[%s257 + $0x94] sm:$0xf] %v1511
        %1640 = vst [vmem:[%s257 + $0x98] sm:$0xf] %v1512
        %1641 = vst [vmem:[%s257 + $0x9c] sm:$0xf] %v1513
        %1642 = vst [vmem:[%s257 + $0xa0] sm:$0xf] %v1514
        %1643 = vst [vmem:[%s257 + $0xa4] sm:$0xf] %v1515
        %1644 = vst [vmem:[%s257 + $0xa8] sm:$0xf] %v1516
        %1645 = vst [vmem:[%s257 + $0xac] sm:$0xf] %v1517
        %1646 = vst [vmem:[%s257 + $0xb0] sm:$0xf] %v1518
        %1647 = vst [vmem:[%s257 + $0xb4] sm:$0xf] %v1519
        %1648 = vst [vmem:[%s257 + $0xb8] sm:$0xf] %v1520
        %1649 = vst [vmem:[%s257 + $0xbc] sm:$0xf] %v1521
        %1650 = vst [vmem:[%s257 + $0xc0] sm:$0xf] %v1522
        %1651 = vst [vmem:[%s257 + $0xc4] sm:$0xf] %v1523
        %1652 = vst [vmem:[%s257 + $0xc8] sm:$0xf] %v1524
        %1653 = vst [vmem:[%s257 + $0xcc] sm:$0xf] %v1525
        %1654 = vst [vmem:[%s257 + $0xd0] sm:$0xf] %v1526
        %1655 = vst [vmem:[%s257 + $0xd4] sm:$0xf] %v1527
        %1656 = vst [vmem:[%s257 + $0xd8] sm:$0xf] %v1528
        %1657 = vst [vmem:[%s257 + $0xdc] sm:$0xf] %v1529
        %1658 = vst [vmem:[%s257 + $0xe0] sm:$0xf] %v1530
        %1659 = vst [vmem:[%s257 + $0xe4] sm:$0xf] %v1531
        %1660 = vst [vmem:[%s257 + $0xe8] sm:$0xf] %v1532
        %1661 = vst [vmem:[%s257 + $0xec] sm:$0xf] %v1533
        %1662 = vst [vmem:[%s257 + $0xf0] sm:$0xf] %v1534
        %1663 = vst [vmem:[%s257 + $0xf4] sm:$0xf] %v1535
        %1664 = vst [vmem:[%s257 + $0xf8] sm:$0xf] %v1536
        %1665 = vst [vmem:[%s257 + $0xfc] sm:$0xf] %v1537
      $region40: #{wild_relation_network_forward.6} parent=31 // pred_fallthru
        _
      %s1666 = smul.u32 64, %s19
      %p1667 = scmp.lt.s32.totalorder %s1666, 191
      %s1668 = scalar_select %p1667, %s1666, 191
      %p1669 = scmp.lt.s32.totalorder %s20, 0
      %s1670 = scalar_select %p1669, %s20, 0
      %s1671 = sadd.s32 %s1670, %s1668
      %s1672 = smul.addr %s1671, 4
      %s1673 = scalar_lea.vmem %s3, %s1672
      // Predicated region
      $region41: #{wild_relation_network_forward.6} parent=31 // pred_check
        %p1674 = pneg %p135
      $region42: #{wild_relation_network_forward.6} parent=31 // pred_check_branch
        %1676 = sbr.rel (%p1674) target = $region44
      $region43: #{wild_relation_network_forward.6} parent=31 // pred_region
        %s1677 = smul.u32 64, %s19
      $region44: #{wild_relation_network_forward.6} parent=31 // pred_fallthru
        _
    $region32: #{wild_relation_network_forward.6} parent=5 // pred_fallthru
      _
    %p1678 = scmp.le.s32.totalorder 2, %s9
    // Predicated region
    $region45: #{wild_relation_network_forward.6} parent=5 // pred_check
      %p1679 = pneg %p1678
    $region46: #{wild_relation_network_forward.6} parent=5 // pred_check_branch
      %1681 = sbr.rel (%p1679) target = $region48
    $region47: #{wild_relation_network_forward.6} parent=5 // pred_region
      %s1682 = ssub.s32 %s9, 2
      // Predicated region
      $region49: #{wild_relation_network_forward.6} parent=47 // pred_check
        %p1683 = pneg %p141
      $region50: #{wild_relation_network_forward.6} parent=47 // pred_check_branch
        %1685 = sbr.rel (%p1683) target = $region52
      $region51: #{wild_relation_network_forward.6} parent=47 // pred_region
        %s1686 = smul.u32 64, %s22
        %p1687 = scmp.lt.s32.totalorder %s1686, 191
        %s1688 = scalar_select %p1687, %s1686, 191
        %p1689 = scmp.lt.s32.totalorder %s23, 0
        %s1690 = scalar_select %p1689, %s23, 0
        %s1691 = sadd.s32 %s1690, %s1688
        %s1692 = smul.addr %s1691, 4
        %s1693 = scalar_lea.vmem %s3, %s1692
      $region52: #{wild_relation_network_forward.6} parent=47 // pred_fallthru
        _
    $region48: #{wild_relation_network_forward.6} parent=5 // pred_fallthru
      _
  $region6: #{wild_relation_network_forward.6} parent=0 // loop_footer
    %s13 = sadd.s32 1, %s9
  $region7: #{wild_relation_network_forward.6} parent=0 // loop_footer_branch
    %8 = sbr.rel target = $region3
  $region8: #{wild_relation_network_forward.6} parent=0 // loop_exit
    _

// kernel: wild_relation_network_forward.7
$region0: #{wild_relation_network_forward.7}
  #allocation0 [shape = 'u32[]', space=smem, size = 0x4, offset = 0x4, fixed_abs, tag = 'smem constant byte address 0x4 - core index']
  #allocation1 [shape = 'u32[144,128]{1,0:T(1,128)}', space=vmem, size = 0x12000, scoped, tag = 'internal scratch']
  %s0 = inlined_call_operand.vmem [shape: bf16[24,110,128], index: 0, kind: input, shape index: {}]
  %s1 = inlined_call_operand.vmem [shape: bf16[9,128,128], index: 1, kind: input, shape index: {}]
  %s2 = inlined_call_operand.vmem [shape: f32[1,128], index: 2, kind: input, shape index: {}]
  %s3 = inlined_call_operand.vmem [shape: bf16[24,80,128], index: 3, kind: output, shape index: {}]
  %s4 = sld [smem:[#allocation0]]
  $region45: #{wild_relation_network_forward.7} parent=0
    _
  %s6 = ssub.s32 1, %s4
  %s7 = scalar_select 0, %s6, %s4
  loop: start=0, step=1, limit=26
  $region2: #{wild_relation_network_forward.7} parent=0 // loop_pre_header
    _
  $region3: #{wild_relation_network_forward.7} parent=0 // loop_header
    %s9 = sphi 0, %s13
    %p10 = scmp.ge.s32.totalorder %s9, 26
    %s19 = sphi 0, %s21
    %s22 = sphi 0, %s19
    %s23 = sphi 0, %s22
    %s39 = sphi 0, %s23
    %s43 = sphi 0, %s43
    %s45 = sphi 0, %s43
    %s46 = sphi 0, %s45
    %s60 = sphi 0, %s46
    %s64 = sphi 0, %s64
    %s66 = sphi 0, %s64
    %s67 = sphi 0, %s66
    %s81 = sphi 0, %s67
    %s87 = sphi 0, %s89
    %s90 = sphi 0, %s87
    %s91 = sphi 0, %s90
    %s107 = sphi 0, %s91
  $region4: #{wild_relation_network_forward.7} parent=0 // loop_header_branch
    %12 = sbr.rel (%p10) target = $region8
  $region5: #{wild_relation_network_forward.7} parent=0 // loop_body
    %s14 = ssub.s32 %s9, 1
    %s15 = ssub.s32 %s9, 2
    %s16 = sadd.s32 %s9, 1
    %s17 = ssub.s32 %s9, %s16
    %p18 = scmp.eq.s32.totalorder %s17, 0
    %s20 = sadd.s32 %s19, 1
    %s21 = scalar_select %p18, %s19, %s20
    %p24 = pneg %p18
    %p25 = scmp.eq.s32.totalorder %s9, 23
    %p26 = por %p24, %p25
    %p27 = scmp.ne.s32.totalorder %s19, %s22
    %p28 = scmp.eq.s32.totalorder %s9, 0
    %p29 = por %p27, %p28
    %p30 = scmp.ne.s32.totalorder %s19, %s22
    %p31 = scmp.eq.s32.totalorder %s14, 23
    %p32 = por %p30, %p31
    %p33 = scmp.ne.s32.totalorder %s22, %s23
    %p34 = scmp.eq.s32.totalorder %s14, 0
    %p35 = por %p33, %p34
    %p36 = scmp.ne.s32.totalorder %s22, %s23
    %p37 = scmp.eq.s32.totalorder %s15, 23
    %p38 = por %p36, %p37
    %p40 = scmp.ne.s32.totalorder %s23, %s39
    %p41 = scmp.eq.s32.totalorder %s15, 0
    %p42 = por %p40, %p41
    %s44 = sadd.s32 %s43, 1
    %p47 = scmp.eq.s32.totalorder %s9, 23
    %p48 = scmp.ne.s32.totalorder %s43, %s45
    %p49 = scmp.eq.s32.totalorder %s9, 0
    %p50 = por %p48, %p49
    %p51 = scmp.ne.s32.totalorder %s43, %s45
    %p52 = scmp.eq.s32.totalorder %s14, 23
    %p53 = por %p51, %p52
    %p54 = scmp.ne.s32.totalorder %s45, %s46
    %p55 = scmp.eq.s32.totalorder %s14, 0
    %p56 = por %p54, %p55
    %p57 = scmp.ne.s32.totalorder %s45, %s46
    %p58 = scmp.eq.s32.totalorder %s15, 23
    %p59 = por %p57, %p58
    %p61 = scmp.ne.s32.totalorder %s46, %s60
    %p62 = scmp.eq.s32.totalorder %s15, 0
    %p63 = por %p61, %p62
    %s65 = sadd.s32 %s64, 1
    %p68 = scmp.eq.s32.totalorder %s9, 23
    %p69 = scmp.ne.s32.totalorder %s64, %s66
    %p70 = scmp.eq.s32.totalorder %s9, 0
    %p71 = por %p69, %p70
    %p72 = scmp.ne.s32.totalorder %s64, %s66
    %p73 = scmp.eq.s32.totalorder %s14, 23
    %p74 = por %p72, %p73
    %p75 = scmp.ne.s32.totalorder %s66, %s67
    %p76 = scmp.eq.s32.totalorder %s14, 0
    %p77 = por %p75, %p76
    %p78 = scmp.ne.s32.totalorder %s66, %s67
    %p79 = scmp.eq.s32.totalorder %s15, 23
    %p80 = por %p78, %p79
    %p82 = scmp.ne.s32.totalorder %s67, %s81
    %p83 = scmp.eq.s32.totalorder %s15, 0
    %p84 = por %p82, %p83
    %s85 = ssub.s32 %s9, %s16
    %p86 = scmp.eq.s32.totalorder %s85, 0
    %s88 = sadd.s32 %s87, 1
    %s89 = scalar_select %p86, %s87, %s88
    %p92 = pneg %p86
    %p93 = scmp.eq.s32.totalorder %s9, 23
    %p94 = por %p92, %p93
    %p95 = scmp.ne.s32.totalorder %s87, %s90
    %p96 = scmp.eq.s32.totalorder %s9, 0
    %p97 = por %p95, %p96
    %p98 = scmp.ne.s32.totalorder %s87, %s90
    %p99 = scmp.eq.s32.totalorder %s14, 23
    %p100 = por %p98, %p99
    %p101 = scmp.ne.s32.totalorder %s90, %s91
    %p102 = scmp.eq.s32.totalorder %s14, 0
    %p103 = por %p101, %p102
    %p104 = scmp.ne.s32.totalorder %s90, %s91
    %p105 = scmp.eq.s32.totalorder %s15, 23
    %p106 = por %p104, %p105
    %p108 = scmp.ne.s32.totalorder %s91, %s107
    %p109 = scmp.eq.s32.totalorder %s15, 0
    %p110 = por %p108, %p109
    %p111 = scmp.le.s32.totalorder 1, %s9
    %p112 = scmp.lt.s32.totalorder %s9, 25
    %p113 = pnand %p111, %p112
    %p114 = pneg %p113
    // Predicated region
    $region9: #{wild_relation_network_forward.7} parent=5 // pred_check
      _
    $region10: #{wild_relation_network_forward.7} parent=5 // pred_check_branch
      %116 = sbr.rel (%p113) target = $region12
    $region11: #{wild_relation_network_forward.7} parent=5 // pred_region
      %s117 = ssub.s32 %s9, 1
      // Predicated region
      $region13: #{wild_relation_network_forward.7} parent=11 // pred_check
        %p118 = pneg %p56
      $region14: #{wild_relation_network_forward.7} parent=11 // pred_check_branch
        %120 = sbr.rel (%p118) target = $region16
      $region15: #{wild_relation_network_forward.7} parent=11 // pred_region
        _
      $region16: #{wild_relation_network_forward.7} parent=11 // pred_fallthru
        _
      // Predicated region
      $region17: #{wild_relation_network_forward.7} parent=11 // pred_check
        %p121 = pneg %p77
      $region18: #{wild_relation_network_forward.7} parent=11 // pred_check_branch
        %123 = sbr.rel (%p121) target = $region20
      $region19: #{wild_relation_network_forward.7} parent=11 // pred_region
        _
      $region20: #{wild_relation_network_forward.7} parent=11 // pred_fallthru
        _
    $region12: #{wild_relation_network_forward.7} parent=5 // pred_fallthru
      _
    %p124 = scmp.lt.s32.totalorder %s9, 24
    // Predicated region
    $region21: #{wild_relation_network_forward.7} parent=5 // pred_check
      %p125 = pneg %p124
    $region22: #{wild_relation_network_forward.7} parent=5 // pred_check_branch
      %127 = sbr.rel (%p125) target = $region24
    $region23: #{wild_relation_network_forward.7} parent=5 // pred_region
      // Predicated region
      $region25: #{wild_relation_network_forward.7} parent=23 // pred_check
        %p128 = pneg %p29
      $region26: #{wild_relation_network_forward.7} parent=23 // pred_check_branch
        %130 = sbr.rel (%p128) target = $region28
      $region27: #{wild_relation_network_forward.7} parent=23 // pred_region
        %p131 = scmp.lt.s32.totalorder %s9, 23
        %s132 = scalar_select %p131, %s9, 23
        %s133 = smul.addr %s132, 14
        %s134 = smul.addr %s133, 4
        %s135 = scalar_lea.vmem %s0, %s134
      $region28: #{wild_relation_network_forward.7} parent=23 // pred_fallthru
        _
    $region24: #{wild_relation_network_forward.7} parent=5 // pred_fallthru
      _
    %p136 = scmp.le.s32.totalorder 1, %s9
    %p137 = scmp.lt.s32.totalorder %s9, 25
    %p138 = pnand %p136, %p137
    %p139 = pneg %p138
    // Predicated region
    $region29: #{wild_relation_network_forward.7} parent=5 // pred_check
      _
    $region30: #{wild_relation_network_forward.7} parent=5 // pred_check_branch
      %141 = sbr.rel (%p138) target = $region32
    $region31: #{wild_relation_network_forward.7} parent=5 // pred_region
      %s142 = ssub.s32 %s9, 1
      %p143 = scmp.lt.s32.totalorder %s14, 23
      %s144 = scalar_select %p143, %s14, 23
      %s145 = smul.addr %s144, 14
      %s146 = smul.addr %s145, 4
      %s147 = scalar_lea.vmem %s0, %s146
      %p148 = pneg %p35
      %p149 = pneg %p32
      %p150 = pneg %p56
      %p151 = pneg %p53
      %p152 = pneg %p77
      %p153 = pneg %p74
      %p154 = pneg %p103
      %p155 = pneg %p100
      %p156 = scmp.lt.s32.totalorder %s14, 23
      %s157 = scalar_select %p156, %s14, 23
      %s158 = smul.addr %s157, 10
      %s159 = smul.addr %s158, 4
      %s160 = scalar_lea.vmem %s3, %s159
      %p161 = scmp.lt.s32.totalorder %s14, 23
      %s162 = scalar_select %p161, %s14, 23
      %s163 = smul.addr %s162, 14
      %s164 = smul.addr %s163, 4
      %s165 = scalar_lea.vmem %s0, %s164
      %p166 = scmp.lt.s32.totalorder %s14, 23
      %s167 = scalar_select %p166, %s14, 23
      %s168 = smul.addr %s167, 10
      %s169 = smul.addr %s168, 4
      %s170 = scalar_lea.vmem %s3, %s169
      %v172 = vld [vmem:[%s2] sm:$0x1]
      %v173 = vld [vmem:[%s165] sm:$0xf]
      %v174 = vld [vmem:[%s165 + $0x4] sm:$0xf]
      %v175 = vld [vmem:[%s165 + $0x8] sm:$0xf]
      %v176 = vld [vmem:[%s165 + $0xc] sm:$0xf]
      %v177 = vld [vmem:[%s165 + $0x10] sm:$0xf]
      %v178 = vld [vmem:[%s165 + $0x14] sm:$0xf]
      %v179 = vld [vmem:[%s165 + $0x18] sm:$0xf]
      %v180 = vld [vmem:[%s165 + $0x1c] sm:$0xf]
      %v181 = vld [vmem:[%s165 + $0x20] sm:$0xf]
      %v182 = vld [vmem:[%s165 + $0x24] sm:$0xf]
      %v183 = vld [vmem:[%s1] sm:$0xf]
      %v184 = vld [vmem:[%s1 + $0x4] sm:$0xf]
      %v185 = vld [vmem:[%s1 + $0x8] sm:$0xf]
      %v186 = vld [vmem:[%s1 + $0xc] sm:$0xf]
      %v187 = vld [vmem:[%s1 + $0x10] sm:$0xf]
      %v188 = vld [vmem:[%s1 + $0x14] sm:$0xf]
      %v189 = vld [vmem:[%s1 + $0x18] sm:$0xf]
      %v190 = vld [vmem:[%s1 + $0x1c] sm:$0xf]
      %v191 = vld [vmem:[%s1 + $0x20] sm:$0xf]
      %v192 = vld [vmem:[%s1 + $0x24] sm:$0xf]
      %v193 = vld [vmem:[%s1 + $0x28] sm:$0xf]
      %v194 = vld [vmem:[%s1 + $0x2c] sm:$0xf]
      %v195 = vld [vmem:[%s1 + $0x30] sm:$0xf]
      %v196 = vld [vmem:[%s1 + $0x34] sm:$0xf]
      %v197 = vld [vmem:[%s1 + $0x38] sm:$0xf]
      %v198 = vld [vmem:[%s1 + $0x3c] sm:$0xf]
      %v199 = vld [vmem:[%s165 + $0x28] sm:$0x1]
      %s200 = scalar_lea.vmem %s1, 64
      %v201 = vld [vmem:[%s200] sm:$0xf]
      %v202 = vld [vmem:[%s200 + $0x4] sm:$0xf]
      %v203 = vld [vmem:[%s200 + $0x8] sm:$0xf]
      %v204 = vld [vmem:[%s200 + $0xc] sm:$0xf]
      %v205 = vld [vmem:[%s200 + $0x10] sm:$0xf]
      %v206 = vld [vmem:[%s200 + $0x14] sm:$0xf]
      %v207 = vld [vmem:[%s200 + $0x18] sm:$0xf]
      %v208 = vld [vmem:[%s200 + $0x1c] sm:$0xf]
      %v209 = vld [vmem:[%s200 + $0x20] sm:$0xf]
      %v210 = vld [vmem:[%s200 + $0x24] sm:$0xf]
      %v211 = vld [vmem:[%s200 + $0x28] sm:$0xf]
      %v212 = vld [vmem:[%s200 + $0x2c] sm:$0xf]
      %v213 = vld [vmem:[%s200 + $0x30] sm:$0xf]
      %v214 = vld [vmem:[%s200 + $0x34] sm:$0xf]
      %v215 = vld [vmem:[%s200 + $0x38] sm:$0xf]
      %v216 = vld [vmem:[%s200 + $0x3c] sm:$0xf]
      %v228 = vunpack.c.l.b16 %v173
      %v229 = vunpack.c.l.b16 %v174
      %v230 = vunpack.c.l.b16 %v175
      %v231 = vunpack.c.l.b16 %v176
      %v232 = vunpack.c.l.b16 %v177
      %v233 = vunpack.c.l.b16 %v178
      %v234 = vunpack.c.l.b16 %v179
      %v235 = vunpack.c.l.b16 %v180
      %v236 = vunpack.c.l.b16 %v181
      %v237 = vunpack.c.l.b16 %v182
      %v238 = vunpack.c.l.b16 %v199
      %v239 = vpack.c.b16 %v229, %v228
      %v240 = vpack.c.b16 %v231, %v230
      %v241 = vpack.c.b16 %v233, %v232
      %v242 = vpack.c.b16 %v235, %v234
      %v243 = vpack.c.b16 %v237, %v236
      %v244 = vpack.c.b16 %v238, %v238
      %vm245 = vsmask.f32 7424
      %v247 = vshrl.u32 %v239, 16
      %v249 = vshll.u32 %v239, 16
      %v251 = vrot.slane %v249, 1
      %v252 = vor.u32 %v247, %v251
      %v254 = vshll.u32 %v240, 16
      %v256 = vrot.slane %v254, 1
      %v257 = vsel %vm245, %v252, %v256
      %v258 = vshrl.u32 %v240, 16
      %v260 = vor.u32 %v258, %v256
      %v262 = vshll.u32 %v241, 16
      %v264 = vrot.slane %v262, 1
      %v265 = vsel %vm245, %v260, %v264
      %v266 = vshrl.u32 %v241, 16
      %v268 = vor.u32 %v266, %v264
      %v270 = vshll.u32 %v242, 16
      %v272 = vrot.slane %v270, 1
      %v273 = vsel %vm245, %v268, %v272
      %v274 = vshrl.u32 %v242, 16
      %v276 = vor.u32 %v274, %v272
      %v278 = vshll.u32 %v243, 16
      %v280 = vrot.slane %v278, 1
      %v281 = vsel %vm245, %v276, %v280
      %v282 = vshrl.u32 %v243, 16
      %v284 = vor.u32 %v282, %v280
      %v286 = vshll.u32 %v244, 16
      %v288 = vrot.slane %v286, 1
      %v289 = vsel %vm245, %v284, %v288
      %v311 = vunpack.c.l.b16 %v201
      %v312 = vunpack.c.l.b16 %v202
      %v313 = vunpack.c.l.b16 %v203
      %v314 = vunpack.c.l.b16 %v204
      %v315 = vunpack.c.l.b16 %v205
      %v316 = vunpack.c.l.b16 %v206
      %v317 = vunpack.c.l.b16 %v207
      %v318 = vunpack.c.l.b16 %v208
      %v319 = vunpack.c.l.b16 %v209
      %v320 = vunpack.c.l.b16 %v210
      %v321 = vunpack.c.l.b16 %v211
      %v322 = vunpack.c.l.b16 %v212
      %v323 = vunpack.c.l.b16 %v213
      %v324 = vunpack.c.l.b16 %v214
      %v325 = vunpack.c.l.b16 %v215
      %v326 = vunpack.c.l.b16 %v216
      %v327 = vpack.c.b16 %v312, %v311
      %v328 = vpack.c.b16 %v314, %v313
      %v329 = vpack.c.b16 %v316, %v315
      %v330 = vpack.c.b16 %v318, %v317
      %v331 = vpack.c.b16 %v320, %v319
      %v332 = vpack.c.b16 %v322, %v321
      %v333 = vpack.c.b16 %v324, %v323
      %v334 = vpack.c.b16 %v326, %v325
      %343 = vmatprep.subr.bf16.mxu0 0
      %344 = vmatpush1.bf16.msra.mxu0 %v327
      %345 = vmatprep.subr.bf16.mxu0 0
      %346 = vmatpush1.bf16.msra.mxu0 %v328
      %347 = vmatprep.subr.bf16.mxu0 0
      %348 = vmatpush1.bf16.msra.mxu0 %v329
      %349 = vmatprep.subr.bf16.mxu0 0
      %350 = vmatpush1.bf16.msra.mxu0 %v330
      %351 = vmatprep.subr.bf16.mxu0 0
      %352 = vmatpush1.bf16.msra.mxu0 %v331
      %353 = vmatprep.subr.bf16.mxu0 0
      %354 = vmatpush1.bf16.msra.mxu0 %v332
      %355 = vmatprep.subr.bf16.mxu0 0
      %356 = vmatpush1.bf16.msra.mxu0 %v333
      %357 = vmatprep.subr.bf16.mxu0 0
      %358 = vmatpush1.bf16.msra.mxu0 %v334
      %359 = vmatprep.subr.bf16.mxu0 0
      %360 = vmatpush1.bf16.msra.mxu0 0
      %361 = vmatprep.subr.bf16.mxu0 0
      %362 = vmatpush1.bf16.msra.mxu0 0
      %363 = vmatprep.subr.bf16.mxu0 0
      %364 = vmatpush1.bf16.msra.mxu0 0
      %365 = vmatprep.subr.bf16.mxu0 0
      %366 = vmatpush1.bf16.msra.mxu0 0
      %367 = vmatprep.subr.bf16.mxu0 0
      %368 = vmatpush1.bf16.msra.mxu0 0
      %369 = vmatprep.subr.bf16.mxu0 0
      %370 = vmatpush1.bf16.msra.mxu0 0
      %371 = vmatprep.subr.bf16.mxu0 0
      %372 = vmatpush1.bf16.msra.mxu0 0
      %373 = vmatprep.subr.bf16.mxu0 0
      %374 = vmatpush1.bf16.msra.mxu0 0
      %375 = vmatprep.mubr.bf16.mxu0 0
      %376 = vmatmul.mubr.bf16.gmra.mrb[0].mxu0 %v257
      %v377 = vpop.f32.mrb[0].mxu0
      %v378 = vadd.f32 0.0, %v377
      %v379 = vpop.f32.mrb[0].mxu0
      %v380 = vpop.f32.mrb[0].mxu0
      %v381 = vadd.f32 0.0, %v380
      %v382 = vpop.f32.mrb[0].mxu0
      %383 = vmatprep.mubr.bf16.mxu0 0
      %384 = vmatmul.mubr.bf16.gmra.mrb[0].mxu0 %v265
      %v385 = vpop.f32.mrb[0].mxu0
      %v386 = vadd.f32 0.0, %v385
      %v387 = vpop.f32.mrb[0].mxu0
      %v388 = vpop.f32.mrb[0].mxu0
      %v389 = vadd.f32 0.0, %v388
      %v390 = vpop.f32.mrb[0].mxu0
      %391 = vmatprep.mubr.bf16.mxu0 0
      %392 = vmatmul.mubr.bf16.gmra.mrb[0].mxu0 %v273
      %v393 = vpop.f32.mrb[0].mxu0
      %v394 = vadd.f32 0.0, %v393
      %v395 = vpop.f32.mrb[0].mxu0
      %v396 = vpop.f32.mrb[0].mxu0
      %v397 = vadd.f32 0.0, %v396
      %v398 = vpop.f32.mrb[0].mxu0
      %399 = vmatprep.mubr.bf16.mxu0 0
      %400 = vmatmul.mubr.bf16.gmra.mrb[0].mxu0 %v281
      %v401 = vpop.f32.mrb[0].mxu0
      %v402 = vadd.f32 0.0, %v401
      %v403 = vpop.f32.mrb[0].mxu0
      %v404 = vpop.f32.mrb[0].mxu0
      %v405 = vadd.f32 0.0, %v404
      %v406 = vpop.f32.mrb[0].mxu0
      %407 = vmatprep.mubr.bf16.mxu0 0
      %408 = vmatmul.mubr.bf16.gmra.mrb[0].mxu0 %v289
      %v409 = vpop.f32.mrb[0].mxu0
      %v410 = vadd.f32 0.0, %v409
      %v411 = vpop.f32.mrb[0].mxu0
      %v412 = vpop.f32.mrb[0].mxu0
      %v413 = vadd.f32 0.0, %v412
      %v414 = vpop.f32.mrb[0].mxu0
      %415 = vdwg.mxu0
      %v437 = vunpack.c.l.b16 %v183
      %v438 = vunpack.c.l.b16 %v184
      %v439 = vunpack.c.l.b16 %v185
      %v440 = vunpack.c.l.b16 %v186
      %v441 = vunpack.c.l.b16 %v187
      %v442 = vunpack.c.l.b16 %v188
      %v443 = vunpack.c.l.b16 %v189
      %v444 = vunpack.c.l.b16 %v190
      %v445 = vunpack.c.l.b16 %v191
      %v446 = vunpack.c.l.b16 %v192
      %v447 = vunpack.c.l.b16 %v193
      %v448 = vunpack.c.l.b16 %v194
      %v449 = vunpack.c.l.b16 %v195
      %v450 = vunpack.c.l.b16 %v196
      %v451 = vunpack.c.l.b16 %v197
      %v452 = vunpack.c.l.b16 %v198
      %v453 = vpack.c.b16 %v438, %v437
      %v454 = vpack.c.b16 %v440, %v439
      %v455 = vpack.c.b16 %v442, %v441
      %v456 = vpack.c.b16 %v444, %v443
      %v457 = vpack.c.b16 %v446, %v445
      %v458 = vpack.c.b16 %v448, %v447
      %v459 = vpack.c.b16 %v450, %v449
      %v460 = vpack.c.b16 %v452, %v451
      %469 = vmatprep.subr.bf16.mxu0 0
      %470 = vmatpush1.bf16.msra.mxu0 %v453
      %471 = vmatprep.subr.bf16.mxu0 0
      %472 = vmatpush1.bf16.msra.mxu0 %v454
      %473 = vmatprep.subr.bf16.mxu0 0
      %474 = vmatpush1.bf16.msra.mxu0 %v455
      %475 = vmatprep.subr.bf16.mxu0 0
      %476 = vmatpush1.bf16.msra.mxu0 %v456
      %477 = vmatprep.subr.bf16.mxu0 0
      %478 = vmatpush1.bf16.msra.mxu0 %v457
      %479 = vmatprep.subr.bf16.mxu0 0
      %480 = vmatpush1.bf16.msra.mxu0 %v458
      %481 = vmatprep.subr.bf16.mxu0 0
      %482 = vmatpush1.bf16.msra.mxu0 %v459
      %483 = vmatprep.subr.bf16.mxu0 0
      %484 = vmatpush1.bf16.msra.mxu0 %v460
      %485 = vmatprep.subr.bf16.mxu0 0
      %486 = vmatpush1.bf16.msra.mxu0 0
      %487 = vmatprep.subr.bf16.mxu0 0
      %488 = vmatpush1.bf16.msra.mxu0 0
      %489 = vmatprep.subr.bf16.mxu0 0
      %490 = vmatpush1.bf16.msra.mxu0 0
      %491 = vmatprep.subr.bf16.mxu0 0
      %492 = vmatpush1.bf16.msra.mxu0 0
      %493 = vmatprep.subr.bf16.mxu0 0
      %494 = vmatpush1.bf16.msra.mxu0 0
      %495 = vmatprep.subr.bf16.mxu0 0
      %496 = vmatpush1.bf16.msra.mxu0 0
      %497 = vmatprep.subr.bf16.mxu0 0
      %498 = vmatpush1.bf16.msra.mxu0 0
      %499 = vmatprep.subr.bf16.mxu0 0
      %500 = vmatpush1.bf16.msra.mxu0 0
      %501 = vmatprep.mubr.bf16.mxu0 0
      %502 = vmatmul.mubr.bf16.gmra.mrb[0].mxu0 %v239
      %v503 = vpop.f32.mrb[0].mxu0
      %v504 = vadd.f32 %v378, %v503
      %v505 = vpop.f32.mrb[0].mxu0
      %v506 = vpop.f32.mrb[0].mxu0
      %v507 = vadd.f32 %v381, %v506
      %v508 = vpop.f32.mrb[0].mxu0
      %509 = vmatprep.mubr.bf16.mxu0 0
      %510 = vmatmul.mubr.bf16.gmra.mrb[0].mxu0 %v240
      %v511 = vpop.f32.mrb[0].mxu0
      %v512 = vadd.f32 %v386, %v511
      %v513 = vpop.f32.mrb[0].mxu0
      %v514 = vpop.f32.mrb[0].mxu0
      %v515 = vadd.f32 %v389, %v514
      %v516 = vpop.f32.mrb[0].mxu0
      %517 = vmatprep.mubr.bf16.mxu0 0
      %518 = vmatmul.mubr.bf16.gmra.mrb[0].mxu0 %v241
      %v519 = vpop.f32.mrb[0].mxu0
      %v520 = vadd.f32 %v394, %v519
      %v521 = vpop.f32.mrb[0].mxu0
      %v522 = vpop.f32.mrb[0].mxu0
      %v523 = vadd.f32 %v397, %v522
      %v524 = vpop.f32.mrb[0].mxu0
      %525 = vmatprep.mubr.bf16.mxu0 0
      %526 = vmatmul.mubr.bf16.gmra.mrb[0].mxu0 %v242
      %v527 = vpop.f32.mrb[0].mxu0
      %v528 = vadd.f32 %v402, %v527
      %v529 = vpop.f32.mrb[0].mxu0
      %v530 = vpop.f32.mrb[0].mxu0
      %v531 = vadd.f32 %v405, %v530
      %v532 = vpop.f32.mrb[0].mxu0
      %533 = vmatprep.mubr.bf16.mxu0 0
      %534 = vmatmul.mubr.bf16.gmra.mrb[0].mxu0 %v243
      %v535 = vpop.f32.mrb[0].mxu0
      %v536 = vadd.f32 %v410, %v535
      %v537 = vpop.f32.mrb[0].mxu0
      %v538 = vpop.f32.mrb[0].mxu0
      %v539 = vadd.f32 %v413, %v538
      %v540 = vpop.f32.mrb[0].mxu0
      %541 = vdwg.mxu0
      %v542 = vld [vmem:[%s165] sm:$0xe]
      %s543 = scalar_lea.vmem %s1, 128
      %v544 = vld [vmem:[%s543] sm:$0xf]
      %v545 = vld [vmem:[%s543 + $0x4] sm:$0xf]
      %v546 = vld [vmem:[%s543 + $0x8] sm:$0xf]
      %v547 = vld [vmem:[%s543 + $0xc] sm:$0xf]
      %v548 = vld [vmem:[%s543 + $0x10] sm:$0xf]
      %v549 = vld [vmem:[%s543 + $0x14] sm:$0xf]
      %v550 = vld [vmem:[%s543 + $0x18] sm:$0xf]
      %v551 = vld [vmem:[%s543 + $0x1c] sm:$0xf]
      %v552 = vld [vmem:[%s543 + $0x20] sm:$0xf]
      %v553 = vld [vmem:[%s543 + $0x24] sm:$0xf]
      %v554 = vld [vmem:[%s543 + $0x28] sm:$0xf]
      %v555 = vld [vmem:[%s543 + $0x2c] sm:$0xf]
      %v556 = vld [vmem:[%s543 + $0x30] sm:$0xf]
      %v557 = vld [vmem:[%s543 + $0x34] sm:$0xf]
      %v558 = vld [vmem:[%s543 + $0x38] sm:$0xf]
      %v559 = vld [vmem:[%s543 + $0x3c] sm:$0xf]
      %v561 = vunpack.c.l.b16 %v542
      %v562 = vpack.c.b16 %v229, %v561
      %vm563 = vcmask 1046528
      %v564 = vrot.slane %v562, 1
      %v565 = vrot.slane %v240, 1
      %v566 = vsel %vm563, %v564, %v565
      %v567 = vrot.slane %v241, 1
      %v568 = vsel %vm563, %v565, %v567
      %v569 = vrot.slane %v242, 1
      %v570 = vsel %vm563, %v567, %v569
      %v571 = vrot.slane %v243, 1
      %v572 = vsel %vm563, %v569, %v571
      %v573 = vrot.slane %v244, 1
      %v574 = vsel %vm563, %v571, %v573
      %v596 = vunpack.c.l.b16 %v544
      %v597 = vunpack.c.l.b16 %v545
      %v598 = vunpack.c.l.b16 %v546
      %v599 = vunpack.c.l.b16 %v547
      %v600 = vunpack.c.l.b16 %v548
      %v601 = vunpack.c.l.b16 %v549
      %v602 = vunpack.c.l.b16 %v550
      %v603 = vunpack.c.l.b16 %v551
      %v604 = vunpack.c.l.b16 %v552
      %v605 = vunpack.c.l.b16 %v553
      %v606 = vunpack.c.l.b16 %v554
      %v607 = vunpack.c.l.b16 %v555
      %v608 = vunpack.c.l.b16 %v556
      %v609 = vunpack.c.l.b16 %v557
      %v610 = vunpack.c.l.b16 %v558
      %v611 = vunpack.c.l.b16 %v559
      %v612 = vpack.c.b16 %v597, %v596
      %v613 = vpack.c.b16 %v599, %v598
      %v614 = vpack.c.b16 %v601, %v600
      %v615 = vpack.c.b16 %v603, %v602
      %v616 = vpack.c.b16 %v605, %v604
      %v617 = vpack.c.b16 %v607, %v606
      %v618 = vpack.c.b16 %v609, %v608
      %v619 = vpack.c.b16 %v611, %v610
      %628 = vmatprep.subr.bf16.mxu0 0
      %629 = vmatpush1.bf16.msra.mxu0 %v612
      %630 = vmatprep.subr.bf16.mxu0 0
      %631 = vmatpush1.bf16.msra.mxu0 %v613
      %632 = vmatprep.subr.bf16.mxu0 0
      %633 = vmatpush1.bf16.msra.mxu0 %v614
      %634 = vmatprep.subr.bf16.mxu0 0
      %635 = vmatpush1.bf16.msra.mxu0 %v615
      %636 = vmatprep.subr.bf16.mxu0 0
      %637 = vmatpush1.bf16.msra.mxu0 %v616
      %638 = vmatprep.subr.bf16.mxu0 0
      %639 = vmatpush1.bf16.msra.mxu0 %v617
      %640 = vmatprep.subr.bf16.mxu0 0
      %641 = vmatpush1.bf16.msra.mxu0 %v618
      %642 = vmatprep.subr.bf16.mxu0 0
      %643 = vmatpush1.bf16.msra.mxu0 %v619
      %644 = vmatprep.subr.bf16.mxu0 0
      %645 = vmatpush1.bf16.msra.mxu0 0
      %646 = vmatprep.subr.bf16.mxu0 0
      %647 = vmatpush1.bf16.msra.mxu0 0
      %648 = vmatprep.subr.bf16.mxu0 0
      %649 = vmatpush1.bf16.msra.mxu0 0
      %650 = vmatprep.subr.bf16.mxu0 0
      %651 = vmatpush1.bf16.msra.mxu0 0
      %652 = vmatprep.subr.bf16.mxu0 0
      %653 = vmatpush1.bf16.msra.mxu0 0
      %654 = vmatprep.subr.bf16.mxu0 0
      %655 = vmatpush1.bf16.msra.mxu0 0
      %656 = vmatprep.subr.bf16.mxu0 0
      %657 = vmatpush1.bf16.msra.mxu0 0
      %658 = vmatprep.subr.bf16.mxu0 0
      %659 = vmatpush1.bf16.msra.mxu0 0
      %660 = vmatprep.mubr.bf16.mxu0 0
      %661 = vmatmul.mubr.bf16.gmra.mrb[0].mxu0 %v566
      %v662 = vpop.f32.mrb[0].mxu0
      %v663 = vadd.f32 0.0, %v662
      %v664 = vpop.f32.mrb[0].mxu0
      %v665 = vpop.f32.mrb[0].mxu0
      %v666 = vadd.f32 0.0, %v665
      %v667 = vpop.f32.mrb[0].mxu0
      %668 = vmatprep.mubr.bf16.mxu0 0
      %669 = vmatmul.mubr.bf16.gmra.mrb[0].mxu0 %v568
      %v670 = vpop.f32.mrb[0].mxu0
      %v671 = vadd.f32 0.0, %v670
      %v672 = vpop.f32.mrb[0].mxu0
      %v673 = vpop.f32.mrb[0].mxu0
      %v674 = vadd.f32 0.0, %v673
      %v675 = vpop.f32.mrb[0].mxu0
      %676 = vmatprep.mubr.bf16.mxu0 0
      %677 = vmatmul.mubr.bf16.gmra.mrb[0].mxu0 %v570
      %v678 = vpop.f32.mrb[0].mxu0
      %v679 = vadd.f32 0.0, %v678
      %v680 = vpop.f32.mrb[0].mxu0
      %v681 = vpop.f32.mrb[0].mxu0
      %v682 = vadd.f32 0.0, %v681
      %v683 = vpop.f32.mrb[0].mxu0
      %684 = vmatprep.mubr.bf16.mxu0 0
      %685 = vmatmul.mubr.bf16.gmra.mrb[0].mxu0 %v572
      %v686 = vpop.f32.mrb[0].mxu0
      %v687 = vadd.f32 0.0, %v686
      %v688 = vpop.f32.mrb[0].mxu0
      %v689 = vpop.f32.mrb[0].mxu0
      %v690 = vadd.f32 0.0, %v689
      %v691 = vpop.f32.mrb[0].mxu0
      %692 = vmatprep.mubr.bf16.mxu0 0
      %693 = vmatmul.mubr.bf16.gmra.mrb[0].mxu0 %v574
      %v694 = vpop.f32.mrb[0].mxu0
      %v695 = vadd.f32 0.0, %v694
      %v696 = vpop.f32.mrb[0].mxu0
      %v697 = vpop.f32.mrb[0].mxu0
      %v698 = vadd.f32 0.0, %v697
      %v699 = vpop.f32.mrb[0].mxu0
      %700 = vdwg.mxu0
      %v701 = vadd.f32 %v504, %v663
      %v702 = vadd.f32 %v507, %v666
      %v703 = vadd.f32 %v512, %v671
      %v704 = vadd.f32 %v515, %v674
      %v705 = vadd.f32 %v520, %v679
      %v706 = vadd.f32 %v523, %v682
      %v707 = vadd.f32 %v528, %v687
      %v708 = vadd.f32 %v531, %v690
      %v709 = vadd.f32 %v536, %v695
      %v710 = vadd.f32 %v539, %v698
      %v711 = vld [vmem:[%s165 + $0x4] sm:$0xe]
      %v712 = vld [vmem:[%s165 + $0x8] sm:$0xf]
      %v713 = vld [vmem:[%s165 + $0xc] sm:$0xf]
      %v714 = vld [vmem:[%s165 + $0x10] sm:$0xf]
      %v715 = vld [vmem:[%s165 + $0x14] sm:$0xf]
      %v716 = vld [vmem:[%s165 + $0x18] sm:$0xf]
      %v717 = vld [vmem:[%s165 + $0x1c] sm:$0xf]
      %v718 = vld [vmem:[%s165 + $0x20] sm:$0xf]
      %v719 = vld [vmem:[%s165 + $0x24] sm:$0xf]
      %v720 = vld [vmem:[%s165 + $0x28] sm:$0xf]
      %v721 = vld [vmem:[%s165 + $0x2c] sm:$0x1]
      %s722 = scalar_lea.vmem %s1, 192
      %v723 = vld [vmem:[%s722] sm:$0xf]
      %v724 = vld [vmem:[%s722 + $0x4] sm:$0xf]
      %v725 = vld [vmem:[%s722 + $0x8] sm:$0xf]
      %v726 = vld [vmem:[%s722 + $0xc] sm:$0xf]
      %v727 = vld [vmem:[%s722 + $0x10] sm:$0xf]
      %v728 = vld [vmem:[%s722 + $0x14] sm:$0xf]
      %v729 = vld [vmem:[%s722 + $0x18] sm:$0xf]
      %v730 = vld [vmem:[%s722 + $0x1c] sm:$0xf]
      %v731 = vld [vmem:[%s722 + $0x20] sm:$0xf]
      %v732 = vld [vmem:[%s722 + $0x24] sm:$0xf]
      %v733 = vld [vmem:[%s722 + $0x28] sm:$0xf]
      %v734 = vld [vmem:[%s722 + $0x2c] sm:$0xf]
      %v735 = vld [vmem:[%s722 + $0x30] sm:$0xf]
      %v736 = vld [vmem:[%s722 + $0x34] sm:$0xf]
      %v737 = vld [vmem:[%s722 + $0x38] sm:$0xf]
      %v738 = vld [vmem:[%s722 + $0x3c] sm:$0xf]
      %v750 = vunpack.c.l.b16 %v711
      %v751 = vunpack.c.l.b16 %v712
      %v752 = vunpack.c.l.b16 %v713
      %v753 = vunpack.c.l.b16 %v714
      %v754 = vunpack.c.l.b16 %v715
      %v755 = vunpack.c.l.b16 %v716
      %v756 = vunpack.c.l.b16 %v717
      %v757 = vunpack.c.l.b16 %v718
      %v758 = vunpack.c.l.b16 %v719
      %v759 = vunpack.c.l.b16 %v720
      %v760 = vunpack.c.l.b16 %v721
      %v761 = vpack.c.b16 %v751, %v750
      %v762 = vpack.c.b16 %v753, %v752
      %v763 = vpack.c.b16 %v755, %v754
      %v764 = vpack.c.b16 %v757, %v756
      %v765 = vpack.c.b16 %v759, %v758
      %v766 = vpack.c.b16 %v760, %v760
      %v767 = vrot.slane %v761, 1
      %v768 = vrot.slane %v762, 1
      %v769 = vsel %vm563, %v767, %v768
      %v770 = vrot.slane %v763, 1
      %v771 = vsel %vm563, %v768, %v770
      %v772 = vrot.slane %v764, 1
      %v773 = vsel %vm563, %v770, %v772
      %v774 = vrot.slane %v765, 1
      %v775 = vsel %vm563, %v772, %v774
      %v776 = vrot.slane %v766, 1
      %v777 = vsel %vm563, %v774, %v776
      %v799 = vunpack.c.l.b16 %v723
      %v800 = vunpack.c.l.b16 %v724
      %v801 = vunpack.c.l.b16 %v725
      %v802 = vunpack.c.l.b16 %v726
      %v803 = vunpack.c.l.b16 %v727
      %v804 = vunpack.c.l.b16 %v728
      %v805 = vunpack.c.l.b16 %v729
      %v806 = vunpack.c.l.b16 %v730
      %v807 = vunpack.c.l.b16 %v731
      %v808 = vunpack.c.l.b16 %v732
      %v809 = vunpack.c.l.b16 %v733
      %v810 = vunpack.c.l.b16 %v734
      %v811 = vunpack.c.l.b16 %v735
      %v812 = vunpack.c.l.b16 %v736
      %v813 = vunpack.c.l.b16 %v737
      %v814 = vunpack.c.l.b16 %v738
      %v815 = vpack.c.b16 %v800, %v799
      %v816 = vpack.c.b16 %v802, %v801
      %v817 = vpack.c.b16 %v804, %v803
      %v818 = vpack.c.b16 %v806, %v805
      %v819 = vpack.c.b16 %v808, %v807
      %v820 = vpack.c.b16 %v810, %v809
      %v821 = vpack.c.b16 %v812, %v811
      %v822 = vpack.c.b16 %v814, %v813
      %831 = vmatprep.subr.bf16.mxu0 0
      %832 = vmatpush1.bf16.msra.mxu0 %v815
      %833 = vmatprep.subr.bf16.mxu0 0
      %834 = vmatpush1.bf16.msra.mxu0 %v816
      %835 = vmatprep.subr.bf16.mxu0 0
      %836 = vmatpush1.bf16.msra.mxu0 %v817
      %837 = vmatprep.subr.bf16.mxu0 0
      %838 = vmatpush1.bf16.msra.mxu0 %v818
      %839 = vmatprep.subr.bf16.mxu0 0
      %840 = vmatpush1.bf16.msra.mxu0 %v819
      %841 = vmatprep.subr.bf16.mxu0 0
      %842 = vmatpush1.bf16.msra.mxu0 %v820
      %843 = vmatprep.subr.bf16.mxu0 0
      %844 = vmatpush1.bf16.msra.mxu0 %v821
      %845 = vmatprep.subr.bf16.mxu0 0
      %846 = vmatpush1.bf16.msra.mxu0 %v822
      %847 = vmatprep.subr.bf16.mxu0 0
      %848 = vmatpush1.bf16.msra.mxu0 0
      %849 = vmatprep.subr.bf16.mxu0 0
      %850 = vmatpush1.bf16.msra.mxu0 0
      %851 = vmatprep.subr.bf16.mxu0 0
      %852 = vmatpush1.bf16.msra.mxu0 0
      %853 = vmatprep.subr.bf16.mxu0 0
      %854 = vmatpush1.bf16.msra.mxu0 0
      %855 = vmatprep.subr.bf16.mxu0 0
      %856 = vmatpush1.bf16.msra.mxu0 0
      %857 = vmatprep.subr.bf16.mxu0 0
      %858 = vmatpush1.bf16.msra.mxu0 0
      %859 = vmatprep.subr.bf16.mxu0 0
      %860 = vmatpush1.bf16.msra.mxu0 0
      %861 = vmatprep.subr.bf16.mxu0 0
      %862 = vmatpush1.bf16.msra.mxu0 0
      %863 = vmatprep.mubr.bf16.mxu0 0
      %864 = vmatmul.mubr.bf16.gmra.mrb[0].mxu0 %v769
      %v865 = vpop.f32.mrb[0].mxu0
      %v866 = vadd.f32 0.0, %v865
      %v867 = vpop.f32.mrb[0].mxu0
      %v868 = vpop.f32.mrb[0].mxu0
      %v869 = vadd.f32 0.0, %v868
      %v870 = vpop.f32.mrb[0].mxu0
      %871 = vmatprep.mubr.bf16.mxu0 0
      %872 = vmatmul.mubr.bf16.gmra.mrb[0].mxu0 %v771
      %v873 = vpop.f32.mrb[0].mxu0
      %v874 = vadd.f32 0.0, %v873
      %v875 = vpop.f32.mrb[0].mxu0
      %v876 = vpop.f32.mrb[0].mxu0
      %v877 = vadd.f32 0.0, %v876
      %v878 = vpop.f32.mrb[0].mxu0
      %879 = vmatprep.mubr.bf16.mxu0 0
      %880 = vmatmul.mubr.bf16.gmra.mrb[0].mxu0 %v773
      %v881 = vpop.f32.mrb[0].mxu0
      %v882 = vadd.f32 0.0, %v881
      %v883 = vpop.f32.mrb[0].mxu0
      %v884 = vpop.f32.mrb[0].mxu0
      %v885 = vadd.f32 0.0, %v884
      %v886 = vpop.f32.mrb[0].mxu0
      %887 = vmatprep.mubr.bf16.mxu0 0
      %888 = vmatmul.mubr.bf16.gmra.mrb[0].mxu0 %v775
      %v889 = vpop.f32.mrb[0].mxu0
      %v890 = vadd.f32 0.0, %v889
      %v891 = vpop.f32.mrb[0].mxu0
      %v892 = vpop.f32.mrb[0].mxu0
      %v893 = vadd.f32 0.0, %v892
      %v894 = vpop.f32.mrb[0].mxu0
      %895 = vmatprep.mubr.bf16.mxu0 0
      %896 = vmatmul.mubr.bf16.gmra.mrb[0].mxu0 %v777
      %v897 = vpop.f32.mrb[0].mxu0
      %v898 = vadd.f32 0.0, %v897
      %v899 = vpop.f32.mrb[0].mxu0
      %v900 = vpop.f32.mrb[0].mxu0
      %v901 = vadd.f32 0.0, %v900
      %v902 = vpop.f32.mrb[0].mxu0
      %903 = vdwg.mxu0
      %v904 = vadd.f32 %v701, %v866
      %v905 = vadd.f32 %v702, %v869
      %v906 = vadd.f32 %v703, %v874
      %v907 = vadd.f32 %v704, %v877
      %v908 = vadd.f32 %v705, %v882
      %v909 = vadd.f32 %v706, %v885
      %v910 = vadd.f32 %v707, %v890
      %v911 = vadd.f32 %v708, %v893
      %v912 = vadd.f32 %v709, %v898
      %v913 = vadd.f32 %v710, %v901
      %v914 = vld [vmem:[%s165 + $0x2c] sm:$0x3]
      %s915 = scalar_lea.vmem %s1, 256
      %v916 = vld [vmem:[%s915] sm:$0xf]
      %v917 = vld [vmem:[%s915 + $0x4] sm:$0xf]
      %v918 = vld [vmem:[%s915 + $0x8] sm:$0xf]
      %v919 = vld [vmem:[%s915 + $0xc] sm:$0xf]
      %v920 = vld [vmem:[%s915 + $0x10] sm:$0xf]
      %v921 = vld [vmem:[%s915 + $0x14] sm:$0xf]
      %v922 = vld [vmem:[%s915 + $0x18] sm:$0xf]
      %v923 = vld [vmem:[%s915 + $0x1c] sm:$0xf]
      %v924 = vld [vmem:[%s915 + $0x20] sm:$0xf]
      %v925 = vld [vmem:[%s915 + $0x24] sm:$0xf]
      %v926 = vld [vmem:[%s915 + $0x28] sm:$0xf]
      %v927 = vld [vmem:[%s915 + $0x2c] sm:$0xf]
      %v928 = vld [vmem:[%s915 + $0x30] sm:$0xf]
      %v929 = vld [vmem:[%s915 + $0x34] sm:$0xf]
      %v930 = vld [vmem:[%s915 + $0x38] sm:$0xf]
      %v931 = vld [vmem:[%s915 + $0x3c] sm:$0xf]
      %v933 = vunpack.c.l.b16 %v914
      %v934 = vpack.c.b16 %v933, %v933
      %vm935 = vsmask.f32 6400
      %v937 = vshrl.u32 %v761, 16
      %v939 = vrot.slane %v937, 1
      %v940 = vshll.u32 %v761, 16
      %v942 = vrot.slane %v940, 2
      %v943 = vor.u32 %v939, %v942
      %v945 = vshrl.u32 %v762, 16
      %v947 = vrot.slane %v945, 1
      %v948 = vshll.u32 %v762, 16
      %v950 = vrot.slane %v948, 2
      %v951 = vor.u32 %v947, %v950
      %v952 = vsel %vm935, %v943, %v951
      %v954 = vshrl.u32 %v763, 16
      %v956 = vrot.slane %v954, 1
      %v957 = vshll.u32 %v763, 16
      %v959 = vrot.slane %v957, 2
      %v960 = vor.u32 %v956, %v959
      %v961 = vsel %vm935, %v951, %v960
      %v963 = vshrl.u32 %v764, 16
      %v965 = vrot.slane %v963, 1
      %v966 = vshll.u32 %v764, 16
      %v968 = vrot.slane %v966, 2
      %v969 = vor.u32 %v965, %v968
      %v970 = vsel %vm935, %v960, %v969
      %v972 = vshrl.u32 %v765, 16
      %v974 = vrot.slane %v972, 1
      %v975 = vshll.u32 %v765, 16
      %v977 = vrot.slane %v975, 2
      %v978 = vor.u32 %v974, %v977
      %v979 = vsel %vm935, %v969, %v978
      %v981 = vshrl.u32 %v934, 16
      %v983 = vrot.slane %v981, 1
      %v984 = vshll.u32 %v934, 16
      %v986 = vrot.slane %v984, 2
      %v987 = vor.u32 %v983, %v986
      %v988 = vsel %vm935, %v978, %v987
      %v1010 = vunpack.c.l.b16 %v916
      %v1011 = vunpack.c.l.b16 %v917
      %v1012 = vunpack.c.l.b16 %v918
      %v1013 = vunpack.c.l.b16 %v919
      %v1014 = vunpack.c.l.b16 %v920
      %v1015 = vunpack.c.l.b16 %v921
      %v1016 = vunpack.c.l.b16 %v922
      %v1017 = vunpack.c.l.b16 %v923
      %v1018 = vunpack.c.l.b16 %v924
      %v1019 = vunpack.c.l.b16 %v925
      %v1020 = vunpack.c.l.b16 %v926
      %v1021 = vunpack.c.l.b16 %v927
      %v1022 = vunpack.c.l.b16 %v928
      %v1023 = vunpack.c.l.b16 %v929
      %v1024 = vunpack.c.l.b16 %v930
      %v1025 = vunpack.c.l.b16 %v931
      %v1026 = vpack.c.b16 %v1011, %v1010
      %v1027 = vpack.c.b16 %v1013, %v1012
      %v1028 = vpack.c.b16 %v1015, %v1014
      %v1029 = vpack.c.b16 %v1017, %v1016
      %v1030 = vpack.c.b16 %v1019, %v1018
      %v1031 = vpack.c.b16 %v1021, %v1020
      %v1032 = vpack.c.b16 %v1023, %v1022
      %v1033 = vpack.c.b16 %v1025, %v1024
      %1042 = vmatprep.subr.bf16.mxu0 0
      %1043 = vmatpush1.bf16.msra.mxu0 %v1026
      %1044 = vmatprep.subr.bf16.mxu0 0
      %1045 = vmatpush1.bf16.msra.mxu0 %v1027
      %1046 = vmatprep.subr.bf16.mxu0 0
      %1047 = vmatpush1.bf16.msra.mxu0 %v1028
      %1048 = vmatprep.subr.bf16.mxu0 0
      %1049 = vmatpush1.bf16.msra.mxu0 %v1029
      %1050 = vmatprep.subr.bf16.mxu0 0
      %1051 = vmatpush1.bf16.msra.mxu0 %v1030
      %1052 = vmatprep.subr.bf16.mxu0 0
      %1053 = vmatpush1.bf16.msra.mxu0 %v1031
      %1054 = vmatprep.subr.bf16.mxu0 0
      %1055 = vmatpush1.bf16.msra.mxu0 %v1032
      %1056 = vmatprep.subr.bf16.mxu0 0
      %1057 = vmatpush1.bf16.msra.mxu0 %v1033
      %1058 = vmatprep.subr.bf16.mxu0 0
      %1059 = vmatpush1.bf16.msra.mxu0 0
      %1060 = vmatprep.subr.bf16.mxu0 0
      %1061 = vmatpush1.bf16.msra.mxu0 0
      %1062 = vmatprep.subr.bf16.mxu0 0
      %1063 = vmatpush1.bf16.msra.mxu0 0
      %1064 = vmatprep.subr.bf16.mxu0 0
      %1065 = vmatpush1.bf16.msra.mxu0 0
      %1066 = vmatprep.subr.bf16.mxu0 0
      %1067 = vmatpush1.bf16.msra.mxu0 0
      %1068 = vmatprep.subr.bf16.mxu0 0
      %1069 = vmatpush1.bf16.msra.mxu0 0
      %1070 = vmatprep.subr.bf16.mxu0 0
      %1071 = vmatpush1.bf16.msra.mxu0 0
      %1072 = vmatprep.subr.bf16.mxu0 0
      %1073 = vmatpush1.bf16.msra.mxu0 0
      %1074 = vmatprep.mubr.bf16.mxu0 0
      %1075 = vmatmul.mubr.bf16.gmra.mrb[0].mxu0 %v952
      %v1076 = vpop.f32.mrb[0].mxu0
      %v1077 = vadd.f32 0.0, %v1076
      %v1078 = vpop.f32.mrb[0].mxu0
      %v1079 = vpop.f32.mrb[0].mxu0
      %v1080 = vadd.f32 0.0, %v1079
      %v1081 = vpop.f32.mrb[0].mxu0
      %1082 = vmatprep.mubr.bf16.mxu0 0
      %1083 = vmatmul.mubr.bf16.gmra.mrb[0].mxu0 %v961
      %v1084 = vpop.f32.mrb[0].mxu0
      %v1085 = vadd.f32 0.0, %v1084
      %v1086 = vpop.f32.mrb[0].mxu0
      %v1087 = vpop.f32.mrb[0].mxu0
      %v1088 = vadd.f32 0.0, %v1087
      %v1089 = vpop.f32.mrb[0].mxu0
      %1090 = vmatprep.mubr.bf16.mxu0 0
      %1091 = vmatmul.mubr.bf16.gmra.mrb[0].mxu0 %v970
      %v1092 = vpop.f32.mrb[0].mxu0
      %v1093 = vadd.f32 0.0, %v1092
      %v1094 = vpop.f32.mrb[0].mxu0
      %v1095 = vpop.f32.mrb[0].mxu0
      %v1096 = vadd.f32 0.0, %v1095
      %v1097 = vpop.f32.mrb[0].mxu0
      %1098 = vmatprep.mubr.bf16.mxu0 0
      %1099 = vmatmul.mubr.bf16.gmra.mrb[0].mxu0 %v979
      %v1100 = vpop.f32.mrb[0].mxu0
      %v1101 = vadd.f32 0.0, %v1100
      %v1102 = vpop.f32.mrb[0].mxu0
      %v1103 = vpop.f32.mrb[0].mxu0
      %v1104 = vadd.f32 0.0, %v1103
      %v1105 = vpop.f32.mrb[0].mxu0
      %1106 = vmatprep.mubr.bf16.mxu0 0
      %1107 = vmatmul.mubr.bf16.gmra.mrb[0].mxu0 %v988
      %v1108 = vpop.f32.mrb[0].mxu0
      %v1109 = vadd.f32 0.0, %v1108
      %v1110 = vpop.f32.mrb[0].mxu0
      %v1111 = vpop.f32.mrb[0].mxu0
      %v1112 = vadd.f32 0.0, %v1111
      %v1113 = vpop.f32.mrb[0].mxu0
      %1114 = vdwg.mxu0
      %v1115 = vadd.f32 %v904, %v1077
      %v1116 = vadd.f32 %v905, %v1080
      %v1117 = vadd.f32 %v906, %v1085
      %v1118 = vadd.f32 %v907, %v1088
      %v1119 = vadd.f32 %v908, %v1093
      %v1120 = vadd.f32 %v909, %v1096
      %v1121 = vadd.f32 %v910, %v1101
      %v1122 = vadd.f32 %v911, %v1104
      %v1123 = vadd.f32 %v912, %v1109
      %v1124 = vadd.f32 %v913, %v1112
      %v1125 = vld [vmem:[%s165 + $0x4] sm:$0xc]
      %s1126 = scalar_lea.vmem %s1, 320
      %v1127 = vld [vmem:[%s1126] sm:$0xf]
      %v1128 = vld [vmem:[%s1126 + $0x4] sm:$0xf]
      %v1129 = vld [vmem:[%s1126 + $0x8] sm:$0xf]
      %v1130 = vld [vmem:[%s1126 + $0xc] sm:$0xf]
      %v1131 = vld [vmem:[%s1126 + $0x10] sm:$0xf]
      %v1132 = vld [vmem:[%s1126 + $0x14] sm:$0xf]
      %v1133 = vld [vmem:[%s1126 + $0x18] sm:$0xf]
      %v1134 = vld [vmem:[%s1126 + $0x1c] sm:$0xf]
      %v1135 = vld [vmem:[%s1126 + $0x20] sm:$0xf]
      %v1136 = vld [vmem:[%s1126 + $0x24] sm:$0xf]
      %v1137 = vld [vmem:[%s1126 + $0x28] sm:$0xf]
      %v1138 = vld [vmem:[%s1126 + $0x2c] sm:$0xf]
      %v1139 = vld [vmem:[%s1126 + $0x30] sm:$0xf]
      %v1140 = vld [vmem:[%s1126 + $0x34] sm:$0xf]
      %v1141 = vld [vmem:[%s1126 + $0x38] sm:$0xf]
      %v1142 = vld [vmem:[%s1126 + $0x3c] sm:$0xf]
      %v1144 = vunpack.c.l.b16 %v1125
      %v1145 = vpack.c.b16 %v751, %v1144
      %vm1146 = vcmask 1045504
      %v1147 = vrot.slane %v1145, 2
      %v1148 = vrot.slane %v762, 2
      %v1149 = vsel %vm1146, %v1147, %v1148
      %v1150 = vrot.slane %v763, 2
      %v1151 = vsel %vm1146, %v1148, %v1150
      %v1152 = vrot.slane %v764, 2
      %v1153 = vsel %vm1146, %v1150, %v1152
      %v1154 = vrot.slane %v765, 2
      %v1155 = vsel %vm1146, %v1152, %v1154
      %v1156 = vrot.slane %v934, 2
      %v1157 = vsel %vm1146, %v1154, %v1156
      %v1179 = vunpack.c.l.b16 %v1127
      %v1180 = vunpack.c.l.b16 %v1128
      %v1181 = vunpack.c.l.b16 %v1129
      %v1182 = vunpack.c.l.b16 %v1130
      %v1183 = vunpack.c.l.b16 %v1131
      %v1184 = vunpack.c.l.b16 %v1132
      %v1185 = vunpack.c.l.b16 %v1133
      %v1186 = vunpack.c.l.b16 %v1134
      %v1187 = vunpack.c.l.b16 %v1135
      %v1188 = vunpack.c.l.b16 %v1136
      %v1189 = vunpack.c.l.b16 %v1137
      %v1190 = vunpack.c.l.b16 %v1138
      %v1191 = vunpack.c.l.b16 %v1139
      %v1192 = vunpack.c.l.b16 %v1140
      %v1193 = vunpack.c.l.b16 %v1141
      %v1194 = vunpack.c.l.b16 %v1142
      %v1195 = vpack.c.b16 %v1180, %v1179
      %v1196 = vpack.c.b16 %v1182, %v1181
      %v1197 = vpack.c.b16 %v1184, %v1183
      %v1198 = vpack.c.b16 %v1186, %v1185
      %v1199 = vpack.c.b16 %v1188, %v1187
      %v1200 = vpack.c.b16 %v1190, %v1189
      %v1201 = vpack.c.b16 %v1192, %v1191
      %v1202 = vpack.c.b16 %v1194, %v1193
      %1211 = vmatprep.subr.bf16.mxu0 0
      %1212 = vmatpush1.bf16.msra.mxu0 %v1195
      %1213 = vmatprep.subr.bf16.mxu0 0
      %1214 = vmatpush1.bf16.msra.mxu0 %v1196
      %1215 = vmatprep.subr.bf16.mxu0 0
      %1216 = vmatpush1.bf16.msra.mxu0 %v1197
      %1217 = vmatprep.subr.bf16.mxu0 0
      %1218 = vmatpush1.bf16.msra.mxu0 %v1198
      %1219 = vmatprep.subr.bf16.mxu0 0
      %1220 = vmatpush1.bf16.msra.mxu0 %v1199
      %1221 = vmatprep.subr.bf16.mxu0 0
      %1222 = vmatpush1.bf16.msra.mxu0 %v1200
      %1223 = vmatprep.subr.bf16.mxu0 0
      %1224 = vmatpush1.bf16.msra.mxu0 %v1201
      %1225 = vmatprep.subr.bf16.mxu0 0
      %1226 = vmatpush1.bf16.msra.mxu0 %v1202
      %1227 = vmatprep.subr.bf16.mxu0 0
      %1228 = vmatpush1.bf16.msra.mxu0 0
      %1229 = vmatprep.subr.bf16.mxu0 0
      %1230 = vmatpush1.bf16.msra.mxu0 0
      %1231 = vmatprep.subr.bf16.mxu0 0
      %1232 = vmatpush1.bf16.msra.mxu0 0
      %1233 = vmatprep.subr.bf16.mxu0 0
      %1234 = vmatpush1.bf16.msra.mxu0 0
      %1235 = vmatprep.subr.bf16.mxu0 0
      %1236 = vmatpush1.bf16.msra.mxu0 0
      %1237 = vmatprep.subr.bf16.mxu0 0
      %1238 = vmatpush1.bf16.msra.mxu0 0
      %1239 = vmatprep.subr.bf16.mxu0 0
      %1240 = vmatpush1.bf16.msra.mxu0 0
      %1241 = vmatprep.subr.bf16.mxu0 0
      %1242 = vmatpush1.bf16.msra.mxu0 0
      %1243 = vmatprep.mubr.bf16.mxu0 0
      %1244 = vmatmul.mubr.bf16.gmra.mrb[0].mxu0 %v1149
      %v1245 = vpop.f32.mrb[0].mxu0
      %v1246 = vadd.f32 0.0, %v1245
      %v1247 = vpop.f32.mrb[0].mxu0
      %v1248 = vpop.f32.mrb[0].mxu0
      %v1249 = vadd.f32 0.0, %v1248
      %v1250 = vpop.f32.mrb[0].mxu0
      %1251 = vmatprep.mubr.bf16.mxu0 0
      %1252 = vmatmul.mubr.bf16.gmra.mrb[0].mxu0 %v1151
      %v1253 = vpop.f32.mrb[0].mxu0
      %v1254 = vadd.f32 0.0, %v1253
      %v1255 = vpop.f32.mrb[0].mxu0
      %v1256 = vpop.f32.mrb[0].mxu0
      %v1257 = vadd.f32 0.0, %v1256
      %v1258 = vpop.f32.mrb[0].mxu0
      %1259 = vmatprep.mubr.bf16.mxu0 0
      %1260 = vmatmul.mubr.bf16.gmra.mrb[0].mxu0 %v1153
      %v1261 = vpop.f32.mrb[0].mxu0
      %v1262 = vadd.f32 0.0, %v1261
      %v1263 = vpop.f32.mrb[0].mxu0
      %v1264 = vpop.f32.mrb[0].mxu0
      %v1265 = vadd.f32 0.0, %v1264
      %v1266 = vpop.f32.mrb[0].mxu0
      %1267 = vmatprep.mubr.bf16.mxu0 0
      %1268 = vmatmul.mubr.bf16.gmra.mrb[0].mxu0 %v1155
      %v1269 = vpop.f32.mrb[0].mxu0
      %v1270 = vadd.f32 0.0, %v1269
      %v1271 = vpop.f32.mrb[0].mxu0
      %v1272 = vpop.f32.mrb[0].mxu0
      %v1273 = vadd.f32 0.0, %v1272
      %v1274 = vpop.f32.mrb[0].mxu0
      %1275 = vmatprep.mubr.bf16.mxu0 0
      %1276 = vmatmul.mubr.bf16.gmra.mrb[0].mxu0 %v1157
      %v1277 = vpop.f32.mrb[0].mxu0
      %v1278 = vadd.f32 0.0, %v1277
      %v1279 = vpop.f32.mrb[0].mxu0
      %v1280 = vpop.f32.mrb[0].mxu0
      %v1281 = vadd.f32 0.0, %v1280
      %v1282 = vpop.f32.mrb[0].mxu0
      %1283 = vdwg.mxu0
      %v1284 = vadd.f32 %v1115, %v1246
      %v1285 = vadd.f32 %v1116, %v1249
      %v1286 = vadd.f32 %v1117, %v1254
      %v1287 = vadd.f32 %v1118, %v1257
      %v1288 = vadd.f32 %v1119, %v1262
      %v1289 = vadd.f32 %v1120, %v1265
      %v1290 = vadd.f32 %v1121, %v1270
      %v1291 = vadd.f32 %v1122, %v1273
      %v1292 = vadd.f32 %v1123, %v1278
      %v1293 = vadd.f32 %v1124, %v1281
      %v1294 = vld [vmem:[%s165 + $0x8] sm:$0xc]
      %v1295 = vld [vmem:[%s165 + $0xc] sm:$0xf]
      %v1296 = vld [vmem:[%s165 + $0x10] sm:$0xf]
      %v1297 = vld [vmem:[%s165 + $0x14] sm:$0xf]
      %v1298 = vld [vmem:[%s165 + $0x18] sm:$0xf]
      %v1299 = vld [vmem:[%s165 + $0x1c] sm:$0xf]
      %v1300 = vld [vmem:[%s165 + $0x20] sm:$0xf]
      %v1301 = vld [vmem:[%s165 + $0x24] sm:$0xf]
      %v1302 = vld [vmem:[%s165 + $0x28] sm:$0xf]
      %v1303 = vld [vmem:[%s165 + $0x2c] sm:$0xf]
      %v1304 = vld [vmem:[%s165 + $0x30] sm:$0x3]
      %s1305 = scalar_lea.vmem %s1, 384
      %v1306 = vld [vmem:[%s1305] sm:$0xf]
      %v1307 = vld [vmem:[%s1305 + $0x4] sm:$0xf]
      %v1308 = vld [vmem:[%s1305 + $0x8] sm:$0xf]
      %v1309 = vld [vmem:[%s1305 + $0xc] sm:$0xf]
      %v1310 = vld [vmem:[%s1305 + $0x10] sm:$0xf]
      %v1311 = vld [vmem:[%s1305 + $0x14] sm:$0xf]
      %v1312 = vld [vmem:[%s1305 + $0x18] sm:$0xf]
      %v1313 = vld [vmem:[%s1305 + $0x1c] sm:$0xf]
      %v1314 = vld [vmem:[%s1305 + $0x20] sm:$0xf]
      %v1315 = vld [vmem:[%s1305 + $0x24] sm:$0xf]
      %v1316 = vld [vmem:[%s1305 + $0x28] sm:$0xf]
      %v1317 = vld [vmem:[%s1305 + $0x2c] sm:$0xf]
      %v1318 = vld [vmem:[%s1305 + $0x30] sm:$0xf]
      %v1319 = vld [vmem:[%s1305 + $0x34] sm:$0xf]
      %v1320 = vld [vmem:[%s1305 + $0x38] sm:$0xf]
      %v1321 = vld [vmem:[%s1305 + $0x3c] sm:$0xf]
      %v1333 = vunpack.c.l.b16 %v1294
      %v1334 = vunpack.c.l.b16 %v1295
      %v1335 = vunpack.c.l.b16 %v1296
      %v1336 = vunpack.c.l.b16 %v1297
      %v1337 = vunpack.c.l.b16 %v1298
      %v1338 = vunpack.c.l.b16 %v1299
      %v1339 = vunpack.c.l.b16 %v1300
      %v1340 = vunpack.c.l.b16 %v1301
      %v1341 = vunpack.c.l.b16 %v1302
      %v1342 = vunpack.c.l.b16 %v1303
      %v1343 = vunpack.c.l.b16 %v1304
      %v1344 = vpack.c.b16 %v1334, %v1333
      %v1345 = vpack.c.b16 %v1336, %v1335
      %v1346 = vpack.c.b16 %v1338, %v1337
      %v1347 = vpack.c.b16 %v1340, %v1339
      %v1348 = vpack.c.b16 %v1342, %v1341
      %v1349 = vpack.c.b16 %v1343, %v1343
      %v1350 = vrot.slane %v1344, 2
      %v1351 = vrot.slane %v1345, 2
      %v1352 = vsel %vm1146, %v1350, %v1351
      %v1353 = vrot.slane %v1346, 2
      %v1354 = vsel %vm1146, %v1351, %v1353
      %v1355 = vrot.slane %v1347, 2
      %v1356 = vsel %vm1146, %v1353, %v1355
      %v1357 = vrot.slane %v1348, 2
      %v1358 = vsel %vm1146, %v1355, %v1357
      %v1359 = vrot.slane %v1349, 2
      %v1360 = vsel %vm1146, %v1357, %v1359
      %v1382 = vunpack.c.l.b16 %v1306
      %v1383 = vunpack.c.l.b16 %v1307
      %v1384 = vunpack.c.l.b16 %v1308
      %v1385 = vunpack.c.l.b16 %v1309
      %v1386 = vunpack.c.l.b16 %v1310
      %v1387 = vunpack.c.l.b16 %v1311
      %v1388 = vunpack.c.l.b16 %v1312
      %v1389 = vunpack.c.l.b16 %v1313
      %v1390 = vunpack.c.l.b16 %v1314
      %v1391 = vunpack.c.l.b16 %v1315
      %v1392 = vunpack.c.l.b16 %v1316
      %v1393 = vunpack.c.l.b16 %v1317
      %v1394 = vunpack.c.l.b16 %v1318
      %v1395 = vunpack.c.l.b16 %v1319
      %v1396 = vunpack.c.l.b16 %v1320
      %v1397 = vunpack.c.l.b16 %v1321
      %v1398 = vpack.c.b16 %v1383, %v1382
      %v1399 = vpack.c.b16 %v1385, %v1384
      %v1400 = vpack.c.b16 %v1387, %v1386
      %v1401 = vpack.c.b16 %v1389, %v1388
      %v1402 = vpack.c.b16 %v1391, %v1390
      %v1403 = vpack.c.b16 %v1393, %v1392
      %v1404 = vpack.c.b16 %v1395, %v1394
      %v1405 = vpack.c.b16 %v1397, %v1396
      %1414 = vmatprep.subr.bf16.mxu0 0
      %1415 = vmatpush1.bf16.msra.mxu0 %v1398
      %1416 = vmatprep.subr.bf16.mxu0 0
      %1417 = vmatpush1.bf16.msra.mxu0 %v1399
      %1418 = vmatprep.subr.bf16.mxu0 0
      %1419 = vmatpush1.bf16.msra.mxu0 %v1400
      %1420 = vmatprep.subr.bf16.mxu0 0
      %1421 = vmatpush1.bf16.msra.mxu0 %v1401
      %1422 = vmatprep.subr.bf16.mxu0 0
      %1423 = vmatpush1.bf16.msra.mxu0 %v1402
      %1424 = vmatprep.subr.bf16.mxu0 0
      %1425 = vmatpush1.bf16.msra.mxu0 %v1403
      %1426 = vmatprep.subr.bf16.mxu0 0
      %1427 = vmatpush1.bf16.msra.mxu0 %v1404
      %1428 = vmatprep.subr.bf16.mxu0 0
      %1429 = vmatpush1.bf16.msra.mxu0 %v1405
      %1430 = vmatprep.subr.bf16.mxu0 0
      %1431 = vmatpush1.bf16.msra.mxu0 0
      %1432 = vmatprep.subr.bf16.mxu0 0
      %1433 = vmatpush1.bf16.msra.mxu0 0
      %1434 = vmatprep.subr.bf16.mxu0 0
      %1435 = vmatpush1.bf16.msra.mxu0 0
      %1436 = vmatprep.subr.bf16.mxu0 0
      %1437 = vmatpush1.bf16.msra.mxu0 0
      %1438 = vmatprep.subr.bf16.mxu0 0
      %1439 = vmatpush1.bf16.msra.mxu0 0
      %1440 = vmatprep.subr.bf16.mxu0 0
      %1441 = vmatpush1.bf16.msra.mxu0 0
      %1442 = vmatprep.subr.bf16.mxu0 0
      %1443 = vmatpush1.bf16.msra.mxu0 0
      %1444 = vmatprep.subr.bf16.mxu0 0
      %1445 = vmatpush1.bf16.msra.mxu0 0
      %1446 = vmatprep.mubr.bf16.mxu0 0
      %1447 = vmatmul.mubr.bf16.gmra.mrb[0].mxu0 %v1352
      %v1448 = vpop.f32.mrb[0].mxu0
      %v1449 = vadd.f32 0.0, %v1448
      %v1450 = vpop.f32.mrb[0].mxu0
      %v1451 = vpop.f32.mrb[0].mxu0
      %v1452 = vadd.f32 0.0, %v1451
      %v1453 = vpop.f32.mrb[0].mxu0
      %1454 = vmatprep.mubr.bf16.mxu0 0
      %1455 = vmatmul.mubr.bf16.gmra.mrb[0].mxu0 %v1354
      %v1456 = vpop.f32.mrb[0].mxu0
      %v1457 = vadd.f32 0.0, %v1456
      %v1458 = vpop.f32.mrb[0].mxu0
      %v1459 = vpop.f32.mrb[0].mxu0
      %v1460 = vadd.f32 0.0, %v1459
      %v1461 = vpop.f32.mrb[0].mxu0
      %1462 = vmatprep.mubr.bf16.mxu0 0
      %1463 = vmatmul.mubr.bf16.gmra.mrb[0].mxu0 %v1356
      %v1464 = vpop.f32.mrb[0].mxu0
      %v1465 = vadd.f32 0.0, %v1464
      %v1466 = vpop.f32.mrb[0].mxu0
      %v1467 = vpop.f32.mrb[0].mxu0
      %v1468 = vadd.f32 0.0, %v1467
      %v1469 = vpop.f32.mrb[0].mxu0
      %1470 = vmatprep.mubr.bf16.mxu0 0
      %1471 = vmatmul.mubr.bf16.gmra.mrb[0].mxu0 %v1358
      %v1472 = vpop.f32.mrb[0].mxu0
      %v1473 = vadd.f32 0.0, %v1472
      %v1474 = vpop.f32.mrb[0].mxu0
      %v1475 = vpop.f32.mrb[0].mxu0
      %v1476 = vadd.f32 0.0, %v1475
      %v1477 = vpop.f32.mrb[0].mxu0
      %1478 = vmatprep.mubr.bf16.mxu0 0
      %1479 = vmatmul.mubr.bf16.gmra.mrb[0].mxu0 %v1360
      %v1480 = vpop.f32.mrb[0].mxu0
      %v1481 = vadd.f32 0.0, %v1480
      %v1482 = vpop.f32.mrb[0].mxu0
      %v1483 = vpop.f32.mrb[0].mxu0
      %v1484 = vadd.f32 0.0, %v1483
      %v1485 = vpop.f32.mrb[0].mxu0
      %1486 = vdwg.mxu0
      %v1487 = vadd.f32 %v1284, %v1449
      %v1488 = vadd.f32 %v1285, %v1452
      %v1489 = vadd.f32 %v1286, %v1457
      %v1490 = vadd.f32 %v1287, %v1460
      %v1491 = vadd.f32 %v1288, %v1465
      %v1492 = vadd.f32 %v1289, %v1468
      %v1493 = vadd.f32 %v1290, %v1473
      %v1494 = vadd.f32 %v1291, %v1476
      %v1495 = vadd.f32 %v1292, %v1481
      %v1496 = vadd.f32 %v1293, %v1484
      %v1497 = vld [vmem:[%s165 + $0x30] sm:$0x7]
      %s1498 = scalar_lea.vmem %s1, 448
      %v1499 = vld [vmem:[%s1498] sm:$0xf]
      %v1500 = vld [vmem:[%s1498 + $0x4] sm:$0xf]
      %v1501 = vld [vmem:[%s1498 + $0x8] sm:$0xf]
      %v1502 = vld [vmem:[%s1498 + $0xc] sm:$0xf]
      %v1503 = vld [vmem:[%s1498 + $0x10] sm:$0xf]
      %v1504 = vld [vmem:[%s1498 + $0x14] sm:$0xf]
      %v1505 = vld [vmem:[%s1498 + $0x18] sm:$0xf]
      %v1506 = vld [vmem:[%s1498 + $0x1c] sm:$0xf]
      %v1507 = vld [vmem:[%s1498 + $0x20] sm:$0xf]
      %v1508 = vld [vmem:[%s1498 + $0x24] sm:$0xf]
      %v1509 = vld [vmem:[%s1498 + $0x28] sm:$0xf]
      %v1510 = vld [vmem:[%s1498 + $0x2c] sm:$0xf]
      %v1511 = vld [vmem:[%s1498 + $0x30] sm:$0xf]
      %v1512 = vld [vmem:[%s1498 + $0x34] sm:$0xf]
      %v1513 = vld [vmem:[%s1498 + $0x38] sm:$0xf]
      %v1514 = vld [vmem:[%s1498 + $0x3c] sm:$0xf]
      %v1516 = vunpack.c.l.b16 %v1497
      %v1517 = vpack.c.b16 %v1516, %v1516
      %vm1518 = vsmask.f32 5376
      %v1520 = vshrl.u32 %v1344, 16
      %v1522 = vrot.slane %v1520, 2
      %v1523 = vshll.u32 %v1344, 16
      %v1525 = vrot.slane %v1523, 3
      %v1526 = vor.u32 %v1522, %v1525
      %v1528 = vshrl.u32 %v1345, 16
      %v1530 = vrot.slane %v1528, 2
      %v1531 = vshll.u32 %v1345, 16
      %v1533 = vrot.slane %v1531, 3
      %v1534 = vor.u32 %v1530, %v1533
      %v1535 = vsel %vm1518, %v1526, %v1534
      %v1537 = vshrl.u32 %v1346, 16
      %v1539 = vrot.slane %v1537, 2
      %v1540 = vshll.u32 %v1346, 16
      %v1542 = vrot.slane %v1540, 3
      %v1543 = vor.u32 %v1539, %v1542
      %v1544 = vsel %vm1518, %v1534, %v1543
      %v1546 = vshrl.u32 %v1347, 16
      %v1548 = vrot.slane %v1546, 2
      %v1549 = vshll.u32 %v1347, 16
      %v1551 = vrot.slane %v1549, 3
      %v1552 = vor.u32 %v1548, %v1551
      %v1553 = vsel %vm1518, %v1543, %v1552
      %v1555 = vshrl.u32 %v1348, 16
      %v1557 = vrot.slane %v1555, 2
      %v1558 = vshll.u32 %v1348, 16
      %v1560 = vrot.slane %v1558, 3
      %v1561 = vor.u32 %v1557, %v1560
      %v1562 = vsel %vm1518, %v1552, %v1561
      %v1564 = vshrl.u32 %v1517, 16
      %v1566 = vrot.slane %v1564, 2
      %v1567 = vshll.u32 %v1517, 16
      %v1569 = vrot.slane %v1567, 3
      %v1570 = vor.u32 %v1566, %v1569
      %v1571 = vsel %vm1518, %v1561, %v1570
      %v1593 = vunpack.c.l.b16 %v1499
      %v1594 = vunpack.c.l.b16 %v1500
      %v1595 = vunpack.c.l.b16 %v1501
      %v1596 = vunpack.c.l.b16 %v1502
      %v1597 = vunpack.c.l.b16 %v1503
      %v1598 = vunpack.c.l.b16 %v1504
      %v1599 = vunpack.c.l.b16 %v1505
      %v1600 = vunpack.c.l.b16 %v1506
      %v1601 = vunpack.c.l.b16 %v1507
      %v1602 = vunpack.c.l.b16 %v1508
      %v1603 = vunpack.c.l.b16 %v1509
      %v1604 = vunpack.c.l.b16 %v1510
      %v1605 = vunpack.c.l.b16 %v1511
      %v1606 = vunpack.c.l.b16 %v1512
      %v1607 = vunpack.c.l.b16 %v1513
      %v1608 = vunpack.c.l.b16 %v1514
      %v1609 = vpack.c.b16 %v1594, %v1593
      %v1610 = vpack.c.b16 %v1596, %v1595
      %v1611 = vpack.c.b16 %v1598, %v1597
      %v1612 = vpack.c.b16 %v1600, %v1599
      %v1613 = vpack.c.b16 %v1602, %v1601
      %v1614 = vpack.c.b16 %v1604, %v1603
      %v1615 = vpack.c.b16 %v1606, %v1605
      %v1616 = vpack.c.b16 %v1608, %v1607
      %1625 = vmatprep.subr.bf16.mxu0 0
      %1626 = vmatpush1.bf16.msra.mxu0 %v1609
      %1627 = vmatprep.subr.bf16.mxu0 0
      %1628 = vmatpush1.bf16.msra.mxu0 %v1610
      %1629 = vmatprep.subr.bf16.mxu0 0
      %1630 = vmatpush1.bf16.msra.mxu0 %v1611
      %1631 = vmatprep.subr.bf16.mxu0 0
      %1632 = vmatpush1.bf16.msra.mxu0 %v1612
      %1633 = vmatprep.subr.bf16.mxu0 0
      %1634 = vmatpush1.bf16.msra.mxu0 %v1613
      %1635 = vmatprep.subr.bf16.mxu0 0
      %1636 = vmatpush1.bf16.msra.mxu0 %v1614
      %1637 = vmatprep.subr.bf16.mxu0 0
      %1638 = vmatpush1.bf16.msra.mxu0 %v1615
      %1639 = vmatprep.subr.bf16.mxu0 0
      %1640 = vmatpush1.bf16.msra.mxu0 %v1616
      %1641 = vmatprep.subr.bf16.mxu0 0
      %1642 = vmatpush1.bf16.msra.mxu0 0
      %1643 = vmatprep.subr.bf16.mxu0 0
      %1644 = vmatpush1.bf16.msra.mxu0 0
      %1645 = vmatprep.subr.bf16.mxu0 0
      %1646 = vmatpush1.bf16.msra.mxu0 0
      %1647 = vmatprep.subr.bf16.mxu0 0
      %1648 = vmatpush1.bf16.msra.mxu0 0
      %1649 = vmatprep.subr.bf16.mxu0 0
      %1650 = vmatpush1.bf16.msra.mxu0 0
      %1651 = vmatprep.subr.bf16.mxu0 0
      %1652 = vmatpush1.bf16.msra.mxu0 0
      %1653 = vmatprep.subr.bf16.mxu0 0
      %1654 = vmatpush1.bf16.msra.mxu0 0
      %1655 = vmatprep.subr.bf16.mxu0 0
      %1656 = vmatpush1.bf16.msra.mxu0 0
      %1657 = vmatprep.mubr.bf16.mxu0 0
      %1658 = vmatmul.mubr.bf16.gmra.mrb[0].mxu0 %v1535
      %v1659 = vpop.f32.mrb[0].mxu0
      %v1660 = vadd.f32 0.0, %v1659
      %v1661 = vpop.f32.mrb[0].mxu0
      %v1662 = vpop.f32.mrb[0].mxu0
      %v1663 = vadd.f32 0.0, %v1662
      %v1664 = vpop.f32.mrb[0].mxu0
      %1665 = vmatprep.mubr.bf16.mxu0 0
      %1666 = vmatmul.mubr.bf16.gmra.mrb[0].mxu0 %v1544
      %v1667 = vpop.f32.mrb[0].mxu0
      %v1668 = vadd.f32 0.0, %v1667
      %v1669 = vpop.f32.mrb[0].mxu0
      %v1670 = vpop.f32.mrb[0].mxu0
      %v1671 = vadd.f32 0.0, %v1670
      %v1672 = vpop.f32.mrb[0].mxu0
      %1673 = vmatprep.mubr.bf16.mxu0 0
      %1674 = vmatmul.mubr.bf16.gmra.mrb[0].mxu0 %v1553
      %v1675 = vpop.f32.mrb[0].mxu0
      %v1676 = vadd.f32 0.0, %v1675
      %v1677 = vpop.f32.mrb[0].mxu0
      %v1678 = vpop.f32.mrb[0].mxu0
      %v1679 = vadd.f32 0.0, %v1678
      %v1680 = vpop.f32.mrb[0].mxu0
      %1681 = vmatprep.mubr.bf16.mxu0 0
      %1682 = vmatmul.mubr.bf16.gmra.mrb[0].mxu0 %v1562
      %v1683 = vpop.f32.mrb[0].mxu0
      %v1684 = vadd.f32 0.0, %v1683
      %v1685 = vpop.f32.mrb[0].mxu0
      %v1686 = vpop.f32.mrb[0].mxu0
      %v1687 = vadd.f32 0.0, %v1686
      %v1688 = vpop.f32.mrb[0].mxu0
      %1689 = vmatprep.mubr.bf16.mxu0 0
      %1690 = vmatmul.mubr.bf16.gmra.mrb[0].mxu0 %v1571
      %v1691 = vpop.f32.mrb[0].mxu0
      %v1692 = vadd.f32 0.0, %v1691
      %v1693 = vpop.f32.mrb[0].mxu0
      %v1694 = vpop.f32.mrb[0].mxu0
      %v1695 = vadd.f32 0.0, %v1694
      %v1696 = vpop.f32.mrb[0].mxu0
      %1697 = vdwg.mxu0
      %v1698 = vadd.f32 %v1487, %v1660
      %v1699 = vadd.f32 %v1488, %v1663
      %v1700 = vadd.f32 %v1489, %v1668
      %v1701 = vadd.f32 %v1490, %v1671
      %v1702 = vadd.f32 %v1491, %v1676
      %v1703 = vadd.f32 %v1492, %v1679
      %v1704 = vadd.f32 %v1493, %v1684
      %v1705 = vadd.f32 %v1494, %v1687
      %v1706 = vadd.f32 %v1495, %v1692
      %v1707 = vadd.f32 %v1496, %v1695
      %v1708 = vld [vmem:[%s165 + $0x8] sm:$0x8]
      %s1709 = scalar_lea.vmem %s1, 512
      %v1710 = vld [vmem:[%s1709] sm:$0xf]
      %v1711 = vld [vmem:[%s1709 + $0x4] sm:$0xf]
      %v1712 = vld [vmem:[%s1709 + $0x8] sm:$0xf]
      %v1713 = vld [vmem:[%s1709 + $0xc] sm:$0xf]
      %v1714 = vld [vmem:[%s1709 + $0x10] sm:$0xf]
      %v1715 = vld [vmem:[%s1709 + $0x14] sm:$0xf]
      %v1716 = vld [vmem:[%s1709 + $0x18] sm:$0xf]
      %v1717 = vld [vmem:[%s1709 + $0x1c] sm:$0xf]
      %v1718 = vld [vmem:[%s1709 + $0x20] sm:$0xf]
      %v1719 = vld [vmem:[%s1709 + $0x24] sm:$0xf]
      %v1720 = vld [vmem:[%s1709 + $0x28] sm:$0xf]
      %v1721 = vld [vmem:[%s1709 + $0x2c] sm:$0xf]
      %v1722 = vld [vmem:[%s1709 + $0x30] sm:$0xf]
      %v1723 = vld [vmem:[%s1709 + $0x34] sm:$0xf]
      %v1724 = vld [vmem:[%s1709 + $0x38] sm:$0xf]
      %v1725 = vld [vmem:[%s1709 + $0x3c] sm:$0xf]
      %v1727 = vunpack.c.l.b16 %v1708
      %v1728 = vpack.c.b16 %v1334, %v1727
      %vm1729 = vcmask 1044480
      %v1730 = vrot.slane %v1728, 3
      %v1731 = vrot.slane %v1345, 3
      %v1732 = vsel %vm1729, %v1730, %v1731
      %v1733 = vrot.slane %v1346, 3
      %v1734 = vsel %vm1729, %v1731, %v1733
      %v1735 = vrot.slane %v1347, 3
      %v1736 = vsel %vm1729, %v1733, %v1735
      %v1737 = vrot.slane %v1348, 3
      %v1738 = vsel %vm1729, %v1735, %v1737
      %v1739 = vrot.slane %v1517, 3
      %v1740 = vsel %vm1729, %v1737, %v1739
      %v1762 = vunpack.c.l.b16 %v1710
      %v1763 = vunpack.c.l.b16 %v1711
      %v1764 = vunpack.c.l.b16 %v1712
      %v1765 = vunpack.c.l.b16 %v1713
      %v1766 = vunpack.c.l.b16 %v1714
      %v1767 = vunpack.c.l.b16 %v1715
      %v1768 = vunpack.c.l.b16 %v1716
      %v1769 = vunpack.c.l.b16 %v1717
      %v1770 = vunpack.c.l.b16 %v1718
      %v1771 = vunpack.c.l.b16 %v1719
      %v1772 = vunpack.c.l.b16 %v1720
      %v1773 = vunpack.c.l.b16 %v1721
      %v1774 = vunpack.c.l.b16 %v1722
      %v1775 = vunpack.c.l.b16 %v1723
      %v1776 = vunpack.c.l.b16 %v1724
      %v1777 = vunpack.c.l.b16 %v1725
      %v1778 = vpack.c.b16 %v1763, %v1762
      %v1779 = vpack.c.b16 %v1765, %v1764
      %v1780 = vpack.c.b16 %v1767, %v1766
      %v1781 = vpack.c.b16 %v1769, %v1768
      %v1782 = vpack.c.b16 %v1771, %v1770
      %v1783 = vpack.c.b16 %v1773, %v1772
      %v1784 = vpack.c.b16 %v1775, %v1774
      %v1785 = vpack.c.b16 %v1777, %v1776
      %1794 = vmatprep.subr.bf16.mxu0 0
      %1795 = vmatpush1.bf16.msra.mxu0 %v1778
      %1796 = vmatprep.subr.bf16.mxu0 0
      %1797 = vmatpush1.bf16.msra.mxu0 %v1779
      %1798 = vmatprep.subr.bf16.mxu0 0
      %1799 = vmatpush1.bf16.msra.mxu0 %v1780
      %1800 = vmatprep.subr.bf16.mxu0 0
      %1801 = vmatpush1.bf16.msra.mxu0 %v1781
      %1802 = vmatprep.subr.bf16.mxu0 0
      %1803 = vmatpush1.bf16.msra.mxu0 %v1782
      %1804 = vmatprep.subr.bf16.mxu0 0
      %1805 = vmatpush1.bf16.msra.mxu0 %v1783
      %1806 = vmatprep.subr.bf16.mxu0 0
      %1807 = vmatpush1.bf16.msra.mxu0 %v1784
      %1808 = vmatprep.subr.bf16.mxu0 0
      %1809 = vmatpush1.bf16.msra.mxu0 %v1785
      %1810 = vmatprep.subr.bf16.mxu0 0
      %1811 = vmatpush1.bf16.msra.mxu0 0
      %1812 = vmatprep.subr.bf16.mxu0 0
      %1813 = vmatpush1.bf16.msra.mxu0 0
      %1814 = vmatprep.subr.bf16.mxu0 0
      %1815 = vmatpush1.bf16.msra.mxu0 0
      %1816 = vmatprep.subr.bf16.mxu0 0
      %1817 = vmatpush1.bf16.msra.mxu0 0
      %1818 = vmatprep.subr.bf16.mxu0 0
      %1819 = vmatpush1.bf16.msra.mxu0 0
      %1820 = vmatprep.subr.bf16.mxu0 0
      %1821 = vmatpush1.bf16.msra.mxu0 0
      %1822 = vmatprep.subr.bf16.mxu0 0
      %1823 = vmatpush1.bf16.msra.mxu0 0
      %1824 = vmatprep.subr.bf16.mxu0 0
      %1825 = vmatpush1.bf16.msra.mxu0 0
      %1826 = vmatprep.mubr.bf16.mxu0 0
      %1827 = vmatmul.mubr.bf16.gmra.mrb[0].mxu0 %v1732
      %v1828 = vpop.f32.mrb[0].mxu0
      %v1829 = vadd.f32 0.0, %v1828
      %v1830 = vpop.f32.mrb[0].mxu0
      %v1831 = vpop.f32.mrb[0].mxu0
      %v1832 = vadd.f32 0.0, %v1831
      %v1833 = vpop.f32.mrb[0].mxu0
      %1834 = vmatprep.mubr.bf16.mxu0 0
      %1835 = vmatmul.mubr.bf16.gmra.mrb[0].mxu0 %v1734
      %v1836 = vpop.f32.mrb[0].mxu0
      %v1837 = vadd.f32 0.0, %v1836
      %v1838 = vpop.f32.mrb[0].mxu0
      %v1839 = vpop.f32.mrb[0].mxu0
      %v1840 = vadd.f32 0.0, %v1839
      %v1841 = vpop.f32.mrb[0].mxu0
      %1842 = vmatprep.mubr.bf16.mxu0 0
      %1843 = vmatmul.mubr.bf16.gmra.mrb[0].mxu0 %v1736
      %v1844 = vpop.f32.mrb[0].mxu0
      %v1845 = vadd.f32 0.0, %v1844
      %v1846 = vpop.f32.mrb[0].mxu0
      %v1847 = vpop.f32.mrb[0].mxu0
      %v1848 = vadd.f32 0.0, %v1847
      %v1849 = vpop.f32.mrb[0].mxu0
      %1850 = vmatprep.mubr.bf16.mxu0 0
      %1851 = vmatmul.mubr.bf16.gmra.mrb[0].mxu0 %v1738
      %v1852 = vpop.f32.mrb[0].mxu0
      %v1853 = vadd.f32 0.0, %v1852
      %v1854 = vpop.f32.mrb[0].mxu0
      %v1855 = vpop.f32.mrb[0].mxu0
      %v1856 = vadd.f32 0.0, %v1855
      %v1857 = vpop.f32.mrb[0].mxu0
      %1858 = vmatprep.mubr.bf16.mxu0 0
      %1859 = vmatmul.mubr.bf16.gmra.mrb[0].mxu0 %v1740
      %v1860 = vpop.f32.mrb[0].mxu0
      %v1861 = vadd.f32 0.0, %v1860
      %v1862 = vpop.f32.mrb[0].mxu0
      %v1863 = vpop.f32.mrb[0].mxu0
      %v1864 = vadd.f32 0.0, %v1863
      %v1865 = vpop.f32.mrb[0].mxu0
      %1866 = vdwg.mxu0
      %v1867 = vadd.f32 %v1698, %v1829
      %v1868 = vadd.f32 %v1699, %v1832
      %v1869 = vadd.f32 %v1700, %v1837
      %v1870 = vadd.f32 %v1701, %v1840
      %v1871 = vadd.f32 %v1702, %v1845
      %v1872 = vadd.f32 %v1703, %v1848
      %v1873 = vadd.f32 %v1704, %v1853
      %v1874 = vadd.f32 %v1705, %v1856
      %v1875 = vadd.f32 %v1706, %v1861
      %v1876 = vadd.f32 %v1707, %v1864
      %v1878 = vlaneseq
      %v1879 = vshrl.u32 %v1878, 7
      %v1880 = vsub.s32 0, %v1879
      %v1881 = vrot.slane %v172, %v1880
      %v1883 = vadd.f32 %v1867, %v1881
      %v1884 = vadd.f32 %v1868, %v1881
      %v1885 = vadd.f32 %v1869, %v1881
      %v1886 = vadd.f32 %v1870, %v1881
      %v1887 = vadd.f32 %v1871, %v1881
      %v1888 = vadd.f32 %v1872, %v1881
      %v1889 = vadd.f32 %v1873, %v1881
      %v1890 = vadd.f32 %v1874, %v1881
      %v1891 = vadd.f32 %v1875, %v1881
      %v1892 = vadd.f32 %v1876, %v1881
      %v1893 = vmax.f32 %v1883, 0.0
      %v1894 = vmax.f32 %v1884, 0.0
      %v1895 = vmax.f32 %v1885, 0.0
      %v1896 = vmax.f32 %v1886, 0.0
      %v1897 = vmax.f32 %v1887, 0.0
      %v1898 = vmax.f32 %v1888, 0.0
      %v1899 = vmax.f32 %v1889, 0.0
      %v1900 = vmax.f32 %v1890, 0.0
      %v1901 = vmax.f32 %v1891, 0.0
      %v1902 = vmax.f32 %v1892, 0.0
      %v1903 = vpack.c.bf16 %v1894, %v1893
      %v1904 = vpack.c.bf16 %v1896, %v1895
      %v1905 = vpack.c.bf16 %v1898, %v1897
      %v1906 = vpack.c.bf16 %v1900, %v1899
      %v1907 = vpack.c.bf16 %v1902, %v1901
      %v1913 = vunpack.c.l.b16 %v1903
      %v1914 = vunpack.c.h.b16 %v1903
      %v1915 = vunpack.c.l.b16 %v1904
      %v1916 = vunpack.c.h.b16 %v1904
      %v1917 = vunpack.c.l.b16 %v1905
      %v1918 = vunpack.c.h.b16 %v1905
      %v1919 = vunpack.c.l.b16 %v1906
      %v1920 = vunpack.c.h.b16 %v1906
      %v1921 = vunpack.c.l.b16 %v1907
      %v1922 = vunpack.c.h.b16 %v1907
      %v1923 = vpack.c.b16 %v1913, %v1913
      %v1924 = vpack.c.b16 %v1914, %v1914
      %v1925 = vpack.c.b16 %v1915, %v1915
      %v1926 = vpack.c.b16 %v1916, %v1916
      %v1927 = vpack.c.b16 %v1917, %v1917
      %v1928 = vpack.c.b16 %v1918, %v1918
      %v1929 = vpack.c.b16 %v1919, %v1919
      %v1930 = vpack.c.b16 %v1920, %v1920
      %v1931 = vpack.c.b16 %v1921, %v1921
      %v1932 = vpack.c.b16 %v1922, %v1922
      %1943 = vst [vmem:[%s170] sm:$0xf] %v1923
      %1944 = vst [vmem:[%s170 + $0x4] sm:$0xf] %v1924
      %1945 = vst [vmem:[%s170 + $0x8] sm:$0xf] %v1925
      %1946 = vst [vmem:[%s170 + $0xc] sm:$0xf] %v1926
      %1947 = vst [vmem:[%s170 + $0x10] sm:$0xf] %v1927
      %1948 = vst [vmem:[%s170 + $0x14] sm:$0xf] %v1928
      %1949 = vst [vmem:[%s170 + $0x18] sm:$0xf] %v1929
      %1950 = vst [vmem:[%s170 + $0x1c] sm:$0xf] %v1930
      %1951 = vst [vmem:[%s170 + $0x20] sm:$0xf] %v1931
      %1952 = vst [vmem:[%s170 + $0x24] sm:$0xf] %v1932
      %p1953 = scmp.lt.s32.totalorder %s14, 23
      %s1954 = scalar_select %p1953, %s14, 23
      %s1955 = smul.addr %s1954, 10
      %s1956 = smul.addr %s1955, 4
      %s1957 = scalar_lea.vmem %s3, %s1956
      // Predicated region
      $region33: #{wild_relation_network_forward.7} parent=31 // pred_check
        %p1958 = pneg %p100
      $region34: #{wild_relation_network_forward.7} parent=31 // pred_check_branch
        %1960 = sbr.rel (%p1958) target = $region36
      $region35: #{wild_relation_network_forward.7} parent=31 // pred_region
        _
      $region36: #{wild_relation_network_forward.7} parent=31 // pred_fallthru
        _
    $region32: #{wild_relation_network_forward.7} parent=5 // pred_fallthru
      _
    %p1961 = scmp.le.s32.totalorder 2, %s9
    // Predicated region
    $region37: #{wild_relation_network_forward.7} parent=5 // pred_check
      %p1962 = pneg %p1961
    $region38: #{wild_relation_network_forward.7} parent=5 // pred_check_branch
      %1964 = sbr.rel (%p1962) target = $region40
    $region39: #{wild_relation_network_forward.7} parent=5 // pred_region
      %s1965 = ssub.s32 %s9, 2
      // Predicated region
      $region41: #{wild_relation_network_forward.7} parent=39 // pred_check
        %p1966 = pneg %p106
      $region42: #{wild_relation_network_forward.7} parent=39 // pred_check_branch
        %1968 = sbr.rel (%p1966) target = $region44
      $region43: #{wild_relation_network_forward.7} parent=39 // pred_region
        %p1969 = scmp.lt.s32.totalorder %s15, 23
        %s1970 = scalar_select %p1969, %s15, 23
        %s1971 = smul.addr %s1970, 10
        %s1972 = smul.addr %s1971, 4
        %s1973 = scalar_lea.vmem %s3, %s1972
      $region44: #{wild_relation_network_forward.7} parent=39 // pred_fallthru
        _
    $region40: #{wild_relation_network_forward.7} parent=5 // pred_fallthru
      _
  $region6: #{wild_relation_network_forward.7} parent=0 // loop_footer
    %s13 = sadd.s32 1, %s9
  $region7: #{wild_relation_network_forward.7} parent=0 // loop_footer_branch
    %8 = sbr.rel target = $region3
  $region8: #{wild_relation_network_forward.7} parent=0 // loop_exit
    _

// kernel: wild_relation_network_forward.10
$region0: #{wild_relation_network_forward.10}
  #allocation0 [shape = 'u32[]', space=smem, size = 0x4, offset = 0x4, fixed_abs, tag = 'smem constant byte address 0x4 - core index']
  #allocation1 [shape = 'u32[144,128]{1,0:T(1,128)}', space=vmem, size = 0x12000, scoped, tag = 'internal scratch']
  #allocation2 [shape = 'f32[128,256]{1,0:T(8,128)}', space=vmem, size = 0x20000, scoped, tag = 'scratch operand']
  %s0 = inlined_call_operand.vmem [shape: bf16[128,1024], index: 0, kind: input, shape index: {}]
  %s1 = inlined_call_operand.vmem [shape: bf16[1024,256], index: 1, kind: input, shape index: {}]
  %s2 = inlined_call_operand.vmem [shape: f32[1,256], index: 2, kind: input, shape index: {}]
  %s3 = inlined_call_operand.vmem [shape: f32[128,256], index: 3, kind: output, shape index: {}]
  %s4 = sld [smem:[#allocation0]]
  $region76: #{wild_relation_network_forward.10} parent=0
    _
  %s6 = ssub.s32 1, %s4
  %s7 = scalar_select 0, %s6, %s4
  $region1: #{wild_relation_network_forward.10} parent=0
    #allocation3 [shape = 'u8[262144]{0}', space=vmem, size = 0x40000, scoped, tag = 'input window, operand 0']
    loop: start=0, step=1, limit=4
    $region2: #{wild_relation_network_forward.10} parent=1 // loop_pre_header
      _
    $region3: #{wild_relation_network_forward.10} parent=1 // loop_header
      %s9 = sphi 0, %s13
      %p10 = scmp.ge.s32.totalorder %s9, 4
      %s16 = sphi 0, %s35
      %s17 = sphi 0, %s31
      %s18 = sphi 0, %s27
      %s19 = sphi 0, %s16
      %s20 = sphi 0, %s17
      %s21 = sphi 0, %s18
      %s22 = sphi 0, %s19
      %s23 = sphi 0, %s20
      %s24 = sphi 0, %s21
      %s40 = sphi 0, %s42
      %s43 = sphi 0, %s40
      %s44 = sphi 0, %s43
      %s60 = sphi 0, %s44
      %s68 = sphi 0, %s70
      %s71 = sphi 0, %s68
      %s72 = sphi 0, %s71
      %s88 = sphi 0, %s72
      %s94 = sphi 0, %s96
      %s97 = sphi 0, %s94
      %s98 = sphi 0, %s97
      %s114 = sphi 0, %s98
      %s122 = sphi 0, %s124
      %s125 = sphi 0, %s122
      %s126 = sphi 0, %s125
      %s142 = sphi 0, %s126
    $region4: #{wild_relation_network_forward.10} parent=1 // loop_header_branch
      %12 = sbr.rel (%p10) target = $region8
    $region5: #{wild_relation_network_forward.10} parent=1 // loop_body
      %s14 = ssub.s32 %s9, 1
      %s15 = ssub.s32 %s9, 2
      %s25 = sadd.s32 1, %s18
      %p26 = scmp.ge.s32.totalorder %s25, 2
      %s27 = scalar_select %p26, 0, %s25
      %s28 = sadd.s32 1, %s17
      %s29 = scalar_select %p26, %s28, %s17
      %p30 = scmp.ge.s32.totalorder %s29, 1
      %s31 = scalar_select %p30, 0, %s29
      %s32 = sadd.s32 1, %s16
      %s33 = scalar_select %p30, %s32, %s16
      %p34 = scmp.ge.s32.totalorder %s33, 1
      %s35 = scalar_select %p34, 0, %s33
      %s36 = ssub.s32 %s16, %s35
      %s37 = ssub.s32 %s18, %s27
      %s38 = sor.u32 %s36, %s37
      %p39 = scmp.eq.s32.totalorder %s38, 0
      %s41 = sadd.s32 %s40, 1
      %s42 = scalar_select %p39, %s40, %s41
      %p45 = pneg %p39
      %p46 = scmp.eq.s32.totalorder %s9, 1
      %p47 = por %p45, %p46
      %p48 = scmp.ne.s32.totalorder %s40, %s43
      %p49 = scmp.eq.s32.totalorder %s9, 0
      %p50 = por %p48, %p49
      %p51 = scmp.ne.s32.totalorder %s40, %s43
      %p52 = scmp.eq.s32.totalorder %s14, 1
      %p53 = por %p51, %p52
      %p54 = scmp.ne.s32.totalorder %s43, %s44
      %p55 = scmp.eq.s32.totalorder %s14, 0
      %p56 = por %p54, %p55
      %p57 = scmp.ne.s32.totalorder %s43, %s44
      %p58 = scmp.eq.s32.totalorder %s15, 1
      %p59 = por %p57, %p58
      %p61 = scmp.ne.s32.totalorder %s44, %s60
      %p62 = scmp.eq.s32.totalorder %s15, 0
      %p63 = por %p61, %p62
      %s64 = ssub.s32 %s18, %s27
      %s65 = ssub.s32 %s17, %s31
      %s66 = sor.u32 %s64, %s65
      %p67 = scmp.eq.s32.totalorder %s66, 0
      %s69 = sadd.s32 %s68, 1
      %s70 = scalar_select %p67, %s68, %s69
      %p73 = pneg %p67
      %p74 = scmp.eq.s32.totalorder %s9, 1
      %p75 = por %p73, %p74
      %p76 = scmp.ne.s32.totalorder %s68, %s71
      %p77 = scmp.eq.s32.totalorder %s9, 0
      %p78 = por %p76, %p77
      %p79 = scmp.ne.s32.totalorder %s68, %s71
      %p80 = scmp.eq.s32.totalorder %s14, 1
      %p81 = por %p79, %p80
      %p82 = scmp.ne.s32.totalorder %s71, %s72
      %p83 = scmp.eq.s32.totalorder %s14, 0
      %p84 = por %p82, %p83
      %p85 = scmp.ne.s32.totalorder %s71, %s72
      %p86 = scmp.eq.s32.totalorder %s15, 1
      %p87 = por %p85, %p86
      %p89 = scmp.ne.s32.totalorder %s72, %s88
      %p90 = scmp.eq.s32.totalorder %s15, 0
      %p91 = por %p89, %p90
      %s92 = ssub.s32 %s17, %s31
      %p93 = scmp.eq.s32.totalorder %s92, 0
      %s95 = sadd.s32 %s94, 1
      %s96 = scalar_select %p93, %s94, %s95
      %p99 = pneg %p93
      %p100 = scmp.eq.s32.totalorder %s9, 1
      %p101 = por %p99, %p100
      %p102 = scmp.ne.s32.totalorder %s94, %s97
      %p103 = scmp.eq.s32.totalorder %s9, 0
      %p104 = por %p102, %p103
      %p105 = scmp.ne.s32.totalorder %s94, %s97
      %p106 = scmp.eq.s32.totalorder %s14, 1
      %p107 = por %p105, %p106
      %p108 = scmp.ne.s32.totalorder %s97, %s98
      %p109 = scmp.eq.s32.totalorder %s14, 0
      %p110 = por %p108, %p109
      %p111 = scmp.ne.s32.totalorder %s97, %s98
      %p112 = scmp.eq.s32.totalorder %s15, 1
      %p113 = por %p111, %p112
      %p115 = scmp.ne.s32.totalorder %s98, %s114
      %p116 = scmp.eq.s32.totalorder %s15, 0
      %p117 = por %p115, %p116
      %s118 = ssub.s32 %s16, %s35
      %s119 = ssub.s32 %s17, %s31
      %s120 = sor.u32 %s118, %s119
      %p121 = scmp.eq.s32.totalorder %s120, 0
      %s123 = sadd.s32 %s122, 1
      %s124 = scalar_select %p121, %s122, %s123
      %p127 = pneg %p121
      %p128 = scmp.eq.s32.totalorder %s9, 1
      %p129 = por %p127, %p128
      %p130 = scmp.ne.s32.totalorder %s122, %s125
      %p131 = scmp.eq.s32.totalorder %s9, 0
      %p132 = por %p130, %p131
      %p133 = scmp.ne.s32.totalorder %s122, %s125
      %p134 = scmp.eq.s32.totalorder %s14, 1
      %p135 = por %p133, %p134
      %p136 = scmp.ne.s32.totalorder %s125, %s126
      %p137 = scmp.eq.s32.totalorder %s14, 0
      %p138 = por %p136, %p137
      %p139 = scmp.ne.s32.totalorder %s125, %s126
      %p140 = scmp.eq.s32.totalorder %s15, 1
      %p141 = por %p139, %p140
      %p143 = scmp.ne.s32.totalorder %s126, %s142
      %p144 = scmp.eq.s32.totalorder %s15, 0
      %p145 = por %p143, %p144
      %p146 = scmp.le.s32.totalorder 1, %s9
      %p147 = scmp.lt.s32.totalorder %s9, 3
      %p148 = pnand %p146, %p147
      %p149 = pneg %p148
      // Predicated region
      $region9: #{wild_relation_network_forward.10} parent=5 // pred_check
        _
      $region10: #{wild_relation_network_forward.10} parent=5 // pred_check_branch
        %151 = sbr.rel (%p148) target = $region12
      $region11: #{wild_relation_network_forward.10} parent=5 // pred_region
        %s152 = ssub.s32 %s9, 1
        // Predicated region
        $region13: #{wild_relation_network_forward.10} parent=11 // pred_check
          %p153 = pneg %p110
        $region14: #{wild_relation_network_forward.10} parent=11 // pred_check_branch
          %155 = sbr.rel (%p153) target = $region16
        $region15: #{wild_relation_network_forward.10} parent=11 // pred_region
          %s156 = smul.u32 2, %s20
          %p157 = scmp.lt.s32.totalorder %s156, 1
          %s158 = scalar_select %p157, %s156, 1
          %s159 = scalar_lea.vmem %s2, %s158
          %s160 = smul.u32 2, %s20
        $region16: #{wild_relation_network_forward.10} parent=11 // pred_fallthru
          _
      $region12: #{wild_relation_network_forward.10} parent=5 // pred_fallthru
        _
      %p161 = scmp.lt.s32.totalorder %s9, 2
      // Predicated region
      $region17: #{wild_relation_network_forward.10} parent=5 // pred_check
        %p162 = pneg %p161
      $region18: #{wild_relation_network_forward.10} parent=5 // pred_check_branch
        %164 = sbr.rel (%p162) target = $region20
      $region19: #{wild_relation_network_forward.10} parent=5 // pred_region
        // Predicated region
        $region21: #{wild_relation_network_forward.10} parent=19 // pred_check
          %p165 = pneg %p50
        $region22: #{wild_relation_network_forward.10} parent=19 // pred_check_branch
          %167 = sbr.rel (%p165) target = $region24
        $region23: #{wild_relation_network_forward.10} parent=19 // pred_region
          %s168 = sand.u32 %s40, 1
          %s169 = sand.u32 %s40, 1
          %s170 = smul.addr %s169, 256
          %s171 = scalar_lea.vmem [#allocation3], %s170
          %s172 = smul.u32 16, %s16
          %s173 = smul.u32 4, %s18
          %s174 = smul.addr %s172, 8
          %s175 = sadd.s32 %s173, %s174
          %s176 = smul.addr %s175, 4
          %s177 = scalar_lea.vmem %s0, %s176
          // Predicated region
          $region25: #{wild_relation_network_forward.10} parent=23 // pred_check
            _
          $region26: #{wild_relation_network_forward.10} parent=23 // pred_check_branch
            %179 = sbr.rel (0) target = $region28
          $region27: #{wild_relation_network_forward.10} parent=23 // pred_region
            // Predicated region
            $region29: #{wild_relation_network_forward.10} parent=27 // pred_check
              _
            $region30: #{wild_relation_network_forward.10} parent=27 // pred_check_branch
              %181 = sbr.rel (0) target = $region32
            $region31: #{wild_relation_network_forward.10} parent=27 // pred_region
              loop: start=0, step=1, limit=1
              $region33: #{wild_relation_network_forward.10} parent=31 // loop_pre_header
                _
              $region34: #{wild_relation_network_forward.10} parent=31 // loop_header
                %s183 = sphi 0, %s187
                %p184 = scmp.ge.s32.totalorder %s183, 1
                %s188 = sphi %s177, %s177
                %s189 = sphi %s171, %s171
              $region35: #{wild_relation_network_forward.10} parent=31 // loop_header_branch
                %186 = sbr.rel (%p184) target = $region39
              $region36: #{wild_relation_network_forward.10} parent=31 // loop_body
                %v190 = vld [vmem:[%s188] sm:$0xff]
                %191 = vst [vmem:[%s189] sm:$0xff] %v190
                %v192 = vld [vmem:[%s188 + $0x8] sm:$0xff]
                %193 = vst [vmem:[%s189 + $0x8] sm:$0xff] %v192
                %v194 = vld [vmem:[%s188 + $0x20] sm:$0xff]
                %195 = vst [vmem:[%s189 + $0x10] sm:$0xff] %v194
                %v196 = vld [vmem:[%s188 + $0x28] sm:$0xff]
                %197 = vst [vmem:[%s189 + $0x18] sm:$0xff] %v196
                %v198 = vld [vmem:[%s188 + $0x40] sm:$0xff]
                %199 = vst [vmem:[%s189 + $0x20] sm:$0xff] %v198
                %v200 = vld [vmem:[%s188 + $0x48] sm:$0xff]
                %201 = vst [vmem:[%s189 + $0x28] sm:$0xff] %v200
                %v202 = vld [vmem:[%s188 + $0x60] sm:$0xff]
                %203 = vst [vmem:[%s189 + $0x30] sm:$0xff] %v202
                %v204 = vld [vmem:[%s188 + $0x68] sm:$0xff]
                %205 = vst [vmem:[%s189 + $0x38] sm:$0xff] %v204
                %v206 = vld [vmem:[%s188 + $0x80] sm:$0xff]
                %207 = vst [vmem:[%s189 + $0x40] sm:$0xff] %v206
                %v208 = vld [vmem:[%s188 + $0x88] sm:$0xff]
                %209 = vst [vmem:[%s189 + $0x48] sm:$0xff] %v208
                %v210 = vld [vmem:[%s188 + $0xa0] sm:$0xff]
                %211 = vst [vmem:[%s189 + $0x50] sm:$0xff] %v210
                %v212 = vld [vmem:[%s188 + $0xa8] sm:$0xff]
                %213 = vst [vmem:[%s189 + $0x58] sm:$0xff] %v212
                %v214 = vld [vmem:[%s188 + $0xc0] sm:$0xff]
                %215 = vst [vmem:[%s189 + $0x60] sm:$0xff] %v214
                %v216 = vld [vmem:[%s188 + $0xc8] sm:$0xff]
                %217 = vst [vmem:[%s189 + $0x68] sm:$0xff] %v216
                %v218 = vld [vmem:[%s188 + $0xe0] sm:$0xff]
                %219 = vst [vmem:[%s189 + $0x70] sm:$0xff] %v218
                %v220 = vld [vmem:[%s188 + $0xe8] sm:$0xff]
                %221 = vst [vmem:[%s189 + $0x78] sm:$0xff] %v220
                %v222 = vld [vmem:[%s188 + $0x100] sm:$0xff]
                %223 = vst [vmem:[%s189 + $0x80] sm:$0xff] %v222
                %v224 = vld [vmem:[%s188 + $0x108] sm:$0xff]
                %225 = vst [vmem:[%s189 + $0x88] sm:$0xff] %v224
                %v226 = vld [vmem:[%s188 + $0x120] sm:$0xff]
                %227 = vst [vmem:[%s189 + $0x90] sm:$0xff] %v226
                %v228 = vld [vmem:[%s188 + $0x128] sm:$0xff]
                %229 = vst [vmem:[%s189 + $0x98] sm:$0xff] %v228
                %v230 = vld [vmem:[%s188 + $0x140] sm:$0xff]
                %231 = vst [vmem:[%s189 + $0xa0] sm:$0xff] %v230
                %v232 = vld [vmem:[%s188 + $0x148] sm:$0xff]
                %233 = vst [vmem:[%s189 + $0xa8] sm:$0xff] %v232
                %v234 = vld [vmem:[%s188 + $0x160] sm:$0xff]
                %235 = vst [vmem:[%s189 + $0xb0] sm:$0xff] %v234
                %v236 = vld [vmem:[%s188 + $0x168] sm:$0xff]
                %237 = vst [vmem:[%s189 + $0xb8] sm:$0xff] %v236
                %v238 = vld [vmem:[%s188 + $0x180] sm:$0xff]
                %239 = vst [vmem:[%s189 + $0xc0] sm:$0xff] %v238
                %v240 = vld [vmem:[%s188 + $0x188] sm:$0xff]
                %241 = vst [vmem:[%s189 + $0xc8] sm:$0xff] %v240
                %v242 = vld [vmem:[%s188 + $0x1a0] sm:$0xff]
                %243 = vst [vmem:[%s189 + $0xd0] sm:$0xff] %v242
                %v244 = vld [vmem:[%s188 + $0x1a8] sm:$0xff]
                %245 = vst [vmem:[%s189 + $0xd8] sm:$0xff] %v244
                %v246 = vld [vmem:[%s188 + $0x1c0] sm:$0xff]
                %247 = vst [vmem:[%s189 + $0xe0] sm:$0xff] %v246
                %v248 = vld [vmem:[%s188 + $0x1c8] sm:$0xff]
                %249 = vst [vmem:[%s189 + $0xe8] sm:$0xff] %v248
                %v250 = vld [vmem:[%s188 + $0x1e0] sm:$0xff]
                %251 = vst [vmem:[%s189 + $0xf0] sm:$0xff] %v250
                %v252 = vld [vmem:[%s188 + $0x1e8] sm:$0xff]
                %253 = vst [vmem:[%s189 + $0xf8] sm:$0xff] %v252
              $region37: #{wild_relation_network_forward.10} parent=31 // loop_footer
                %s187 = sadd.s32 1, %s183
              $region38: #{wild_relation_network_forward.10} parent=31 // loop_footer_branch
                %182 = sbr.rel target = $region34
              $region39: #{wild_relation_network_forward.10} parent=31 // loop_exit
                _
            $region32: #{wild_relation_network_forward.10} parent=27 // pred_fallthru
              _
            // Predicated region
            $region40: #{wild_relation_network_forward.10} parent=27 // pred_check
              _
            $region41: #{wild_relation_network_forward.10} parent=27 // pred_check_branch
              %255 = sbr.rel target = $region43
            $region42: #{wild_relation_network_forward.10} parent=27 // pred_region
              _
            $region43: #{wild_relation_network_forward.10} parent=27 // pred_fallthru
              _
          $region28: #{wild_relation_network_forward.10} parent=23 // pred_fallthru
            _
          %256 = vnop
        $region24: #{wild_relation_network_forward.10} parent=19 // pred_fallthru
          _
        // Predicated region
        $region44: #{wild_relation_network_forward.10} parent=19 // pred_check
          %p257 = pneg %p78
        $region45: #{wild_relation_network_forward.10} parent=19 // pred_check_branch
          %259 = sbr.rel (%p257) target = $region47
        $region46: #{wild_relation_network_forward.10} parent=19 // pred_region
          %s260 = smul.u32 64, %s18
          %s261 = smul.u32 2, %s17
          %p262 = scmp.lt.s32.totalorder %s260, 127
          %s263 = scalar_select %p262, %s260, 127
          %p264 = scmp.lt.s32.totalorder %s261, 1
          %s265 = scalar_select %p264, %s261, 1
          %s266 = smul.addr %s263, 2
          %s267 = sadd.s32 %s265, %s266
          %s268 = smul.addr %s267, 4
          %s269 = scalar_lea.vmem %s1, %s268
          %s270 = smul.u32 64, %s18
          %s271 = smul.u32 2, %s17
        $region47: #{wild_relation_network_forward.10} parent=19 // pred_fallthru
          _
      $region20: #{wild_relation_network_forward.10} parent=5 // pred_fallthru
        _
      %p272 = scmp.le.s32.totalorder 1, %s9
      %p273 = scmp.lt.s32.totalorder %s9, 3
      %p274 = pnand %p272, %p273
      %p275 = pneg %p274
      // Predicated region
      $region48: #{wild_relation_network_forward.10} parent=5 // pred_check
        _
      $region49: #{wild_relation_network_forward.10} parent=5 // pred_check_branch
        %277 = sbr.rel (%p274) target = $region51
      $region50: #{wild_relation_network_forward.10} parent=5 // pred_region
        %s278 = ssub.s32 %s9, 1
        %s279 = sand.u32 %s43, 1
        %s280 = sand.u32 %s43, 1
        %s281 = smul.addr %s280, 256
        %s282 = scalar_lea.vmem [#allocation3], %s281
        // Predicated region
        $region52: #{wild_relation_network_forward.10} parent=50 // pred_check
          %p283 = pneg %p56
        $region53: #{wild_relation_network_forward.10} parent=50 // pred_check_branch
          %285 = sbr.rel (%p283) target = $region55
        $region54: #{wild_relation_network_forward.10} parent=50 // pred_region
          _
        $region55: #{wild_relation_network_forward.10} parent=50 // pred_fallthru
          _
        %s286 = sand.u32 %s43, 1
        %s287 = sand.u32 %s43, 1
        %s288 = smul.addr %s287, 256
        %s289 = scalar_lea.vmem [#allocation3], %s288
        %p290 = pneg %p56
        %p291 = pneg %p53
        %s292 = smul.u32 64, %s21
        %s293 = smul.u32 2, %s20
        %p294 = scmp.lt.s32.totalorder %s292, 127
        %s295 = scalar_select %p294, %s292, 127
        %p296 = scmp.lt.s32.totalorder %s293, 1
        %s297 = scalar_select %p296, %s293, 1
        %s298 = smul.addr %s295, 2
        %s299 = sadd.s32 %s297, %s298
        %s300 = smul.addr %s299, 4
        %s301 = scalar_lea.vmem %s1, %s300
        %p302 = pneg %p84
        %p303 = pneg %p81
        %s304 = smul.u32 2, %s20
        %p305 = scmp.lt.s32.totalorder %s304, 1
        %s306 = scalar_select %p305, %s304, 1
        %s307 = scalar_lea.vmem %s2, %s306
        %p308 = pneg %p110
        %p309 = pneg %p107
        %p310 = pneg %p138
        %p311 = pneg %p135
        %s312 = smul.u32 16, %s19
        %s313 = smul.u32 2, %s20
        %p314 = scmp.lt.s32.totalorder %s312, 15
        %s315 = scalar_select %p314, %s312, 15
        %p316 = scmp.lt.s32.totalorder %s313, 1
        %s317 = scalar_select %p316, %s313, 1
        %s318 = smul.addr %s315, 2
        %s319 = sadd.s32 %s317, %s318
        %s320 = smul.addr %s319, 8
        %s321 = scalar_lea.vmem %s3, %s320
        %s322 = smul.u32 16, %s19
        %s323 = smul.u32 4, %s21
        %s324 = smul.u32 64, %s21
        %s325 = smul.u32 2, %s20
        %p326 = scmp.lt.s32.totalorder %s324, 127
        %s327 = scalar_select %p326, %s324, 127
        %p328 = scmp.lt.s32.totalorder %s325, 1
        %s329 = scalar_select %p328, %s325, 1
        %s330 = smul.addr %s327, 2
        %s331 = sadd.s32 %s329, %s330
        %s332 = smul.addr %s331, 4
        %s333 = scalar_lea.vmem %s1, %s332
        %s334 = smul.u32 64, %s21
        %s335 = smul.u32 2, %s20
        %s336 = smul.u32 2, %s20
        %p337 = scmp.lt.s32.totalorder %s336, 1
        %s338 = scalar_select %p337, %s336, 1
        %s339 = scalar_lea.vmem %s2, %s338
        %s340 = smul.u32 2, %s20
        %s341 = smul.u32 16, %s19
        %s342 = smul.u32 2, %s20
        %p343 = scmp.lt.s32.totalorder %s341, 15
        %s344 = scalar_select %p343, %s341, 15
        %p345 = scmp.lt.s32.totalorder %s342, 1
        %s346 = scalar_select %p345, %s342, 1
        %s347 = smul.addr %s344, 2
        %s348 = sadd.s32 %s346, %s347
        %s349 = smul.addr %s348, 8
        %s350 = scalar_lea.vmem %s3, %s349
        %s351 = smul.u32 16, %s19
        %s352 = smul.u32 2, %s20
        %p353 = scmp.eq.s32.totalorder %s21, 0
        // Predicated region
        $region56: #{wild_relation_network_forward.10} parent=50 // pred_check
          %p354 = pneg %p353
        $region57: #{wild_relation_network_forward.10} parent=50 // pred_check_branch
          %356 = sbr.rel (%p354) target = $region59
        $region58: #{wild_relation_network_forward.10} parent=50 // pred_region
          %357 = vst [vmem:[#allocation2] sm:$0xff] 0.0
          %358 = vst [vmem:[#allocation2 + $0x8] sm:$0xff] 0.0
          %359 = vst [vmem:[#allocation2 + $0x10] sm:$0xff] 0.0
          %360 = vst [vmem:[#allocation2 + $0x18] sm:$0xff] 0.0
          %361 = vst [vmem:[#allocation2 + $0x20] sm:$0xff] 0.0
          %362 = vst [vmem:[#allocation2 + $0x28] sm:$0xff] 0.0
          %363 = vst [vmem:[#allocation2 + $0x30] sm:$0xff] 0.0
          %364 = vst [vmem:[#allocation2 + $0x38] sm:$0xff] 0.0
          %365 = vst [vmem:[#allocation2 + $0x40] sm:$0xff] 0.0
          %366 = vst [vmem:[#allocation2 + $0x48] sm:$0xff] 0.0
          %367 = vst [vmem:[#allocation2 + $0x50] sm:$0xff] 0.0
          %368 = vst [vmem:[#allocation2 + $0x58] sm:$0xff] 0.0
          %369 = vst [vmem:[#allocation2 + $0x60] sm:$0xff] 0.0
          %370 = vst [vmem:[#allocation2 + $0x68] sm:$0xff] 0.0
          %371 = vst [vmem:[#allocation2 + $0x70] sm:$0xff] 0.0
          %372 = vst [vmem:[#allocation2 + $0x78] sm:$0xff] 0.0
          %373 = vst [vmem:[#allocation2 + $0x80] sm:$0xff] 0.0
          %374 = vst [vmem:[#allocation2 + $0x88] sm:$0xff] 0.0
          %375 = vst [vmem:[#allocation2 + $0x90] sm:$0xff] 0.0
          %376 = vst [vmem:[#allocation2 + $0x98] sm:$0xff] 0.0
          %377 = vst [vmem:[#allocation2 + $0xa0] sm:$0xff] 0.0
          %378 = vst [vmem:[#allocation2 + $0xa8] sm:$0xff] 0.0
          %379 = vst [vmem:[#allocation2 + $0xb0] sm:$0xff] 0.0
          %380 = vst [vmem:[#allocation2 + $0xb8] sm:$0xff] 0.0
          %381 = vst [vmem:[#allocation2 + $0xc0] sm:$0xff] 0.0
          %382 = vst [vmem:[#allocation2 + $0xc8] sm:$0xff] 0.0
          %383 = vst [vmem:[#allocation2 + $0xd0] sm:$0xff] 0.0
          %384 = vst [vmem:[#allocation2 + $0xd8] sm:$0xff] 0.0
          %385 = vst [vmem:[#allocation2 + $0xe0] sm:$0xff] 0.0
          %386 = vst [vmem:[#allocation2 + $0xe8] sm:$0xff] 0.0
          %387 = vst [vmem:[#allocation2 + $0xf0] sm:$0xff] 0.0
          %388 = vst [vmem:[#allocation2 + $0xf8] sm:$0xff] 0.0
        $region59: #{wild_relation_network_forward.10} parent=50 // pred_fallthru
          _
        %v389 = vld [vmem:[#allocation2] sm:$0xff]
        %v390 = vld [vmem:[#allocation2 + $0x8] sm:$0xff]
        %v391 = vld [vmem:[#allocation2 + $0x10] sm:$0xff]
        %v392 = vld [vmem:[#allocation2 + $0x18] sm:$0xff]
        %v393 = vld [vmem:[#allocation2 + $0x20] sm:$0xff]
        %v394 = vld [vmem:[#allocation2 + $0x28] sm:$0xff]
        %v395 = vld [vmem:[#allocation2 + $0x30] sm:$0xff]
        %v396 = vld [vmem:[#allocation2 + $0x38] sm:$0xff]
        %v397 = vld [vmem:[#allocation2 + $0x40] sm:$0xff]
        %v398 = vld [vmem:[#allocation2 + $0x48] sm:$0xff]
        %v399 = vld [vmem:[#allocation2 + $0x50] sm:$0xff]
        %v400 = vld [vmem:[#allocation2 + $0x58] sm:$0xff]
        %v401 = vld [vmem:[#allocation2 + $0x60] sm:$0xff]
        %v402 = vld [vmem:[#allocation2 + $0x68] sm:$0xff]
        %v403 = vld [vmem:[#allocation2 + $0x70] sm:$0xff]
        %v404 = vld [vmem:[#allocation2 + $0x78] sm:$0xff]
        %v405 = vld [vmem:[#allocation2 + $0x80] sm:$0xff]
        %v406 = vld [vmem:[#allocation2 + $0x88] sm:$0xff]
        %v407 = vld [vmem:[#allocation2 + $0x90] sm:$0xff]
        %v408 = vld [vmem:[#allocation2 + $0x98] sm:$0xff]
        %v409 = vld [vmem:[#allocation2 + $0xa0] sm:$0xff]
        %v410 = vld [vmem:[#allocation2 + $0xa8] sm:$0xff]
        %v411 = vld [vmem:[#allocation2 + $0xb0] sm:$0xff]
        %v412 = vld [vmem:[#allocation2 + $0xb8] sm:$0xff]
        %v413 = vld [vmem:[#allocation2 + $0xc0] sm:$0xff]
        %v414 = vld [vmem:[#allocation2 + $0xc8] sm:$0xff]
        %v415 = vld [vmem:[#allocation2 + $0xd0] sm:$0xff]
        %v416 = vld [vmem:[#allocation2 + $0xd8] sm:$0xff]
        %v417 = vld [vmem:[#allocation2 + $0xe0] sm:$0xff]
        %v418 = vld [vmem:[#allocation2 + $0xe8] sm:$0xff]
        %v419 = vld [vmem:[#allocation2 + $0xf0] sm:$0xff]
        %v420 = vld [vmem:[#allocation2 + $0xf8] sm:$0xff]
        %v421 = vld [vmem:[%s282] sm:$0xff]
        %v422 = vld [vmem:[%s282 + $0x8] sm:$0xff]
        %v423 = vld [vmem:[%s282 + $0x10] sm:$0xff]
        %v424 = vld [vmem:[%s282 + $0x18] sm:$0xff]
        %v425 = vld [vmem:[%s282 + $0x20] sm:$0xff]
        %v426 = vld [vmem:[%s282 + $0x28] sm:$0xff]
        %v427 = vld [vmem:[%s282 + $0x30] sm:$0xff]
        %v428 = vld [vmem:[%s282 + $0x38] sm:$0xff]
        %v429 = vld [vmem:[%s282 + $0x40] sm:$0xff]
        %v430 = vld [vmem:[%s282 + $0x48] sm:$0xff]
        %v431 = vld [vmem:[%s282 + $0x50] sm:$0xff]
        %v432 = vld [vmem:[%s282 + $0x58] sm:$0xff]
        %v433 = vld [vmem:[%s282 + $0x60] sm:$0xff]
        %v434 = vld [vmem:[%s282 + $0x68] sm:$0xff]
        %v435 = vld [vmem:[%s282 + $0x70] sm:$0xff]
        %v436 = vld [vmem:[%s282 + $0x78] sm:$0xff]
        %v437 = vld [vmem:[%s282 + $0x80] sm:$0xff]
        %v438 = vld [vmem:[%s282 + $0x88] sm:$0xff]
        %v439 = vld [vmem:[%s282 + $0x90] sm:$0xff]
        %v440 = vld [vmem:[%s282 + $0x98] sm:$0xff]
        %v441 = vld [vmem:[%s282 + $0xa0] sm:$0xff]
        %v442 = vld [vmem:[%s282 + $0xa8] sm:$0xff]
        %v443 = vld [vmem:[%s282 + $0xb0] sm:$0xff]
        %v444 = vld [vmem:[%s282 + $0xb8] sm:$0xff]
        %v445 = vld [vmem:[%s282 + $0xc0] sm:$0xff]
        %v446 = vld [vmem:[%s282 + $0xc8] sm:$0xff]
        %v447 = vld [vmem:[%s282 + $0xd0] sm:$0xff]
        %v448 = vld [vmem:[%s282 + $0xd8] sm:$0xff]
        %v449 = vld [vmem:[%s282 + $0xe0] sm:$0xff]
        %v450 = vld [vmem:[%s282 + $0xe8] sm:$0xff]
        %v451 = vld [vmem:[%s282 + $0xf0] sm:$0xff]
        %v452 = vld [vmem:[%s282 + $0xf8] sm:$0xff]
        %v453 = vld [vmem:[%s333] sm:$0xff]
        %v454 = vld [vmem:[%s333 + $0x8] sm:$0xff]
        %v455 = vld [vmem:[%s333 + $0x10] sm:$0xff]
        %v456 = vld [vmem:[%s333 + $0x18] sm:$0xff]
        %v457 = vld [vmem:[%s333 + $0x20] sm:$0xff]
        %v458 = vld [vmem:[%s333 + $0x28] sm:$0xff]
        %v459 = vld [vmem:[%s333 + $0x30] sm:$0xff]
        %v460 = vld [vmem:[%s333 + $0x38] sm:$0xff]
        %v461 = vld [vmem:[%s333 + $0x40] sm:$0xff]
        %v462 = vld [vmem:[%s333 + $0x48] sm:$0xff]
        %v463 = vld [vmem:[%s333 + $0x50] sm:$0xff]
        %v464 = vld [vmem:[%s333 + $0x58] sm:$0xff]
        %v465 = vld [vmem:[%s333 + $0x60] sm:$0xff]
        %v466 = vld [vmem:[%s333 + $0x68] sm:$0xff]
        %v467 = vld [vmem:[%s333 + $0x70] sm:$0xff]
        %v468 = vld [vmem:[%s333 + $0x78] sm:$0xff]
        %v469 = vld [vmem:[%s333 + $0x80] sm:$0xff]
        %v470 = vld [vmem:[%s333 + $0x88] sm:$0xff]
        %v471 = vld [vmem:[%s333 + $0x90] sm:$0xff]
        %v472 = vld [vmem:[%s333 + $0x98] sm:$0xff]
        %v473 = vld [vmem:[%s333 + $0xa0] sm:$0xff]
        %v474 = vld [vmem:[%s333 + $0xa8] sm:$0xff]
        %v475 = vld [vmem:[%s333 + $0xb0] sm:$0xff]
        %v476 = vld [vmem:[%s333 + $0xb8] sm:$0xff]
        %v477 = vld [vmem:[%s333 + $0xc0] sm:$0xff]
        %v478 = vld [vmem:[%s333 + $0xc8] sm:$0xff]
        %v479 = vld [vmem:[%s333 + $0xd0] sm:$0xff]
        %v480 = vld [vmem:[%s333 + $0xd8] sm:$0xff]
        %v481 = vld [vmem:[%s333 + $0xe0] sm:$0xff]
        %v482 = vld [vmem:[%s333 + $0xe8] sm:$0xff]
        %v483 = vld [vmem:[%s333 + $0xf0] sm:$0xff]
        %v484 = vld [vmem:[%s333 + $0xf8] sm:$0xff]
        %v485 = vld [vmem:[%s333 + $0x100] sm:$0xff]
        %v486 = vld [vmem:[%s333 + $0x108] sm:$0xff]
        %v487 = vld [vmem:[%s333 + $0x110] sm:$0xff]
        %v488 = vld [vmem:[%s333 + $0x118] sm:$0xff]
        %v489 = vld [vmem:[%s333 + $0x120] sm:$0xff]
        %v490 = vld [vmem:[%s333 + $0x128] sm:$0xff]
        %v491 = vld [vmem:[%s333 + $0x130] sm:$0xff]
        %v492 = vld [vmem:[%s333 + $0x138] sm:$0xff]
        %v493 = vld [vmem:[%s333 + $0x140] sm:$0xff]
        %v494 = vld [vmem:[%s333 + $0x148] sm:$0xff]
        %v495 = vld [vmem:[%s333 + $0x150] sm:$0xff]
        %v496 = vld [vmem:[%s333 + $0x158] sm:$0xff]
        %v497 = vld [vmem:[%s333 + $0x160] sm:$0xff]
        %v498 = vld [vmem:[%s333 + $0x168] sm:$0xff]
        %v499 = vld [vmem:[%s333 + $0x170] sm:$0xff]
        %v500 = vld [vmem:[%s333 + $0x178] sm:$0xff]
        %v501 = vld [vmem:[%s333 + $0x180] sm:$0xff]
        %v502 = vld [vmem:[%s333 + $0x188] sm:$0xff]
        %v503 = vld [vmem:[%s333 + $0x190] sm:$0xff]
        %v504 = vld [vmem:[%s333 + $0x198] sm:$0xff]
        %v505 = vld [vmem:[%s333 + $0x1a0] sm:$0xff]
        %v506 = vld [vmem:[%s333 + $0x1a8] sm:$0xff]
        %v507 = vld [vmem:[%s333 + $0x1b0] sm:$0xff]
        %v508 = vld [vmem:[%s333 + $0x1b8] sm:$0xff]
        %v509 = vld [vmem:[%s333 + $0x1c0] sm:$0xff]
        %v510 = vld [vmem:[%s333 + $0x1c8] sm:$0xff]
        %v511 = vld [vmem:[%s333 + $0x1d0] sm:$0xff]
        %v512 = vld [vmem:[%s333 + $0x1d8] sm:$0xff]
        %v513 = vld [vmem:[%s333 + $0x1e0] sm:$0xff]
        %v514 = vld [vmem:[%s333 + $0x1e8] sm:$0xff]
        %v515 = vld [vmem:[%s333 + $0x1f0] sm:$0xff]
        %v516 = vld [vmem:[%s333 + $0x1f8] sm:$0xff]
        %v549 = vunpack.c.l.b16 %v421
        %v550 = vunpack.c.h.b16 %v421
        %v551 = vunpack.c.l.b16 %v422
        %v552 = vunpack.c.h.b16 %v422
        %v553 = vunpack.c.l.b16 %v423
        %v554 = vunpack.c.h.b16 %v423
        %v555 = vunpack.c.l.b16 %v424
        %v556 = vunpack.c.h.b16 %v424
        %v557 = vunpack.c.l.b16 %v425
        %v558 = vunpack.c.h.b16 %v425
        %v559 = vunpack.c.l.b16 %v426
        %v560 = vunpack.c.h.b16 %v426
        %v561 = vunpack.c.l.b16 %v427
        %v562 = vunpack.c.h.b16 %v427
        %v563 = vunpack.c.l.b16 %v428
        %v564 = vunpack.c.h.b16 %v428
        %v565 = vunpack.c.l.b16 %v429
        %v566 = vunpack.c.h.b16 %v429
        %v567 = vunpack.c.l.b16 %v430
        %v568 = vunpack.c.h.b16 %v430
        %v569 = vunpack.c.l.b16 %v431
        %v570 = vunpack.c.h.b16 %v431
        %v571 = vunpack.c.l.b16 %v432
        %v572 = vunpack.c.h.b16 %v432
        %v573 = vunpack.c.l.b16 %v433
        %v574 = vunpack.c.h.b16 %v433
        %v575 = vunpack.c.l.b16 %v434
        %v576 = vunpack.c.h.b16 %v434
        %v577 = vunpack.c.l.b16 %v435
        %v578 = vunpack.c.h.b16 %v435
        %v579 = vunpack.c.l.b16 %v436
        %v580 = vunpack.c.h.b16 %v436
        %v581 = vunpack.c.l.b16 %v437
        %v582 = vunpack.c.h.b16 %v437
        %v583 = vunpack.c.l.b16 %v438
        %v584 = vunpack.c.h.b16 %v438
        %v585 = vunpack.c.l.b16 %v439
        %v586 = vunpack.c.h.b16 %v439
        %v587 = vunpack.c.l.b16 %v440
        %v588 = vunpack.c.h.b16 %v440
        %v589 = vunpack.c.l.b16 %v441
        %v590 = vunpack.c.h.b16 %v441
        %v591 = vunpack.c.l.b16 %v442
        %v592 = vunpack.c.h.b16 %v442
        %v593 = vunpack.c.l.b16 %v443
        %v594 = vunpack.c.h.b16 %v443
        %v595 = vunpack.c.l.b16 %v444
        %v596 = vunpack.c.h.b16 %v444
        %v597 = vunpack.c.l.b16 %v445
        %v598 = vunpack.c.h.b16 %v445
        %v599 = vunpack.c.l.b16 %v446
        %v600 = vunpack.c.h.b16 %v446
        %v601 = vunpack.c.l.b16 %v447
        %v602 = vunpack.c.h.b16 %v447
        %v603 = vunpack.c.l.b16 %v448
        %v604 = vunpack.c.h.b16 %v448
        %v605 = vunpack.c.l.b16 %v449
        %v606 = vunpack.c.h.b16 %v449
        %v607 = vunpack.c.l.b16 %v450
        %v608 = vunpack.c.h.b16 %v450
        %v609 = vunpack.c.l.b16 %v451
        %v610 = vunpack.c.h.b16 %v451
        %v611 = vunpack.c.l.b16 %v452
        %v612 = vunpack.c.h.b16 %v452
        %v613 = vpack.c.b16 %v553, %v549
        %v614 = vpack.c.b16 %v554, %v550
        %v615 = vpack.c.b16 %v555, %v551
        %v616 = vpack.c.b16 %v556, %v552
        %v617 = vpack.c.b16 %v561, %v557
        %v618 = vpack.c.b16 %v562, %v558
        %v619 = vpack.c.b16 %v563, %v559
        %v620 = vpack.c.b16 %v564, %v560
        %v621 = vpack.c.b16 %v569, %v565
        %v622 = vpack.c.b16 %v570, %v566
        %v623 = vpack.c.b16 %v571, %v567
        %v624 = vpack.c.b16 %v572, %v568
        %v625 = vpack.c.b16 %v577, %v573
        %v626 = vpack.c.b16 %v578, %v574
        %v627 = vpack.c.b16 %v579, %v575
        %v628 = vpack.c.b16 %v580, %v576
        %v629 = vpack.c.b16 %v585, %v581
        %v630 = vpack.c.b16 %v586, %v582
        %v631 = vpack.c.b16 %v587, %v583
        %v632 = vpack.c.b16 %v588, %v584
        %v633 = vpack.c.b16 %v593, %v589
        %v634 = vpack.c.b16 %v594, %v590
        %v635 = vpack.c.b16 %v595, %v591
        %v636 = vpack.c.b16 %v596, %v592
        %v637 = vpack.c.b16 %v601, %v597
        %v638 = vpack.c.b16 %v602, %v598
        %v639 = vpack.c.b16 %v603, %v599
        %v640 = vpack.c.b16 %v604, %v600
        %v641 = vpack.c.b16 %v609, %v605
        %v642 = vpack.c.b16 %v610, %v606
        %v643 = vpack.c.b16 %v611, %v607
        %v644 = vpack.c.b16 %v612, %v608
        %v741 = vunpack.c.l.b16 %v453
        %v742 = vunpack.c.h.b16 %v453
        %v743 = vunpack.c.l.b16 %v454
        %v744 = vunpack.c.h.b16 %v454
        %v745 = vunpack.c.l.b16 %v455
        %v746 = vunpack.c.h.b16 %v455
        %v747 = vunpack.c.l.b16 %v456
        %v748 = vunpack.c.h.b16 %v456
        %v749 = vunpack.c.l.b16 %v457
        %v750 = vunpack.c.h.b16 %v457
        %v751 = vunpack.c.l.b16 %v458
        %v752 = vunpack.c.h.b16 %v458
        %v753 = vunpack.c.l.b16 %v459
        %v754 = vunpack.c.h.b16 %v459
        %v755 = vunpack.c.l.b16 %v460
        %v756 = vunpack.c.h.b16 %v460
        %v757 = vunpack.c.l.b16 %v461
        %v758 = vunpack.c.h.b16 %v461
        %v759 = vunpack.c.l.b16 %v462
        %v760 = vunpack.c.h.b16 %v462
        %v761 = vunpack.c.l.b16 %v463
        %v762 = vunpack.c.h.b16 %v463
        %v763 = vunpack.c.l.b16 %v464
        %v764 = vunpack.c.h.b16 %v464
        %v765 = vunpack.c.l.b16 %v465
        %v766 = vunpack.c.h.b16 %v465
        %v767 = vunpack.c.l.b16 %v466
        %v768 = vunpack.c.h.b16 %v466
        %v769 = vunpack.c.l.b16 %v467
        %v770 = vunpack.c.h.b16 %v467
        %v771 = vunpack.c.l.b16 %v468
        %v772 = vunpack.c.h.b16 %v468
        %v773 = vunpack.c.l.b16 %v469
        %v774 = vunpack.c.h.b16 %v469
        %v775 = vunpack.c.l.b16 %v470
        %v776 = vunpack.c.h.b16 %v470
        %v777 = vunpack.c.l.b16 %v471
        %v778 = vunpack.c.h.b16 %v471
        %v779 = vunpack.c.l.b16 %v472
        %v780 = vunpack.c.h.b16 %v472
        %v781 = vunpack.c.l.b16 %v473
        %v782 = vunpack.c.h.b16 %v473
        %v783 = vunpack.c.l.b16 %v474
        %v784 = vunpack.c.h.b16 %v474
        %v785 = vunpack.c.l.b16 %v475
        %v786 = vunpack.c.h.b16 %v475
        %v787 = vunpack.c.l.b16 %v476
        %v788 = vunpack.c.h.b16 %v476
        %v789 = vunpack.c.l.b16 %v477
        %v790 = vunpack.c.h.b16 %v477
        %v791 = vunpack.c.l.b16 %v478
        %v792 = vunpack.c.h.b16 %v478
        %v793 = vunpack.c.l.b16 %v479
        %v794 = vunpack.c.h.b16 %v479
        %v795 = vunpack.c.l.b16 %v480
        %v796 = vunpack.c.h.b16 %v480
        %v797 = vunpack.c.l.b16 %v481
        %v798 = vunpack.c.h.b16 %v481
        %v799 = vunpack.c.l.b16 %v482
        %v800 = vunpack.c.h.b16 %v482
        %v801 = vunpack.c.l.b16 %v483
        %v802 = vunpack.c.h.b16 %v483
        %v803 = vunpack.c.l.b16 %v484
        %v804 = vunpack.c.h.b16 %v484
        %v805 = vunpack.c.l.b16 %v485
        %v806 = vunpack.c.h.b16 %v485
        %v807 = vunpack.c.l.b16 %v486
        %v808 = vunpack.c.h.b16 %v486
        %v809 = vunpack.c.l.b16 %v487
        %v810 = vunpack.c.h.b16 %v487
        %v811 = vunpack.c.l.b16 %v488
        %v812 = vunpack.c.h.b16 %v488
        %v813 = vunpack.c.l.b16 %v489
        %v814 = vunpack.c.h.b16 %v489
        %v815 = vunpack.c.l.b16 %v490
        %v816 = vunpack.c.h.b16 %v490
        %v817 = vunpack.c.l.b16 %v491
        %v818 = vunpack.c.h.b16 %v491
        %v819 = vunpack.c.l.b16 %v492
        %v820 = vunpack.c.h.b16 %v492
        %v821 = vunpack.c.l.b16 %v493
        %v822 = vunpack.c.h.b16 %v493
        %v823 = vunpack.c.l.b16 %v494
        %v824 = vunpack.c.h.b16 %v494
        %v825 = vunpack.c.l.b16 %v495
        %v826 = vunpack.c.h.b16 %v495
        %v827 = vunpack.c.l.b16 %v496
        %v828 = vunpack.c.h.b16 %v496
        %v829 = vunpack.c.l.b16 %v497
        %v830 = vunpack.c.h.b16 %v497
        %v831 = vunpack.c.l.b16 %v498
        %v832 = vunpack.c.h.b16 %v498
        %v833 = vunpack.c.l.b16 %v499
        %v834 = vunpack.c.h.b16 %v499
        %v835 = vunpack.c.l.b16 %v500
        %v836 = vunpack.c.h.b16 %v500
        %v837 = vunpack.c.l.b16 %v501
        %v838 = vunpack.c.h.b16 %v501
        %v839 = vunpack.c.l.b16 %v502
        %v840 = vunpack.c.h.b16 %v502
        %v841 = vunpack.c.l.b16 %v503
        %v842 = vunpack.c.h.b16 %v503
        %v843 = vunpack.c.l.b16 %v504
        %v844 = vunpack.c.h.b16 %v504
        %v845 = vunpack.c.l.b16 %v505
        %v846 = vunpack.c.h.b16 %v505
        %v847 = vunpack.c.l.b16 %v506
        %v848 = vunpack.c.h.b16 %v506
        %v849 = vunpack.c.l.b16 %v507
        %v850 = vunpack.c.h.b16 %v507
        %v851 = vunpack.c.l.b16 %v508
        %v852 = vunpack.c.h.b16 %v508
        %v853 = vunpack.c.l.b16 %v509
        %v854 = vunpack.c.h.b16 %v509
        %v855 = vunpack.c.l.b16 %v510
        %v856 = vunpack.c.h.b16 %v510
        %v857 = vunpack.c.l.b16 %v511
        %v858 = vunpack.c.h.b16 %v511
        %v859 = vunpack.c.l.b16 %v512
        %v860 = vunpack.c.h.b16 %v512
        %v861 = vunpack.c.l.b16 %v513
        %v862 = vunpack.c.h.b16 %v513
        %v863 = vunpack.c.l.b16 %v514
        %v864 = vunpack.c.h.b16 %v514
        %v865 = vunpack.c.l.b16 %v515
        %v866 = vunpack.c.h.b16 %v515
        %v867 = vunpack.c.l.b16 %v516
        %v868 = vunpack.c.h.b16 %v516
        %v869 = vpack.c.b16 %v743, %v741
        %v870 = vpack.c.b16 %v744, %v742
        %v871 = vpack.c.b16 %v747, %v745
        %v872 = vpack.c.b16 %v748, %v746
        %v873 = vpack.c.b16 %v751, %v749
        %v874 = vpack.c.b16 %v752, %v750
        %v875 = vpack.c.b16 %v755, %v753
        %v876 = vpack.c.b16 %v756, %v754
        %v877 = vpack.c.b16 %v759, %v757
        %v878 = vpack.c.b16 %v760, %v758
        %v879 = vpack.c.b16 %v763, %v761
        %v880 = vpack.c.b16 %v764, %v762
        %v881 = vpack.c.b16 %v767, %v765
        %v882 = vpack.c.b16 %v768, %v766
        %v883 = vpack.c.b16 %v771, %v769
        %v884 = vpack.c.b16 %v772, %v770
        %v885 = vpack.c.b16 %v775, %v773
        %v886 = vpack.c.b16 %v776, %v774
        %v887 = vpack.c.b16 %v779, %v777
        %v888 = vpack.c.b16 %v780, %v778
        %v889 = vpack.c.b16 %v783, %v781
        %v890 = vpack.c.b16 %v784, %v782
        %v891 = vpack.c.b16 %v787, %v785
        %v892 = vpack.c.b16 %v788, %v786
        %v893 = vpack.c.b16 %v791, %v789
        %v894 = vpack.c.b16 %v792, %v790
        %v895 = vpack.c.b16 %v795, %v793
        %v896 = vpack.c.b16 %v796, %v794
        %v897 = vpack.c.b16 %v799, %v797
        %v898 = vpack.c.b16 %v800, %v798
        %v899 = vpack.c.b16 %v803, %v801
        %v900 = vpack.c.b16 %v804, %v802
        %v901 = vpack.c.b16 %v807, %v805
        %v902 = vpack.c.b16 %v808, %v806
        %v903 = vpack.c.b16 %v811, %v809
        %v904 = vpack.c.b16 %v812, %v810
        %v905 = vpack.c.b16 %v815, %v813
        %v906 = vpack.c.b16 %v816, %v814
        %v907 = vpack.c.b16 %v819, %v817
        %v908 = vpack.c.b16 %v820, %v818
        %v909 = vpack.c.b16 %v823, %v821
        %v910 = vpack.c.b16 %v824, %v822
        %v911 = vpack.c.b16 %v827, %v825
        %v912 = vpack.c.b16 %v828, %v826
        %v913 = vpack.c.b16 %v831, %v829
        %v914 = vpack.c.b16 %v832, %v830
        %v915 = vpack.c.b16 %v835, %v833
        %v916 = vpack.c.b16 %v836, %v834
        %v917 = vpack.c.b16 %v839, %v837
        %v918 = vpack.c.b16 %v840, %v838
        %v919 = vpack.c.b16 %v843, %v841
        %v920 = vpack.c.b16 %v844, %v842
        %v921 = vpack.c.b16 %v847, %v845
        %v922 = vpack.c.b16 %v848, %v846
        %v923 = vpack.c.b16 %v851, %v849
        %v924 = vpack.c.b16 %v852, %v850
        %v925 = vpack.c.b16 %v855, %v853
        %v926 = vpack.c.b16 %v856, %v854
        %v927 = vpack.c.b16 %v859, %v857
        %v928 = vpack.c.b16 %v860, %v858
        %v929 = vpack.c.b16 %v863, %v861
        %v930 = vpack.c.b16 %v864, %v862
        %v931 = vpack.c.b16 %v867, %v865
        %v932 = vpack.c.b16 %v868, %v866
        %997 = vmatprep.subr.bf16.mxu0 %v870
        %998 = vmatpush1.bf16.msra.mxu0 %v869
        %999 = vmatprep.subr.bf16.mxu0 %v872
        %1000 = vmatpush1.bf16.msra.mxu0 %v871
        %1001 = vmatprep.subr.bf16.mxu0 %v874
        %1002 = vmatpush1.bf16.msra.mxu0 %v873
        %1003 = vmatprep.subr.bf16.mxu0 %v876
        %1004 = vmatpush1.bf16.msra.mxu0 %v875
        %1005 = vmatprep.subr.bf16.mxu0 %v878
        %1006 = vmatpush1.bf16.msra.mxu0 %v877
        %1007 = vmatprep.subr.bf16.mxu0 %v880
        %1008 = vmatpush1.bf16.msra.mxu0 %v879
        %1009 = vmatprep.subr.bf16.mxu0 %v882
        %1010 = vmatpush1.bf16.msra.mxu0 %v881
        %1011 = vmatprep.subr.bf16.mxu0 %v884
        %1012 = vmatpush1.bf16.msra.mxu0 %v883
        %1013 = vmatprep.subr.bf16.mxu0 %v886
        %1014 = vmatpush1.bf16.msra.mxu0 %v885
        %1015 = vmatprep.subr.bf16.mxu0 %v888
        %1016 = vmatpush1.bf16.msra.mxu0 %v887
        %1017 = vmatprep.subr.bf16.mxu0 %v890
        %1018 = vmatpush1.bf16.msra.mxu0 %v889
        %1019 = vmatprep.subr.bf16.mxu0 %v892
        %1020 = vmatpush1.bf16.msra.mxu0 %v891
        %1021 = vmatprep.subr.bf16.mxu0 %v894
        %1022 = vmatpush1.bf16.msra.mxu0 %v893
        %1023 = vmatprep.subr.bf16.mxu0 %v896
        %1024 = vmatpush1.bf16.msra.mxu0 %v895
        %1025 = vmatprep.subr.bf16.mxu0 %v898
        %1026 = vmatpush1.bf16.msra.mxu0 %v897
        %1027 = vmatprep.subr.bf16.mxu0 %v900
        %1028 = vmatpush1.bf16.msra.mxu0 %v899
        %1029 = vmatprep.mubr.bf16.mxu0 %v614
        %1030 = vmatmul.mubr.bf16.gmra.mrb[0].mxu0 %v613
        %v1031 = vpop.f32.mrb[0].mxu0
        %v1032 = vadd.f32 0.0, %v1031
        %v1033 = vpop.f32.mrb[0].mxu0
        %v1034 = vadd.f32 0.0, %v1033
        %v1035 = vpop.f32.mrb[0].mxu0
        %v1036 = vadd.f32 0.0, %v1035
        %v1037 = vpop.f32.mrb[0].mxu0
        %v1038 = vadd.f32 0.0, %v1037
        %1039 = vmatprep.mubr.bf16.mxu0 %v618
        %1040 = vmatmul.mubr.bf16.gmra.mrb[0].mxu0 %v617
        %v1041 = vpop.f32.mrb[0].mxu0
        %v1042 = vadd.f32 0.0, %v1041
        %v1043 = vpop.f32.mrb[0].mxu0
        %v1044 = vadd.f32 0.0, %v1043
        %v1045 = vpop.f32.mrb[0].mxu0
        %v1046 = vadd.f32 0.0, %v1045
        %v1047 = vpop.f32.mrb[0].mxu0
        %v1048 = vadd.f32 0.0, %v1047
        %1049 = vmatprep.mubr.bf16.mxu0 %v622
        %1050 = vmatmul.mubr.bf16.gmra.mrb[0].mxu0 %v621
        %v1051 = vpop.f32.mrb[0].mxu0
        %v1052 = vadd.f32 0.0, %v1051
        %v1053 = vpop.f32.mrb[0].mxu0
        %v1054 = vadd.f32 0.0, %v1053
        %v1055 = vpop.f32.mrb[0].mxu0
        %v1056 = vadd.f32 0.0, %v1055
        %v1057 = vpop.f32.mrb[0].mxu0
        %v1058 = vadd.f32 0.0, %v1057
        %1059 = vmatprep.mubr.bf16.mxu0 %v626
        %1060 = vmatmul.mubr.bf16.gmra.mrb[0].mxu0 %v625
        %v1061 = vpop.f32.mrb[0].mxu0
        %v1062 = vadd.f32 0.0, %v1061
        %v1063 = vpop.f32.mrb[0].mxu0
        %v1064 = vadd.f32 0.0, %v1063
        %v1065 = vpop.f32.mrb[0].mxu0
        %v1066 = vadd.f32 0.0, %v1065
        %v1067 = vpop.f32.mrb[0].mxu0
        %v1068 = vadd.f32 0.0, %v1067
        %1069 = vmatprep.mubr.bf16.mxu0 %v630
        %1070 = vmatmul.mubr.bf16.gmra.mrb[0].mxu0 %v629
        %v1071 = vpop.f32.mrb[0].mxu0
        %v1072 = vadd.f32 0.0, %v1071
        %v1073 = vpop.f32.mrb[0].mxu0
        %v1074 = vadd.f32 0.0, %v1073
        %v1075 = vpop.f32.mrb[0].mxu0
        %v1076 = vadd.f32 0.0, %v1075
        %v1077 = vpop.f32.mrb[0].mxu0
        %v1078 = vadd.f32 0.0, %v1077
        %1079 = vmatprep.mubr.bf16.mxu0 %v634
        %1080 = vmatmul.mubr.bf16.gmra.mrb[0].mxu0 %v633
        %v1081 = vpop.f32.mrb[0].mxu0
        %v1082 = vadd.f32 0.0, %v1081
        %v1083 = vpop.f32.mrb[0].mxu0
        %v1084 = vadd.f32 0.0, %v1083
        %v1085 = vpop.f32.mrb[0].mxu0
        %v1086 = vadd.f32 0.0, %v1085
        %v1087 = vpop.f32.mrb[0].mxu0
        %v1088 = vadd.f32 0.0, %v1087
        %1089 = vmatprep.mubr.bf16.mxu0 %v638
        %1090 = vmatmul.mubr.bf16.gmra.mrb[0].mxu0 %v637
        %v1091 = vpop.f32.mrb[0].mxu0
        %v1092 = vadd.f32 0.0, %v1091
        %v1093 = vpop.f32.mrb[0].mxu0
        %v1094 = vadd.f32 0.0, %v1093
        %v1095 = vpop.f32.mrb[0].mxu0
        %v1096 = vadd.f32 0.0, %v1095
        %v1097 = vpop.f32.mrb[0].mxu0
        %v1098 = vadd.f32 0.0, %v1097
        %1099 = vmatprep.mubr.bf16.mxu0 %v642
        %1100 = vmatmul.mubr.bf16.gmra.mrb[0].mxu0 %v641
        %v1101 = vpop.f32.mrb[0].mxu0
        %v1102 = vadd.f32 0.0, %v1101
        %v1103 = vpop.f32.mrb[0].mxu0
        %v1104 = vadd.f32 0.0, %v1103
        %v1105 = vpop.f32.mrb[0].mxu0
        %v1106 = vadd.f32 0.0, %v1105
        %v1107 = vpop.f32.mrb[0].mxu0
        %v1108 = vadd.f32 0.0, %v1107
        %1109 = vdwg.mxu0
        %1110 = vmatprep.subr.bf16.mxu0 %v902
        %1111 = vmatpush1.bf16.msra.mxu0 %v901
        %1112 = vmatprep.subr.bf16.mxu0 %v904
        %1113 = vmatpush1.bf16.msra.mxu0 %v903
        %1114 = vmatprep.subr.bf16.mxu0 %v906
        %1115 = vmatpush1.bf16.msra.mxu0 %v905
        %1116 = vmatprep.subr.bf16.mxu0 %v908
        %1117 = vmatpush1.bf16.msra.mxu0 %v907
        %1118 = vmatprep.subr.bf16.mxu0 %v910
        %1119 = vmatpush1.bf16.msra.mxu0 %v909
        %1120 = vmatprep.subr.bf16.mxu0 %v912
        %1121 = vmatpush1.bf16.msra.mxu0 %v911
        %1122 = vmatprep.subr.bf16.mxu0 %v914
        %1123 = vmatpush1.bf16.msra.mxu0 %v913
        %1124 = vmatprep.subr.bf16.mxu0 %v916
        %1125 = vmatpush1.bf16.msra.mxu0 %v915
        %1126 = vmatprep.subr.bf16.mxu0 %v918
        %1127 = vmatpush1.bf16.msra.mxu0 %v917
        %1128 = vmatprep.subr.bf16.mxu0 %v920
        %1129 = vmatpush1.bf16.msra.mxu0 %v919
        %1130 = vmatprep.subr.bf16.mxu0 %v922
        %1131 = vmatpush1.bf16.msra.mxu0 %v921
        %1132 = vmatprep.subr.bf16.mxu0 %v924
        %1133 = vmatpush1.bf16.msra.mxu0 %v923
        %1134 = vmatprep.subr.bf16.mxu0 %v926
        %1135 = vmatpush1.bf16.msra.mxu0 %v925
        %1136 = vmatprep.subr.bf16.mxu0 %v928
        %1137 = vmatpush1.bf16.msra.mxu0 %v927
        %1138 = vmatprep.subr.bf16.mxu0 %v930
        %1139 = vmatpush1.bf16.msra.mxu0 %v929
        %1140 = vmatprep.subr.bf16.mxu0 %v932
        %1141 = vmatpush1.bf16.msra.mxu0 %v931
        %1142 = vmatprep.mubr.bf16.mxu0 %v616
        %1143 = vmatmul.mubr.bf16.gmra.mrb[0].mxu0 %v615
        %v1144 = vpop.f32.mrb[0].mxu0
        %v1145 = vadd.f32 %v1032, %v1144
        %v1146 = vpop.f32.mrb[0].mxu0
        %v1147 = vadd.f32 %v1034, %v1146
        %v1148 = vpop.f32.mrb[0].mxu0
        %v1149 = vadd.f32 %v1036, %v1148
        %v1150 = vpop.f32.mrb[0].mxu0
        %v1151 = vadd.f32 %v1038, %v1150
        %1152 = vmatprep.mubr.bf16.mxu0 %v620
        %1153 = vmatmul.mubr.bf16.gmra.mrb[0].mxu0 %v619
        %v1154 = vpop.f32.mrb[0].mxu0
        %v1155 = vadd.f32 %v1042, %v1154
        %v1156 = vpop.f32.mrb[0].mxu0
        %v1157 = vadd.f32 %v1044, %v1156
        %v1158 = vpop.f32.mrb[0].mxu0
        %v1159 = vadd.f32 %v1046, %v1158
        %v1160 = vpop.f32.mrb[0].mxu0
        %v1161 = vadd.f32 %v1048, %v1160
        %1162 = vmatprep.mubr.bf16.mxu0 %v624
        %1163 = vmatmul.mubr.bf16.gmra.mrb[0].mxu0 %v623
        %v1164 = vpop.f32.mrb[0].mxu0
        %v1165 = vadd.f32 %v1052, %v1164
        %v1166 = vpop.f32.mrb[0].mxu0
        %v1167 = vadd.f32 %v1054, %v1166
        %v1168 = vpop.f32.mrb[0].mxu0
        %v1169 = vadd.f32 %v1056, %v1168
        %v1170 = vpop.f32.mrb[0].mxu0
        %v1171 = vadd.f32 %v1058, %v1170
        %1172 = vmatprep.mubr.bf16.mxu0 %v628
        %1173 = vmatmul.mubr.bf16.gmra.mrb[0].mxu0 %v627
        %v1174 = vpop.f32.mrb[0].mxu0
        %v1175 = vadd.f32 %v1062, %v1174
        %v1176 = vpop.f32.mrb[0].mxu0
        %v1177 = vadd.f32 %v1064, %v1176
        %v1178 = vpop.f32.mrb[0].mxu0
        %v1179 = vadd.f32 %v1066, %v1178
        %v1180 = vpop.f32.mrb[0].mxu0
        %v1181 = vadd.f32 %v1068, %v1180
        %1182 = vmatprep.mubr.bf16.mxu0 %v632
        %1183 = vmatmul.mubr.bf16.gmra.mrb[0].mxu0 %v631
        %v1184 = vpop.f32.mrb[0].mxu0
        %v1185 = vadd.f32 %v1072, %v1184
        %v1186 = vpop.f32.mrb[0].mxu0
        %v1187 = vadd.f32 %v1074, %v1186
        %v1188 = vpop.f32.mrb[0].mxu0
        %v1189 = vadd.f32 %v1076, %v1188
        %v1190 = vpop.f32.mrb[0].mxu0
        %v1191 = vadd.f32 %v1078, %v1190
        %1192 = vmatprep.mubr.bf16.mxu0 %v636
        %1193 = vmatmul.mubr.bf16.gmra.mrb[0].mxu0 %v635
        %v1194 = vpop.f32.mrb[0].mxu0
        %v1195 = vadd.f32 %v1082, %v1194
        %v1196 = vpop.f32.mrb[0].mxu0
        %v1197 = vadd.f32 %v1084, %v1196
        %v1198 = vpop.f32.mrb[0].mxu0
        %v1199 = vadd.f32 %v1086, %v1198
        %v1200 = vpop.f32.mrb[0].mxu0
        %v1201 = vadd.f32 %v1088, %v1200
        %1202 = vmatprep.mubr.bf16.mxu0 %v640
        %1203 = vmatmul.mubr.bf16.gmra.mrb[0].mxu0 %v639
        %v1204 = vpop.f32.mrb[0].mxu0
        %v1205 = vadd.f32 %v1092, %v1204
        %v1206 = vpop.f32.mrb[0].mxu0
        %v1207 = vadd.f32 %v1094, %v1206
        %v1208 = vpop.f32.mrb[0].mxu0
        %v1209 = vadd.f32 %v1096, %v1208
        %v1210 = vpop.f32.mrb[0].mxu0
        %v1211 = vadd.f32 %v1098, %v1210
        %1212 = vmatprep.mubr.bf16.mxu0 %v644
        %1213 = vmatmul.mubr.bf16.gmra.mrb[0].mxu0 %v643
        %v1214 = vpop.f32.mrb[0].mxu0
        %v1215 = vadd.f32 %v1102, %v1214
        %v1216 = vpop.f32.mrb[0].mxu0
        %v1217 = vadd.f32 %v1104, %v1216
        %v1218 = vpop.f32.mrb[0].mxu0
        %v1219 = vadd.f32 %v1106, %v1218
        %v1220 = vpop.f32.mrb[0].mxu0
        %v1221 = vadd.f32 %v1108, %v1220
        %1222 = vdwg.mxu0
        %v1223 = vadd.f32 %v389, %v1145
        %v1224 = vadd.f32 %v390, %v1147
        %v1225 = vadd.f32 %v391, %v1149
        %v1226 = vadd.f32 %v392, %v1151
        %v1227 = vadd.f32 %v393, %v1155
        %v1228 = vadd.f32 %v394, %v1157
        %v1229 = vadd.f32 %v395, %v1159
        %v1230 = vadd.f32 %v396, %v1161
        %v1231 = vadd.f32 %v397, %v1165
        %v1232 = vadd.f32 %v398, %v1167
        %v1233 = vadd.f32 %v399, %v1169
        %v1234 = vadd.f32 %v400, %v1171
        %v1235 = vadd.f32 %v401, %v1175
        %v1236 = vadd.f32 %v402, %v1177
        %v1237 = vadd.f32 %v403, %v1179
        %v1238 = vadd.f32 %v404, %v1181
        %v1239 = vadd.f32 %v405, %v1185
        %v1240 = vadd.f32 %v406, %v1187
        %v1241 = vadd.f32 %v407, %v1189
        %v1242 = vadd.f32 %v408, %v1191
        %v1243 = vadd.f32 %v409, %v1195
        %v1244 = vadd.f32 %v410, %v1197
        %v1245 = vadd.f32 %v411, %v1199
        %v1246 = vadd.f32 %v412, %v1201
        %v1247 = vadd.f32 %v413, %v1205
        %v1248 = vadd.f32 %v414, %v1207
        %v1249 = vadd.f32 %v415, %v1209
        %v1250 = vadd.f32 %v416, %v1211
        %v1251 = vadd.f32 %v417, %v1215
        %v1252 = vadd.f32 %v418, %v1217
        %v1253 = vadd.f32 %v419, %v1219
        %v1254 = vadd.f32 %v420, %v1221
        %1255 = vst [vmem:[#allocation2] sm:$0xff] %v1223
        %1256 = vst [vmem:[#allocation2 + $0x8] sm:$0xff] %v1224
        %1257 = vst [vmem:[#allocation2 + $0x10] sm:$0xff] %v1225
        %1258 = vst [vmem:[#allocation2 + $0x18] sm:$0xff] %v1226
        %1259 = vst [vmem:[#allocation2 + $0x20] sm:$0xff] %v1227
        %1260 = vst [vmem:[#allocation2 + $0x28] sm:$0xff] %v1228
        %1261 = vst [vmem:[#allocation2 + $0x30] sm:$0xff] %v1229
        %1262 = vst [vmem:[#allocation2 + $0x38] sm:$0xff] %v1230
        %1263 = vst [vmem:[#allocation2 + $0x40] sm:$0xff] %v1231
        %1264 = vst [vmem:[#allocation2 + $0x48] sm:$0xff] %v1232
        %1265 = vst [vmem:[#allocation2 + $0x50] sm:$0xff] %v1233
        %1266 = vst [vmem:[#allocation2 + $0x58] sm:$0xff] %v1234
        %1267 = vst [vmem:[#allocation2 + $0x60] sm:$0xff] %v1235
        %1268 = vst [vmem:[#allocation2 + $0x68] sm:$0xff] %v1236
        %1269 = vst [vmem:[#allocation2 + $0x70] sm:$0xff] %v1237
        %1270 = vst [vmem:[#allocation2 + $0x78] sm:$0xff] %v1238
        %1271 = vst [vmem:[#allocation2 + $0x80] sm:$0xff] %v1239
        %1272 = vst [vmem:[#allocation2 + $0x88] sm:$0xff] %v1240
        %1273 = vst [vmem:[#allocation2 + $0x90] sm:$0xff] %v1241
        %1274 = vst [vmem:[#allocation2 + $0x98] sm:$0xff] %v1242
        %1275 = vst [vmem:[#allocation2 + $0xa0] sm:$0xff] %v1243
        %1276 = vst [vmem:[#allocation2 + $0xa8] sm:$0xff] %v1244
        %1277 = vst [vmem:[#allocation2 + $0xb0] sm:$0xff] %v1245
        %1278 = vst [vmem:[#allocation2 + $0xb8] sm:$0xff] %v1246
        %1279 = vst [vmem:[#allocation2 + $0xc0] sm:$0xff] %v1247
        %1280 = vst [vmem:[#allocation2 + $0xc8] sm:$0xff] %v1248
        %1281 = vst [vmem:[#allocation2 + $0xd0] sm:$0xff] %v1249
        %1282 = vst [vmem:[#allocation2 + $0xd8] sm:$0xff] %v1250
        %1283 = vst [vmem:[#allocation2 + $0xe0] sm:$0xff] %v1251
        %1284 = vst [vmem:[#allocation2 + $0xe8] sm:$0xff] %v1252
        %1285 = vst [vmem:[#allocation2 + $0xf0] sm:$0xff] %v1253
        %1286 = vst [vmem:[#allocation2 + $0xf8] sm:$0xff] %v1254
        %p1287 = scmp.eq.s32.totalorder %s21, 1
        // Predicated region
        $region60: #{wild_relation_network_forward.10} parent=50 // pred_check
          %p1288 = pneg %p1287
        $region61: #{wild_relation_network_forward.10} parent=50 // pred_check_branch
          %1290 = sbr.rel (%p1288) target = $region63
        $region62: #{wild_relation_network_forward.10} parent=50 // pred_region
          %v1291 = vld [vmem:[#allocation2] sm:$0xff]
          %v1292 = vld [vmem:[#allocation2 + $0x8] sm:$0xff]
          %v1293 = vld [vmem:[#allocation2 + $0x10] sm:$0xff]
          %v1294 = vld [vmem:[#allocation2 + $0x18] sm:$0xff]
          %v1295 = vld [vmem:[#allocation2 + $0x20] sm:$0xff]
          %v1296 = vld [vmem:[#allocation2 + $0x28] sm:$0xff]
          %v1297 = vld [vmem:[#allocation2 + $0x30] sm:$0xff]
          %v1298 = vld [vmem:[#allocation2 + $0x38] sm:$0xff]
          %v1299 = vld [vmem:[#allocation2 + $0x40] sm:$0xff]
          %v1300 = vld [vmem:[#allocation2 + $0x48] sm:$0xff]
          %v1301 = vld [vmem:[#allocation2 + $0x50] sm:$0xff]
          %v1302 = vld [vmem:[#allocation2 + $0x58] sm:$0xff]
          %v1303 = vld [vmem:[#allocation2 + $0x60] sm:$0xff]
          %v1304 = vld [vmem:[#allocation2 + $0x68] sm:$0xff]
          %v1305 = vld [vmem:[#allocation2 + $0x70] sm:$0xff]
          %v1306 = vld [vmem:[#allocation2 + $0x78] sm:$0xff]
          %v1307 = vld [vmem:[#allocation2 + $0x80] sm:$0xff]
          %v1308 = vld [vmem:[#allocation2 + $0x88] sm:$0xff]
          %v1309 = vld [vmem:[#allocation2 + $0x90] sm:$0xff]
          %v1310 = vld [vmem:[#allocation2 + $0x98] sm:$0xff]
          %v1311 = vld [vmem:[#allocation2 + $0xa0] sm:$0xff]
          %v1312 = vld [vmem:[#allocation2 + $0xa8] sm:$0xff]
          %v1313 = vld [vmem:[#allocation2 + $0xb0] sm:$0xff]
          %v1314 = vld [vmem:[#allocation2 + $0xb8] sm:$0xff]
          %v1315 = vld [vmem:[#allocation2 + $0xc0] sm:$0xff]
          %v1316 = vld [vmem:[#allocation2 + $0xc8] sm:$0xff]
          %v1317 = vld [vmem:[#allocation2 + $0xd0] sm:$0xff]
          %v1318 = vld [vmem:[#allocation2 + $0xd8] sm:$0xff]
          %v1319 = vld [vmem:[#allocation2 + $0xe0] sm:$0xff]
          %v1320 = vld [vmem:[#allocation2 + $0xe8] sm:$0xff]
          %v1321 = vld [vmem:[#allocation2 + $0xf0] sm:$0xff]
          %v1322 = vld [vmem:[#allocation2 + $0xf8] sm:$0xff]
          %v1323 = vld [vmem:[%s339] sm:$0x3]
          %v1325 = vlaneseq
          %v1326 = vshrl.u32 %v1325, 7
          %v1327 = vsub.s32 0, %v1326
          %v1328 = vrot.slane %v1323, %v1327
          %v1329 = vlaneseq
          %v1330 = vshrl.u32 %v1329, 7
          %v1331 = vsub.s32 1, %v1330
          %v1332 = vrot.slane %v1323, %v1331
          %v1335 = vadd.f32 %v1291, %v1328
          %v1336 = vadd.f32 %v1292, %v1332
          %v1337 = vadd.f32 %v1293, %v1328
          %v1338 = vadd.f32 %v1294, %v1332
          %v1339 = vadd.f32 %v1295, %v1328
          %v1340 = vadd.f32 %v1296, %v1332
          %v1341 = vadd.f32 %v1297, %v1328
          %v1342 = vadd.f32 %v1298, %v1332
          %v1343 = vadd.f32 %v1299, %v1328
          %v1344 = vadd.f32 %v1300, %v1332
          %v1345 = vadd.f32 %v1301, %v1328
          %v1346 = vadd.f32 %v1302, %v1332
          %v1347 = vadd.f32 %v1303, %v1328
          %v1348 = vadd.f32 %v1304, %v1332
          %v1349 = vadd.f32 %v1305, %v1328
          %v1350 = vadd.f32 %v1306, %v1332
          %v1351 = vadd.f32 %v1307, %v1328
          %v1352 = vadd.f32 %v1308, %v1332
          %v1353 = vadd.f32 %v1309, %v1328
          %v1354 = vadd.f32 %v1310, %v1332
          %v1355 = vadd.f32 %v1311, %v1328
          %v1356 = vadd.f32 %v1312, %v1332
          %v1357 = vadd.f32 %v1313, %v1328
          %v1358 = vadd.f32 %v1314, %v1332
          %v1359 = vadd.f32 %v1315, %v1328
          %v1360 = vadd.f32 %v1316, %v1332
          %v1361 = vadd.f32 %v1317, %v1328
          %v1362 = vadd.f32 %v1318, %v1332
          %v1363 = vadd.f32 %v1319, %v1328
          %v1364 = vadd.f32 %v1320, %v1332
          %v1365 = vadd.f32 %v1321, %v1328
          %v1366 = vadd.f32 %v1322, %v1332
          %1367 = vst [vmem:[%s350] sm:$0xff] %v1335
          %1368 = vst [vmem:[%s350 + $0x8] sm:$0xff] %v1336
          %1369 = vst [vmem:[%s350 + $0x10] sm:$0xff] %v1337
          %1370 = vst [vmem:[%s350 + $0x18] sm:$0xff] %v1338
          %1371 = vst [vmem:[%s350 + $0x20] sm:$0xff] %v1339
          %1372 = vst [vmem:[%s350 + $0x28] sm:$0xff] %v1340
          %1373 = vst [vmem:[%s350 + $0x30] sm:$0xff] %v1341
          %1374 = vst [vmem:[%s350 + $0x38] sm:$0xff] %v1342
          %1375 = vst [vmem:[%s350 + $0x40] sm:$0xff] %v1343
          %1376 = vst [vmem:[%s350 + $0x48] sm:$0xff] %v1344
          %1377 = vst [vmem:[%s350 + $0x50] sm:$0xff] %v1345
          %1378 = vst [vmem:[%s350 + $0x58] sm:$0xff] %v1346
          %1379 = vst [vmem:[%s350 + $0x60] sm:$0xff] %v1347
          %1380 = vst [vmem:[%s350 + $0x68] sm:$0xff] %v1348
          %1381 = vst [vmem:[%s350 + $0x70] sm:$0xff] %v1349
          %1382 = vst [vmem:[%s350 + $0x78] sm:$0xff] %v1350
          %1383 = vst [vmem:[%s350 + $0x80] sm:$0xff] %v1351
          %1384 = vst [vmem:[%s350 + $0x88] sm:$0xff] %v1352
          %1385 = vst [vmem:[%s350 + $0x90] sm:$0xff] %v1353
          %1386 = vst [vmem:[%s350 + $0x98] sm:$0xff] %v1354
          %1387 = vst [vmem:[%s350 + $0xa0] sm:$0xff] %v1355
          %1388 = vst [vmem:[%s350 + $0xa8] sm:$0xff] %v1356
          %1389 = vst [vmem:[%s350 + $0xb0] sm:$0xff] %v1357
          %1390 = vst [vmem:[%s350 + $0xb8] sm:$0xff] %v1358
          %1391 = vst [vmem:[%s350 + $0xc0] sm:$0xff] %v1359
          %1392 = vst [vmem:[%s350 + $0xc8] sm:$0xff] %v1360
          %1393 = vst [vmem:[%s350 + $0xd0] sm:$0xff] %v1361
          %1394 = vst [vmem:[%s350 + $0xd8] sm:$0xff] %v1362
          %1395 = vst [vmem:[%s350 + $0xe0] sm:$0xff] %v1363
          %1396 = vst [vmem:[%s350 + $0xe8] sm:$0xff] %v1364
          %1397 = vst [vmem:[%s350 + $0xf0] sm:$0xff] %v1365
          %1398 = vst [vmem:[%s350 + $0xf8] sm:$0xff] %v1366
        $region63: #{wild_relation_network_forward.10} parent=50 // pred_fallthru
          _
        %s1399 = smul.u32 16, %s19
        %s1400 = smul.u32 2, %s20
        %p1401 = scmp.lt.s32.totalorder %s1399, 15
        %s1402 = scalar_select %p1401, %s1399, 15
        %p1403 = scmp.lt.s32.totalorder %s1400, 1
        %s1404 = scalar_select %p1403, %s1400, 1
        %s1405 = smul.addr %s1402, 2
        %s1406 = sadd.s32 %s1404, %s1405
        %s1407 = smul.addr %s1406, 8
        %s1408 = scalar_lea.vmem %s3, %s1407
        // Predicated region
        $region64: #{wild_relation_network_forward.10} parent=50 // pred_check
          %p1409 = pneg %p135
        $region65: #{wild_relation_network_forward.10} parent=50 // pred_check_branch
          %1411 = sbr.rel (%p1409) target = $region67
        $region66: #{wild_relation_network_forward.10} parent=50 // pred_region
          %s1412 = smul.u32 16, %s19
          %s1413 = smul.u32 2, %s20
        $region67: #{wild_relation_network_forward.10} parent=50 // pred_fallthru
          _
        // Predicated region
        $region68: #{wild_relation_network_forward.10} parent=50 // pred_check
          %p1414 = pneg %p135
        $region69: #{wild_relation_network_forward.10} parent=50 // pred_check_branch
          %1416 = sbr.rel (%p1414) target = $region71
        $region70: #{wild_relation_network_forward.10} parent=50 // pred_region
          %s1417 = smul.u32 16, %s19
          %s1418 = smul.u32 2, %s20
          %p1419 = scmp.lt.s32.totalorder %s1417, 15
          %s1420 = scalar_select %p1419, %s1417, 15
          %p1421 = scmp.lt.s32.totalorder %s1418, 1
          %s1422 = scalar_select %p1421, %s1418, 1
          %s1423 = smul.addr %s1420, 2
          %s1424 = sadd.s32 %s1422, %s1423
          %s1425 = smul.addr %s1424, 8
          %s1426 = scalar_lea.vmem %s3, %s1425
        $region71: #{wild_relation_network_forward.10} parent=50 // pred_fallthru
          _
      $region51: #{wild_relation_network_forward.10} parent=5 // pred_fallthru
        _
      %p1427 = scmp.le.s32.totalorder 2, %s9
      // Predicated region
      $region72: #{wild_relation_network_forward.10} parent=5 // pred_check
        %p1428 = pneg %p1427
      $region73: #{wild_relation_network_forward.10} parent=5 // pred_check_branch
        %1430 = sbr.rel (%p1428) target = $region75
      $region74: #{wild_relation_network_forward.10} parent=5 // pred_region
        %s1431 = ssub.s32 %s9, 2
      $region75: #{wild_relation_network_forward.10} parent=5 // pred_fallthru
        _
    $region6: #{wild_relation_network_forward.10} parent=1 // loop_footer
      %s13 = sadd.s32 1, %s9
    $region7: #{wild_relation_network_forward.10} parent=1 // loop_footer_branch
      %8 = sbr.rel target = $region3
    $region8: #{wild_relation_network_forward.10} parent=1 // loop_exit
      _

// kernel: wild_relation_network_forward.11
$region0: #{wild_relation_network_forward.11}
  #allocation0 [shape = 'u32[]', space=smem, size = 0x4, offset = 0x4, fixed_abs, tag = 'smem constant byte address 0x4 - core index']
  #allocation1 [shape = 'u32[144,128]{1,0:T(1,128)}', space=vmem, size = 0x12000, scoped, tag = 'internal scratch']
  %s0 = inlined_call_operand.vmem [shape: f32[2,8,128], index: 0, kind: input, shape index: {}]
  %s1 = inlined_call_operand.vmem [shape: f32[2,8,128], index: 1, kind: input, shape index: {}]
  %s2 = inlined_call_operand.vmem [shape: f32[2,4,128], index: 2, kind: input, shape index: {}]
  %s3 = inlined_call_operand.vmem [shape: f32[1,128], index: 3, kind: input, shape index: {}]
  %s4 = inlined_call_operand.vmem [shape: bf16[128,128], index: 4, kind: input, shape index: {}]
  %s5 = inlined_call_operand.vmem [shape: f32[1,128], index: 5, kind: input, shape index: {}]
  %s6 = inlined_call_operand.vmem [shape: bf16[128,128], index: 6, kind: input, shape index: {}]
  %s7 = inlined_call_operand.vmem [shape: f32[1,128], index: 7, kind: input, shape index: {}]
  %s8 = inlined_call_operand.vmem [shape: bf16[128,128], index: 8, kind: input, shape index: {}]
  %s9 = inlined_call_operand.vmem [shape: f32[1,128], index: 9, kind: input, shape index: {}]
  %s10 = inlined_call_operand.vmem [shape: bf16[128,128], index: 10, kind: input, shape index: {}]
  %s11 = inlined_call_operand.vmem [shape: f32[1,128], index: 11, kind: input, shape index: {}]
  %s12 = inlined_call_operand.vmem [shape: bf16[128,128], index: 12, kind: input, shape index: {}]
  %s13 = inlined_call_operand.vmem [shape: f32[1,128], index: 13, kind: input, shape index: {}]
  %s14 = inlined_call_operand.hbm [shape: f32[2,4,128], index: 14, kind: output, shape index: {}]
  %s15 = sld [smem:[#allocation0]]
  $region89: #{wild_relation_network_forward.11} parent=0
    _
  %s17 = ssub.s32 1, %s15
  %s18 = scalar_select 0, %s17, %s15
  $region1: #{wild_relation_network_forward.11} parent=0
    #allocation2 [shape = 'u8[4096]{0}', space=vmem, size = 0x1000, scoped, tag = 'output window, operand 0']
    #allocation3 [shape = 's32[2]{0}', space=sflag, size = 0x8, scoped, tag = 'scoped memory for wild_relation_network_forward.11']
    %19 = vsyncpa [#allocation3], 0
    %s20 = scalar_lea.sflag [#allocation3], 1
    %21 = vsyncpa %s20, 0
    loop: start=0, step=1, limit=4
    $region2: #{wild_relation_network_forward.11} parent=1 // loop_pre_header
      _
    $region3: #{wild_relation_network_forward.11} parent=1 // loop_header
      %s23 = sphi 0, %s27
      %p24 = scmp.ge.s32.totalorder %s23, 4
      %s33 = sphi 0, %s35
      %s36 = sphi 0, %s33
      %s37 = sphi 0, %s36
      %s53 = sphi 0, %s37
      %s59 = sphi 0, %s61
      %s62 = sphi 0, %s59
      %s63 = sphi 0, %s62
      %s79 = sphi 0, %s63
      %s85 = sphi 0, %s87
      %s88 = sphi 0, %s85
      %s89 = sphi 0, %s88
      %s105 = sphi 0, %s89
      %s109 = sphi 0, %s109
      %s111 = sphi 0, %s109
      %s112 = sphi 0, %s111
      %s126 = sphi 0, %s112
      %s130 = sphi 0, %s130
      %s132 = sphi 0, %s130
      %s133 = sphi 0, %s132
      %s147 = sphi 0, %s133
      %s151 = sphi 0, %s151
      %s153 = sphi 0, %s151
      %s154 = sphi 0, %s153
      %s168 = sphi 0, %s154
      %s172 = sphi 0, %s172
      %s174 = sphi 0, %s172
      %s175 = sphi 0, %s174
      %s189 = sphi 0, %s175
      %s193 = sphi 0, %s193
      %s195 = sphi 0, %s193
      %s196 = sphi 0, %s195
      %s210 = sphi 0, %s196
      %s214 = sphi 0, %s214
      %s216 = sphi 0, %s214
      %s217 = sphi 0, %s216
      %s231 = sphi 0, %s217
      %s235 = sphi 0, %s235
      %s237 = sphi 0, %s235
      %s238 = sphi 0, %s237
      %s252 = sphi 0, %s238
      %s256 = sphi 0, %s256
      %s258 = sphi 0, %s256
      %s259 = sphi 0, %s258
      %s273 = sphi 0, %s259
      %s277 = sphi 0, %s277
      %s279 = sphi 0, %s277
      %s280 = sphi 0, %s279
      %s294 = sphi 0, %s280
      %s298 = sphi 0, %s298
      %s300 = sphi 0, %s298
      %s301 = sphi 0, %s300
      %s315 = sphi 0, %s301
      %s319 = sphi 0, %s319
      %s321 = sphi 0, %s319
      %s322 = sphi 0, %s321
      %s336 = sphi 0, %s322
      %s342 = sphi 0, %s344
      %s345 = sphi 0, %s342
      %s346 = sphi 0, %s345
      %s362 = sphi 0, %s346
    $region4: #{wild_relation_network_forward.11} parent=1 // loop_header_branch
      %26 = sbr.rel (%p24) target = $region8
    $region5: #{wild_relation_network_forward.11} parent=1 // loop_body
      %s28 = ssub.s32 %s23, 1
      %s29 = ssub.s32 %s23, 2
      %s30 = sadd.s32 %s23, 1
      %s31 = ssub.s32 %s23, %s30
      %p32 = scmp.eq.s32.totalorder %s31, 0
      %s34 = sadd.s32 %s33, 1
      %s35 = scalar_select %p32, %s33, %s34
      %p38 = pneg %p32
      %p39 = scmp.eq.s32.totalorder %s23, 1
      %p40 = por %p38, %p39
      %p41 = scmp.ne.s32.totalorder %s33, %s36
      %p42 = scmp.eq.s32.totalorder %s23, 0
      %p43 = por %p41, %p42
      %p44 = scmp.ne.s32.totalorder %s33, %s36
      %p45 = scmp.eq.s32.totalorder %s28, 1
      %p46 = por %p44, %p45
      %p47 = scmp.ne.s32.totalorder %s36, %s37
      %p48 = scmp.eq.s32.totalorder %s28, 0
      %p49 = por %p47, %p48
      %p50 = scmp.ne.s32.totalorder %s36, %s37
      %p51 = scmp.eq.s32.totalorder %s29, 1
      %p52 = por %p50, %p51
      %p54 = scmp.ne.s32.totalorder %s37, %s53
      %p55 = scmp.eq.s32.totalorder %s29, 0
      %p56 = por %p54, %p55
      %s57 = ssub.s32 %s23, %s30
      %p58 = scmp.eq.s32.totalorder %s57, 0
      %s60 = sadd.s32 %s59, 1
      %s61 = scalar_select %p58, %s59, %s60
      %p64 = pneg %p58
      %p65 = scmp.eq.s32.totalorder %s23, 1
      %p66 = por %p64, %p65
      %p67 = scmp.ne.s32.totalorder %s59, %s62
      %p68 = scmp.eq.s32.totalorder %s23, 0
      %p69 = por %p67, %p68
      %p70 = scmp.ne.s32.totalorder %s59, %s62
      %p71 = scmp.eq.s32.totalorder %s28, 1
      %p72 = por %p70, %p71
      %p73 = scmp.ne.s32.totalorder %s62, %s63
      %p74 = scmp.eq.s32.totalorder %s28, 0
      %p75 = por %p73, %p74
      %p76 = scmp.ne.s32.totalorder %s62, %s63
      %p77 = scmp.eq.s32.totalorder %s29, 1
      %p78 = por %p76, %p77
      %p80 = scmp.ne.s32.totalorder %s63, %s79
      %p81 = scmp.eq.s32.totalorder %s29, 0
      %p82 = por %p80, %p81
      %s83 = ssub.s32 %s23, %s30
      %p84 = scmp.eq.s32.totalorder %s83, 0
      %s86 = sadd.s32 %s85, 1
      %s87 = scalar_select %p84, %s85, %s86
      %p90 = pneg %p84
      %p91 = scmp.eq.s32.totalorder %s23, 1
      %p92 = por %p90, %p91
      %p93 = scmp.ne.s32.totalorder %s85, %s88
      %p94 = scmp.eq.s32.totalorder %s23, 0
      %p95 = por %p93, %p94
      %p96 = scmp.ne.s32.totalorder %s85, %s88
      %p97 = scmp.eq.s32.totalorder %s28, 1
      %p98 = por %p96, %p97
      %p99 = scmp.ne.s32.totalorder %s88, %s89
      %p100 = scmp.eq.s32.totalorder %s28, 0
      %p101 = por %p99, %p100
      %p102 = scmp.ne.s32.totalorder %s88, %s89
      %p103 = scmp.eq.s32.totalorder %s29, 1
      %p104 = por %p102, %p103
      %p106 = scmp.ne.s32.totalorder %s89, %s105
      %p107 = scmp.eq.s32.totalorder %s29, 0
      %p108 = por %p106, %p107
      %s110 = sadd.s32 %s109, 1
      %p113 = scmp.eq.s32.totalorder %s23, 1
      %p114 = scmp.ne.s32.totalorder %s109, %s111
      %p115 = scmp.eq.s32.totalorder %s23, 0
      %p116 = por %p114, %p115
      %p117 = scmp.ne.s32.totalorder %s109, %s111
      %p118 = scmp.eq.s32.totalorder %s28, 1
      %p119 = por %p117, %p118
      %p120 = scmp.ne.s32.totalorder %s111, %s112
      %p121 = scmp.eq.s32.totalorder %s28, 0
      %p122 = por %p120, %p121
      %p123 = scmp.ne.s32.totalorder %s111, %s112
      %p124 = scmp.eq.s32.totalorder %s29, 1
      %p125 = por %p123, %p124
      %p127 = scmp.ne.s32.totalorder %s112, %s126
      %p128 = scmp.eq.s32.totalorder %s29, 0
      %p129 = por %p127, %p128
      %s131 = sadd.s32 %s130, 1
      %p134 = scmp.eq.s32.totalorder %s23, 1
      %p135 = scmp.ne.s32.totalorder %s130, %s132
      %p136 = scmp.eq.s32.totalorder %s23, 0
      %p137 = por %p135, %p136
      %p138 = scmp.ne.s32.totalorder %s130, %s132
      %p139 = scmp.eq.s32.totalorder %s28, 1
      %p140 = por %p138, %p139
      %p141 = scmp.ne.s32.totalorder %s132, %s133
      %p142 = scmp.eq.s32.totalorder %s28, 0
      %p143 = por %p141, %p142
      %p144 = scmp.ne.s32.totalorder %s132, %s133
      %p145 = scmp.eq.s32.totalorder %s29, 1
      %p146 = por %p144, %p145
      %p148 = scmp.ne.s32.totalorder %s133, %s147
      %p149 = scmp.eq.s32.totalorder %s29, 0
      %p150 = por %p148, %p149
      %s152 = sadd.s32 %s151, 1
      %p155 = scmp.eq.s32.totalorder %s23, 1
      %p156 = scmp.ne.s32.totalorder %s151, %s153
      %p157 = scmp.eq.s32.totalorder %s23, 0
      %p158 = por %p156, %p157
      %p159 = scmp.ne.s32.totalorder %s151, %s153
      %p160 = scmp.eq.s32.totalorder %s28, 1
      %p161 = por %p159, %p160
      %p162 = scmp.ne.s32.totalorder %s153, %s154
      %p163 = scmp.eq.s32.totalorder %s28, 0
      %p164 = por %p162, %p163
      %p165 = scmp.ne.s32.totalorder %s153, %s154
      %p166 = scmp.eq.s32.totalorder %s29, 1
      %p167 = por %p165, %p166
      %p169 = scmp.ne.s32.totalorder %s154, %s168
      %p170 = scmp.eq.s32.totalorder %s29, 0
      %p171 = por %p169, %p170
      %s173 = sadd.s32 %s172, 1
      %p176 = scmp.eq.s32.totalorder %s23, 1
      %p177 = scmp.ne.s32.totalorder %s172, %s174
      %p178 = scmp.eq.s32.totalorder %s23, 0
      %p179 = por %p177, %p178
      %p180 = scmp.ne.s32.totalorder %s172, %s174
      %p181 = scmp.eq.s32.totalorder %s28, 1
      %p182 = por %p180, %p181
      %p183 = scmp.ne.s32.totalorder %s174, %s175
      %p184 = scmp.eq.s32.totalorder %s28, 0
      %p185 = por %p183, %p184
      %p186 = scmp.ne.s32.totalorder %s174, %s175
      %p187 = scmp.eq.s32.totalorder %s29, 1
      %p188 = por %p186, %p187
      %p190 = scmp.ne.s32.totalorder %s175, %s189
      %p191 = scmp.eq.s32.totalorder %s29, 0
      %p192 = por %p190, %p191
      %s194 = sadd.s32 %s193, 1
      %p197 = scmp.eq.s32.totalorder %s23, 1
      %p198 = scmp.ne.s32.totalorder %s193, %s195
      %p199 = scmp.eq.s32.totalorder %s23, 0
      %p200 = por %p198, %p199
      %p201 = scmp.ne.s32.totalorder %s193, %s195
      %p202 = scmp.eq.s32.totalorder %s28, 1
      %p203 = por %p201, %p202
      %p204 = scmp.ne.s32.totalorder %s195, %s196
      %p205 = scmp.eq.s32.totalorder %s28, 0
      %p206 = por %p204, %p205
      %p207 = scmp.ne.s32.totalorder %s195, %s196
      %p208 = scmp.eq.s32.totalorder %s29, 1
      %p209 = por %p207, %p208
      %p211 = scmp.ne.s32.totalorder %s196, %s210
      %p212 = scmp.eq.s32.totalorder %s29, 0
      %p213 = por %p211, %p212
      %s215 = sadd.s32 %s214, 1
      %p218 = scmp.eq.s32.totalorder %s23, 1
      %p219 = scmp.ne.s32.totalorder %s214, %s216
      %p220 = scmp.eq.s32.totalorder %s23, 0
      %p221 = por %p219, %p220
      %p222 = scmp.ne.s32.totalorder %s214, %s216
      %p223 = scmp.eq.s32.totalorder %s28, 1
      %p224 = por %p222, %p223
      %p225 = scmp.ne.s32.totalorder %s216, %s217
      %p226 = scmp.eq.s32.totalorder %s28, 0
      %p227 = por %p225, %p226
      %p228 = scmp.ne.s32.totalorder %s216, %s217
      %p229 = scmp.eq.s32.totalorder %s29, 1
      %p230 = por %p228, %p229
      %p232 = scmp.ne.s32.totalorder %s217, %s231
      %p233 = scmp.eq.s32.totalorder %s29, 0
      %p234 = por %p232, %p233
      %s236 = sadd.s32 %s235, 1
      %p239 = scmp.eq.s32.totalorder %s23, 1
      %p240 = scmp.ne.s32.totalorder %s235, %s237
      %p241 = scmp.eq.s32.totalorder %s23, 0
      %p242 = por %p240, %p241
      %p243 = scmp.ne.s32.totalorder %s235, %s237
      %p244 = scmp.eq.s32.totalorder %s28, 1
      %p245 = por %p243, %p244
      %p246 = scmp.ne.s32.totalorder %s237, %s238
      %p247 = scmp.eq.s32.totalorder %s28, 0
      %p248 = por %p246, %p247
      %p249 = scmp.ne.s32.totalorder %s237, %s238
      %p250 = scmp.eq.s32.totalorder %s29, 1
      %p251 = por %p249, %p250
      %p253 = scmp.ne.s32.totalorder %s238, %s252
      %p254 = scmp.eq.s32.totalorder %s29, 0
      %p255 = por %p253, %p254
      %s257 = sadd.s32 %s256, 1
      %p260 = scmp.eq.s32.totalorder %s23, 1
      %p261 = scmp.ne.s32.totalorder %s256, %s258
      %p262 = scmp.eq.s32.totalorder %s23, 0
      %p263 = por %p261, %p262
      %p264 = scmp.ne.s32.totalorder %s256, %s258
      %p265 = scmp.eq.s32.totalorder %s28, 1
      %p266 = por %p264, %p265
      %p267 = scmp.ne.s32.totalorder %s258, %s259
      %p268 = scmp.eq.s32.totalorder %s28, 0
      %p269 = por %p267, %p268
      %p270 = scmp.ne.s32.totalorder %s258, %s259
      %p271 = scmp.eq.s32.totalorder %s29, 1
      %p272 = por %p270, %p271
      %p274 = scmp.ne.s32.totalorder %s259, %s273
      %p275 = scmp.eq.s32.totalorder %s29, 0
      %p276 = por %p274, %p275
      %s278 = sadd.s32 %s277, 1
      %p281 = scmp.eq.s32.totalorder %s23, 1
      %p282 = scmp.ne.s32.totalorder %s277, %s279
      %p283 = scmp.eq.s32.totalorder %s23, 0
      %p284 = por %p282, %p283
      %p285 = scmp.ne.s32.totalorder %s277, %s279
      %p286 = scmp.eq.s32.totalorder %s28, 1
      %p287 = por %p285, %p286
      %p288 = scmp.ne.s32.totalorder %s279, %s280
      %p289 = scmp.eq.s32.totalorder %s28, 0
      %p290 = por %p288, %p289
      %p291 = scmp.ne.s32.totalorder %s279, %s280
      %p292 = scmp.eq.s32.totalorder %s29, 1
      %p293 = por %p291, %p292
      %p295 = scmp.ne.s32.totalorder %s280, %s294
      %p296 = scmp.eq.s32.totalorder %s29, 0
      %p297 = por %p295, %p296
      %s299 = sadd.s32 %s298, 1
      %p302 = scmp.eq.s32.totalorder %s23, 1
      %p303 = scmp.ne.s32.totalorder %s298, %s300
      %p304 = scmp.eq.s32.totalorder %s23, 0
      %p305 = por %p303, %p304
      %p306 = scmp.ne.s32.totalorder %s298, %s300
      %p307 = scmp.eq.s32.totalorder %s28, 1
      %p308 = por %p306, %p307
      %p309 = scmp.ne.s32.totalorder %s300, %s301
      %p310 = scmp.eq.s32.totalorder %s28, 0
      %p311 = por %p309, %p310
      %p312 = scmp.ne.s32.totalorder %s300, %s301
      %p313 = scmp.eq.s32.totalorder %s29, 1
      %p314 = por %p312, %p313
      %p316 = scmp.ne.s32.totalorder %s301, %s315
      %p317 = scmp.eq.s32.totalorder %s29, 0
      %p318 = por %p316, %p317
      %s320 = sadd.s32 %s319, 1
      %p323 = scmp.eq.s32.totalorder %s23, 1
      %p324 = scmp.ne.s32.totalorder %s319, %s321
      %p325 = scmp.eq.s32.totalorder %s23, 0
      %p326 = por %p324, %p325
      %p327 = scmp.ne.s32.totalorder %s319, %s321
      %p328 = scmp.eq.s32.totalorder %s28, 1
      %p329 = por %p327, %p328
      %p330 = scmp.ne.s32.totalorder %s321, %s322
      %p331 = scmp.eq.s32.totalorder %s28, 0
      %p332 = por %p330, %p331
      %p333 = scmp.ne.s32.totalorder %s321, %s322
      %p334 = scmp.eq.s32.totalorder %s29, 1
      %p335 = por %p333, %p334
      %p337 = scmp.ne.s32.totalorder %s322, %s336
      %p338 = scmp.eq.s32.totalorder %s29, 0
      %p339 = por %p337, %p338
      %s340 = ssub.s32 %s23, %s30
      %p341 = scmp.eq.s32.totalorder %s340, 0
      %s343 = sadd.s32 %s342, 1
      %s344 = scalar_select %p341, %s342, %s343
      %p347 = pneg %p341
      %p348 = scmp.eq.s32.totalorder %s23, 1
      %p349 = por %p347, %p348
      %p350 = scmp.ne.s32.totalorder %s342, %s345
      %p351 = scmp.eq.s32.totalorder %s23, 0
      %p352 = por %p350, %p351
      %p353 = scmp.ne.s32.totalorder %s342, %s345
      %p354 = scmp.eq.s32.totalorder %s28, 1
      %p355 = por %p353, %p354
      %p356 = scmp.ne.s32.totalorder %s345, %s346
      %p357 = scmp.eq.s32.totalorder %s28, 0
      %p358 = por %p356, %p357
      %p359 = scmp.ne.s32.totalorder %s345, %s346
      %p360 = scmp.eq.s32.totalorder %s29, 1
      %p361 = por %p359, %p360
      %p363 = scmp.ne.s32.totalorder %s346, %s362
      %p364 = scmp.eq.s32.totalorder %s29, 0
      %p365 = por %p363, %p364
      %p366 = scmp.le.s32.totalorder 1, %s23
      %p367 = scmp.lt.s32.totalorder %s23, 3
      %p368 = pnand %p366, %p367
      %p369 = pneg %p368
      // Predicated region
      $region9: #{wild_relation_network_forward.11} parent=5 // pred_check
        _
      $region10: #{wild_relation_network_forward.11} parent=5 // pred_check_branch
        %371 = sbr.rel (%p368) target = $region12
      $region11: #{wild_relation_network_forward.11} parent=5 // pred_region
        %s372 = ssub.s32 %s23, 1
        // Predicated region
        $region13: #{wild_relation_network_forward.11} parent=11 // pred_check
          %p373 = pneg %p122
        $region14: #{wild_relation_network_forward.11} parent=11 // pred_check_branch
          %375 = sbr.rel (%p373) target = $region16
        $region15: #{wild_relation_network_forward.11} parent=11 // pred_region
          _
        $region16: #{wild_relation_network_forward.11} parent=11 // pred_fallthru
          _
        // Predicated region
        $region17: #{wild_relation_network_forward.11} parent=11 // pred_check
          %p376 = pneg %p143
        $region18: #{wild_relation_network_forward.11} parent=11 // pred_check_branch
          %378 = sbr.rel (%p376) target = $region20
        $region19: #{wild_relation_network_forward.11} parent=11 // pred_region
          _
        $region20: #{wild_relation_network_forward.11} parent=11 // pred_fallthru
          _
        // Predicated region
        $region21: #{wild_relation_network_forward.11} parent=11 // pred_check
          %p379 = pneg %p164
        $region22: #{wild_relation_network_forward.11} parent=11 // pred_check_branch
          %381 = sbr.rel (%p379) target = $region24
        $region23: #{wild_relation_network_forward.11} parent=11 // pred_region
          _
        $region24: #{wild_relation_network_forward.11} parent=11 // pred_fallthru
          _
        // Predicated region
        $region25: #{wild_relation_network_forward.11} parent=11 // pred_check
          %p382 = pneg %p185
        $region26: #{wild_relation_network_forward.11} parent=11 // pred_check_branch
          %384 = sbr.rel (%p382) target = $region28
        $region27: #{wild_relation_network_forward.11} parent=11 // pred_region
          _
        $region28: #{wild_relation_network_forward.11} parent=11 // pred_fallthru
          _
        // Predicated region
        $region29: #{wild_relation_network_forward.11} parent=11 // pred_check
          %p385 = pneg %p206
        $region30: #{wild_relation_network_forward.11} parent=11 // pred_check_branch
          %387 = sbr.rel (%p385) target = $region32
        $region31: #{wild_relation_network_forward.11} parent=11 // pred_region
          _
        $region32: #{wild_relation_network_forward.11} parent=11 // pred_fallthru
          _
        // Predicated region
        $region33: #{wild_relation_network_forward.11} parent=11 // pred_check
          %p388 = pneg %p227
        $region34: #{wild_relation_network_forward.11} parent=11 // pred_check_branch
          %390 = sbr.rel (%p388) target = $region36
        $region35: #{wild_relation_network_forward.11} parent=11 // pred_region
          _
        $region36: #{wild_relation_network_forward.11} parent=11 // pred_fallthru
          _
        // Predicated region
        $region37: #{wild_relation_network_forward.11} parent=11 // pred_check
          %p391 = pneg %p248
        $region38: #{wild_relation_network_forward.11} parent=11 // pred_check_branch
          %393 = sbr.rel (%p391) target = $region40
        $region39: #{wild_relation_network_forward.11} parent=11 // pred_region
          _
        $region40: #{wild_relation_network_forward.11} parent=11 // pred_fallthru
          _
        // Predicated region
        $region41: #{wild_relation_network_forward.11} parent=11 // pred_check
          %p394 = pneg %p269
        $region42: #{wild_relation_network_forward.11} parent=11 // pred_check_branch
          %396 = sbr.rel (%p394) target = $region44
        $region43: #{wild_relation_network_forward.11} parent=11 // pred_region
          _
        $region44: #{wild_relation_network_forward.11} parent=11 // pred_fallthru
          _
        // Predicated region
        $region45: #{wild_relation_network_forward.11} parent=11 // pred_check
          %p397 = pneg %p290
        $region46: #{wild_relation_network_forward.11} parent=11 // pred_check_branch
          %399 = sbr.rel (%p397) target = $region48
        $region47: #{wild_relation_network_forward.11} parent=11 // pred_region
          _
        $region48: #{wild_relation_network_forward.11} parent=11 // pred_fallthru
          _
        // Predicated region
        $region49: #{wild_relation_network_forward.11} parent=11 // pred_check
          %p400 = pneg %p311
        $region50: #{wild_relation_network_forward.11} parent=11 // pred_check_branch
          %402 = sbr.rel (%p400) target = $region52
        $region51: #{wild_relation_network_forward.11} parent=11 // pred_region
          _
        $region52: #{wild_relation_network_forward.11} parent=11 // pred_fallthru
          _
        // Predicated region
        $region53: #{wild_relation_network_forward.11} parent=11 // pred_check
          %p403 = pneg %p332
        $region54: #{wild_relation_network_forward.11} parent=11 // pred_check_branch
          %405 = sbr.rel (%p403) target = $region56
        $region55: #{wild_relation_network_forward.11} parent=11 // pred_region
          _
        $region56: #{wild_relation_network_forward.11} parent=11 // pred_fallthru
          _
      $region12: #{wild_relation_network_forward.11} parent=5 // pred_fallthru
        _
      %p406 = scmp.lt.s32.totalorder %s23, 2
      // Predicated region
      $region57: #{wild_relation_network_forward.11} parent=5 // pred_check
        %p407 = pneg %p406
      $region58: #{wild_relation_network_forward.11} parent=5 // pred_check_branch
        %409 = sbr.rel (%p407) target = $region60
      $region59: #{wild_relation_network_forward.11} parent=5 // pred_region
        // Predicated region
        $region61: #{wild_relation_network_forward.11} parent=59 // pred_check
          %p410 = pneg %p43
        $region62: #{wild_relation_network_forward.11} parent=59 // pred_check_branch
          %412 = sbr.rel (%p410) target = $region64
        $region63: #{wild_relation_network_forward.11} parent=59 // pred_region
          %p413 = scmp.lt.s32.totalorder %s23, 1
          %s414 = scalar_select %p413, %s23, 1
          %s415 = smul.addr %s414, 8
          %s416 = scalar_lea.vmem %s0, %s415
        $region64: #{wild_relation_network_forward.11} parent=59 // pred_fallthru
          _
        // Predicated region
        $region65: #{wild_relation_network_forward.11} parent=59 // pred_check
          %p417 = pneg %p69
        $region66: #{wild_relation_network_forward.11} parent=59 // pred_check_branch
          %419 = sbr.rel (%p417) target = $region68
        $region67: #{wild_relation_network_forward.11} parent=59 // pred_region
          %p420 = scmp.lt.s32.totalorder %s23, 1
          %s421 = scalar_select %p420, %s23, 1
          %s422 = smul.addr %s421, 8
          %s423 = scalar_lea.vmem %s1, %s422
        $region68: #{wild_relation_network_forward.11} parent=59 // pred_fallthru
          _
        // Predicated region
        $region69: #{wild_relation_network_forward.11} parent=59 // pred_check
          %p424 = pneg %p95
        $region70: #{wild_relation_network_forward.11} parent=59 // pred_check_branch
          %426 = sbr.rel (%p424) target = $region72
        $region71: #{wild_relation_network_forward.11} parent=59 // pred_region
          %p427 = scmp.lt.s32.totalorder %s23, 1
          %s428 = scalar_select %p427, %s23, 1
          %s429 = smul.addr %s428, 4
          %s430 = scalar_lea.vmem %s2, %s429
        $region72: #{wild_relation_network_forward.11} parent=59 // pred_fallthru
          _
      $region60: #{wild_relation_network_forward.11} parent=5 // pred_fallthru
        _
      %p431 = scmp.le.s32.totalorder 1, %s23
      %p432 = scmp.lt.s32.totalorder %s23, 3
      %p433 = pnand %p431, %p432
      %p434 = pneg %p433
      // Predicated region
      $region73: #{wild_relation_network_forward.11} parent=5 // pred_check
        _
      $region74: #{wild_relation_network_forward.11} parent=5 // pred_check_branch
        %436 = sbr.rel (%p433) target = $region76
      $region75: #{wild_relation_network_forward.11} parent=5 // pred_region
        %s437 = ssub.s32 %s23, 1
        %p438 = scmp.lt.s32.totalorder %s28, 1
        %s439 = scalar_select %p438, %s28, 1
        %s440 = smul.addr %s439, 8
        %s441 = scalar_lea.vmem %s0, %s440
        %p442 = pneg %p49
        %p443 = pneg %p46
        %p444 = scmp.lt.s32.totalorder %s28, 1
        %s445 = scalar_select %p444, %s28, 1
        %s446 = smul.addr %s445, 8
        %s447 = scalar_lea.vmem %s1, %s446
        %p448 = pneg %p75
        %p449 = pneg %p72
        %p450 = scmp.lt.s32.totalorder %s28, 1
        %s451 = scalar_select %p450, %s28, 1
        %s452 = smul.addr %s451, 4
        %s453 = scalar_lea.vmem %s2, %s452
        %p454 = pneg %p101
        %p455 = pneg %p98
        %p456 = pneg %p122
        %p457 = pneg %p119
        %p458 = pneg %p143
        %p459 = pneg %p140
        %p460 = pneg %p164
        %p461 = pneg %p161
        %p462 = pneg %p185
        %p463 = pneg %p182
        %p464 = pneg %p206
        %p465 = pneg %p203
        %p466 = pneg %p227
        %p467 = pneg %p224
        %p468 = pneg %p248
        %p469 = pneg %p245
        %p470 = pneg %p269
        %p471 = pneg %p266
        %p472 = pneg %p290
        %p473 = pneg %p287
        %p474 = pneg %p311
        %p475 = pneg %p308
        %p476 = pneg %p332
        %p477 = pneg %p329
        %p478 = pneg %p358
        %p479 = pneg %p355
        %s480 = sand.u32 %s345, 1
        %s481 = scalar_lea.sflag [#allocation3], %s480
        %s482 = sand.u32 %s345, 1
        %s483 = smul.addr %s482, 4
        %s484 = scalar_lea.vmem [#allocation2], %s483
        %p485 = scmp.lt.s32.totalorder %s28, 1
        %s486 = scalar_select %p485, %s28, 1
        %s487 = smul.addr %s486, 8
        %s488 = scalar_lea.vmem %s0, %s487
        %p489 = scmp.lt.s32.totalorder %s28, 1
        %s490 = scalar_select %p489, %s28, 1
        %s491 = smul.addr %s490, 8
        %s492 = scalar_lea.vmem %s1, %s491
        %p493 = scmp.lt.s32.totalorder %s28, 1
        %s494 = scalar_select %p493, %s28, 1
        %s495 = smul.addr %s494, 4
        %s496 = scalar_lea.vmem %s2, %s495
        %v498 = vld [vmem:[%s488] sm:$0xff]
        %v499 = vld [vmem:[%s492] sm:$0xff]
        %v500 = vld [vmem:[%s496] sm:$0xf]
        %v501 = vld [vmem:[%s3] sm:$0x1]
        %v502 = vlaneseq
        %v503 = vshrl.u32 %v502, 7
        %v504 = vsub.s32 0, %v503
        %v505 = vrot.slane %v499, %v504
        %v506 = vadd.f32 %v498, %v505
        %v507 = vlaneseq
        %v508 = vshrl.u32 %v507, 7
        %v509 = vsub.s32 1, %v508
        %v510 = vrot.slane %v499, %v509
        %v511 = vadd.f32 %v498, %v510
        %v512 = vlaneseq
        %v513 = vshrl.u32 %v512, 7
        %v514 = vsub.s32 2, %v513
        %v515 = vrot.slane %v499, %v514
        %v516 = vadd.f32 %v498, %v515
        %v517 = vlaneseq
        %v518 = vshrl.u32 %v517, 7
        %v519 = vsub.s32 3, %v518
        %v520 = vrot.slane %v499, %v519
        %v521 = vadd.f32 %v498, %v520
        %v522 = vlaneseq
        %v523 = vshrl.u32 %v522, 7
        %v524 = vsub.s32 4, %v523
        %v525 = vrot.slane %v499, %v524
        %v526 = vadd.f32 %v498, %v525
        %v527 = vlaneseq
        %v528 = vshrl.u32 %v527, 7
        %v529 = vsub.s32 5, %v528
        %v530 = vrot.slane %v499, %v529
        %v531 = vadd.f32 %v498, %v530
        %v532 = vlaneseq
        %v533 = vshrl.u32 %v532, 7
        %v534 = vsub.s32 6, %v533
        %v535 = vrot.slane %v499, %v534
        %v536 = vadd.f32 %v498, %v535
        %v537 = vlaneseq
        %v538 = vshrl.u32 %v537, 7
        %v539 = vsub.s32 7, %v538
        %v540 = vrot.slane %v499, %v539
        %v541 = vadd.f32 %v498, %v540
        %v543 = vlaneseq
        %v544 = vshrl.u32 %v543, 7
        %v545 = vsub.s32 0, %v544
        %v546 = vrot.slane %v501, %v545
        %v548 = vadd.f32 %v506, %v546
        %v549 = vadd.f32 %v511, %v546
        %v550 = vadd.f32 %v516, %v546
        %v551 = vadd.f32 %v521, %v546
        %v552 = vadd.f32 %v526, %v546
        %v553 = vadd.f32 %v531, %v546
        %v554 = vadd.f32 %v536, %v546
        %v555 = vadd.f32 %v541, %v546
        %v556 = vmax.f32 %v548, 0.0
        %v557 = vmax.f32 %v549, 0.0
        %v558 = vmax.f32 %v550, 0.0
        %v559 = vmax.f32 %v551, 0.0
        %v560 = vmax.f32 %v552, 0.0
        %v561 = vmax.f32 %v553, 0.0
        %v562 = vmax.f32 %v554, 0.0
        %v563 = vmax.f32 %v555, 0.0
        %v564 = vpack.c.bf16 %v557, %v556
        %v565 = vpack.c.bf16 %v559, %v558
        %v566 = vpack.c.bf16 %v561, %v560
        %v567 = vpack.c.bf16 %v563, %v562
        %v568 = vld [vmem:[%s4] sm:$0xf]
        %v569 = vld [vmem:[%s4 + $0x4] sm:$0xf]
        %v570 = vld [vmem:[%s4 + $0x8] sm:$0xf]
        %v571 = vld [vmem:[%s4 + $0xc] sm:$0xf]
        %v572 = vld [vmem:[%s4 + $0x10] sm:$0xf]
        %v573 = vld [vmem:[%s4 + $0x14] sm:$0xf]
        %v574 = vld [vmem:[%s4 + $0x18] sm:$0xf]
        %v575 = vld [vmem:[%s4 + $0x1c] sm:$0xf]
        %v576 = vld [vmem:[%s4 + $0x20] sm:$0xf]
        %v577 = vld [vmem:[%s4 + $0x24] sm:$0xf]
        %v578 = vld [vmem:[%s4 + $0x28] sm:$0xf]
        %v579 = vld [vmem:[%s4 + $0x2c] sm:$0xf]
        %v580 = vld [vmem:[%s4 + $0x30] sm:$0xf]
        %v581 = vld [vmem:[%s4 + $0x34] sm:$0xf]
        %v582 = vld [vmem:[%s4 + $0x38] sm:$0xf]
        %v583 = vld [vmem:[%s4 + $0x3c] sm:$0xf]
        %v584 = vld [vmem:[%s5] sm:$0x1]
        %v586 = vlaneseq
        %v587 = vshrl.u32 %v586, 7
        %v588 = vsub.s32 0, %v587
        %v589 = vrot.slane %v584, %v588
        %v607 = vunpack.c.l.b16 %v568
        %v608 = vunpack.c.l.b16 %v569
        %v609 = vunpack.c.l.b16 %v570
        %v610 = vunpack.c.l.b16 %v571
        %v611 = vunpack.c.l.b16 %v572
        %v612 = vunpack.c.l.b16 %v573
        %v613 = vunpack.c.l.b16 %v574
        %v614 = vunpack.c.l.b16 %v575
        %v615 = vunpack.c.l.b16 %v576
        %v616 = vunpack.c.l.b16 %v577
        %v617 = vunpack.c.l.b16 %v578
        %v618 = vunpack.c.l.b16 %v579
        %v619 = vunpack.c.l.b16 %v580
        %v620 = vunpack.c.l.b16 %v581
        %v621 = vunpack.c.l.b16 %v582
        %v622 = vunpack.c.l.b16 %v583
        %v623 = vpack.c.b16 %v608, %v607
        %v624 = vpack.c.b16 %v610, %v609
        %v625 = vpack.c.b16 %v612, %v611
        %v626 = vpack.c.b16 %v614, %v613
        %v627 = vpack.c.b16 %v616, %v615
        %v628 = vpack.c.b16 %v618, %v617
        %v629 = vpack.c.b16 %v620, %v619
        %v630 = vpack.c.b16 %v622, %v621
        %639 = vmatprep.subr.bf16.mxu0 0
        %640 = vmatpush1.bf16.msra.mxu0 %v623
        %641 = vmatprep.subr.bf16.mxu0 0
        %642 = vmatpush1.bf16.msra.mxu0 %v624
        %643 = vmatprep.subr.bf16.mxu0 0
        %644 = vmatpush1.bf16.msra.mxu0 %v625
        %645 = vmatprep.subr.bf16.mxu0 0
        %646 = vmatpush1.bf16.msra.mxu0 %v626
        %647 = vmatprep.subr.bf16.mxu0 0
        %648 = vmatpush1.bf16.msra.mxu0 %v627
        %649 = vmatprep.subr.bf16.mxu0 0
        %650 = vmatpush1.bf16.msra.mxu0 %v628
        %651 = vmatprep.subr.bf16.mxu0 0
        %652 = vmatpush1.bf16.msra.mxu0 %v629
        %653 = vmatprep.subr.bf16.mxu0 0
        %654 = vmatpush1.bf16.msra.mxu0 %v630
        %655 = vmatprep.subr.bf16.mxu0 0
        %656 = vmatpush1.bf16.msra.mxu0 0
        %657 = vmatprep.subr.bf16.mxu0 0
        %658 = vmatpush1.bf16.msra.mxu0 0
        %659 = vmatprep.subr.bf16.mxu0 0
        %660 = vmatpush1.bf16.msra.mxu0 0
        %661 = vmatprep.subr.bf16.mxu0 0
        %662 = vmatpush1.bf16.msra.mxu0 0
        %663 = vmatprep.subr.bf16.mxu0 0
        %664 = vmatpush1.bf16.msra.mxu0 0
        %665 = vmatprep.subr.bf16.mxu0 0
        %666 = vmatpush1.bf16.msra.mxu0 0
        %667 = vmatprep.subr.bf16.mxu0 0
        %668 = vmatpush1.bf16.msra.mxu0 0
        %669 = vmatprep.subr.bf16.mxu0 0
        %670 = vmatpush1.bf16.msra.mxu0 0
        %671 = vmatprep.mubr.bf16.mxu0 0
        %672 = vmatmul.mubr.bf16.gmra.mrb[0].mxu0 %v564
        %v673 = vpop.f32.mrb[0].mxu0
        %v674 = vadd.f32 %v589, %v673
        %v675 = vpop.f32.mrb[0].mxu0
        %v676 = vpop.f32.mrb[0].mxu0
        %v677 = vadd.f32 %v589, %v676
        %v678 = vpop.f32.mrb[0].mxu0
        %679 = vmatprep.mubr.bf16.mxu0 0
        %680 = vmatmul.mubr.bf16.gmra.mrb[0].mxu0 %v565
        %v681 = vpop.f32.mrb[0].mxu0
        %v682 = vadd.f32 %v589, %v681
        %v683 = vpop.f32.mrb[0].mxu0
        %v684 = vpop.f32.mrb[0].mxu0
        %v685 = vadd.f32 %v589, %v684
        %v686 = vpop.f32.mrb[0].mxu0
        %687 = vmatprep.mubr.bf16.mxu0 0
        %688 = vmatmul.mubr.bf16.gmra.mrb[0].mxu0 %v566
        %v689 = vpop.f32.mrb[0].mxu0
        %v690 = vadd.f32 %v589, %v689
        %v691 = vpop.f32.mrb[0].mxu0
        %v692 = vpop.f32.mrb[0].mxu0
        %v693 = vadd.f32 %v589, %v692
        %v694 = vpop.f32.mrb[0].mxu0
        %695 = vmatprep.mubr.bf16.mxu0 0
        %696 = vmatmul.mubr.bf16.gmra.mrb[0].mxu0 %v567
        %v697 = vpop.f32.mrb[0].mxu0
        %v698 = vadd.f32 %v589, %v697
        %v699 = vpop.f32.mrb[0].mxu0
        %v700 = vpop.f32.mrb[0].mxu0
        %v701 = vadd.f32 %v589, %v700
        %v702 = vpop.f32.mrb[0].mxu0
        %703 = vdwg.mxu0
        %v704 = vmax.f32 %v674, 0.0
        %v705 = vmax.f32 %v677, 0.0
        %v706 = vmax.f32 %v682, 0.0
        %v707 = vmax.f32 %v685, 0.0
        %v708 = vmax.f32 %v690, 0.0
        %v709 = vmax.f32 %v693, 0.0
        %v710 = vmax.f32 %v698, 0.0
        %v711 = vmax.f32 %v701, 0.0
        %v712 = vpack.c.bf16 %v705, %v704
        %v713 = vpack.c.bf16 %v707, %v706
        %v714 = vpack.c.bf16 %v709, %v708
        %v715 = vpack.c.bf16 %v711, %v710
        %v716 = vld [vmem:[%s6] sm:$0xf]
        %v717 = vld [vmem:[%s6 + $0x4] sm:$0xf]
        %v718 = vld [vmem:[%s6 + $0x8] sm:$0xf]
        %v719 = vld [vmem:[%s6 + $0xc] sm:$0xf]
        %v720 = vld [vmem:[%s6 + $0x10] sm:$0xf]
        %v721 = vld [vmem:[%s6 + $0x14] sm:$0xf]
        %v722 = vld [vmem:[%s6 + $0x18] sm:$0xf]
        %v723 = vld [vmem:[%s6 + $0x1c] sm:$0xf]
        %v724 = vld [vmem:[%s6 + $0x20] sm:$0xf]
        %v725 = vld [vmem:[%s6 + $0x24] sm:$0xf]
        %v726 = vld [vmem:[%s6 + $0x28] sm:$0xf]
        %v727 = vld [vmem:[%s6 + $0x2c] sm:$0xf]
        %v728 = vld [vmem:[%s6 + $0x30] sm:$0xf]
        %v729 = vld [vmem:[%s6 + $0x34] sm:$0xf]
        %v730 = vld [vmem:[%s6 + $0x38] sm:$0xf]
        %v731 = vld [vmem:[%s6 + $0x3c] sm:$0xf]
        %v732 = vld [vmem:[%s7] sm:$0x1]
        %v734 = vlaneseq
        %v735 = vshrl.u32 %v734, 7
        %v736 = vsub.s32 0, %v735
        %v737 = vrot.slane %v732, %v736
        %v755 = vunpack.c.l.b16 %v716
        %v756 = vunpack.c.l.b16 %v717
        %v757 = vunpack.c.l.b16 %v718
        %v758 = vunpack.c.l.b16 %v719
        %v759 = vunpack.c.l.b16 %v720
        %v760 = vunpack.c.l.b16 %v721
        %v761 = vunpack.c.l.b16 %v722
        %v762 = vunpack.c.l.b16 %v723
        %v763 = vunpack.c.l.b16 %v724
        %v764 = vunpack.c.l.b16 %v725
        %v765 = vunpack.c.l.b16 %v726
        %v766 = vunpack.c.l.b16 %v727
        %v767 = vunpack.c.l.b16 %v728
        %v768 = vunpack.c.l.b16 %v729
        %v769 = vunpack.c.l.b16 %v730
        %v770 = vunpack.c.l.b16 %v731
        %v771 = vpack.c.b16 %v756, %v755
        %v772 = vpack.c.b16 %v758, %v757
        %v773 = vpack.c.b16 %v760, %v759
        %v774 = vpack.c.b16 %v762, %v761
        %v775 = vpack.c.b16 %v764, %v763
        %v776 = vpack.c.b16 %v766, %v765
        %v777 = vpack.c.b16 %v768, %v767
        %v778 = vpack.c.b16 %v770, %v769
        %787 = vmatprep.subr.bf16.mxu0 0
        %788 = vmatpush1.bf16.msra.mxu0 %v771
        %789 = vmatprep.subr.bf16.mxu0 0
        %790 = vmatpush1.bf16.msra.mxu0 %v772
        %791 = vmatprep.subr.bf16.mxu0 0
        %792 = vmatpush1.bf16.msra.mxu0 %v773
        %793 = vmatprep.subr.bf16.mxu0 0
        %794 = vmatpush1.bf16.msra.mxu0 %v774
        %795 = vmatprep.subr.bf16.mxu0 0
        %796 = vmatpush1.bf16.msra.mxu0 %v775
        %797 = vmatprep.subr.bf16.mxu0 0
        %798 = vmatpush1.bf16.msra.mxu0 %v776
        %799 = vmatprep.subr.bf16.mxu0 0
        %800 = vmatpush1.bf16.msra.mxu0 %v777
        %801 = vmatprep.subr.bf16.mxu0 0
        %802 = vmatpush1.bf16.msra.mxu0 %v778
        %803 = vmatprep.subr.bf16.mxu0 0
        %804 = vmatpush1.bf16.msra.mxu0 0
        %805 = vmatprep.subr.bf16.mxu0 0
        %806 = vmatpush1.bf16.msra.mxu0 0
        %807 = vmatprep.subr.bf16.mxu0 0
        %808 = vmatpush1.bf16.msra.mxu0 0
        %809 = vmatprep.subr.bf16.mxu0 0
        %810 = vmatpush1.bf16.msra.mxu0 0
        %811 = vmatprep.subr.bf16.mxu0 0
        %812 = vmatpush1.bf16.msra.mxu0 0
        %813 = vmatprep.subr.bf16.mxu0 0
        %814 = vmatpush1.bf16.msra.mxu0 0
        %815 = vmatprep.subr.bf16.mxu0 0
        %816 = vmatpush1.bf16.msra.mxu0 0
        %817 = vmatprep.subr.bf16.mxu0 0
        %818 = vmatpush1.bf16.msra.mxu0 0
        %819 = vmatprep.mubr.bf16.mxu0 0
        %820 = vmatmul.mubr.bf16.gmra.mrb[0].mxu0 %v712
        %v821 = vpop.f32.mrb[0].mxu0
        %v822 = vadd.f32 %v737, %v821
        %v823 = vpop.f32.mrb[0].mxu0
        %v824 = vpop.f32.mrb[0].mxu0
        %v825 = vadd.f32 %v737, %v824
        %v826 = vpop.f32.mrb[0].mxu0
        %827 = vmatprep.mubr.bf16.mxu0 0
        %828 = vmatmul.mubr.bf16.gmra.mrb[0].mxu0 %v713
        %v829 = vpop.f32.mrb[0].mxu0
        %v830 = vadd.f32 %v737, %v829
        %v831 = vpop.f32.mrb[0].mxu0
        %v832 = vpop.f32.mrb[0].mxu0
        %v833 = vadd.f32 %v737, %v832
        %v834 = vpop.f32.mrb[0].mxu0
        %835 = vmatprep.mubr.bf16.mxu0 0
        %836 = vmatmul.mubr.bf16.gmra.mrb[0].mxu0 %v714
        %v837 = vpop.f32.mrb[0].mxu0
        %v838 = vadd.f32 %v737, %v837
        %v839 = vpop.f32.mrb[0].mxu0
        %v840 = vpop.f32.mrb[0].mxu0
        %v841 = vadd.f32 %v737, %v840
        %v842 = vpop.f32.mrb[0].mxu0
        %843 = vmatprep.mubr.bf16.mxu0 0
        %844 = vmatmul.mubr.bf16.gmra.mrb[0].mxu0 %v715
        %v845 = vpop.f32.mrb[0].mxu0
        %v846 = vadd.f32 %v737, %v845
        %v847 = vpop.f32.mrb[0].mxu0
        %v848 = vpop.f32.mrb[0].mxu0
        %v849 = vadd.f32 %v737, %v848
        %v850 = vpop.f32.mrb[0].mxu0
        %851 = vdwg.mxu0
        %v852 = vmax.f32 %v822, 0.0
        %v853 = vmax.f32 %v825, 0.0
        %v854 = vmax.f32 %v830, 0.0
        %v855 = vmax.f32 %v833, 0.0
        %v856 = vmax.f32 %v838, 0.0
        %v857 = vmax.f32 %v841, 0.0
        %v858 = vmax.f32 %v846, 0.0
        %v859 = vmax.f32 %v849, 0.0
        %v860 = vadd.f32 %v852, %v853
        %v861 = vadd.f32 %v860, %v854
        %v862 = vadd.f32 %v861, %v855
        %v863 = vadd.f32 %v862, %v856
        %v864 = vadd.f32 %v863, %v857
        %v865 = vadd.f32 %v864, %v858
        %v866 = vadd.f32 %v865, %v859
        %v867 = vrot.slane %v866, 4
        %v868 = vadd.f32 %v866, %v867
        %v869 = vrot.slane %v868, 2
        %v870 = vadd.f32 %v868, %v869
        %v871 = vrot.slane %v870, 1
        %v872 = vadd.f32 %v870, %v871
        %v873 = vlaneseq
        %v874 = vshrl.u32 %v873, 7
        %v875 = vsub.s32 0, %v874
        %v876 = vrot.slane %v500, %v875
        %v877 = vadd.f32 %v498, %v876
        %v878 = vadd.f32 %v877, %v546
        %v879 = vmax.f32 %v878, 0.0
        %v880 = vpack.c.bf16 %v879, %v879
        %881 = vmatprep.subr.bf16.mxu0 0
        %882 = vmatpush1.bf16.msra.mxu0 %v623
        %883 = vmatprep.subr.bf16.mxu0 0
        %884 = vmatpush1.bf16.msra.mxu0 %v624
        %885 = vmatprep.subr.bf16.mxu0 0
        %886 = vmatpush1.bf16.msra.mxu0 %v625
        %887 = vmatprep.subr.bf16.mxu0 0
        %888 = vmatpush1.bf16.msra.mxu0 %v626
        %889 = vmatprep.subr.bf16.mxu0 0
        %890 = vmatpush1.bf16.msra.mxu0 %v627
        %891 = vmatprep.subr.bf16.mxu0 0
        %892 = vmatpush1.bf16.msra.mxu0 %v628
        %893 = vmatprep.subr.bf16.mxu0 0
        %894 = vmatpush1.bf16.msra.mxu0 %v629
        %895 = vmatprep.subr.bf16.mxu0 0
        %896 = vmatpush1.bf16.msra.mxu0 %v630
        %897 = vmatprep.subr.bf16.mxu0 0
        %898 = vmatpush1.bf16.msra.mxu0 0
        %899 = vmatprep.subr.bf16.mxu0 0
        %900 = vmatpush1.bf16.msra.mxu0 0
        %901 = vmatprep.subr.bf16.mxu0 0
        %902 = vmatpush1.bf16.msra.mxu0 0
        %903 = vmatprep.subr.bf16.mxu0 0
        %904 = vmatpush1.bf16.msra.mxu0 0
        %905 = vmatprep.subr.bf16.mxu0 0
        %906 = vmatpush1.bf16.msra.mxu0 0
        %907 = vmatprep.subr.bf16.mxu0 0
        %908 = vmatpush1.bf16.msra.mxu0 0
        %909 = vmatprep.subr.bf16.mxu0 0
        %910 = vmatpush1.bf16.msra.mxu0 0
        %911 = vmatprep.subr.bf16.mxu0 0
        %912 = vmatpush1.bf16.msra.mxu0 0
        %913 = vmatprep.mubr.bf16.mxu0 0
        %914 = vmatmul.mubr.bf16.gmra.mrb[0].mxu0 %v880
        %v915 = vpop.f32.mrb[0].mxu0
        %v916 = vadd.f32 %v589, %v915
        %v917 = vpop.f32.mrb[0].mxu0
        %v918 = vpop.f32.mrb[0].mxu0
        %v919 = vpop.f32.mrb[0].mxu0
        %920 = vdwg.mxu0
        %v921 = vmax.f32 %v916, 0.0
        %v922 = vpack.c.bf16 %v921, %v921
        %923 = vmatprep.subr.bf16.mxu0 0
        %924 = vmatpush1.bf16.msra.mxu0 %v771
        %925 = vmatprep.subr.bf16.mxu0 0
        %926 = vmatpush1.bf16.msra.mxu0 %v772
        %927 = vmatprep.subr.bf16.mxu0 0
        %928 = vmatpush1.bf16.msra.mxu0 %v773
        %929 = vmatprep.subr.bf16.mxu0 0
        %930 = vmatpush1.bf16.msra.mxu0 %v774
        %931 = vmatprep.subr.bf16.mxu0 0
        %932 = vmatpush1.bf16.msra.mxu0 %v775
        %933 = vmatprep.subr.bf16.mxu0 0
        %934 = vmatpush1.bf16.msra.mxu0 %v776
        %935 = vmatprep.subr.bf16.mxu0 0
        %936 = vmatpush1.bf16.msra.mxu0 %v777
        %937 = vmatprep.subr.bf16.mxu0 0
        %938 = vmatpush1.bf16.msra.mxu0 %v778
        %939 = vmatprep.subr.bf16.mxu0 0
        %940 = vmatpush1.bf16.msra.mxu0 0
        %941 = vmatprep.subr.bf16.mxu0 0
        %942 = vmatpush1.bf16.msra.mxu0 0
        %943 = vmatprep.subr.bf16.mxu0 0
        %944 = vmatpush1.bf16.msra.mxu0 0
        %945 = vmatprep.subr.bf16.mxu0 0
        %946 = vmatpush1.bf16.msra.mxu0 0
        %947 = vmatprep.subr.bf16.mxu0 0
        %948 = vmatpush1.bf16.msra.mxu0 0
        %949 = vmatprep.subr.bf16.mxu0 0
        %950 = vmatpush1.bf16.msra.mxu0 0
        %951 = vmatprep.subr.bf16.mxu0 0
        %952 = vmatpush1.bf16.msra.mxu0 0
        %953 = vmatprep.subr.bf16.mxu0 0
        %954 = vmatpush1.bf16.msra.mxu0 0
        %955 = vmatprep.mubr.bf16.mxu0 0
        %956 = vmatmul.mubr.bf16.gmra.mrb[0].mxu0 %v922
        %v957 = vpop.f32.mrb[0].mxu0
        %v958 = vadd.f32 %v737, %v957
        %v959 = vpop.f32.mrb[0].mxu0
        %v960 = vpop.f32.mrb[0].mxu0
        %v961 = vpop.f32.mrb[0].mxu0
        %962 = vdwg.mxu0
        %v963 = vmax.f32 %v958, 0.0
        %v964 = vrot.slane %v963, 4
        %v965 = vadd.f32 %v963, %v964
        %v966 = vrot.slane %v965, 2
        %v967 = vadd.f32 %v965, %v966
        %v968 = vrot.slane %v967, 1
        %v969 = vadd.f32 %v967, %v968
        %v970 = vadd.f32 %v872, %v969
        %v971 = vlaneseq
        %v972 = vshrl.u32 %v971, 7
        %v973 = vsub.s32 1, %v972
        %v974 = vrot.slane %v500, %v973
        %v975 = vadd.f32 %v498, %v974
        %v976 = vadd.f32 %v975, %v546
        %v977 = vmax.f32 %v976, 0.0
        %v978 = vpack.c.bf16 %v977, %v977
        %979 = vmatprep.subr.bf16.mxu0 0
        %980 = vmatpush1.bf16.msra.mxu0 %v623
        %981 = vmatprep.subr.bf16.mxu0 0
        %982 = vmatpush1.bf16.msra.mxu0 %v624
        %983 = vmatprep.subr.bf16.mxu0 0
        %984 = vmatpush1.bf16.msra.mxu0 %v625
        %985 = vmatprep.subr.bf16.mxu0 0
        %986 = vmatpush1.bf16.msra.mxu0 %v626
        %987 = vmatprep.subr.bf16.mxu0 0
        %988 = vmatpush1.bf16.msra.mxu0 %v627
        %989 = vmatprep.subr.bf16.mxu0 0
        %990 = vmatpush1.bf16.msra.mxu0 %v628
        %991 = vmatprep.subr.bf16.mxu0 0
        %992 = vmatpush1.bf16.msra.mxu0 %v629
        %993 = vmatprep.subr.bf16.mxu0 0
        %994 = vmatpush1.bf16.msra.mxu0 %v630
        %995 = vmatprep.subr.bf16.mxu0 0
        %996 = vmatpush1.bf16.msra.mxu0 0
        %997 = vmatprep.subr.bf16.mxu0 0
        %998 = vmatpush1.bf16.msra.mxu0 0
        %999 = vmatprep.subr.bf16.mxu0 0
        %1000 = vmatpush1.bf16.msra.mxu0 0
        %1001 = vmatprep.subr.bf16.mxu0 0
        %1002 = vmatpush1.bf16.msra.mxu0 0
        %1003 = vmatprep.subr.bf16.mxu0 0
        %1004 = vmatpush1.bf16.msra.mxu0 0
        %1005 = vmatprep.subr.bf16.mxu0 0
        %1006 = vmatpush1.bf16.msra.mxu0 0
        %1007 = vmatprep.subr.bf16.mxu0 0
        %1008 = vmatpush1.bf16.msra.mxu0 0
        %1009 = vmatprep.subr.bf16.mxu0 0
        %1010 = vmatpush1.bf16.msra.mxu0 0
        %1011 = vmatprep.mubr.bf16.mxu0 0
        %1012 = vmatmul.mubr.bf16.gmra.mrb[0].mxu0 %v978
        %v1013 = vpop.f32.mrb[0].mxu0
        %v1014 = vadd.f32 %v589, %v1013
        %v1015 = vpop.f32.mrb[0].mxu0
        %v1016 = vpop.f32.mrb[0].mxu0
        %v1017 = vpop.f32.mrb[0].mxu0
        %1018 = vdwg.mxu0
        %v1019 = vmax.f32 %v1014, 0.0
        %v1020 = vpack.c.bf16 %v1019, %v1019
        %1021 = vmatprep.subr.bf16.mxu0 0
        %1022 = vmatpush1.bf16.msra.mxu0 %v771
        %1023 = vmatprep.subr.bf16.mxu0 0
        %1024 = vmatpush1.bf16.msra.mxu0 %v772
        %1025 = vmatprep.subr.bf16.mxu0 0
        %1026 = vmatpush1.bf16.msra.mxu0 %v773
        %1027 = vmatprep.subr.bf16.mxu0 0
        %1028 = vmatpush1.bf16.msra.mxu0 %v774
        %1029 = vmatprep.subr.bf16.mxu0 0
        %1030 = vmatpush1.bf16.msra.mxu0 %v775
        %1031 = vmatprep.subr.bf16.mxu0 0
        %1032 = vmatpush1.bf16.msra.mxu0 %v776
        %1033 = vmatprep.subr.bf16.mxu0 0
        %1034 = vmatpush1.bf16.msra.mxu0 %v777
        %1035 = vmatprep.subr.bf16.mxu0 0
        %1036 = vmatpush1.bf16.msra.mxu0 %v778
        %1037 = vmatprep.subr.bf16.mxu0 0
        %1038 = vmatpush1.bf16.msra.mxu0 0
        %1039 = vmatprep.subr.bf16.mxu0 0
        %1040 = vmatpush1.bf16.msra.mxu0 0
        %1041 = vmatprep.subr.bf16.mxu0 0
        %1042 = vmatpush1.bf16.msra.mxu0 0
        %1043 = vmatprep.subr.bf16.mxu0 0
        %1044 = vmatpush1.bf16.msra.mxu0 0
        %1045 = vmatprep.subr.bf16.mxu0 0
        %1046 = vmatpush1.bf16.msra.mxu0 0
        %1047 = vmatprep.subr.bf16.mxu0 0
        %1048 = vmatpush1.bf16.msra.mxu0 0
        %1049 = vmatprep.subr.bf16.mxu0 0
        %1050 = vmatpush1.bf16.msra.mxu0 0
        %1051 = vmatprep.subr.bf16.mxu0 0
        %1052 = vmatpush1.bf16.msra.mxu0 0
        %1053 = vmatprep.mubr.bf16.mxu0 0
        %1054 = vmatmul.mubr.bf16.gmra.mrb[0].mxu0 %v1020
        %v1055 = vpop.f32.mrb[0].mxu0
        %v1056 = vadd.f32 %v737, %v1055
        %v1057 = vpop.f32.mrb[0].mxu0
        %v1058 = vpop.f32.mrb[0].mxu0
        %v1059 = vpop.f32.mrb[0].mxu0
        %1060 = vdwg.mxu0
        %v1061 = vmax.f32 %v1056, 0.0
        %v1062 = vrot.slane %v1061, 4
        %v1063 = vadd.f32 %v1061, %v1062
        %v1064 = vrot.slane %v1063, 2
        %v1065 = vadd.f32 %v1063, %v1064
        %v1066 = vrot.slane %v1065, 1
        %v1067 = vadd.f32 %v1065, %v1066
        %v1068 = vadd.f32 %v872, %v1067
        %v1069 = vlaneseq
        %v1070 = vshrl.u32 %v1069, 7
        %v1071 = vsub.s32 2, %v1070
        %v1072 = vrot.slane %v500, %v1071
        %v1073 = vadd.f32 %v498, %v1072
        %v1074 = vadd.f32 %v1073, %v546
        %v1075 = vmax.f32 %v1074, 0.0
        %v1076 = vpack.c.bf16 %v1075, %v1075
        %1077 = vmatprep.subr.bf16.mxu0 0
        %1078 = vmatpush1.bf16.msra.mxu0 %v623
        %1079 = vmatprep.subr.bf16.mxu0 0
        %1080 = vmatpush1.bf16.msra.mxu0 %v624
        %1081 = vmatprep.subr.bf16.mxu0 0
        %1082 = vmatpush1.bf16.msra.mxu0 %v625
        %1083 = vmatprep.subr.bf16.mxu0 0
        %1084 = vmatpush1.bf16.msra.mxu0 %v626
        %1085 = vmatprep.subr.bf16.mxu0 0
        %1086 = vmatpush1.bf16.msra.mxu0 %v627
        %1087 = vmatprep.subr.bf16.mxu0 0
        %1088 = vmatpush1.bf16.msra.mxu0 %v628
        %1089 = vmatprep.subr.bf16.mxu0 0
        %1090 = vmatpush1.bf16.msra.mxu0 %v629
        %1091 = vmatprep.subr.bf16.mxu0 0
        %1092 = vmatpush1.bf16.msra.mxu0 %v630
        %1093 = vmatprep.subr.bf16.mxu0 0
        %1094 = vmatpush1.bf16.msra.mxu0 0
        %1095 = vmatprep.subr.bf16.mxu0 0
        %1096 = vmatpush1.bf16.msra.mxu0 0
        %1097 = vmatprep.subr.bf16.mxu0 0
        %1098 = vmatpush1.bf16.msra.mxu0 0
        %1099 = vmatprep.subr.bf16.mxu0 0
        %1100 = vmatpush1.bf16.msra.mxu0 0
        %1101 = vmatprep.subr.bf16.mxu0 0
        %1102 = vmatpush1.bf16.msra.mxu0 0
        %1103 = vmatprep.subr.bf16.mxu0 0
        %1104 = vmatpush1.bf16.msra.mxu0 0
        %1105 = vmatprep.subr.bf16.mxu0 0
        %1106 = vmatpush1.bf16.msra.mxu0 0
        %1107 = vmatprep.subr.bf16.mxu0 0
        %1108 = vmatpush1.bf16.msra.mxu0 0
        %1109 = vmatprep.mubr.bf16.mxu0 0
        %1110 = vmatmul.mubr.bf16.gmra.mrb[0].mxu0 %v1076
        %v1111 = vpop.f32.mrb[0].mxu0
        %v1112 = vadd.f32 %v589, %v1111
        %v1113 = vpop.f32.mrb[0].mxu0
        %v1114 = vpop.f32.mrb[0].mxu0
        %v1115 = vpop.f32.mrb[0].mxu0
        %1116 = vdwg.mxu0
        %v1117 = vmax.f32 %v1112, 0.0
        %v1118 = vpack.c.bf16 %v1117, %v1117
        %1119 = vmatprep.subr.bf16.mxu0 0
        %1120 = vmatpush1.bf16.msra.mxu0 %v771
        %1121 = vmatprep.subr.bf16.mxu0 0
        %1122 = vmatpush1.bf16.msra.mxu0 %v772
        %1123 = vmatprep.subr.bf16.mxu0 0
        %1124 = vmatpush1.bf16.msra.mxu0 %v773
        %1125 = vmatprep.subr.bf16.mxu0 0
        %1126 = vmatpush1.bf16.msra.mxu0 %v774
        %1127 = vmatprep.subr.bf16.mxu0 0
        %1128 = vmatpush1.bf16.msra.mxu0 %v775
        %1129 = vmatprep.subr.bf16.mxu0 0
        %1130 = vmatpush1.bf16.msra.mxu0 %v776
        %1131 = vmatprep.subr.bf16.mxu0 0
        %1132 = vmatpush1.bf16.msra.mxu0 %v777
        %1133 = vmatprep.subr.bf16.mxu0 0
        %1134 = vmatpush1.bf16.msra.mxu0 %v778
        %1135 = vmatprep.subr.bf16.mxu0 0
        %1136 = vmatpush1.bf16.msra.mxu0 0
        %1137 = vmatprep.subr.bf16.mxu0 0
        %1138 = vmatpush1.bf16.msra.mxu0 0
        %1139 = vmatprep.subr.bf16.mxu0 0
        %1140 = vmatpush1.bf16.msra.mxu0 0
        %1141 = vmatprep.subr.bf16.mxu0 0
        %1142 = vmatpush1.bf16.msra.mxu0 0
        %1143 = vmatprep.subr.bf16.mxu0 0
        %1144 = vmatpush1.bf16.msra.mxu0 0
        %1145 = vmatprep.subr.bf16.mxu0 0
        %1146 = vmatpush1.bf16.msra.mxu0 0
        %1147 = vmatprep.subr.bf16.mxu0 0
        %1148 = vmatpush1.bf16.msra.mxu0 0
        %1149 = vmatprep.subr.bf16.mxu0 0
        %1150 = vmatpush1.bf16.msra.mxu0 0
        %1151 = vmatprep.mubr.bf16.mxu0 0
        %1152 = vmatmul.mubr.bf16.gmra.mrb[0].mxu0 %v1118
        %v1153 = vpop.f32.mrb[0].mxu0
        %v1154 = vadd.f32 %v737, %v1153
        %v1155 = vpop.f32.mrb[0].mxu0
        %v1156 = vpop.f32.mrb[0].mxu0
        %v1157 = vpop.f32.mrb[0].mxu0
        %1158 = vdwg.mxu0
        %v1159 = vmax.f32 %v1154, 0.0
        %v1160 = vrot.slane %v1159, 4
        %v1161 = vadd.f32 %v1159, %v1160
        %v1162 = vrot.slane %v1161, 2
        %v1163 = vadd.f32 %v1161, %v1162
        %v1164 = vrot.slane %v1163, 1
        %v1165 = vadd.f32 %v1163, %v1164
        %v1166 = vadd.f32 %v872, %v1165
        %v1167 = vlaneseq
        %v1168 = vshrl.u32 %v1167, 7
        %v1169 = vsub.s32 3, %v1168
        %v1170 = vrot.slane %v500, %v1169
        %v1171 = vadd.f32 %v498, %v1170
        %v1172 = vadd.f32 %v1171, %v546
        %v1173 = vmax.f32 %v1172, 0.0
        %v1174 = vpack.c.bf16 %v1173, %v1173
        %1175 = vmatprep.subr.bf16.mxu0 0
        %1176 = vmatpush1.bf16.msra.mxu0 %v623
        %1177 = vmatprep.subr.bf16.mxu0 0
        %1178 = vmatpush1.bf16.msra.mxu0 %v624
        %1179 = vmatprep.subr.bf16.mxu0 0
        %1180 = vmatpush1.bf16.msra.mxu0 %v625
        %1181 = vmatprep.subr.bf16.mxu0 0
        %1182 = vmatpush1.bf16.msra.mxu0 %v626
        %1183 = vmatprep.subr.bf16.mxu0 0
        %1184 = vmatpush1.bf16.msra.mxu0 %v627
        %1185 = vmatprep.subr.bf16.mxu0 0
        %1186 = vmatpush1.bf16.msra.mxu0 %v628
        %1187 = vmatprep.subr.bf16.mxu0 0
        %1188 = vmatpush1.bf16.msra.mxu0 %v629
        %1189 = vmatprep.subr.bf16.mxu0 0
        %1190 = vmatpush1.bf16.msra.mxu0 %v630
        %1191 = vmatprep.subr.bf16.mxu0 0
        %1192 = vmatpush1.bf16.msra.mxu0 0
        %1193 = vmatprep.subr.bf16.mxu0 0
        %1194 = vmatpush1.bf16.msra.mxu0 0
        %1195 = vmatprep.subr.bf16.mxu0 0
        %1196 = vmatpush1.bf16.msra.mxu0 0
        %1197 = vmatprep.subr.bf16.mxu0 0
        %1198 = vmatpush1.bf16.msra.mxu0 0
        %1199 = vmatprep.subr.bf16.mxu0 0
        %1200 = vmatpush1.bf16.msra.mxu0 0
        %1201 = vmatprep.subr.bf16.mxu0 0
        %1202 = vmatpush1.bf16.msra.mxu0 0
        %1203 = vmatprep.subr.bf16.mxu0 0
        %1204 = vmatpush1.bf16.msra.mxu0 0
        %1205 = vmatprep.subr.bf16.mxu0 0
        %1206 = vmatpush1.bf16.msra.mxu0 0
        %1207 = vmatprep.mubr.bf16.mxu0 0
        %1208 = vmatmul.mubr.bf16.gmra.mrb[0].mxu0 %v1174
        %v1209 = vpop.f32.mrb[0].mxu0
        %v1210 = vadd.f32 %v589, %v1209
        %v1211 = vpop.f32.mrb[0].mxu0
        %v1212 = vpop.f32.mrb[0].mxu0
        %v1213 = vpop.f32.mrb[0].mxu0
        %1214 = vdwg.mxu0
        %v1215 = vmax.f32 %v1210, 0.0
        %v1216 = vpack.c.bf16 %v1215, %v1215
        %1217 = vmatprep.subr.bf16.mxu0 0
        %1218 = vmatpush1.bf16.msra.mxu0 %v771
        %1219 = vmatprep.subr.bf16.mxu0 0
        %1220 = vmatpush1.bf16.msra.mxu0 %v772
        %1221 = vmatprep.subr.bf16.mxu0 0
        %1222 = vmatpush1.bf16.msra.mxu0 %v773
        %1223 = vmatprep.subr.bf16.mxu0 0
        %1224 = vmatpush1.bf16.msra.mxu0 %v774
        %1225 = vmatprep.subr.bf16.mxu0 0
        %1226 = vmatpush1.bf16.msra.mxu0 %v775
        %1227 = vmatprep.subr.bf16.mxu0 0
        %1228 = vmatpush1.bf16.msra.mxu0 %v776
        %1229 = vmatprep.subr.bf16.mxu0 0
        %1230 = vmatpush1.bf16.msra.mxu0 %v777
        %1231 = vmatprep.subr.bf16.mxu0 0
        %1232 = vmatpush1.bf16.msra.mxu0 %v778
        %1233 = vmatprep.subr.bf16.mxu0 0
        %1234 = vmatpush1.bf16.msra.mxu0 0
        %1235 = vmatprep.subr.bf16.mxu0 0
        %1236 = vmatpush1.bf16.msra.mxu0 0
        %1237 = vmatprep.subr.bf16.mxu0 0
        %1238 = vmatpush1.bf16.msra.mxu0 0
        %1239 = vmatprep.subr.bf16.mxu0 0
        %1240 = vmatpush1.bf16.msra.mxu0 0
        %1241 = vmatprep.subr.bf16.mxu0 0
        %1242 = vmatpush1.bf16.msra.mxu0 0
        %1243 = vmatprep.subr.bf16.mxu0 0
        %1244 = vmatpush1.bf16.msra.mxu0 0
        %1245 = vmatprep.subr.bf16.mxu0 0
        %1246 = vmatpush1.bf16.msra.mxu0 0
        %1247 = vmatprep.subr.bf16.mxu0 0
        %1248 = vmatpush1.bf16.msra.mxu0 0
        %1249 = vmatprep.mubr.bf16.mxu0 0
        %1250 = vmatmul.mubr.bf16.gmra.mrb[0].mxu0 %v1216
        %v1251 = vpop.f32.mrb[0].mxu0
        %v1252 = vadd.f32 %v737, %v1251
        %v1253 = vpop.f32.mrb[0].mxu0
        %v1254 = vpop.f32.mrb[0].mxu0
        %v1255 = vpop.f32.mrb[0].mxu0
        %1256 = vdwg.mxu0
        %v1257 = vmax.f32 %v1252, 0.0
        %v1258 = vrot.slane %v1257, 4
        %v1259 = vadd.f32 %v1257, %v1258
        %v1260 = vrot.slane %v1259, 2
        %v1261 = vadd.f32 %v1259, %v1260
        %v1262 = vrot.slane %v1261, 1
        %v1263 = vadd.f32 %v1261, %v1262
        %v1264 = vadd.f32 %v872, %v1263
        %vm1265 = vcmask 1040384
        %v1266 = vsel %vm1265, %v970, %v1068
        %vm1267 = vcmask 1041408
        %v1268 = vsel %vm1267, %v1266, %v1166
        %vm1269 = vcmask 1042432
        %v1270 = vsel %vm1269, %v1268, %v1264
        %v1271 = vpack.c.bf16 %v1270, %v1270
        %v1272 = vld [vmem:[%s8] sm:$0xf]
        %v1273 = vld [vmem:[%s8 + $0x4] sm:$0xf]
        %v1274 = vld [vmem:[%s8 + $0x8] sm:$0xf]
        %v1275 = vld [vmem:[%s8 + $0xc] sm:$0xf]
        %v1276 = vld [vmem:[%s8 + $0x10] sm:$0xf]
        %v1277 = vld [vmem:[%s8 + $0x14] sm:$0xf]
        %v1278 = vld [vmem:[%s8 + $0x18] sm:$0xf]
        %v1279 = vld [vmem:[%s8 + $0x1c] sm:$0xf]
        %v1280 = vld [vmem:[%s8 + $0x20] sm:$0xf]
        %v1281 = vld [vmem:[%s8 + $0x24] sm:$0xf]
        %v1282 = vld [vmem:[%s8 + $0x28] sm:$0xf]
        %v1283 = vld [vmem:[%s8 + $0x2c] sm:$0xf]
        %v1284 = vld [vmem:[%s8 + $0x30] sm:$0xf]
        %v1285 = vld [vmem:[%s8 + $0x34] sm:$0xf]
        %v1286 = vld [vmem:[%s8 + $0x38] sm:$0xf]
        %v1287 = vld [vmem:[%s8 + $0x3c] sm:$0xf]
        %v1288 = vld [vmem:[%s9] sm:$0x1]
        %v1290 = vlaneseq
        %v1291 = vshrl.u32 %v1290, 7
        %v1292 = vsub.s32 0, %v1291
        %v1293 = vrot.slane %v1288, %v1292
        %v1311 = vunpack.c.l.b16 %v1272
        %v1312 = vunpack.c.l.b16 %v1273
        %v1313 = vunpack.c.l.b16 %v1274
        %v1314 = vunpack.c.l.b16 %v1275
        %v1315 = vunpack.c.l.b16 %v1276
        %v1316 = vunpack.c.l.b16 %v1277
        %v1317 = vunpack.c.l.b16 %v1278
        %v1318 = vunpack.c.l.b16 %v1279
        %v1319 = vunpack.c.l.b16 %v1280
        %v1320 = vunpack.c.l.b16 %v1281
        %v1321 = vunpack.c.l.b16 %v1282
        %v1322 = vunpack.c.l.b16 %v1283
        %v1323 = vunpack.c.l.b16 %v1284
        %v1324 = vunpack.c.l.b16 %v1285
        %v1325 = vunpack.c.l.b16 %v1286
        %v1326 = vunpack.c.l.b16 %v1287
        %v1327 = vpack.c.b16 %v1312, %v1311
        %v1328 = vpack.c.b16 %v1314, %v1313
        %v1329 = vpack.c.b16 %v1316, %v1315
        %v1330 = vpack.c.b16 %v1318, %v1317
        %v1331 = vpack.c.b16 %v1320, %v1319
        %v1332 = vpack.c.b16 %v1322, %v1321
        %v1333 = vpack.c.b16 %v1324, %v1323
        %v1334 = vpack.c.b16 %v1326, %v1325
        %1343 = vmatprep.subr.bf16.mxu0 0
        %1344 = vmatpush1.bf16.msra.mxu0 %v1327
        %1345 = vmatprep.subr.bf16.mxu0 0
        %1346 = vmatpush1.bf16.msra.mxu0 %v1328
        %1347 = vmatprep.subr.bf16.mxu0 0
        %1348 = vmatpush1.bf16.msra.mxu0 %v1329
        %1349 = vmatprep.subr.bf16.mxu0 0
        %1350 = vmatpush1.bf16.msra.mxu0 %v1330
        %1351 = vmatprep.subr.bf16.mxu0 0
        %1352 = vmatpush1.bf16.msra.mxu0 %v1331
        %1353 = vmatprep.subr.bf16.mxu0 0
        %1354 = vmatpush1.bf16.msra.mxu0 %v1332
        %1355 = vmatprep.subr.bf16.mxu0 0
        %1356 = vmatpush1.bf16.msra.mxu0 %v1333
        %1357 = vmatprep.subr.bf16.mxu0 0
        %1358 = vmatpush1.bf16.msra.mxu0 %v1334
        %1359 = vmatprep.subr.bf16.mxu0 0
        %1360 = vmatpush1.bf16.msra.mxu0 0
        %1361 = vmatprep.subr.bf16.mxu0 0
        %1362 = vmatpush1.bf16.msra.mxu0 0
        %1363 = vmatprep.subr.bf16.mxu0 0
        %1364 = vmatpush1.bf16.msra.mxu0 0
        %1365 = vmatprep.subr.bf16.mxu0 0
        %1366 = vmatpush1.bf16.msra.mxu0 0
        %1367 = vmatprep.subr.bf16.mxu0 0
        %1368 = vmatpush1.bf16.msra.mxu0 0
        %1369 = vmatprep.subr.bf16.mxu0 0
        %1370 = vmatpush1.bf16.msra.mxu0 0
        %1371 = vmatprep.subr.bf16.mxu0 0
        %1372 = vmatpush1.bf16.msra.mxu0 0
        %1373 = vmatprep.subr.bf16.mxu0 0
        %1374 = vmatpush1.bf16.msra.mxu0 0
        %1375 = vmatprep.mubr.bf16.mxu0 0
        %1376 = vmatmul.mubr.bf16.gmra.mrb[0].mxu0 %v1271
        %v1377 = vpop.f32.mrb[0].mxu0
        %v1378 = vadd.f32 %v1293, %v1377
        %v1379 = vpop.f32.mrb[0].mxu0
        %v1380 = vpop.f32.mrb[0].mxu0
        %v1381 = vpop.f32.mrb[0].mxu0
        %1382 = vdwg.mxu0
        %v1383 = vmax.f32 %v1378, 0.0
        %v1384 = vpack.c.bf16 %v1383, %v1383
        %v1385 = vld [vmem:[%s10] sm:$0xf]
        %v1386 = vld [vmem:[%s10 + $0x4] sm:$0xf]
        %v1387 = vld [vmem:[%s10 + $0x8] sm:$0xf]
        %v1388 = vld [vmem:[%s10 + $0xc] sm:$0xf]
        %v1389 = vld [vmem:[%s10 + $0x10] sm:$0xf]
        %v1390 = vld [vmem:[%s10 + $0x14] sm:$0xf]
        %v1391 = vld [vmem:[%s10 + $0x18] sm:$0xf]
        %v1392 = vld [vmem:[%s10 + $0x1c] sm:$0xf]
        %v1393 = vld [vmem:[%s10 + $0x20] sm:$0xf]
        %v1394 = vld [vmem:[%s10 + $0x24] sm:$0xf]
        %v1395 = vld [vmem:[%s10 + $0x28] sm:$0xf]
        %v1396 = vld [vmem:[%s10 + $0x2c] sm:$0xf]
        %v1397 = vld [vmem:[%s10 + $0x30] sm:$0xf]
        %v1398 = vld [vmem:[%s10 + $0x34] sm:$0xf]
        %v1399 = vld [vmem:[%s10 + $0x38] sm:$0xf]
        %v1400 = vld [vmem:[%s10 + $0x3c] sm:$0xf]
        %v1401 = vld [vmem:[%s11] sm:$0x1]
        %v1403 = vlaneseq
        %v1404 = vshrl.u32 %v1403, 7
        %v1405 = vsub.s32 0, %v1404
        %v1406 = vrot.slane %v1401, %v1405
        %v1424 = vunpack.c.l.b16 %v1385
        %v1425 = vunpack.c.l.b16 %v1386
        %v1426 = vunpack.c.l.b16 %v1387
        %v1427 = vunpack.c.l.b16 %v1388
        %v1428 = vunpack.c.l.b16 %v1389
        %v1429 = vunpack.c.l.b16 %v1390
        %v1430 = vunpack.c.l.b16 %v1391
        %v1431 = vunpack.c.l.b16 %v1392
        %v1432 = vunpack.c.l.b16 %v1393
        %v1433 = vunpack.c.l.b16 %v1394
        %v1434 = vunpack.c.l.b16 %v1395
        %v1435 = vunpack.c.l.b16 %v1396
        %v1436 = vunpack.c.l.b16 %v1397
        %v1437 = vunpack.c.l.b16 %v1398
        %v1438 = vunpack.c.l.b16 %v1399
        %v1439 = vunpack.c.l.b16 %v1400
        %v1440 = vpack.c.b16 %v1425, %v1424
        %v1441 = vpack.c.b16 %v1427, %v1426
        %v1442 = vpack.c.b16 %v1429, %v1428
        %v1443 = vpack.c.b16 %v1431, %v1430
        %v1444 = vpack.c.b16 %v1433, %v1432
        %v1445 = vpack.c.b16 %v1435, %v1434
        %v1446 = vpack.c.b16 %v1437, %v1436
        %v1447 = vpack.c.b16 %v1439, %v1438
        %1456 = vmatprep.subr.bf16.mxu0 0
        %1457 = vmatpush1.bf16.msra.mxu0 %v1440
        %1458 = vmatprep.subr.bf16.mxu0 0
        %1459 = vmatpush1.bf16.msra.mxu0 %v1441
        %1460 = vmatprep.subr.bf16.mxu0 0
        %1461 = vmatpush1.bf16.msra.mxu0 %v1442
        %1462 = vmatprep.subr.bf16.mxu0 0
        %1463 = vmatpush1.bf16.msra.mxu0 %v1443
        %1464 = vmatprep.subr.bf16.mxu0 0
        %1465 = vmatpush1.bf16.msra.mxu0 %v1444
        %1466 = vmatprep.subr.bf16.mxu0 0
        %1467 = vmatpush1.bf16.msra.mxu0 %v1445
        %1468 = vmatprep.subr.bf16.mxu0 0
        %1469 = vmatpush1.bf16.msra.mxu0 %v1446
        %1470 = vmatprep.subr.bf16.mxu0 0
        %1471 = vmatpush1.bf16.msra.mxu0 %v1447
        %1472 = vmatprep.subr.bf16.mxu0 0
        %1473 = vmatpush1.bf16.msra.mxu0 0
        %1474 = vmatprep.subr.bf16.mxu0 0
        %1475 = vmatpush1.bf16.msra.mxu0 0
        %1476 = vmatprep.subr.bf16.mxu0 0
        %1477 = vmatpush1.bf16.msra.mxu0 0
        %1478 = vmatprep.subr.bf16.mxu0 0
        %1479 = vmatpush1.bf16.msra.mxu0 0
        %1480 = vmatprep.subr.bf16.mxu0 0
        %1481 = vmatpush1.bf16.msra.mxu0 0
        %1482 = vmatprep.subr.bf16.mxu0 0
        %1483 = vmatpush1.bf16.msra.mxu0 0
        %1484 = vmatprep.subr.bf16.mxu0 0
        %1485 = vmatpush1.bf16.msra.mxu0 0
        %1486 = vmatprep.subr.bf16.mxu0 0
        %1487 = vmatpush1.bf16.msra.mxu0 0
        %1488 = vmatprep.mubr.bf16.mxu0 0
        %1489 = vmatmul.mubr.bf16.gmra.mrb[0].mxu0 %v1384
        %v1490 = vpop.f32.mrb[0].mxu0
        %v1491 = vadd.f32 %v1406, %v1490
        %v1492 = vpop.f32.mrb[0].mxu0
        %v1493 = vpop.f32.mrb[0].mxu0
        %v1494 = vpop.f32.mrb[0].mxu0
        %1495 = vdwg.mxu0
        %v1496 = vmax.f32 %v1491, 0.0
        %v1497 = vpack.c.bf16 %v1496, %v1496
        %v1498 = vld [vmem:[%s12] sm:$0xf]
        %v1499 = vld [vmem:[%s12 + $0x4] sm:$0xf]
        %v1500 = vld [vmem:[%s12 + $0x8] sm:$0xf]
        %v1501 = vld [vmem:[%s12 + $0xc] sm:$0xf]
        %v1502 = vld [vmem:[%s12 + $0x10] sm:$0xf]
        %v1503 = vld [vmem:[%s12 + $0x14] sm:$0xf]
        %v1504 = vld [vmem:[%s12 + $0x18] sm:$0xf]
        %v1505 = vld [vmem:[%s12 + $0x1c] sm:$0xf]
        %v1506 = vld [vmem:[%s12 + $0x20] sm:$0xf]
        %v1507 = vld [vmem:[%s12 + $0x24] sm:$0xf]
        %v1508 = vld [vmem:[%s12 + $0x28] sm:$0xf]
        %v1509 = vld [vmem:[%s12 + $0x2c] sm:$0xf]
        %v1510 = vld [vmem:[%s12 + $0x30] sm:$0xf]
        %v1511 = vld [vmem:[%s12 + $0x34] sm:$0xf]
        %v1512 = vld [vmem:[%s12 + $0x38] sm:$0xf]
        %v1513 = vld [vmem:[%s12 + $0x3c] sm:$0xf]
        %v1514 = vld [vmem:[%s13] sm:$0x1]
        %v1516 = vlaneseq
        %v1517 = vshrl.u32 %v1516, 7
        %v1518 = vsub.s32 0, %v1517
        %v1519 = vrot.slane %v1514, %v1518
        %v1537 = vunpack.c.l.b16 %v1498
        %v1538 = vunpack.c.l.b16 %v1499
        %v1539 = vunpack.c.l.b16 %v1500
        %v1540 = vunpack.c.l.b16 %v1501
        %v1541 = vunpack.c.l.b16 %v1502
        %v1542 = vunpack.c.l.b16 %v1503
        %v1543 = vunpack.c.l.b16 %v1504
        %v1544 = vunpack.c.l.b16 %v1505
        %v1545 = vunpack.c.l.b16 %v1506
        %v1546 = vunpack.c.l.b16 %v1507
        %v1547 = vunpack.c.l.b16 %v1508
        %v1548 = vunpack.c.l.b16 %v1509
        %v1549 = vunpack.c.l.b16 %v1510
        %v1550 = vunpack.c.l.b16 %v1511
        %v1551 = vunpack.c.l.b16 %v1512
        %v1552 = vunpack.c.l.b16 %v1513
        %v1553 = vpack.c.b16 %v1538, %v1537
        %v1554 = vpack.c.b16 %v1540, %v1539
        %v1555 = vpack.c.b16 %v1542, %v1541
        %v1556 = vpack.c.b16 %v1544, %v1543
        %v1557 = vpack.c.b16 %v1546, %v1545
        %v1558 = vpack.c.b16 %v1548, %v1547
        %v1559 = vpack.c.b16 %v1550, %v1549
        %v1560 = vpack.c.b16 %v1552, %v1551
        %1569 = vmatprep.subr.bf16.mxu0 0
        %1570 = vmatpush1.bf16.msra.mxu0 %v1553
        %1571 = vmatprep.subr.bf16.mxu0 0
        %1572 = vmatpush1.bf16.msra.mxu0 %v1554
        %1573 = vmatprep.subr.bf16.mxu0 0
        %1574 = vmatpush1.bf16.msra.mxu0 %v1555
        %1575 = vmatprep.subr.bf16.mxu0 0
        %1576 = vmatpush1.bf16.msra.mxu0 %v1556
        %1577 = vmatprep.subr.bf16.mxu0 0
        %1578 = vmatpush1.bf16.msra.mxu0 %v1557
        %1579 = vmatprep.subr.bf16.mxu0 0
        %1580 = vmatpush1.bf16.msra.mxu0 %v1558
        %1581 = vmatprep.subr.bf16.mxu0 0
        %1582 = vmatpush1.bf16.msra.mxu0 %v1559
        %1583 = vmatprep.subr.bf16.mxu0 0
        %1584 = vmatpush1.bf16.msra.mxu0 %v1560
        %1585 = vmatprep.subr.bf16.mxu0 0
        %1586 = vmatpush1.bf16.msra.mxu0 0
        %1587 = vmatprep.subr.bf16.mxu0 0
        %1588 = vmatpush1.bf16.msra.mxu0 0
        %1589 = vmatprep.subr.bf16.mxu0 0
        %1590 = vmatpush1.bf16.msra.mxu0 0
        %1591 = vmatprep.subr.bf16.mxu0 0
        %1592 = vmatpush1.bf16.msra.mxu0 0
        %1593 = vmatprep.subr.bf16.mxu0 0
        %1594 = vmatpush1.bf16.msra.mxu0 0
        %1595 = vmatprep.subr.bf16.mxu0 0
        %1596 = vmatpush1.bf16.msra.mxu0 0
        %1597 = vmatprep.subr.bf16.mxu0 0
        %1598 = vmatpush1.bf16.msra.mxu0 0
        %1599 = vmatprep.subr.bf16.mxu0 0
        %1600 = vmatpush1.bf16.msra.mxu0 0
        %1601 = vmatprep.mubr.bf16.mxu0 0
        %1602 = vmatmul.mubr.bf16.gmra.mrb[0].mxu0 %v1497
        %v1603 = vpop.f32.mrb[0].mxu0
        %v1604 = vadd.f32 %v1519, %v1603
        %v1605 = vpop.f32.mrb[0].mxu0
        %v1606 = vpop.f32.mrb[0].mxu0
        %v1607 = vpop.f32.mrb[0].mxu0
        %1608 = vdwg.mxu0
        %1609 = vst [vmem:[%s484] sm:$0xf] %v1604
        %s1610 = sand.u32 %s345, 1
        %s1611 = scalar_lea.sflag [#allocation3], %s1610
        %s1612 = sand.u32 %s345, 1
        %s1613 = smul.addr %s1612, 4
        %s1614 = scalar_lea.vmem [#allocation2], %s1613
        // Predicated region
        $region77: #{wild_relation_network_forward.11} parent=75 // pred_check
          %p1615 = pneg %p355
        $region78: #{wild_relation_network_forward.11} parent=75 // pred_check_branch
          %1617 = sbr.rel (%p1615) target = $region80
        $region79: #{wild_relation_network_forward.11} parent=75 // pred_region
          %s1619 = ssub.s32 64, 64
          %1620 = vsyncadd %s1611, %s1619
          %s1621 = smul.addr %s28, 64
          %s1622 = scalar_lea.hbm %s14, %s1621
          %s1624 = sshll.u32 %s1614, 4
          %s1625 = int_to_ptr.vmem [resolvable:$true] %s1624
          %1627 = dma.vmem_to_hbm [thread:$0]  %s1625, 64, %s1622, %s1611
        $region80: #{wild_relation_network_forward.11} parent=75 // pred_fallthru
          _
      $region76: #{wild_relation_network_forward.11} parent=5 // pred_fallthru
        _
      %p1628 = scmp.le.s32.totalorder 2, %s23
      // Predicated region
      $region81: #{wild_relation_network_forward.11} parent=5 // pred_check
        %p1629 = pneg %p1628
      $region82: #{wild_relation_network_forward.11} parent=5 // pred_check_branch
        %1631 = sbr.rel (%p1629) target = $region84
      $region83: #{wild_relation_network_forward.11} parent=5 // pred_region
        %s1632 = ssub.s32 %s23, 2
        // Predicated region
        $region85: #{wild_relation_network_forward.11} parent=83 // pred_check
          %p1633 = pneg %p361
        $region86: #{wild_relation_network_forward.11} parent=83 // pred_check_branch
          %1635 = sbr.rel (%p1633) target = $region88
        $region87: #{wild_relation_network_forward.11} parent=83 // pred_region
          %s1636 = sand.u32 %s346, 1
          %s1637 = scalar_lea.sflag [#allocation3], %s1636
          %s1638 = sand.u32 %s346, 1
          %s1639 = smul.addr %s1638, 4
          %s1640 = scalar_lea.vmem [#allocation2], %s1639
          %1641 = dma.done %s1637, 64
        $region88: #{wild_relation_network_forward.11} parent=83 // pred_fallthru
          _
      $region84: #{wild_relation_network_forward.11} parent=5 // pred_fallthru
        _
    $region6: #{wild_relation_network_forward.11} parent=1 // loop_footer
      %s27 = sadd.s32 1, %s23
    $region7: #{wild_relation_network_forward.11} parent=1 // loop_footer_branch
      %22 = sbr.rel target = $region3
    $region8: #{wild_relation_network_forward.11} parent=1 // loop_exit
      _
    %1642 = vsyncpa [#allocation3], 1
    %s1643 = scalar_lea.sflag [#allocation3], 1
    %1644 = vsyncpa %s1643, 1

</llo_original>
